<compile_context>
chip_gen: v7x
topology: tpu7x:2x2x1
jax: 0.10.0
libtpu: 0.0.40
codegen_flags: <defaults>
</compile_context>

<pallas_src>
import functools

import jax
import jax.numpy as jnp
import numpy as np
from jax.experimental import pallas as pl
from jax.experimental.pallas import tpu as pltpu


def _round_up(x, m):
    return ((x + m - 1) // m) * m


def _tap_table(D, H, W):
    """Static per-tap (flat shift, validity mask) for a 3x3x3 'same' conv.

    Built host-side with NumPy; masks ship as one small f32 input so the kernel
    needs no vector integer div/mod.  Flat index order is p = d*H*W + h*W + w.
    """
    DHW = D * H * W
    d = np.arange(D)[:, None, None]
    h = np.arange(H)[None, :, None]
    w = np.arange(W)[None, None, :]
    shifts, masks = [], []
    for kd in range(3):
        for kh in range(3):
            for kw in range(3):
                od, oh, ow = kd - 1, kh - 1, kw - 1
                shifts.append(od * H * W + oh * W + ow)
                valid = ((d + od >= 0) & (d + od < D) &
                         (h + oh >= 0) & (h + oh < H) &
                         (w + ow >= 0) & (w + ow < W))
                masks.append(valid.reshape(1, DHW))
    return tuple(shifts), np.stack(masks).astype(np.float32)  # (27, 1, DHW)


def _expand_grouped_weights(w, groups, cin_total, cout_pad, cin_pad):
    """(Cout, cin_pg, 3,3,3) -> block-diagonal per-tap (27, cout_pad, cin_pad) bf16."""
    cout, cin_pg = w.shape[0], w.shape[1]
    cout_pg = cout // groups
    wt = w.astype(jnp.float32).reshape(cout, cin_pg, 27).transpose(2, 0, 1)
    full = jnp.zeros((27, cout, cin_total), jnp.float32)
    for g in range(groups):
        full = full.at[:, g * cout_pg:(g + 1) * cout_pg,
                          g * cin_pg:(g + 1) * cin_pg].set(
                              wt[:, g * cout_pg:(g + 1) * cout_pg, :])
    full = jnp.pad(full, ((0, 0), (0, cout_pad - cout), (0, cin_pad - cin_total)))
    return full.astype(jnp.bfloat16)


def _encode_unit_kernel(x_ref, m_ref, w1_ref, w2_ref, o_ref, hbuf,
                        *, shifts, halo, dhw, neg_slope, eps):
    # x_ref : bf16 [cin_pad,  2*halo + dhw]  activation (zero halo baked in by wrapper)
    # m_ref : f32  [27, 1, dhw]              per-tap boundary masks (shared by layers)
    # w*_ref: bf16 [27, c_out_pad, c_in_pad] block-diagonal per-tap weights
    # o_ref : f32  [cout_pad, dhw]
    # hbuf  : bf16 [cmid_pad, 2*halo + dhw]  VMEM scratch for the layer-1 activation

    def grouped_conv(act_ref, w_ref):
        # Sum of 27 MXU matmuls (bf16 x bf16 -> f32 accumulation).  Each tap is a
        # static lane-shifted window of the flat-DHW activation; any element that
        # maps outside the real volume (into the halo or a flat-wrap neighbour) is
        # zeroed by the mask, reproducing Conv3d's zero padding.
        cout = w_ref.shape[1]
        acc = jnp.zeros((cout, dhw), jnp.float32)
        for t, s in enumerate(shifts):
            tap = act_ref[:, pl.ds(halo + s, dhw)]          # (c_in_pad, dhw) bf16
            valid = m_ref[t] > 0.5                          # (1, dhw) bool, broadcast
            tap = jnp.where(valid, tap, jnp.zeros_like(tap))
            acc = acc + jnp.dot(w_ref[t], tap,
                                preferred_element_type=jnp.float32)
        return acc

    def inorm_lrelu(acc):
        # InstanceNorm3d (affine=False, eps) with two-pass f32 stats + LeakyReLU.
        inv_n = 1.0 / dhw
        mean = jnp.sum(acc, axis=-1, keepdims=True) * inv_n
        c = acc - mean
        var = jnp.maximum(jnp.sum(c * c, axis=-1, keepdims=True) * inv_n, 0.0)
        y = c * jax.lax.rsqrt(var + eps)                    # rsqrt -> EUP slot
        return jnp.where(y > 0, y, neg_slope * y)

    # ---- layer 1 ----
    h = inorm_lrelu(grouped_conv(x_ref, w1_ref))            # f32 (cmid_pad, dhw)
    # Stage bf16 layer-1 activation in the haloed scratch.  The halo content is
    # never consumed: every tap element that lands in it has mask == 0.
    hbuf[:, pl.ds(halo, dhw)] = h.astype(jnp.bfloat16)
    # ---- layer 2 ----
    y = inorm_lrelu(grouped_conv(hbuf, w2_ref))
    o_ref[...] = y.astype(o_ref.dtype)


def encode_conv_unit(x, params, groups, *, neg_slope=0.01, eps=1e-5):
    """Fused EncodeConvUnit forward (eval mode)."""
    (w1, b1), (w2, b2) = params
    del b1, b2  # exactly cancelled by InstanceNorm3d's mean subtraction (affine=False)

    N, Cin, D, H, W = x.shape
    Cmid, Cout = w1.shape[0], w2.shape[0]
    DHW = D * H * W
    cin_pad = _round_up(Cin, 8)
    cmid_pad = _round_up(Cmid, 8)
    cout_pad = _round_up(Cout, 8)

    shifts, masks_np = _tap_table(D, H, W)
    halo = _round_up(max(abs(min(shifts)), max(shifts)), 128)   # lane-aligned halo
    padded = DHW + 2 * halo

    # Activation: bf16, channel-padded, flat DHW with a zero halo on each side.
    # The halo keeps every in-kernel shifted tap read in-bounds; the masks make
    # the boundary values correct (zero padding).
    xg = x.astype(jnp.bfloat16).reshape(N, Cin, DHW)
    xg = jnp.pad(xg, ((0, 0), (0, cin_pad - Cin), (halo, halo)))

    w1t = _expand_grouped_weights(w1, groups, Cin, cmid_pad, cin_pad)
    w2t = _expand_grouped_weights(w2, groups, Cmid, cout_pad, cmid_pad)
    masks = jnp.asarray(masks_np)

    kernel = functools.partial(
        _encode_unit_kernel, shifts=shifts, halo=halo, dhw=DHW,
        neg_slope=neg_slope, eps=eps)

    out = pl.pallas_call(
        kernel,
        out_shape=jax.ShapeDtypeStruct((N, cout_pad, DHW), jnp.float32),
        grid_spec=pltpu.PrefetchScalarGridSpec(
            num_scalar_prefetch=0,
            grid=(N,),
            in_specs=[
                # activation: one batch element per step (batch dim squeezed)
                pl.BlockSpec((None, cin_pad, padded), lambda n: (n, 0, 0)),
                # masks / weights: constant block index -> fetched once, VMEM-resident
                pl.BlockSpec((27, 1, DHW), lambda n: (0, 0, 0)),
                pl.BlockSpec((27, cmid_pad, cin_pad), lambda n: (0, 0, 0)),
                pl.BlockSpec((27, cout_pad, cmid_pad), lambda n: (0, 0, 0)),
            ],
            out_specs=pl.BlockSpec((None, cout_pad, DHW), lambda n: (n, 0, 0)),
            scratch_shapes=[pltpu.VMEM((cmid_pad, padded), jnp.bfloat16)],
        ),
        compiler_params=pltpu.CompilerParams(
            dimension_semantics=("parallel",),
            # Tiny usage here; headroom for larger DHW blocks on v5e/v6e while
            # staying under v7x's 64 MiB physical VMEM.
            vmem_limit_bytes=48 * 1024 * 1024),
    )(xg, masks, w1t, w2t)

    out = out[:, :Cout, :]          # drop channel padding rows (no-op here)
    return out.reshape(N, Cout, D, H, W)


# ---------------- pure-JAX reference (for correctness check) ----------------
def _ref_layer(x, w, b, groups):
    y = jax.lax.conv_general_dilated(
        x, w, window_strides=(1, 1, 1), padding="SAME",
        dimension_numbers=("NCDHW", "OIDHW", "NCDHW"),
        feature_group_count=groups)
    y = y + b[None, :, None, None, None]
    mean = y.mean(axis=(2, 3, 4), keepdims=True)
    var = ((y - mean) ** 2).mean(axis=(2, 3, 4), keepdims=True)
    y = (y - mean) / jnp.sqrt(var + 1e-5)
    return jnp.where(y > 0, y, 0.01 * y)


def encode_conv_unit_ref(x, params, groups):
    (w1, b1), (w2, b2) = params
    return _ref_layer(_ref_layer(x, w1, b1, groups), w2, b2, groups)


# ---------------- deterministic parameter init ----------------
def init_params(key, channels, groups):
    in_, mid_, out_ = channels

    def conv_init(key, cout, cin_pg):
        kw, kb = jax.random.split(key)
        fan_in = cin_pg * 27
        bound = 1.0 / np.sqrt(fan_in)
        w = jax.random.uniform(kw, (cout, cin_pg, 3, 3, 3),
                               jnp.float32, -bound, bound)
        b = jax.random.uniform(kb, (cout,), jnp.float32, -bound, bound)
        return w, b

    k1, k2 = jax.random.split(key)
    p1 = conv_init(k1, mid_, in_ // groups)
    p2 = conv_init(k2, out_, mid_ // groups)
    return (p1, p2)


if __name__ == "__main__":
    key = jax.random.PRNGKey(0)
    N, D, H, W = 2, 8, 8, 8
    channels = (4, 8, 8)          # (in_, mid_, out_); out_ != 320 -> groups = 4
    groups = 1 if channels[2] == 320 else 4

    kx, kp = jax.random.split(key)
    x = jax.random.normal(kx, (N, channels[0], D, H, W), jnp.float32)
    params = init_params(kp, channels, groups)

    y = encode_conv_unit(x, params, groups)
    y = jax.block_until_ready(y)

    y_ref = encode_conv_unit_ref(x, params, groups)
    # bf16 matmul operands (f32 accumulation) -> loosened vs-f32 tolerance.
    np.testing.assert_allclose(np.asarray(y), np.asarray(y_ref),
                               atol=3e-2, rtol=3e-2)

    print("KERNEL_OK")
</pallas_src>

<mosaic_0001>
module attributes {stable_mosaic.version = 11 : i64} {
  func.func @_encode_unit_kernel(%arg0: i32, %arg1: memref<1x8x768xbf16, #tpu.memory_space<vmem>>, %arg2: memref<27x1x512xf32, #tpu.memory_space<vmem>>, %arg3: memref<27x8x8xbf16, #tpu.memory_space<vmem>>, %arg4: memref<27x8x8xbf16, #tpu.memory_space<vmem>>, %arg5: memref<1x8x512xf32, #tpu.memory_space<vmem>>, %arg6: memref<8x768xbf16, #tpu.memory_space<vmem>>) attributes {dimension_semantics = [#tpu.dimension_semantics<parallel>], iteration_bounds = array<i64: 2>, scalar_prefetch = 0 : i64, scratch_operands = 1 : i64, tpu.core_type = #tpu.core_type<tc>, window_params = [{transform_indices = @transform_0, window_bounds = array<i64: 1, 8, 768>}, {pipeline_mode = #tpu.pipeline_mode<synchronous>, transform_indices = @transform_1, window_bounds = array<i64: 27, 1, 512>}, {pipeline_mode = #tpu.pipeline_mode<synchronous>, transform_indices = @transform_2, window_bounds = array<i64: 27, 8, 8>}, {pipeline_mode = #tpu.pipeline_mode<synchronous>, transform_indices = @transform_3, window_bounds = array<i64: 27, 8, 8>}, {transform_indices = @transform_4, window_bounds = array<i64: 1, 8, 512>}]} {
    %cst = arith.constant 0.000000e+00 : f32
    %0 = vector.broadcast %cst : f32 to vector<8x512xf32>
    %c0 = arith.constant 0 : index
    %c0_0 = arith.constant 0 : index
    %c55 = arith.constant 55 : index
    %1 = vector.load %arg1[%c0, %c0_0, %c55] : memref<1x8x768xbf16, #tpu.memory_space<vmem>>, vector<1x8x512xbf16>
    %2 = vector.shape_cast %1 : vector<1x8x512xbf16> to vector<8x512xbf16>
    %c0_1 = arith.constant 0 : index
    %c0_2 = arith.constant 0 : index
    %c0_3 = arith.constant 0 : index
    %3 = vector.load %arg2[%c0_1, %c0_2, %c0_3] : memref<27x1x512xf32, #tpu.memory_space<vmem>>, vector<1x1x512xf32>
    %4 = vector.shape_cast %3 : vector<1x1x512xf32> to vector<1x512xf32>
    %cst_4 = arith.constant 5.000000e-01 : f32
    %5 = vector.broadcast %cst_4 : f32 to vector<1x512xf32>
    %6 = arith.cmpf ogt, %4, %5 : vector<1x512xf32>
    %cst_5 = arith.constant 0.000000e+00 : bf16
    %7 = vector.broadcast %cst_5 : bf16 to vector<8x512xbf16>
    %8 = vector.shape_cast %6 : vector<1x512xi1> to vector<1x512xi1>
    %9 = vector.broadcast %8 : vector<1x512xi1> to vector<8x512xi1>
    %10 = arith.select %9, %2, %7 : vector<8x512xi1>, vector<8x512xbf16>
    %c0_6 = arith.constant 0 : index
    %c0_7 = arith.constant 0 : index
    %c0_8 = arith.constant 0 : index
    %11 = vector.load %arg3[%c0_6, %c0_7, %c0_8] : memref<27x8x8xbf16, #tpu.memory_space<vmem>>, vector<1x8x8xbf16>
    %12 = vector.shape_cast %11 : vector<1x8x8xbf16> to vector<8x8xbf16>
    %cst_9 = arith.constant dense<0.000000e+00> : vector<8x512xf32>
    %13 = tpu.matmul %12, %10, %cst_9 {dimension_numbers = #tpu.dot_dimension_numbers<[1], [0], [0], [1], [0, 0, 1, 1], [], []>} : vector<8x8xbf16>, vector<8x512xbf16>, vector<8x512xf32> -> vector<8x512xf32>
    %14 = arith.addf %0, %13 : vector<8x512xf32>
    %c0_10 = arith.constant 0 : index
    %c0_11 = arith.constant 0 : index
    %c56 = arith.constant 56 : index
    %15 = vector.load %arg1[%c0_10, %c0_11, %c56] : memref<1x8x768xbf16, #tpu.memory_space<vmem>>, vector<1x8x512xbf16>
    %16 = vector.shape_cast %15 : vector<1x8x512xbf16> to vector<8x512xbf16>
    %c1 = arith.constant 1 : index
    %c0_12 = arith.constant 0 : index
    %c0_13 = arith.constant 0 : index
    %17 = vector.load %arg2[%c1, %c0_12, %c0_13] : memref<27x1x512xf32, #tpu.memory_space<vmem>>, vector<1x1x512xf32>
    %18 = vector.shape_cast %17 : vector<1x1x512xf32> to vector<1x512xf32>
    %cst_14 = arith.constant 5.000000e-01 : f32
    %19 = vector.broadcast %cst_14 : f32 to vector<1x512xf32>
    %20 = arith.cmpf ogt, %18, %19 : vector<1x512xf32>
    %cst_15 = arith.constant 0.000000e+00 : bf16
    %21 = vector.broadcast %cst_15 : bf16 to vector<8x512xbf16>
    %22 = vector.shape_cast %20 : vector<1x512xi1> to vector<1x512xi1>
    %23 = vector.broadcast %22 : vector<1x512xi1> to vector<8x512xi1>
    %24 = arith.select %23, %16, %21 : vector<8x512xi1>, vector<8x512xbf16>
    %c1_16 = arith.constant 1 : index
    %c0_17 = arith.constant 0 : index
    %c0_18 = arith.constant 0 : index
    %25 = vector.load %arg3[%c1_16, %c0_17, %c0_18] : memref<27x8x8xbf16, #tpu.memory_space<vmem>>, vector<1x8x8xbf16>
    %26 = vector.shape_cast %25 : vector<1x8x8xbf16> to vector<8x8xbf16>
    %cst_19 = arith.constant dense<0.000000e+00> : vector<8x512xf32>
    %27 = tpu.matmul %26, %24, %cst_19 {dimension_numbers = #tpu.dot_dimension_numbers<[1], [0], [0], [1], [0, 0, 1, 1], [], []>} : vector<8x8xbf16>, vector<8x512xbf16>, vector<8x512xf32> -> vector<8x512xf32>
    %28 = arith.addf %14, %27 : vector<8x512xf32>
    %c0_20 = arith.constant 0 : index
    %c0_21 = arith.constant 0 : index
    %c57 = arith.constant 57 : index
    %29 = vector.load %arg1[%c0_20, %c0_21, %c57] : memref<1x8x768xbf16, #tpu.memory_space<vmem>>, vector<1x8x512xbf16>
    %30 = vector.shape_cast %29 : vector<1x8x512xbf16> to vector<8x512xbf16>
    %c2 = arith.constant 2 : index
    %c0_22 = arith.constant 0 : index
    %c0_23 = arith.constant 0 : index
    %31 = vector.load %arg2[%c2, %c0_22, %c0_23] : memref<27x1x512xf32, #tpu.memory_space<vmem>>, vector<1x1x512xf32>
    %32 = vector.shape_cast %31 : vector<1x1x512xf32> to vector<1x512xf32>
    %cst_24 = arith.constant 5.000000e-01 : f32
    %33 = vector.broadcast %cst_24 : f32 to vector<1x512xf32>
    %34 = arith.cmpf ogt, %32, %33 : vector<1x512xf32>
    %cst_25 = arith.constant 0.000000e+00 : bf16
    %35 = vector.broadcast %cst_25 : bf16 to vector<8x512xbf16>
    %36 = vector.shape_cast %34 : vector<1x512xi1> to vector<1x512xi1>
    %37 = vector.broadcast %36 : vector<1x512xi1> to vector<8x512xi1>
    %38 = arith.select %37, %30, %35 : vector<8x512xi1>, vector<8x512xbf16>
    %c2_26 = arith.constant 2 : index
    %c0_27 = arith.constant 0 : index
    %c0_28 = arith.constant 0 : index
    %39 = vector.load %arg3[%c2_26, %c0_27, %c0_28] : memref<27x8x8xbf16, #tpu.memory_space<vmem>>, vector<1x8x8xbf16>
    %40 = vector.shape_cast %39 : vector<1x8x8xbf16> to vector<8x8xbf16>
    %cst_29 = arith.constant dense<0.000000e+00> : vector<8x512xf32>
    %41 = tpu.matmul %40, %38, %cst_29 {dimension_numbers = #tpu.dot_dimension_numbers<[1], [0], [0], [1], [0, 0, 1, 1], [], []>} : vector<8x8xbf16>, vector<8x512xbf16>, vector<8x512xf32> -> vector<8x512xf32>
    %42 = arith.addf %28, %41 : vector<8x512xf32>
    %c0_30 = arith.constant 0 : index
    %c0_31 = arith.constant 0 : index
    %c63 = arith.constant 63 : index
    %43 = vector.load %arg1[%c0_30, %c0_31, %c63] : memref<1x8x768xbf16, #tpu.memory_space<vmem>>, vector<1x8x512xbf16>
    %44 = vector.shape_cast %43 : vector<1x8x512xbf16> to vector<8x512xbf16>
    %c3 = arith.constant 3 : index
    %c0_32 = arith.constant 0 : index
    %c0_33 = arith.constant 0 : index
    %45 = vector.load %arg2[%c3, %c0_32, %c0_33] : memref<27x1x512xf32, #tpu.memory_space<vmem>>, vector<1x1x512xf32>
    %46 = vector.shape_cast %45 : vector<1x1x512xf32> to vector<1x512xf32>
    %cst_34 = arith.constant 5.000000e-01 : f32
    %47 = vector.broadcast %cst_34 : f32 to vector<1x512xf32>
    %48 = arith.cmpf ogt, %46, %47 : vector<1x512xf32>
    %cst_35 = arith.constant 0.000000e+00 : bf16
    %49 = vector.broadcast %cst_35 : bf16 to vector<8x512xbf16>
    %50 = vector.shape_cast %48 : vector<1x512xi1> to vector<1x512xi1>
    %51 = vector.broadcast %50 : vector<1x512xi1> to vector<8x512xi1>
    %52 = arith.select %51, %44, %49 : vector<8x512xi1>, vector<8x512xbf16>
    %c3_36 = arith.constant 3 : index
    %c0_37 = arith.constant 0 : index
    %c0_38 = arith.constant 0 : index
    %53 = vector.load %arg3[%c3_36, %c0_37, %c0_38] : memref<27x8x8xbf16, #tpu.memory_space<vmem>>, vector<1x8x8xbf16>
    %54 = vector.shape_cast %53 : vector<1x8x8xbf16> to vector<8x8xbf16>
    %cst_39 = arith.constant dense<0.000000e+00> : vector<8x512xf32>
    %55 = tpu.matmul %54, %52, %cst_39 {dimension_numbers = #tpu.dot_dimension_numbers<[1], [0], [0], [1], [0, 0, 1, 1], [], []>} : vector<8x8xbf16>, vector<8x512xbf16>, vector<8x512xf32> -> vector<8x512xf32>
    %56 = arith.addf %42, %55 : vector<8x512xf32>
    %c0_40 = arith.constant 0 : index
    %c0_41 = arith.constant 0 : index
    %c64 = arith.constant 64 : index
    %57 = vector.load %arg1[%c0_40, %c0_41, %c64] : memref<1x8x768xbf16, #tpu.memory_space<vmem>>, vector<1x8x512xbf16>
    %58 = vector.shape_cast %57 : vector<1x8x512xbf16> to vector<8x512xbf16>
    %c4 = arith.constant 4 : index
    %c0_42 = arith.constant 0 : index
    %c0_43 = arith.constant 0 : index
    %59 = vector.load %arg2[%c4, %c0_42, %c0_43] : memref<27x1x512xf32, #tpu.memory_space<vmem>>, vector<1x1x512xf32>
    %60 = vector.shape_cast %59 : vector<1x1x512xf32> to vector<1x512xf32>
    %cst_44 = arith.constant 5.000000e-01 : f32
    %61 = vector.broadcast %cst_44 : f32 to vector<1x512xf32>
    %62 = arith.cmpf ogt, %60, %61 : vector<1x512xf32>
    %cst_45 = arith.constant 0.000000e+00 : bf16
    %63 = vector.broadcast %cst_45 : bf16 to vector<8x512xbf16>
    %64 = vector.shape_cast %62 : vector<1x512xi1> to vector<1x512xi1>
    %65 = vector.broadcast %64 : vector<1x512xi1> to vector<8x512xi1>
    %66 = arith.select %65, %58, %63 : vector<8x512xi1>, vector<8x512xbf16>
    %c4_46 = arith.constant 4 : index
    %c0_47 = arith.constant 0 : index
    %c0_48 = arith.constant 0 : index
    %67 = vector.load %arg3[%c4_46, %c0_47, %c0_48] : memref<27x8x8xbf16, #tpu.memory_space<vmem>>, vector<1x8x8xbf16>
    %68 = vector.shape_cast %67 : vector<1x8x8xbf16> to vector<8x8xbf16>
    %cst_49 = arith.constant dense<0.000000e+00> : vector<8x512xf32>
    %69 = tpu.matmul %68, %66, %cst_49 {dimension_numbers = #tpu.dot_dimension_numbers<[1], [0], [0], [1], [0, 0, 1, 1], [], []>} : vector<8x8xbf16>, vector<8x512xbf16>, vector<8x512xf32> -> vector<8x512xf32>
    %70 = arith.addf %56, %69 : vector<8x512xf32>
    %c0_50 = arith.constant 0 : index
    %c0_51 = arith.constant 0 : index
    %c65 = arith.constant 65 : index
    %71 = vector.load %arg1[%c0_50, %c0_51, %c65] : memref<1x8x768xbf16, #tpu.memory_space<vmem>>, vector<1x8x512xbf16>
    %72 = vector.shape_cast %71 : vector<1x8x512xbf16> to vector<8x512xbf16>
    %c5 = arith.constant 5 : index
    %c0_52 = arith.constant 0 : index
    %c0_53 = arith.constant 0 : index
    %73 = vector.load %arg2[%c5, %c0_52, %c0_53] : memref<27x1x512xf32, #tpu.memory_space<vmem>>, vector<1x1x512xf32>
    %74 = vector.shape_cast %73 : vector<1x1x512xf32> to vector<1x512xf32>
    %cst_54 = arith.constant 5.000000e-01 : f32
    %75 = vector.broadcast %cst_54 : f32 to vector<1x512xf32>
    %76 = arith.cmpf ogt, %74, %75 : vector<1x512xf32>
    %cst_55 = arith.constant 0.000000e+00 : bf16
    %77 = vector.broadcast %cst_55 : bf16 to vector<8x512xbf16>
    %78 = vector.shape_cast %76 : vector<1x512xi1> to vector<1x512xi1>
    %79 = vector.broadcast %78 : vector<1x512xi1> to vector<8x512xi1>
    %80 = arith.select %79, %72, %77 : vector<8x512xi1>, vector<8x512xbf16>
    %c5_56 = arith.constant 5 : index
    %c0_57 = arith.constant 0 : index
    %c0_58 = arith.constant 0 : index
    %81 = vector.load %arg3[%c5_56, %c0_57, %c0_58] : memref<27x8x8xbf16, #tpu.memory_space<vmem>>, vector<1x8x8xbf16>
    %82 = vector.shape_cast %81 : vector<1x8x8xbf16> to vector<8x8xbf16>
    %cst_59 = arith.constant dense<0.000000e+00> : vector<8x512xf32>
    %83 = tpu.matmul %82, %80, %cst_59 {dimension_numbers = #tpu.dot_dimension_numbers<[1], [0], [0], [1], [0, 0, 1, 1], [], []>} : vector<8x8xbf16>, vector<8x512xbf16>, vector<8x512xf32> -> vector<8x512xf32>
    %84 = arith.addf %70, %83 : vector<8x512xf32>
    %c0_60 = arith.constant 0 : index
    %c0_61 = arith.constant 0 : index
    %c71 = arith.constant 71 : index
    %85 = vector.load %arg1[%c0_60, %c0_61, %c71] : memref<1x8x768xbf16, #tpu.memory_space<vmem>>, vector<1x8x512xbf16>
    %86 = vector.shape_cast %85 : vector<1x8x512xbf16> to vector<8x512xbf16>
    %c6 = arith.constant 6 : index
    %c0_62 = arith.constant 0 : index
    %c0_63 = arith.constant 0 : index
    %87 = vector.load %arg2[%c6, %c0_62, %c0_63] : memref<27x1x512xf32, #tpu.memory_space<vmem>>, vector<1x1x512xf32>
    %88 = vector.shape_cast %87 : vector<1x1x512xf32> to vector<1x512xf32>
    %cst_64 = arith.constant 5.000000e-01 : f32
    %89 = vector.broadcast %cst_64 : f32 to vector<1x512xf32>
    %90 = arith.cmpf ogt, %88, %89 : vector<1x512xf32>
    %cst_65 = arith.constant 0.000000e+00 : bf16
    %91 = vector.broadcast %cst_65 : bf16 to vector<8x512xbf16>
    %92 = vector.shape_cast %90 : vector<1x512xi1> to vector<1x512xi1>
    %93 = vector.broadcast %92 : vector<1x512xi1> to vector<8x512xi1>
    %94 = arith.select %93, %86, %91 : vector<8x512xi1>, vector<8x512xbf16>
    %c6_66 = arith.constant 6 : index
    %c0_67 = arith.constant 0 : index
    %c0_68 = arith.constant 0 : index
    %95 = vector.load %arg3[%c6_66, %c0_67, %c0_68] : memref<27x8x8xbf16, #tpu.memory_space<vmem>>, vector<1x8x8xbf16>
    %96 = vector.shape_cast %95 : vector<1x8x8xbf16> to vector<8x8xbf16>
    %cst_69 = arith.constant dense<0.000000e+00> : vector<8x512xf32>
    %97 = tpu.matmul %96, %94, %cst_69 {dimension_numbers = #tpu.dot_dimension_numbers<[1], [0], [0], [1], [0, 0, 1, 1], [], []>} : vector<8x8xbf16>, vector<8x512xbf16>, vector<8x512xf32> -> vector<8x512xf32>
    %98 = arith.addf %84, %97 : vector<8x512xf32>
    %c0_70 = arith.constant 0 : index
    %c0_71 = arith.constant 0 : index
    %c72 = arith.constant 72 : index
    %99 = vector.load %arg1[%c0_70, %c0_71, %c72] : memref<1x8x768xbf16, #tpu.memory_space<vmem>>, vector<1x8x512xbf16>
    %100 = vector.shape_cast %99 : vector<1x8x512xbf16> to vector<8x512xbf16>
    %c7 = arith.constant 7 : index
    %c0_72 = arith.constant 0 : index
    %c0_73 = arith.constant 0 : index
    %101 = vector.load %arg2[%c7, %c0_72, %c0_73] : memref<27x1x512xf32, #tpu.memory_space<vmem>>, vector<1x1x512xf32>
    %102 = vector.shape_cast %101 : vector<1x1x512xf32> to vector<1x512xf32>
    %cst_74 = arith.constant 5.000000e-01 : f32
    %103 = vector.broadcast %cst_74 : f32 to vector<1x512xf32>
    %104 = arith.cmpf ogt, %102, %103 : vector<1x512xf32>
    %cst_75 = arith.constant 0.000000e+00 : bf16
    %105 = vector.broadcast %cst_75 : bf16 to vector<8x512xbf16>
    %106 = vector.shape_cast %104 : vector<1x512xi1> to vector<1x512xi1>
    %107 = vector.broadcast %106 : vector<1x512xi1> to vector<8x512xi1>
    %108 = arith.select %107, %100, %105 : vector<8x512xi1>, vector<8x512xbf16>
    %c7_76 = arith.constant 7 : index
    %c0_77 = arith.constant 0 : index
    %c0_78 = arith.constant 0 : index
    %109 = vector.load %arg3[%c7_76, %c0_77, %c0_78] : memref<27x8x8xbf16, #tpu.memory_space<vmem>>, vector<1x8x8xbf16>
    %110 = vector.shape_cast %109 : vector<1x8x8xbf16> to vector<8x8xbf16>
    %cst_79 = arith.constant dense<0.000000e+00> : vector<8x512xf32>
    %111 = tpu.matmul %110, %108, %cst_79 {dimension_numbers = #tpu.dot_dimension_numbers<[1], [0], [0], [1], [0, 0, 1, 1], [], []>} : vector<8x8xbf16>, vector<8x512xbf16>, vector<8x512xf32> -> vector<8x512xf32>
    %112 = arith.addf %98, %111 : vector<8x512xf32>
    %c0_80 = arith.constant 0 : index
    %c0_81 = arith.constant 0 : index
    %c73 = arith.constant 73 : index
    %113 = vector.load %arg1[%c0_80, %c0_81, %c73] : memref<1x8x768xbf16, #tpu.memory_space<vmem>>, vector<1x8x512xbf16>
    %114 = vector.shape_cast %113 : vector<1x8x512xbf16> to vector<8x512xbf16>
    %c8 = arith.constant 8 : index
    %c0_82 = arith.constant 0 : index
    %c0_83 = arith.constant 0 : index
    %115 = vector.load %arg2[%c8, %c0_82, %c0_83] : memref<27x1x512xf32, #tpu.memory_space<vmem>>, vector<1x1x512xf32>
    %116 = vector.shape_cast %115 : vector<1x1x512xf32> to vector<1x512xf32>
    %cst_84 = arith.constant 5.000000e-01 : f32
    %117 = vector.broadcast %cst_84 : f32 to vector<1x512xf32>
    %118 = arith.cmpf ogt, %116, %117 : vector<1x512xf32>
    %cst_85 = arith.constant 0.000000e+00 : bf16
    %119 = vector.broadcast %cst_85 : bf16 to vector<8x512xbf16>
    %120 = vector.shape_cast %118 : vector<1x512xi1> to vector<1x512xi1>
    %121 = vector.broadcast %120 : vector<1x512xi1> to vector<8x512xi1>
    %122 = arith.select %121, %114, %119 : vector<8x512xi1>, vector<8x512xbf16>
    %c8_86 = arith.constant 8 : index
    %c0_87 = arith.constant 0 : index
    %c0_88 = arith.constant 0 : index
    %123 = vector.load %arg3[%c8_86, %c0_87, %c0_88] : memref<27x8x8xbf16, #tpu.memory_space<vmem>>, vector<1x8x8xbf16>
    %124 = vector.shape_cast %123 : vector<1x8x8xbf16> to vector<8x8xbf16>
    %cst_89 = arith.constant dense<0.000000e+00> : vector<8x512xf32>
    %125 = tpu.matmul %124, %122, %cst_89 {dimension_numbers = #tpu.dot_dimension_numbers<[1], [0], [0], [1], [0, 0, 1, 1], [], []>} : vector<8x8xbf16>, vector<8x512xbf16>, vector<8x512xf32> -> vector<8x512xf32>
    %126 = arith.addf %112, %125 : vector<8x512xf32>
    %c0_90 = arith.constant 0 : index
    %c0_91 = arith.constant 0 : index
    %c119 = arith.constant 119 : index
    %127 = vector.load %arg1[%c0_90, %c0_91, %c119] : memref<1x8x768xbf16, #tpu.memory_space<vmem>>, vector<1x8x512xbf16>
    %128 = vector.shape_cast %127 : vector<1x8x512xbf16> to vector<8x512xbf16>
    %c9 = arith.constant 9 : index
    %c0_92 = arith.constant 0 : index
    %c0_93 = arith.constant 0 : index
    %129 = vector.load %arg2[%c9, %c0_92, %c0_93] : memref<27x1x512xf32, #tpu.memory_space<vmem>>, vector<1x1x512xf32>
    %130 = vector.shape_cast %129 : vector<1x1x512xf32> to vector<1x512xf32>
    %cst_94 = arith.constant 5.000000e-01 : f32
    %131 = vector.broadcast %cst_94 : f32 to vector<1x512xf32>
    %132 = arith.cmpf ogt, %130, %131 : vector<1x512xf32>
    %cst_95 = arith.constant 0.000000e+00 : bf16
    %133 = vector.broadcast %cst_95 : bf16 to vector<8x512xbf16>
    %134 = vector.shape_cast %132 : vector<1x512xi1> to vector<1x512xi1>
    %135 = vector.broadcast %134 : vector<1x512xi1> to vector<8x512xi1>
    %136 = arith.select %135, %128, %133 : vector<8x512xi1>, vector<8x512xbf16>
    %c9_96 = arith.constant 9 : index
    %c0_97 = arith.constant 0 : index
    %c0_98 = arith.constant 0 : index
    %137 = vector.load %arg3[%c9_96, %c0_97, %c0_98] : memref<27x8x8xbf16, #tpu.memory_space<vmem>>, vector<1x8x8xbf16>
    %138 = vector.shape_cast %137 : vector<1x8x8xbf16> to vector<8x8xbf16>
    %cst_99 = arith.constant dense<0.000000e+00> : vector<8x512xf32>
    %139 = tpu.matmul %138, %136, %cst_99 {dimension_numbers = #tpu.dot_dimension_numbers<[1], [0], [0], [1], [0, 0, 1, 1], [], []>} : vector<8x8xbf16>, vector<8x512xbf16>, vector<8x512xf32> -> vector<8x512xf32>
    %140 = arith.addf %126, %139 : vector<8x512xf32>
    %c0_100 = arith.constant 0 : index
    %c0_101 = arith.constant 0 : index
    %c120 = arith.constant 120 : index
    %141 = vector.load %arg1[%c0_100, %c0_101, %c120] : memref<1x8x768xbf16, #tpu.memory_space<vmem>>, vector<1x8x512xbf16>
    %142 = vector.shape_cast %141 : vector<1x8x512xbf16> to vector<8x512xbf16>
    %c10 = arith.constant 10 : index
    %c0_102 = arith.constant 0 : index
    %c0_103 = arith.constant 0 : index
    %143 = vector.load %arg2[%c10, %c0_102, %c0_103] : memref<27x1x512xf32, #tpu.memory_space<vmem>>, vector<1x1x512xf32>
    %144 = vector.shape_cast %143 : vector<1x1x512xf32> to vector<1x512xf32>
    %cst_104 = arith.constant 5.000000e-01 : f32
    %145 = vector.broadcast %cst_104 : f32 to vector<1x512xf32>
    %146 = arith.cmpf ogt, %144, %145 : vector<1x512xf32>
    %cst_105 = arith.constant 0.000000e+00 : bf16
    %147 = vector.broadcast %cst_105 : bf16 to vector<8x512xbf16>
    %148 = vector.shape_cast %146 : vector<1x512xi1> to vector<1x512xi1>
    %149 = vector.broadcast %148 : vector<1x512xi1> to vector<8x512xi1>
    %150 = arith.select %149, %142, %147 : vector<8x512xi1>, vector<8x512xbf16>
    %c10_106 = arith.constant 10 : index
    %c0_107 = arith.constant 0 : index
    %c0_108 = arith.constant 0 : index
    %151 = vector.load %arg3[%c10_106, %c0_107, %c0_108] : memref<27x8x8xbf16, #tpu.memory_space<vmem>>, vector<1x8x8xbf16>
    %152 = vector.shape_cast %151 : vector<1x8x8xbf16> to vector<8x8xbf16>
    %cst_109 = arith.constant dense<0.000000e+00> : vector<8x512xf32>
    %153 = tpu.matmul %152, %150, %cst_109 {dimension_numbers = #tpu.dot_dimension_numbers<[1], [0], [0], [1], [0, 0, 1, 1], [], []>} : vector<8x8xbf16>, vector<8x512xbf16>, vector<8x512xf32> -> vector<8x512xf32>
    %154 = arith.addf %140, %153 : vector<8x512xf32>
    %c0_110 = arith.constant 0 : index
    %c0_111 = arith.constant 0 : index
    %c121 = arith.constant 121 : index
    %155 = vector.load %arg1[%c0_110, %c0_111, %c121] : memref<1x8x768xbf16, #tpu.memory_space<vmem>>, vector<1x8x512xbf16>
    %156 = vector.shape_cast %155 : vector<1x8x512xbf16> to vector<8x512xbf16>
    %c11 = arith.constant 11 : index
    %c0_112 = arith.constant 0 : index
    %c0_113 = arith.constant 0 : index
    %157 = vector.load %arg2[%c11, %c0_112, %c0_113] : memref<27x1x512xf32, #tpu.memory_space<vmem>>, vector<1x1x512xf32>
    %158 = vector.shape_cast %157 : vector<1x1x512xf32> to vector<1x512xf32>
    %cst_114 = arith.constant 5.000000e-01 : f32
    %159 = vector.broadcast %cst_114 : f32 to vector<1x512xf32>
    %160 = arith.cmpf ogt, %158, %159 : vector<1x512xf32>
    %cst_115 = arith.constant 0.000000e+00 : bf16
    %161 = vector.broadcast %cst_115 : bf16 to vector<8x512xbf16>
    %162 = vector.shape_cast %160 : vector<1x512xi1> to vector<1x512xi1>
    %163 = vector.broadcast %162 : vector<1x512xi1> to vector<8x512xi1>
    %164 = arith.select %163, %156, %161 : vector<8x512xi1>, vector<8x512xbf16>
    %c11_116 = arith.constant 11 : index
    %c0_117 = arith.constant 0 : index
    %c0_118 = arith.constant 0 : index
    %165 = vector.load %arg3[%c11_116, %c0_117, %c0_118] : memref<27x8x8xbf16, #tpu.memory_space<vmem>>, vector<1x8x8xbf16>
    %166 = vector.shape_cast %165 : vector<1x8x8xbf16> to vector<8x8xbf16>
    %cst_119 = arith.constant dense<0.000000e+00> : vector<8x512xf32>
    %167 = tpu.matmul %166, %164, %cst_119 {dimension_numbers = #tpu.dot_dimension_numbers<[1], [0], [0], [1], [0, 0, 1, 1], [], []>} : vector<8x8xbf16>, vector<8x512xbf16>, vector<8x512xf32> -> vector<8x512xf32>
    %168 = arith.addf %154, %167 : vector<8x512xf32>
    %c0_120 = arith.constant 0 : index
    %c0_121 = arith.constant 0 : index
    %c127 = arith.constant 127 : index
    %169 = vector.load %arg1[%c0_120, %c0_121, %c127] : memref<1x8x768xbf16, #tpu.memory_space<vmem>>, vector<1x8x512xbf16>
    %170 = vector.shape_cast %169 : vector<1x8x512xbf16> to vector<8x512xbf16>
    %c12 = arith.constant 12 : index
    %c0_122 = arith.constant 0 : index
    %c0_123 = arith.constant 0 : index
    %171 = vector.load %arg2[%c12, %c0_122, %c0_123] : memref<27x1x512xf32, #tpu.memory_space<vmem>>, vector<1x1x512xf32>
    %172 = vector.shape_cast %171 : vector<1x1x512xf32> to vector<1x512xf32>
    %cst_124 = arith.constant 5.000000e-01 : f32
    %173 = vector.broadcast %cst_124 : f32 to vector<1x512xf32>
    %174 = arith.cmpf ogt, %172, %173 : vector<1x512xf32>
    %cst_125 = arith.constant 0.000000e+00 : bf16
    %175 = vector.broadcast %cst_125 : bf16 to vector<8x512xbf16>
    %176 = vector.shape_cast %174 : vector<1x512xi1> to vector<1x512xi1>
    %177 = vector.broadcast %176 : vector<1x512xi1> to vector<8x512xi1>
    %178 = arith.select %177, %170, %175 : vector<8x512xi1>, vector<8x512xbf16>
    %c12_126 = arith.constant 12 : index
    %c0_127 = arith.constant 0 : index
    %c0_128 = arith.constant 0 : index
    %179 = vector.load %arg3[%c12_126, %c0_127, %c0_128] : memref<27x8x8xbf16, #tpu.memory_space<vmem>>, vector<1x8x8xbf16>
    %180 = vector.shape_cast %179 : vector<1x8x8xbf16> to vector<8x8xbf16>
    %cst_129 = arith.constant dense<0.000000e+00> : vector<8x512xf32>
    %181 = tpu.matmul %180, %178, %cst_129 {dimension_numbers = #tpu.dot_dimension_numbers<[1], [0], [0], [1], [0, 0, 1, 1], [], []>} : vector<8x8xbf16>, vector<8x512xbf16>, vector<8x512xf32> -> vector<8x512xf32>
    %182 = arith.addf %168, %181 : vector<8x512xf32>
    %c0_130 = arith.constant 0 : index
    %c0_131 = arith.constant 0 : index
    %c128 = arith.constant 128 : index
    %183 = vector.load %arg1[%c0_130, %c0_131, %c128] : memref<1x8x768xbf16, #tpu.memory_space<vmem>>, vector<1x8x512xbf16>
    %184 = vector.shape_cast %183 : vector<1x8x512xbf16> to vector<8x512xbf16>
    %c13 = arith.constant 13 : index
    %c0_132 = arith.constant 0 : index
    %c0_133 = arith.constant 0 : index
    %185 = vector.load %arg2[%c13, %c0_132, %c0_133] : memref<27x1x512xf32, #tpu.memory_space<vmem>>, vector<1x1x512xf32>
    %186 = vector.shape_cast %185 : vector<1x1x512xf32> to vector<1x512xf32>
    %cst_134 = arith.constant 5.000000e-01 : f32
    %187 = vector.broadcast %cst_134 : f32 to vector<1x512xf32>
    %188 = arith.cmpf ogt, %186, %187 : vector<1x512xf32>
    %cst_135 = arith.constant 0.000000e+00 : bf16
    %189 = vector.broadcast %cst_135 : bf16 to vector<8x512xbf16>
    %190 = vector.shape_cast %188 : vector<1x512xi1> to vector<1x512xi1>
    %191 = vector.broadcast %190 : vector<1x512xi1> to vector<8x512xi1>
    %192 = arith.select %191, %184, %189 : vector<8x512xi1>, vector<8x512xbf16>
    %c13_136 = arith.constant 13 : index
    %c0_137 = arith.constant 0 : index
    %c0_138 = arith.constant 0 : index
    %193 = vector.load %arg3[%c13_136, %c0_137, %c0_138] : memref<27x8x8xbf16, #tpu.memory_space<vmem>>, vector<1x8x8xbf16>
    %194 = vector.shape_cast %193 : vector<1x8x8xbf16> to vector<8x8xbf16>
    %cst_139 = arith.constant dense<0.000000e+00> : vector<8x512xf32>
    %195 = tpu.matmul %194, %192, %cst_139 {dimension_numbers = #tpu.dot_dimension_numbers<[1], [0], [0], [1], [0, 0, 1, 1], [], []>} : vector<8x8xbf16>, vector<8x512xbf16>, vector<8x512xf32> -> vector<8x512xf32>
    %196 = arith.addf %182, %195 : vector<8x512xf32>
    %c0_140 = arith.constant 0 : index
    %c0_141 = arith.constant 0 : index
    %c129 = arith.constant 129 : index
    %197 = vector.load %arg1[%c0_140, %c0_141, %c129] : memref<1x8x768xbf16, #tpu.memory_space<vmem>>, vector<1x8x512xbf16>
    %198 = vector.shape_cast %197 : vector<1x8x512xbf16> to vector<8x512xbf16>
    %c14 = arith.constant 14 : index
    %c0_142 = arith.constant 0 : index
    %c0_143 = arith.constant 0 : index
    %199 = vector.load %arg2[%c14, %c0_142, %c0_143] : memref<27x1x512xf32, #tpu.memory_space<vmem>>, vector<1x1x512xf32>
    %200 = vector.shape_cast %199 : vector<1x1x512xf32> to vector<1x512xf32>
    %cst_144 = arith.constant 5.000000e-01 : f32
    %201 = vector.broadcast %cst_144 : f32 to vector<1x512xf32>
    %202 = arith.cmpf ogt, %200, %201 : vector<1x512xf32>
    %cst_145 = arith.constant 0.000000e+00 : bf16
    %203 = vector.broadcast %cst_145 : bf16 to vector<8x512xbf16>
    %204 = vector.shape_cast %202 : vector<1x512xi1> to vector<1x512xi1>
    %205 = vector.broadcast %204 : vector<1x512xi1> to vector<8x512xi1>
    %206 = arith.select %205, %198, %203 : vector<8x512xi1>, vector<8x512xbf16>
    %c14_146 = arith.constant 14 : index
    %c0_147 = arith.constant 0 : index
    %c0_148 = arith.constant 0 : index
    %207 = vector.load %arg3[%c14_146, %c0_147, %c0_148] : memref<27x8x8xbf16, #tpu.memory_space<vmem>>, vector<1x8x8xbf16>
    %208 = vector.shape_cast %207 : vector<1x8x8xbf16> to vector<8x8xbf16>
    %cst_149 = arith.constant dense<0.000000e+00> : vector<8x512xf32>
    %209 = tpu.matmul %208, %206, %cst_149 {dimension_numbers = #tpu.dot_dimension_numbers<[1], [0], [0], [1], [0, 0, 1, 1], [], []>} : vector<8x8xbf16>, vector<8x512xbf16>, vector<8x512xf32> -> vector<8x512xf32>
    %210 = arith.addf %196, %209 : vector<8x512xf32>
    %c0_150 = arith.constant 0 : index
    %c0_151 = arith.constant 0 : index
    %c135 = arith.constant 135 : index
    %211 = vector.load %arg1[%c0_150, %c0_151, %c135] : memref<1x8x768xbf16, #tpu.memory_space<vmem>>, vector<1x8x512xbf16>
    %212 = vector.shape_cast %211 : vector<1x8x512xbf16> to vector<8x512xbf16>
    %c15 = arith.constant 15 : index
    %c0_152 = arith.constant 0 : index
    %c0_153 = arith.constant 0 : index
    %213 = vector.load %arg2[%c15, %c0_152, %c0_153] : memref<27x1x512xf32, #tpu.memory_space<vmem>>, vector<1x1x512xf32>
    %214 = vector.shape_cast %213 : vector<1x1x512xf32> to vector<1x512xf32>
    %cst_154 = arith.constant 5.000000e-01 : f32
    %215 = vector.broadcast %cst_154 : f32 to vector<1x512xf32>
    %216 = arith.cmpf ogt, %214, %215 : vector<1x512xf32>
    %cst_155 = arith.constant 0.000000e+00 : bf16
    %217 = vector.broadcast %cst_155 : bf16 to vector<8x512xbf16>
    %218 = vector.shape_cast %216 : vector<1x512xi1> to vector<1x512xi1>
    %219 = vector.broadcast %218 : vector<1x512xi1> to vector<8x512xi1>
    %220 = arith.select %219, %212, %217 : vector<8x512xi1>, vector<8x512xbf16>
    %c15_156 = arith.constant 15 : index
    %c0_157 = arith.constant 0 : index
    %c0_158 = arith.constant 0 : index
    %221 = vector.load %arg3[%c15_156, %c0_157, %c0_158] : memref<27x8x8xbf16, #tpu.memory_space<vmem>>, vector<1x8x8xbf16>
    %222 = vector.shape_cast %221 : vector<1x8x8xbf16> to vector<8x8xbf16>
    %cst_159 = arith.constant dense<0.000000e+00> : vector<8x512xf32>
    %223 = tpu.matmul %222, %220, %cst_159 {dimension_numbers = #tpu.dot_dimension_numbers<[1], [0], [0], [1], [0, 0, 1, 1], [], []>} : vector<8x8xbf16>, vector<8x512xbf16>, vector<8x512xf32> -> vector<8x512xf32>
    %224 = arith.addf %210, %223 : vector<8x512xf32>
    %c0_160 = arith.constant 0 : index
    %c0_161 = arith.constant 0 : index
    %c136 = arith.constant 136 : index
    %225 = vector.load %arg1[%c0_160, %c0_161, %c136] : memref<1x8x768xbf16, #tpu.memory_space<vmem>>, vector<1x8x512xbf16>
    %226 = vector.shape_cast %225 : vector<1x8x512xbf16> to vector<8x512xbf16>
    %c16 = arith.constant 16 : index
    %c0_162 = arith.constant 0 : index
    %c0_163 = arith.constant 0 : index
    %227 = vector.load %arg2[%c16, %c0_162, %c0_163] : memref<27x1x512xf32, #tpu.memory_space<vmem>>, vector<1x1x512xf32>
    %228 = vector.shape_cast %227 : vector<1x1x512xf32> to vector<1x512xf32>
    %cst_164 = arith.constant 5.000000e-01 : f32
    %229 = vector.broadcast %cst_164 : f32 to vector<1x512xf32>
    %230 = arith.cmpf ogt, %228, %229 : vector<1x512xf32>
    %cst_165 = arith.constant 0.000000e+00 : bf16
    %231 = vector.broadcast %cst_165 : bf16 to vector<8x512xbf16>
    %232 = vector.shape_cast %230 : vector<1x512xi1> to vector<1x512xi1>
    %233 = vector.broadcast %232 : vector<1x512xi1> to vector<8x512xi1>
    %234 = arith.select %233, %226, %231 : vector<8x512xi1>, vector<8x512xbf16>
    %c16_166 = arith.constant 16 : index
    %c0_167 = arith.constant 0 : index
    %c0_168 = arith.constant 0 : index
    %235 = vector.load %arg3[%c16_166, %c0_167, %c0_168] : memref<27x8x8xbf16, #tpu.memory_space<vmem>>, vector<1x8x8xbf16>
    %236 = vector.shape_cast %235 : vector<1x8x8xbf16> to vector<8x8xbf16>
    %cst_169 = arith.constant dense<0.000000e+00> : vector<8x512xf32>
    %237 = tpu.matmul %236, %234, %cst_169 {dimension_numbers = #tpu.dot_dimension_numbers<[1], [0], [0], [1], [0, 0, 1, 1], [], []>} : vector<8x8xbf16>, vector<8x512xbf16>, vector<8x512xf32> -> vector<8x512xf32>
    %238 = arith.addf %224, %237 : vector<8x512xf32>
    %c0_170 = arith.constant 0 : index
    %c0_171 = arith.constant 0 : index
    %c137 = arith.constant 137 : index
    %239 = vector.load %arg1[%c0_170, %c0_171, %c137] : memref<1x8x768xbf16, #tpu.memory_space<vmem>>, vector<1x8x512xbf16>
    %240 = vector.shape_cast %239 : vector<1x8x512xbf16> to vector<8x512xbf16>
    %c17 = arith.constant 17 : index
    %c0_172 = arith.constant 0 : index
    %c0_173 = arith.constant 0 : index
    %241 = vector.load %arg2[%c17, %c0_172, %c0_173] : memref<27x1x512xf32, #tpu.memory_space<vmem>>, vector<1x1x512xf32>
    %242 = vector.shape_cast %241 : vector<1x1x512xf32> to vector<1x512xf32>
    %cst_174 = arith.constant 5.000000e-01 : f32
    %243 = vector.broadcast %cst_174 : f32 to vector<1x512xf32>
    %244 = arith.cmpf ogt, %242, %243 : vector<1x512xf32>
    %cst_175 = arith.constant 0.000000e+00 : bf16
    %245 = vector.broadcast %cst_175 : bf16 to vector<8x512xbf16>
    %246 = vector.shape_cast %244 : vector<1x512xi1> to vector<1x512xi1>
    %247 = vector.broadcast %246 : vector<1x512xi1> to vector<8x512xi1>
    %248 = arith.select %247, %240, %245 : vector<8x512xi1>, vector<8x512xbf16>
    %c17_176 = arith.constant 17 : index
    %c0_177 = arith.constant 0 : index
    %c0_178 = arith.constant 0 : index
    %249 = vector.load %arg3[%c17_176, %c0_177, %c0_178] : memref<27x8x8xbf16, #tpu.memory_space<vmem>>, vector<1x8x8xbf16>
    %250 = vector.shape_cast %249 : vector<1x8x8xbf16> to vector<8x8xbf16>
    %cst_179 = arith.constant dense<0.000000e+00> : vector<8x512xf32>
    %251 = tpu.matmul %250, %248, %cst_179 {dimension_numbers = #tpu.dot_dimension_numbers<[1], [0], [0], [1], [0, 0, 1, 1], [], []>} : vector<8x8xbf16>, vector<8x512xbf16>, vector<8x512xf32> -> vector<8x512xf32>
    %252 = arith.addf %238, %251 : vector<8x512xf32>
    %c0_180 = arith.constant 0 : index
    %c0_181 = arith.constant 0 : index
    %c183 = arith.constant 183 : index
    %253 = vector.load %arg1[%c0_180, %c0_181, %c183] : memref<1x8x768xbf16, #tpu.memory_space<vmem>>, vector<1x8x512xbf16>
    %254 = vector.shape_cast %253 : vector<1x8x512xbf16> to vector<8x512xbf16>
    %c18 = arith.constant 18 : index
    %c0_182 = arith.constant 0 : index
    %c0_183 = arith.constant 0 : index
    %255 = vector.load %arg2[%c18, %c0_182, %c0_183] : memref<27x1x512xf32, #tpu.memory_space<vmem>>, vector<1x1x512xf32>
    %256 = vector.shape_cast %255 : vector<1x1x512xf32> to vector<1x512xf32>
    %cst_184 = arith.constant 5.000000e-01 : f32
    %257 = vector.broadcast %cst_184 : f32 to vector<1x512xf32>
    %258 = arith.cmpf ogt, %256, %257 : vector<1x512xf32>
    %cst_185 = arith.constant 0.000000e+00 : bf16
    %259 = vector.broadcast %cst_185 : bf16 to vector<8x512xbf16>
    %260 = vector.shape_cast %258 : vector<1x512xi1> to vector<1x512xi1>
    %261 = vector.broadcast %260 : vector<1x512xi1> to vector<8x512xi1>
    %262 = arith.select %261, %254, %259 : vector<8x512xi1>, vector<8x512xbf16>
    %c18_186 = arith.constant 18 : index
    %c0_187 = arith.constant 0 : index
    %c0_188 = arith.constant 0 : index
    %263 = vector.load %arg3[%c18_186, %c0_187, %c0_188] : memref<27x8x8xbf16, #tpu.memory_space<vmem>>, vector<1x8x8xbf16>
    %264 = vector.shape_cast %263 : vector<1x8x8xbf16> to vector<8x8xbf16>
    %cst_189 = arith.constant dense<0.000000e+00> : vector<8x512xf32>
    %265 = tpu.matmul %264, %262, %cst_189 {dimension_numbers = #tpu.dot_dimension_numbers<[1], [0], [0], [1], [0, 0, 1, 1], [], []>} : vector<8x8xbf16>, vector<8x512xbf16>, vector<8x512xf32> -> vector<8x512xf32>
    %266 = arith.addf %252, %265 : vector<8x512xf32>
    %c0_190 = arith.constant 0 : index
    %c0_191 = arith.constant 0 : index
    %c184 = arith.constant 184 : index
    %267 = vector.load %arg1[%c0_190, %c0_191, %c184] : memref<1x8x768xbf16, #tpu.memory_space<vmem>>, vector<1x8x512xbf16>
    %268 = vector.shape_cast %267 : vector<1x8x512xbf16> to vector<8x512xbf16>
    %c19 = arith.constant 19 : index
    %c0_192 = arith.constant 0 : index
    %c0_193 = arith.constant 0 : index
    %269 = vector.load %arg2[%c19, %c0_192, %c0_193] : memref<27x1x512xf32, #tpu.memory_space<vmem>>, vector<1x1x512xf32>
    %270 = vector.shape_cast %269 : vector<1x1x512xf32> to vector<1x512xf32>
    %cst_194 = arith.constant 5.000000e-01 : f32
    %271 = vector.broadcast %cst_194 : f32 to vector<1x512xf32>
    %272 = arith.cmpf ogt, %270, %271 : vector<1x512xf32>
    %cst_195 = arith.constant 0.000000e+00 : bf16
    %273 = vector.broadcast %cst_195 : bf16 to vector<8x512xbf16>
    %274 = vector.shape_cast %272 : vector<1x512xi1> to vector<1x512xi1>
    %275 = vector.broadcast %274 : vector<1x512xi1> to vector<8x512xi1>
    %276 = arith.select %275, %268, %273 : vector<8x512xi1>, vector<8x512xbf16>
    %c19_196 = arith.constant 19 : index
    %c0_197 = arith.constant 0 : index
    %c0_198 = arith.constant 0 : index
    %277 = vector.load %arg3[%c19_196, %c0_197, %c0_198] : memref<27x8x8xbf16, #tpu.memory_space<vmem>>, vector<1x8x8xbf16>
    %278 = vector.shape_cast %277 : vector<1x8x8xbf16> to vector<8x8xbf16>
    %cst_199 = arith.constant dense<0.000000e+00> : vector<8x512xf32>
    %279 = tpu.matmul %278, %276, %cst_199 {dimension_numbers = #tpu.dot_dimension_numbers<[1], [0], [0], [1], [0, 0, 1, 1], [], []>} : vector<8x8xbf16>, vector<8x512xbf16>, vector<8x512xf32> -> vector<8x512xf32>
    %280 = arith.addf %266, %279 : vector<8x512xf32>
    %c0_200 = arith.constant 0 : index
    %c0_201 = arith.constant 0 : index
    %c185 = arith.constant 185 : index
    %281 = vector.load %arg1[%c0_200, %c0_201, %c185] : memref<1x8x768xbf16, #tpu.memory_space<vmem>>, vector<1x8x512xbf16>
    %282 = vector.shape_cast %281 : vector<1x8x512xbf16> to vector<8x512xbf16>
    %c20 = arith.constant 20 : index
    %c0_202 = arith.constant 0 : index
    %c0_203 = arith.constant 0 : index
    %283 = vector.load %arg2[%c20, %c0_202, %c0_203] : memref<27x1x512xf32, #tpu.memory_space<vmem>>, vector<1x1x512xf32>
    %284 = vector.shape_cast %283 : vector<1x1x512xf32> to vector<1x512xf32>
    %cst_204 = arith.constant 5.000000e-01 : f32
    %285 = vector.broadcast %cst_204 : f32 to vector<1x512xf32>
    %286 = arith.cmpf ogt, %284, %285 : vector<1x512xf32>
    %cst_205 = arith.constant 0.000000e+00 : bf16
    %287 = vector.broadcast %cst_205 : bf16 to vector<8x512xbf16>
    %288 = vector.shape_cast %286 : vector<1x512xi1> to vector<1x512xi1>
    %289 = vector.broadcast %288 : vector<1x512xi1> to vector<8x512xi1>
    %290 = arith.select %289, %282, %287 : vector<8x512xi1>, vector<8x512xbf16>
    %c20_206 = arith.constant 20 : index
    %c0_207 = arith.constant 0 : index
    %c0_208 = arith.constant 0 : index
    %291 = vector.load %arg3[%c20_206, %c0_207, %c0_208] : memref<27x8x8xbf16, #tpu.memory_space<vmem>>, vector<1x8x8xbf16>
    %292 = vector.shape_cast %291 : vector<1x8x8xbf16> to vector<8x8xbf16>
    %cst_209 = arith.constant dense<0.000000e+00> : vector<8x512xf32>
    %293 = tpu.matmul %292, %290, %cst_209 {dimension_numbers = #tpu.dot_dimension_numbers<[1], [0], [0], [1], [0, 0, 1, 1], [], []>} : vector<8x8xbf16>, vector<8x512xbf16>, vector<8x512xf32> -> vector<8x512xf32>
    %294 = arith.addf %280, %293 : vector<8x512xf32>
    %c0_210 = arith.constant 0 : index
    %c0_211 = arith.constant 0 : index
    %c191 = arith.constant 191 : index
    %295 = vector.load %arg1[%c0_210, %c0_211, %c191] : memref<1x8x768xbf16, #tpu.memory_space<vmem>>, vector<1x8x512xbf16>
    %296 = vector.shape_cast %295 : vector<1x8x512xbf16> to vector<8x512xbf16>
    %c21 = arith.constant 21 : index
    %c0_212 = arith.constant 0 : index
    %c0_213 = arith.constant 0 : index
    %297 = vector.load %arg2[%c21, %c0_212, %c0_213] : memref<27x1x512xf32, #tpu.memory_space<vmem>>, vector<1x1x512xf32>
    %298 = vector.shape_cast %297 : vector<1x1x512xf32> to vector<1x512xf32>
    %cst_214 = arith.constant 5.000000e-01 : f32
    %299 = vector.broadcast %cst_214 : f32 to vector<1x512xf32>
    %300 = arith.cmpf ogt, %298, %299 : vector<1x512xf32>
    %cst_215 = arith.constant 0.000000e+00 : bf16
    %301 = vector.broadcast %cst_215 : bf16 to vector<8x512xbf16>
    %302 = vector.shape_cast %300 : vector<1x512xi1> to vector<1x512xi1>
    %303 = vector.broadcast %302 : vector<1x512xi1> to vector<8x512xi1>
    %304 = arith.select %303, %296, %301 : vector<8x512xi1>, vector<8x512xbf16>
    %c21_216 = arith.constant 21 : index
    %c0_217 = arith.constant 0 : index
    %c0_218 = arith.constant 0 : index
    %305 = vector.load %arg3[%c21_216, %c0_217, %c0_218] : memref<27x8x8xbf16, #tpu.memory_space<vmem>>, vector<1x8x8xbf16>
    %306 = vector.shape_cast %305 : vector<1x8x8xbf16> to vector<8x8xbf16>
    %cst_219 = arith.constant dense<0.000000e+00> : vector<8x512xf32>
    %307 = tpu.matmul %306, %304, %cst_219 {dimension_numbers = #tpu.dot_dimension_numbers<[1], [0], [0], [1], [0, 0, 1, 1], [], []>} : vector<8x8xbf16>, vector<8x512xbf16>, vector<8x512xf32> -> vector<8x512xf32>
    %308 = arith.addf %294, %307 : vector<8x512xf32>
    %c0_220 = arith.constant 0 : index
    %c0_221 = arith.constant 0 : index
    %c192 = arith.constant 192 : index
    %309 = vector.load %arg1[%c0_220, %c0_221, %c192] : memref<1x8x768xbf16, #tpu.memory_space<vmem>>, vector<1x8x512xbf16>
    %310 = vector.shape_cast %309 : vector<1x8x512xbf16> to vector<8x512xbf16>
    %c22 = arith.constant 22 : index
    %c0_222 = arith.constant 0 : index
    %c0_223 = arith.constant 0 : index
    %311 = vector.load %arg2[%c22, %c0_222, %c0_223] : memref<27x1x512xf32, #tpu.memory_space<vmem>>, vector<1x1x512xf32>
    %312 = vector.shape_cast %311 : vector<1x1x512xf32> to vector<1x512xf32>
    %cst_224 = arith.constant 5.000000e-01 : f32
    %313 = vector.broadcast %cst_224 : f32 to vector<1x512xf32>
    %314 = arith.cmpf ogt, %312, %313 : vector<1x512xf32>
    %cst_225 = arith.constant 0.000000e+00 : bf16
    %315 = vector.broadcast %cst_225 : bf16 to vector<8x512xbf16>
    %316 = vector.shape_cast %314 : vector<1x512xi1> to vector<1x512xi1>
    %317 = vector.broadcast %316 : vector<1x512xi1> to vector<8x512xi1>
    %318 = arith.select %317, %310, %315 : vector<8x512xi1>, vector<8x512xbf16>
    %c22_226 = arith.constant 22 : index
    %c0_227 = arith.constant 0 : index
    %c0_228 = arith.constant 0 : index
    %319 = vector.load %arg3[%c22_226, %c0_227, %c0_228] : memref<27x8x8xbf16, #tpu.memory_space<vmem>>, vector<1x8x8xbf16>
    %320 = vector.shape_cast %319 : vector<1x8x8xbf16> to vector<8x8xbf16>
    %cst_229 = arith.constant dense<0.000000e+00> : vector<8x512xf32>
    %321 = tpu.matmul %320, %318, %cst_229 {dimension_numbers = #tpu.dot_dimension_numbers<[1], [0], [0], [1], [0, 0, 1, 1], [], []>} : vector<8x8xbf16>, vector<8x512xbf16>, vector<8x512xf32> -> vector<8x512xf32>
    %322 = arith.addf %308, %321 : vector<8x512xf32>
    %c0_230 = arith.constant 0 : index
    %c0_231 = arith.constant 0 : index
    %c193 = arith.constant 193 : index
    %323 = vector.load %arg1[%c0_230, %c0_231, %c193] : memref<1x8x768xbf16, #tpu.memory_space<vmem>>, vector<1x8x512xbf16>
    %324 = vector.shape_cast %323 : vector<1x8x512xbf16> to vector<8x512xbf16>
    %c23 = arith.constant 23 : index
    %c0_232 = arith.constant 0 : index
    %c0_233 = arith.constant 0 : index
    %325 = vector.load %arg2[%c23, %c0_232, %c0_233] : memref<27x1x512xf32, #tpu.memory_space<vmem>>, vector<1x1x512xf32>
    %326 = vector.shape_cast %325 : vector<1x1x512xf32> to vector<1x512xf32>
    %cst_234 = arith.constant 5.000000e-01 : f32
    %327 = vector.broadcast %cst_234 : f32 to vector<1x512xf32>
    %328 = arith.cmpf ogt, %326, %327 : vector<1x512xf32>
    %cst_235 = arith.constant 0.000000e+00 : bf16
    %329 = vector.broadcast %cst_235 : bf16 to vector<8x512xbf16>
    %330 = vector.shape_cast %328 : vector<1x512xi1> to vector<1x512xi1>
    %331 = vector.broadcast %330 : vector<1x512xi1> to vector<8x512xi1>
    %332 = arith.select %331, %324, %329 : vector<8x512xi1>, vector<8x512xbf16>
    %c23_236 = arith.constant 23 : index
    %c0_237 = arith.constant 0 : index
    %c0_238 = arith.constant 0 : index
    %333 = vector.load %arg3[%c23_236, %c0_237, %c0_238] : memref<27x8x8xbf16, #tpu.memory_space<vmem>>, vector<1x8x8xbf16>
    %334 = vector.shape_cast %333 : vector<1x8x8xbf16> to vector<8x8xbf16>
    %cst_239 = arith.constant dense<0.000000e+00> : vector<8x512xf32>
    %335 = tpu.matmul %334, %332, %cst_239 {dimension_numbers = #tpu.dot_dimension_numbers<[1], [0], [0], [1], [0, 0, 1, 1], [], []>} : vector<8x8xbf16>, vector<8x512xbf16>, vector<8x512xf32> -> vector<8x512xf32>
    %336 = arith.addf %322, %335 : vector<8x512xf32>
    %c0_240 = arith.constant 0 : index
    %c0_241 = arith.constant 0 : index
    %c199 = arith.constant 199 : index
    %337 = vector.load %arg1[%c0_240, %c0_241, %c199] : memref<1x8x768xbf16, #tpu.memory_space<vmem>>, vector<1x8x512xbf16>
    %338 = vector.shape_cast %337 : vector<1x8x512xbf16> to vector<8x512xbf16>
    %c24 = arith.constant 24 : index
    %c0_242 = arith.constant 0 : index
    %c0_243 = arith.constant 0 : index
    %339 = vector.load %arg2[%c24, %c0_242, %c0_243] : memref<27x1x512xf32, #tpu.memory_space<vmem>>, vector<1x1x512xf32>
    %340 = vector.shape_cast %339 : vector<1x1x512xf32> to vector<1x512xf32>
    %cst_244 = arith.constant 5.000000e-01 : f32
    %341 = vector.broadcast %cst_244 : f32 to vector<1x512xf32>
    %342 = arith.cmpf ogt, %340, %341 : vector<1x512xf32>
    %cst_245 = arith.constant 0.000000e+00 : bf16
    %343 = vector.broadcast %cst_245 : bf16 to vector<8x512xbf16>
    %344 = vector.shape_cast %342 : vector<1x512xi1> to vector<1x512xi1>
    %345 = vector.broadcast %344 : vector<1x512xi1> to vector<8x512xi1>
    %346 = arith.select %345, %338, %343 : vector<8x512xi1>, vector<8x512xbf16>
    %c24_246 = arith.constant 24 : index
    %c0_247 = arith.constant 0 : index
    %c0_248 = arith.constant 0 : index
    %347 = vector.load %arg3[%c24_246, %c0_247, %c0_248] : memref<27x8x8xbf16, #tpu.memory_space<vmem>>, vector<1x8x8xbf16>
    %348 = vector.shape_cast %347 : vector<1x8x8xbf16> to vector<8x8xbf16>
    %cst_249 = arith.constant dense<0.000000e+00> : vector<8x512xf32>
    %349 = tpu.matmul %348, %346, %cst_249 {dimension_numbers = #tpu.dot_dimension_numbers<[1], [0], [0], [1], [0, 0, 1, 1], [], []>} : vector<8x8xbf16>, vector<8x512xbf16>, vector<8x512xf32> -> vector<8x512xf32>
    %350 = arith.addf %336, %349 : vector<8x512xf32>
    %c0_250 = arith.constant 0 : index
    %c0_251 = arith.constant 0 : index
    %c200 = arith.constant 200 : index
    %351 = vector.load %arg1[%c0_250, %c0_251, %c200] : memref<1x8x768xbf16, #tpu.memory_space<vmem>>, vector<1x8x512xbf16>
    %352 = vector.shape_cast %351 : vector<1x8x512xbf16> to vector<8x512xbf16>
    %c25 = arith.constant 25 : index
    %c0_252 = arith.constant 0 : index
    %c0_253 = arith.constant 0 : index
    %353 = vector.load %arg2[%c25, %c0_252, %c0_253] : memref<27x1x512xf32, #tpu.memory_space<vmem>>, vector<1x1x512xf32>
    %354 = vector.shape_cast %353 : vector<1x1x512xf32> to vector<1x512xf32>
    %cst_254 = arith.constant 5.000000e-01 : f32
    %355 = vector.broadcast %cst_254 : f32 to vector<1x512xf32>
    %356 = arith.cmpf ogt, %354, %355 : vector<1x512xf32>
    %cst_255 = arith.constant 0.000000e+00 : bf16
    %357 = vector.broadcast %cst_255 : bf16 to vector<8x512xbf16>
    %358 = vector.shape_cast %356 : vector<1x512xi1> to vector<1x512xi1>
    %359 = vector.broadcast %358 : vector<1x512xi1> to vector<8x512xi1>
    %360 = arith.select %359, %352, %357 : vector<8x512xi1>, vector<8x512xbf16>
    %c25_256 = arith.constant 25 : index
    %c0_257 = arith.constant 0 : index
    %c0_258 = arith.constant 0 : index
    %361 = vector.load %arg3[%c25_256, %c0_257, %c0_258] : memref<27x8x8xbf16, #tpu.memory_space<vmem>>, vector<1x8x8xbf16>
    %362 = vector.shape_cast %361 : vector<1x8x8xbf16> to vector<8x8xbf16>
    %cst_259 = arith.constant dense<0.000000e+00> : vector<8x512xf32>
    %363 = tpu.matmul %362, %360, %cst_259 {dimension_numbers = #tpu.dot_dimension_numbers<[1], [0], [0], [1], [0, 0, 1, 1], [], []>} : vector<8x8xbf16>, vector<8x512xbf16>, vector<8x512xf32> -> vector<8x512xf32>
    %364 = arith.addf %350, %363 : vector<8x512xf32>
    %c0_260 = arith.constant 0 : index
    %c0_261 = arith.constant 0 : index
    %c201 = arith.constant 201 : index
    %365 = vector.load %arg1[%c0_260, %c0_261, %c201] : memref<1x8x768xbf16, #tpu.memory_space<vmem>>, vector<1x8x512xbf16>
    %366 = vector.shape_cast %365 : vector<1x8x512xbf16> to vector<8x512xbf16>
    %c26 = arith.constant 26 : index
    %c0_262 = arith.constant 0 : index
    %c0_263 = arith.constant 0 : index
    %367 = vector.load %arg2[%c26, %c0_262, %c0_263] : memref<27x1x512xf32, #tpu.memory_space<vmem>>, vector<1x1x512xf32>
    %368 = vector.shape_cast %367 : vector<1x1x512xf32> to vector<1x512xf32>
    %cst_264 = arith.constant 5.000000e-01 : f32
    %369 = vector.broadcast %cst_264 : f32 to vector<1x512xf32>
    %370 = arith.cmpf ogt, %368, %369 : vector<1x512xf32>
    %cst_265 = arith.constant 0.000000e+00 : bf16
    %371 = vector.broadcast %cst_265 : bf16 to vector<8x512xbf16>
    %372 = vector.shape_cast %370 : vector<1x512xi1> to vector<1x512xi1>
    %373 = vector.broadcast %372 : vector<1x512xi1> to vector<8x512xi1>
    %374 = arith.select %373, %366, %371 : vector<8x512xi1>, vector<8x512xbf16>
    %c26_266 = arith.constant 26 : index
    %c0_267 = arith.constant 0 : index
    %c0_268 = arith.constant 0 : index
    %375 = vector.load %arg3[%c26_266, %c0_267, %c0_268] : memref<27x8x8xbf16, #tpu.memory_space<vmem>>, vector<1x8x8xbf16>
    %376 = vector.shape_cast %375 : vector<1x8x8xbf16> to vector<8x8xbf16>
    %cst_269 = arith.constant dense<0.000000e+00> : vector<8x512xf32>
    %377 = tpu.matmul %376, %374, %cst_269 {dimension_numbers = #tpu.dot_dimension_numbers<[1], [0], [0], [1], [0, 0, 1, 1], [], []>} : vector<8x8xbf16>, vector<8x512xbf16>, vector<8x512xf32> -> vector<8x512xf32>
    %378 = arith.addf %364, %377 : vector<8x512xf32>
    %cst_270 = arith.constant dense<0.000000e+00> : vector<8xf32>
    %379 = vector.multi_reduction <add>, %378, %cst_270 [1] : vector<8x512xf32> to vector<8xf32>
    %380 = vector.shape_cast %379 : vector<8xf32> to vector<8x1xf32>
    %cst_271 = arith.constant 0.001953125 : f32
    %381 = vector.broadcast %cst_271 : f32 to vector<8x1xf32>
    %382 = arith.mulf %380, %381 : vector<8x1xf32>
    %383 = vector.broadcast %382 : vector<8x1xf32> to vector<8x512xf32>
    %384 = arith.subf %378, %383 : vector<8x512xf32>
    %385 = arith.mulf %384, %384 : vector<8x512xf32>
    %cst_272 = arith.constant dense<0.000000e+00> : vector<8xf32>
    %386 = vector.multi_reduction <add>, %385, %cst_272 [1] : vector<8x512xf32> to vector<8xf32>
    %387 = vector.shape_cast %386 : vector<8xf32> to vector<8x1xf32>
    %cst_273 = arith.constant 0.001953125 : f32
    %388 = vector.broadcast %cst_273 : f32 to vector<8x1xf32>
    %389 = arith.mulf %387, %388 : vector<8x1xf32>
    %cst_274 = arith.constant 0.000000e+00 : f32
    %390 = vector.broadcast %cst_274 : f32 to vector<8x1xf32>
    %391 = arith.maximumf %389, %390 : vector<8x1xf32>
    %cst_275 = arith.constant 9.99999974E-6 : f32
    %392 = vector.broadcast %cst_275 : f32 to vector<8x1xf32>
    %393 = arith.addf %391, %392 : vector<8x1xf32>
    %394 = math.rsqrt %393 : vector<8x1xf32>
    %395 = vector.broadcast %394 : vector<8x1xf32> to vector<8x512xf32>
    %396 = arith.mulf %384, %395 : vector<8x512xf32>
    %cst_276 = arith.constant 0.000000e+00 : f32
    %397 = vector.broadcast %cst_276 : f32 to vector<8x512xf32>
    %398 = arith.cmpf ogt, %396, %397 : vector<8x512xf32>
    %cst_277 = arith.constant 0.00999999977 : f32
    %399 = vector.broadcast %cst_277 : f32 to vector<8x512xf32>
    %400 = arith.mulf %399, %396 : vector<8x512xf32>
    %401 = arith.select %398, %396, %400 : vector<8x512xi1>, vector<8x512xf32>
    %402 = arith.truncf %401 : vector<8x512xf32> to vector<8x512xbf16>
    %c0_278 = arith.constant 0 : index
    %c128_279 = arith.constant 128 : index
    %403 = vector.load %arg6[%c0_278, %c128_279] : memref<8x768xbf16, #tpu.memory_space<vmem>>, vector<8x512xbf16>
    tpu.vector_store %arg6[%c0_278, %c128_279], %402 {strides = array<i32>} : memref<8x768xbf16, #tpu.memory_space<vmem>>, vector<8x512xbf16>,
    %cst_280 = arith.constant 0.000000e+00 : f32
    %404 = vector.broadcast %cst_280 : f32 to vector<8x512xf32>
    %c0_281 = arith.constant 0 : index
    %c55_282 = arith.constant 55 : index
    %405 = vector.load %arg6[%c0_281, %c55_282] : memref<8x768xbf16, #tpu.memory_space<vmem>>, vector<8x512xbf16>
    %c0_283 = arith.constant 0 : index
    %c0_284 = arith.constant 0 : index
    %c0_285 = arith.constant 0 : index
    %406 = vector.load %arg2[%c0_283, %c0_284, %c0_285] : memref<27x1x512xf32, #tpu.memory_space<vmem>>, vector<1x1x512xf32>
    %407 = vector.shape_cast %406 : vector<1x1x512xf32> to vector<1x512xf32>
    %cst_286 = arith.constant 5.000000e-01 : f32
    %408 = vector.broadcast %cst_286 : f32 to vector<1x512xf32>
    %409 = arith.cmpf ogt, %407, %408 : vector<1x512xf32>
    %cst_287 = arith.constant 0.000000e+00 : bf16
    %410 = vector.broadcast %cst_287 : bf16 to vector<8x512xbf16>
    %411 = vector.shape_cast %409 : vector<1x512xi1> to vector<1x512xi1>
    %412 = vector.broadcast %411 : vector<1x512xi1> to vector<8x512xi1>
    %413 = arith.select %412, %405, %410 : vector<8x512xi1>, vector<8x512xbf16>
    %c0_288 = arith.constant 0 : index
    %c0_289 = arith.constant 0 : index
    %c0_290 = arith.constant 0 : index
    %414 = vector.load %arg4[%c0_288, %c0_289, %c0_290] : memref<27x8x8xbf16, #tpu.memory_space<vmem>>, vector<1x8x8xbf16>
    %415 = vector.shape_cast %414 : vector<1x8x8xbf16> to vector<8x8xbf16>
    %cst_291 = arith.constant dense<0.000000e+00> : vector<8x512xf32>
    %416 = tpu.matmul %415, %413, %cst_291 {dimension_numbers = #tpu.dot_dimension_numbers<[1], [0], [0], [1], [0, 0, 1, 1], [], []>} : vector<8x8xbf16>, vector<8x512xbf16>, vector<8x512xf32> -> vector<8x512xf32>
    %417 = arith.addf %404, %416 : vector<8x512xf32>
    %c0_292 = arith.constant 0 : index
    %c56_293 = arith.constant 56 : index
    %418 = vector.load %arg6[%c0_292, %c56_293] : memref<8x768xbf16, #tpu.memory_space<vmem>>, vector<8x512xbf16>
    %c1_294 = arith.constant 1 : index
    %c0_295 = arith.constant 0 : index
    %c0_296 = arith.constant 0 : index
    %419 = vector.load %arg2[%c1_294, %c0_295, %c0_296] : memref<27x1x512xf32, #tpu.memory_space<vmem>>, vector<1x1x512xf32>
    %420 = vector.shape_cast %419 : vector<1x1x512xf32> to vector<1x512xf32>
    %cst_297 = arith.constant 5.000000e-01 : f32
    %421 = vector.broadcast %cst_297 : f32 to vector<1x512xf32>
    %422 = arith.cmpf ogt, %420, %421 : vector<1x512xf32>
    %cst_298 = arith.constant 0.000000e+00 : bf16
    %423 = vector.broadcast %cst_298 : bf16 to vector<8x512xbf16>
    %424 = vector.shape_cast %422 : vector<1x512xi1> to vector<1x512xi1>
    %425 = vector.broadcast %424 : vector<1x512xi1> to vector<8x512xi1>
    %426 = arith.select %425, %418, %423 : vector<8x512xi1>, vector<8x512xbf16>
    %c1_299 = arith.constant 1 : index
    %c0_300 = arith.constant 0 : index
    %c0_301 = arith.constant 0 : index
    %427 = vector.load %arg4[%c1_299, %c0_300, %c0_301] : memref<27x8x8xbf16, #tpu.memory_space<vmem>>, vector<1x8x8xbf16>
    %428 = vector.shape_cast %427 : vector<1x8x8xbf16> to vector<8x8xbf16>
    %cst_302 = arith.constant dense<0.000000e+00> : vector<8x512xf32>
    %429 = tpu.matmul %428, %426, %cst_302 {dimension_numbers = #tpu.dot_dimension_numbers<[1], [0], [0], [1], [0, 0, 1, 1], [], []>} : vector<8x8xbf16>, vector<8x512xbf16>, vector<8x512xf32> -> vector<8x512xf32>
    %430 = arith.addf %417, %429 : vector<8x512xf32>
    %c0_303 = arith.constant 0 : index
    %c57_304 = arith.constant 57 : index
    %431 = vector.load %arg6[%c0_303, %c57_304] : memref<8x768xbf16, #tpu.memory_space<vmem>>, vector<8x512xbf16>
    %c2_305 = arith.constant 2 : index
    %c0_306 = arith.constant 0 : index
    %c0_307 = arith.constant 0 : index
    %432 = vector.load %arg2[%c2_305, %c0_306, %c0_307] : memref<27x1x512xf32, #tpu.memory_space<vmem>>, vector<1x1x512xf32>
    %433 = vector.shape_cast %432 : vector<1x1x512xf32> to vector<1x512xf32>
    %cst_308 = arith.constant 5.000000e-01 : f32
    %434 = vector.broadcast %cst_308 : f32 to vector<1x512xf32>
    %435 = arith.cmpf ogt, %433, %434 : vector<1x512xf32>
    %cst_309 = arith.constant 0.000000e+00 : bf16
    %436 = vector.broadcast %cst_309 : bf16 to vector<8x512xbf16>
    %437 = vector.shape_cast %435 : vector<1x512xi1> to vector<1x512xi1>
    %438 = vector.broadcast %437 : vector<1x512xi1> to vector<8x512xi1>
    %439 = arith.select %438, %431, %436 : vector<8x512xi1>, vector<8x512xbf16>
    %c2_310 = arith.constant 2 : index
    %c0_311 = arith.constant 0 : index
    %c0_312 = arith.constant 0 : index
    %440 = vector.load %arg4[%c2_310, %c0_311, %c0_312] : memref<27x8x8xbf16, #tpu.memory_space<vmem>>, vector<1x8x8xbf16>
    %441 = vector.shape_cast %440 : vector<1x8x8xbf16> to vector<8x8xbf16>
    %cst_313 = arith.constant dense<0.000000e+00> : vector<8x512xf32>
    %442 = tpu.matmul %441, %439, %cst_313 {dimension_numbers = #tpu.dot_dimension_numbers<[1], [0], [0], [1], [0, 0, 1, 1], [], []>} : vector<8x8xbf16>, vector<8x512xbf16>, vector<8x512xf32> -> vector<8x512xf32>
    %443 = arith.addf %430, %442 : vector<8x512xf32>
    %c0_314 = arith.constant 0 : index
    %c63_315 = arith.constant 63 : index
    %444 = vector.load %arg6[%c0_314, %c63_315] : memref<8x768xbf16, #tpu.memory_space<vmem>>, vector<8x512xbf16>
    %c3_316 = arith.constant 3 : index
    %c0_317 = arith.constant 0 : index
    %c0_318 = arith.constant 0 : index
    %445 = vector.load %arg2[%c3_316, %c0_317, %c0_318] : memref<27x1x512xf32, #tpu.memory_space<vmem>>, vector<1x1x512xf32>
    %446 = vector.shape_cast %445 : vector<1x1x512xf32> to vector<1x512xf32>
    %cst_319 = arith.constant 5.000000e-01 : f32
    %447 = vector.broadcast %cst_319 : f32 to vector<1x512xf32>
    %448 = arith.cmpf ogt, %446, %447 : vector<1x512xf32>
    %cst_320 = arith.constant 0.000000e+00 : bf16
    %449 = vector.broadcast %cst_320 : bf16 to vector<8x512xbf16>
    %450 = vector.shape_cast %448 : vector<1x512xi1> to vector<1x512xi1>
    %451 = vector.broadcast %450 : vector<1x512xi1> to vector<8x512xi1>
    %452 = arith.select %451, %444, %449 : vector<8x512xi1>, vector<8x512xbf16>
    %c3_321 = arith.constant 3 : index
    %c0_322 = arith.constant 0 : index
    %c0_323 = arith.constant 0 : index
    %453 = vector.load %arg4[%c3_321, %c0_322, %c0_323] : memref<27x8x8xbf16, #tpu.memory_space<vmem>>, vector<1x8x8xbf16>
    %454 = vector.shape_cast %453 : vector<1x8x8xbf16> to vector<8x8xbf16>
    %cst_324 = arith.constant dense<0.000000e+00> : vector<8x512xf32>
    %455 = tpu.matmul %454, %452, %cst_324 {dimension_numbers = #tpu.dot_dimension_numbers<[1], [0], [0], [1], [0, 0, 1, 1], [], []>} : vector<8x8xbf16>, vector<8x512xbf16>, vector<8x512xf32> -> vector<8x512xf32>
    %456 = arith.addf %443, %455 : vector<8x512xf32>
    %c0_325 = arith.constant 0 : index
    %c64_326 = arith.constant 64 : index
    %457 = vector.load %arg6[%c0_325, %c64_326] : memref<8x768xbf16, #tpu.memory_space<vmem>>, vector<8x512xbf16>
    %c4_327 = arith.constant 4 : index
    %c0_328 = arith.constant 0 : index
    %c0_329 = arith.constant 0 : index
    %458 = vector.load %arg2[%c4_327, %c0_328, %c0_329] : memref<27x1x512xf32, #tpu.memory_space<vmem>>, vector<1x1x512xf32>
    %459 = vector.shape_cast %458 : vector<1x1x512xf32> to vector<1x512xf32>
    %cst_330 = arith.constant 5.000000e-01 : f32
    %460 = vector.broadcast %cst_330 : f32 to vector<1x512xf32>
    %461 = arith.cmpf ogt, %459, %460 : vector<1x512xf32>
    %cst_331 = arith.constant 0.000000e+00 : bf16
    %462 = vector.broadcast %cst_331 : bf16 to vector<8x512xbf16>
    %463 = vector.shape_cast %461 : vector<1x512xi1> to vector<1x512xi1>
    %464 = vector.broadcast %463 : vector<1x512xi1> to vector<8x512xi1>
    %465 = arith.select %464, %457, %462 : vector<8x512xi1>, vector<8x512xbf16>
    %c4_332 = arith.constant 4 : index
    %c0_333 = arith.constant 0 : index
    %c0_334 = arith.constant 0 : index
    %466 = vector.load %arg4[%c4_332, %c0_333, %c0_334] : memref<27x8x8xbf16, #tpu.memory_space<vmem>>, vector<1x8x8xbf16>
    %467 = vector.shape_cast %466 : vector<1x8x8xbf16> to vector<8x8xbf16>
    %cst_335 = arith.constant dense<0.000000e+00> : vector<8x512xf32>
    %468 = tpu.matmul %467, %465, %cst_335 {dimension_numbers = #tpu.dot_dimension_numbers<[1], [0], [0], [1], [0, 0, 1, 1], [], []>} : vector<8x8xbf16>, vector<8x512xbf16>, vector<8x512xf32> -> vector<8x512xf32>
    %469 = arith.addf %456, %468 : vector<8x512xf32>
    %c0_336 = arith.constant 0 : index
    %c65_337 = arith.constant 65 : index
    %470 = vector.load %arg6[%c0_336, %c65_337] : memref<8x768xbf16, #tpu.memory_space<vmem>>, vector<8x512xbf16>
    %c5_338 = arith.constant 5 : index
    %c0_339 = arith.constant 0 : index
    %c0_340 = arith.constant 0 : index
    %471 = vector.load %arg2[%c5_338, %c0_339, %c0_340] : memref<27x1x512xf32, #tpu.memory_space<vmem>>, vector<1x1x512xf32>
    %472 = vector.shape_cast %471 : vector<1x1x512xf32> to vector<1x512xf32>
    %cst_341 = arith.constant 5.000000e-01 : f32
    %473 = vector.broadcast %cst_341 : f32 to vector<1x512xf32>
    %474 = arith.cmpf ogt, %472, %473 : vector<1x512xf32>
    %cst_342 = arith.constant 0.000000e+00 : bf16
    %475 = vector.broadcast %cst_342 : bf16 to vector<8x512xbf16>
    %476 = vector.shape_cast %474 : vector<1x512xi1> to vector<1x512xi1>
    %477 = vector.broadcast %476 : vector<1x512xi1> to vector<8x512xi1>
    %478 = arith.select %477, %470, %475 : vector<8x512xi1>, vector<8x512xbf16>
    %c5_343 = arith.constant 5 : index
    %c0_344 = arith.constant 0 : index
    %c0_345 = arith.constant 0 : index
    %479 = vector.load %arg4[%c5_343, %c0_344, %c0_345] : memref<27x8x8xbf16, #tpu.memory_space<vmem>>, vector<1x8x8xbf16>
    %480 = vector.shape_cast %479 : vector<1x8x8xbf16> to vector<8x8xbf16>
    %cst_346 = arith.constant dense<0.000000e+00> : vector<8x512xf32>
    %481 = tpu.matmul %480, %478, %cst_346 {dimension_numbers = #tpu.dot_dimension_numbers<[1], [0], [0], [1], [0, 0, 1, 1], [], []>} : vector<8x8xbf16>, vector<8x512xbf16>, vector<8x512xf32> -> vector<8x512xf32>
    %482 = arith.addf %469, %481 : vector<8x512xf32>
    %c0_347 = arith.constant 0 : index
    %c71_348 = arith.constant 71 : index
    %483 = vector.load %arg6[%c0_347, %c71_348] : memref<8x768xbf16, #tpu.memory_space<vmem>>, vector<8x512xbf16>
    %c6_349 = arith.constant 6 : index
    %c0_350 = arith.constant 0 : index
    %c0_351 = arith.constant 0 : index
    %484 = vector.load %arg2[%c6_349, %c0_350, %c0_351] : memref<27x1x512xf32, #tpu.memory_space<vmem>>, vector<1x1x512xf32>
    %485 = vector.shape_cast %484 : vector<1x1x512xf32> to vector<1x512xf32>
    %cst_352 = arith.constant 5.000000e-01 : f32
    %486 = vector.broadcast %cst_352 : f32 to vector<1x512xf32>
    %487 = arith.cmpf ogt, %485, %486 : vector<1x512xf32>
    %cst_353 = arith.constant 0.000000e+00 : bf16
    %488 = vector.broadcast %cst_353 : bf16 to vector<8x512xbf16>
    %489 = vector.shape_cast %487 : vector<1x512xi1> to vector<1x512xi1>
    %490 = vector.broadcast %489 : vector<1x512xi1> to vector<8x512xi1>
    %491 = arith.select %490, %483, %488 : vector<8x512xi1>, vector<8x512xbf16>
    %c6_354 = arith.constant 6 : index
    %c0_355 = arith.constant 0 : index
    %c0_356 = arith.constant 0 : index
    %492 = vector.load %arg4[%c6_354, %c0_355, %c0_356] : memref<27x8x8xbf16, #tpu.memory_space<vmem>>, vector<1x8x8xbf16>
    %493 = vector.shape_cast %492 : vector<1x8x8xbf16> to vector<8x8xbf16>
    %cst_357 = arith.constant dense<0.000000e+00> : vector<8x512xf32>
    %494 = tpu.matmul %493, %491, %cst_357 {dimension_numbers = #tpu.dot_dimension_numbers<[1], [0], [0], [1], [0, 0, 1, 1], [], []>} : vector<8x8xbf16>, vector<8x512xbf16>, vector<8x512xf32> -> vector<8x512xf32>
    %495 = arith.addf %482, %494 : vector<8x512xf32>
    %c0_358 = arith.constant 0 : index
    %c72_359 = arith.constant 72 : index
    %496 = vector.load %arg6[%c0_358, %c72_359] : memref<8x768xbf16, #tpu.memory_space<vmem>>, vector<8x512xbf16>
    %c7_360 = arith.constant 7 : index
    %c0_361 = arith.constant 0 : index
    %c0_362 = arith.constant 0 : index
    %497 = vector.load %arg2[%c7_360, %c0_361, %c0_362] : memref<27x1x512xf32, #tpu.memory_space<vmem>>, vector<1x1x512xf32>
    %498 = vector.shape_cast %497 : vector<1x1x512xf32> to vector<1x512xf32>
    %cst_363 = arith.constant 5.000000e-01 : f32
    %499 = vector.broadcast %cst_363 : f32 to vector<1x512xf32>
    %500 = arith.cmpf ogt, %498, %499 : vector<1x512xf32>
    %cst_364 = arith.constant 0.000000e+00 : bf16
    %501 = vector.broadcast %cst_364 : bf16 to vector<8x512xbf16>
    %502 = vector.shape_cast %500 : vector<1x512xi1> to vector<1x512xi1>
    %503 = vector.broadcast %502 : vector<1x512xi1> to vector<8x512xi1>
    %504 = arith.select %503, %496, %501 : vector<8x512xi1>, vector<8x512xbf16>
    %c7_365 = arith.constant 7 : index
    %c0_366 = arith.constant 0 : index
    %c0_367 = arith.constant 0 : index
    %505 = vector.load %arg4[%c7_365, %c0_366, %c0_367] : memref<27x8x8xbf16, #tpu.memory_space<vmem>>, vector<1x8x8xbf16>
    %506 = vector.shape_cast %505 : vector<1x8x8xbf16> to vector<8x8xbf16>
    %cst_368 = arith.constant dense<0.000000e+00> : vector<8x512xf32>
    %507 = tpu.matmul %506, %504, %cst_368 {dimension_numbers = #tpu.dot_dimension_numbers<[1], [0], [0], [1], [0, 0, 1, 1], [], []>} : vector<8x8xbf16>, vector<8x512xbf16>, vector<8x512xf32> -> vector<8x512xf32>
    %508 = arith.addf %495, %507 : vector<8x512xf32>
    %c0_369 = arith.constant 0 : index
    %c73_370 = arith.constant 73 : index
    %509 = vector.load %arg6[%c0_369, %c73_370] : memref<8x768xbf16, #tpu.memory_space<vmem>>, vector<8x512xbf16>
    %c8_371 = arith.constant 8 : index
    %c0_372 = arith.constant 0 : index
    %c0_373 = arith.constant 0 : index
    %510 = vector.load %arg2[%c8_371, %c0_372, %c0_373] : memref<27x1x512xf32, #tpu.memory_space<vmem>>, vector<1x1x512xf32>
    %511 = vector.shape_cast %510 : vector<1x1x512xf32> to vector<1x512xf32>
    %cst_374 = arith.constant 5.000000e-01 : f32
    %512 = vector.broadcast %cst_374 : f32 to vector<1x512xf32>
    %513 = arith.cmpf ogt, %511, %512 : vector<1x512xf32>
    %cst_375 = arith.constant 0.000000e+00 : bf16
    %514 = vector.broadcast %cst_375 : bf16 to vector<8x512xbf16>
    %515 = vector.shape_cast %513 : vector<1x512xi1> to vector<1x512xi1>
    %516 = vector.broadcast %515 : vector<1x512xi1> to vector<8x512xi1>
    %517 = arith.select %516, %509, %514 : vector<8x512xi1>, vector<8x512xbf16>
    %c8_376 = arith.constant 8 : index
    %c0_377 = arith.constant 0 : index
    %c0_378 = arith.constant 0 : index
    %518 = vector.load %arg4[%c8_376, %c0_377, %c0_378] : memref<27x8x8xbf16, #tpu.memory_space<vmem>>, vector<1x8x8xbf16>
    %519 = vector.shape_cast %518 : vector<1x8x8xbf16> to vector<8x8xbf16>
    %cst_379 = arith.constant dense<0.000000e+00> : vector<8x512xf32>
    %520 = tpu.matmul %519, %517, %cst_379 {dimension_numbers = #tpu.dot_dimension_numbers<[1], [0], [0], [1], [0, 0, 1, 1], [], []>} : vector<8x8xbf16>, vector<8x512xbf16>, vector<8x512xf32> -> vector<8x512xf32>
    %521 = arith.addf %508, %520 : vector<8x512xf32>
    %c0_380 = arith.constant 0 : index
    %c119_381 = arith.constant 119 : index
    %522 = vector.load %arg6[%c0_380, %c119_381] : memref<8x768xbf16, #tpu.memory_space<vmem>>, vector<8x512xbf16>
    %c9_382 = arith.constant 9 : index
    %c0_383 = arith.constant 0 : index
    %c0_384 = arith.constant 0 : index
    %523 = vector.load %arg2[%c9_382, %c0_383, %c0_384] : memref<27x1x512xf32, #tpu.memory_space<vmem>>, vector<1x1x512xf32>
    %524 = vector.shape_cast %523 : vector<1x1x512xf32> to vector<1x512xf32>
    %cst_385 = arith.constant 5.000000e-01 : f32
    %525 = vector.broadcast %cst_385 : f32 to vector<1x512xf32>
    %526 = arith.cmpf ogt, %524, %525 : vector<1x512xf32>
    %cst_386 = arith.constant 0.000000e+00 : bf16
    %527 = vector.broadcast %cst_386 : bf16 to vector<8x512xbf16>
    %528 = vector.shape_cast %526 : vector<1x512xi1> to vector<1x512xi1>
    %529 = vector.broadcast %528 : vector<1x512xi1> to vector<8x512xi1>
    %530 = arith.select %529, %522, %527 : vector<8x512xi1>, vector<8x512xbf16>
    %c9_387 = arith.constant 9 : index
    %c0_388 = arith.constant 0 : index
    %c0_389 = arith.constant 0 : index
    %531 = vector.load %arg4[%c9_387, %c0_388, %c0_389] : memref<27x8x8xbf16, #tpu.memory_space<vmem>>, vector<1x8x8xbf16>
    %532 = vector.shape_cast %531 : vector<1x8x8xbf16> to vector<8x8xbf16>
    %cst_390 = arith.constant dense<0.000000e+00> : vector<8x512xf32>
    %533 = tpu.matmul %532, %530, %cst_390 {dimension_numbers = #tpu.dot_dimension_numbers<[1], [0], [0], [1], [0, 0, 1, 1], [], []>} : vector<8x8xbf16>, vector<8x512xbf16>, vector<8x512xf32> -> vector<8x512xf32>
    %534 = arith.addf %521, %533 : vector<8x512xf32>
    %c0_391 = arith.constant 0 : index
    %c120_392 = arith.constant 120 : index
    %535 = vector.load %arg6[%c0_391, %c120_392] : memref<8x768xbf16, #tpu.memory_space<vmem>>, vector<8x512xbf16>
    %c10_393 = arith.constant 10 : index
    %c0_394 = arith.constant 0 : index
    %c0_395 = arith.constant 0 : index
    %536 = vector.load %arg2[%c10_393, %c0_394, %c0_395] : memref<27x1x512xf32, #tpu.memory_space<vmem>>, vector<1x1x512xf32>
    %537 = vector.shape_cast %536 : vector<1x1x512xf32> to vector<1x512xf32>
    %cst_396 = arith.constant 5.000000e-01 : f32
    %538 = vector.broadcast %cst_396 : f32 to vector<1x512xf32>
    %539 = arith.cmpf ogt, %537, %538 : vector<1x512xf32>
    %cst_397 = arith.constant 0.000000e+00 : bf16
    %540 = vector.broadcast %cst_397 : bf16 to vector<8x512xbf16>
    %541 = vector.shape_cast %539 : vector<1x512xi1> to vector<1x512xi1>
    %542 = vector.broadcast %541 : vector<1x512xi1> to vector<8x512xi1>
    %543 = arith.select %542, %535, %540 : vector<8x512xi1>, vector<8x512xbf16>
    %c10_398 = arith.constant 10 : index
    %c0_399 = arith.constant 0 : index
    %c0_400 = arith.constant 0 : index
    %544 = vector.load %arg4[%c10_398, %c0_399, %c0_400] : memref<27x8x8xbf16, #tpu.memory_space<vmem>>, vector<1x8x8xbf16>
    %545 = vector.shape_cast %544 : vector<1x8x8xbf16> to vector<8x8xbf16>
    %cst_401 = arith.constant dense<0.000000e+00> : vector<8x512xf32>
    %546 = tpu.matmul %545, %543, %cst_401 {dimension_numbers = #tpu.dot_dimension_numbers<[1], [0], [0], [1], [0, 0, 1, 1], [], []>} : vector<8x8xbf16>, vector<8x512xbf16>, vector<8x512xf32> -> vector<8x512xf32>
    %547 = arith.addf %534, %546 : vector<8x512xf32>
    %c0_402 = arith.constant 0 : index
    %c121_403 = arith.constant 121 : index
    %548 = vector.load %arg6[%c0_402, %c121_403] : memref<8x768xbf16, #tpu.memory_space<vmem>>, vector<8x512xbf16>
    %c11_404 = arith.constant 11 : index
    %c0_405 = arith.constant 0 : index
    %c0_406 = arith.constant 0 : index
    %549 = vector.load %arg2[%c11_404, %c0_405, %c0_406] : memref<27x1x512xf32, #tpu.memory_space<vmem>>, vector<1x1x512xf32>
    %550 = vector.shape_cast %549 : vector<1x1x512xf32> to vector<1x512xf32>
    %cst_407 = arith.constant 5.000000e-01 : f32
    %551 = vector.broadcast %cst_407 : f32 to vector<1x512xf32>
    %552 = arith.cmpf ogt, %550, %551 : vector<1x512xf32>
    %cst_408 = arith.constant 0.000000e+00 : bf16
    %553 = vector.broadcast %cst_408 : bf16 to vector<8x512xbf16>
    %554 = vector.shape_cast %552 : vector<1x512xi1> to vector<1x512xi1>
    %555 = vector.broadcast %554 : vector<1x512xi1> to vector<8x512xi1>
    %556 = arith.select %555, %548, %553 : vector<8x512xi1>, vector<8x512xbf16>
    %c11_409 = arith.constant 11 : index
    %c0_410 = arith.constant 0 : index
    %c0_411 = arith.constant 0 : index
    %557 = vector.load %arg4[%c11_409, %c0_410, %c0_411] : memref<27x8x8xbf16, #tpu.memory_space<vmem>>, vector<1x8x8xbf16>
    %558 = vector.shape_cast %557 : vector<1x8x8xbf16> to vector<8x8xbf16>
    %cst_412 = arith.constant dense<0.000000e+00> : vector<8x512xf32>
    %559 = tpu.matmul %558, %556, %cst_412 {dimension_numbers = #tpu.dot_dimension_numbers<[1], [0], [0], [1], [0, 0, 1, 1], [], []>} : vector<8x8xbf16>, vector<8x512xbf16>, vector<8x512xf32> -> vector<8x512xf32>
    %560 = arith.addf %547, %559 : vector<8x512xf32>
    %c0_413 = arith.constant 0 : index
    %c127_414 = arith.constant 127 : index
    %561 = vector.load %arg6[%c0_413, %c127_414] : memref<8x768xbf16, #tpu.memory_space<vmem>>, vector<8x512xbf16>
    %c12_415 = arith.constant 12 : index
    %c0_416 = arith.constant 0 : index
    %c0_417 = arith.constant 0 : index
    %562 = vector.load %arg2[%c12_415, %c0_416, %c0_417] : memref<27x1x512xf32, #tpu.memory_space<vmem>>, vector<1x1x512xf32>
    %563 = vector.shape_cast %562 : vector<1x1x512xf32> to vector<1x512xf32>
    %cst_418 = arith.constant 5.000000e-01 : f32
    %564 = vector.broadcast %cst_418 : f32 to vector<1x512xf32>
    %565 = arith.cmpf ogt, %563, %564 : vector<1x512xf32>
    %cst_419 = arith.constant 0.000000e+00 : bf16
    %566 = vector.broadcast %cst_419 : bf16 to vector<8x512xbf16>
    %567 = vector.shape_cast %565 : vector<1x512xi1> to vector<1x512xi1>
    %568 = vector.broadcast %567 : vector<1x512xi1> to vector<8x512xi1>
    %569 = arith.select %568, %561, %566 : vector<8x512xi1>, vector<8x512xbf16>
    %c12_420 = arith.constant 12 : index
    %c0_421 = arith.constant 0 : index
    %c0_422 = arith.constant 0 : index
    %570 = vector.load %arg4[%c12_420, %c0_421, %c0_422] : memref<27x8x8xbf16, #tpu.memory_space<vmem>>, vector<1x8x8xbf16>
    %571 = vector.shape_cast %570 : vector<1x8x8xbf16> to vector<8x8xbf16>
    %cst_423 = arith.constant dense<0.000000e+00> : vector<8x512xf32>
    %572 = tpu.matmul %571, %569, %cst_423 {dimension_numbers = #tpu.dot_dimension_numbers<[1], [0], [0], [1], [0, 0, 1, 1], [], []>} : vector<8x8xbf16>, vector<8x512xbf16>, vector<8x512xf32> -> vector<8x512xf32>
    %573 = arith.addf %560, %572 : vector<8x512xf32>
    %c0_424 = arith.constant 0 : index
    %c128_425 = arith.constant 128 : index
    %574 = vector.load %arg6[%c0_424, %c128_425] : memref<8x768xbf16, #tpu.memory_space<vmem>>, vector<8x512xbf16>
    %c13_426 = arith.constant 13 : index
    %c0_427 = arith.constant 0 : index
    %c0_428 = arith.constant 0 : index
    %575 = vector.load %arg2[%c13_426, %c0_427, %c0_428] : memref<27x1x512xf32, #tpu.memory_space<vmem>>, vector<1x1x512xf32>
    %576 = vector.shape_cast %575 : vector<1x1x512xf32> to vector<1x512xf32>
    %cst_429 = arith.constant 5.000000e-01 : f32
    %577 = vector.broadcast %cst_429 : f32 to vector<1x512xf32>
    %578 = arith.cmpf ogt, %576, %577 : vector<1x512xf32>
    %cst_430 = arith.constant 0.000000e+00 : bf16
    %579 = vector.broadcast %cst_430 : bf16 to vector<8x512xbf16>
    %580 = vector.shape_cast %578 : vector<1x512xi1> to vector<1x512xi1>
    %581 = vector.broadcast %580 : vector<1x512xi1> to vector<8x512xi1>
    %582 = arith.select %581, %574, %579 : vector<8x512xi1>, vector<8x512xbf16>
    %c13_431 = arith.constant 13 : index
    %c0_432 = arith.constant 0 : index
    %c0_433 = arith.constant 0 : index
    %583 = vector.load %arg4[%c13_431, %c0_432, %c0_433] : memref<27x8x8xbf16, #tpu.memory_space<vmem>>, vector<1x8x8xbf16>
    %584 = vector.shape_cast %583 : vector<1x8x8xbf16> to vector<8x8xbf16>
    %cst_434 = arith.constant dense<0.000000e+00> : vector<8x512xf32>
    %585 = tpu.matmul %584, %582, %cst_434 {dimension_numbers = #tpu.dot_dimension_numbers<[1], [0], [0], [1], [0, 0, 1, 1], [], []>} : vector<8x8xbf16>, vector<8x512xbf16>, vector<8x512xf32> -> vector<8x512xf32>
    %586 = arith.addf %573, %585 : vector<8x512xf32>
    %c0_435 = arith.constant 0 : index
    %c129_436 = arith.constant 129 : index
    %587 = vector.load %arg6[%c0_435, %c129_436] : memref<8x768xbf16, #tpu.memory_space<vmem>>, vector<8x512xbf16>
    %c14_437 = arith.constant 14 : index
    %c0_438 = arith.constant 0 : index
    %c0_439 = arith.constant 0 : index
    %588 = vector.load %arg2[%c14_437, %c0_438, %c0_439] : memref<27x1x512xf32, #tpu.memory_space<vmem>>, vector<1x1x512xf32>
    %589 = vector.shape_cast %588 : vector<1x1x512xf32> to vector<1x512xf32>
    %cst_440 = arith.constant 5.000000e-01 : f32
    %590 = vector.broadcast %cst_440 : f32 to vector<1x512xf32>
    %591 = arith.cmpf ogt, %589, %590 : vector<1x512xf32>
    %cst_441 = arith.constant 0.000000e+00 : bf16
    %592 = vector.broadcast %cst_441 : bf16 to vector<8x512xbf16>
    %593 = vector.shape_cast %591 : vector<1x512xi1> to vector<1x512xi1>
    %594 = vector.broadcast %593 : vector<1x512xi1> to vector<8x512xi1>
    %595 = arith.select %594, %587, %592 : vector<8x512xi1>, vector<8x512xbf16>
    %c14_442 = arith.constant 14 : index
    %c0_443 = arith.constant 0 : index
    %c0_444 = arith.constant 0 : index
    %596 = vector.load %arg4[%c14_442, %c0_443, %c0_444] : memref<27x8x8xbf16, #tpu.memory_space<vmem>>, vector<1x8x8xbf16>
    %597 = vector.shape_cast %596 : vector<1x8x8xbf16> to vector<8x8xbf16>
    %cst_445 = arith.constant dense<0.000000e+00> : vector<8x512xf32>
    %598 = tpu.matmul %597, %595, %cst_445 {dimension_numbers = #tpu.dot_dimension_numbers<[1], [0], [0], [1], [0, 0, 1, 1], [], []>} : vector<8x8xbf16>, vector<8x512xbf16>, vector<8x512xf32> -> vector<8x512xf32>
    %599 = arith.addf %586, %598 : vector<8x512xf32>
    %c0_446 = arith.constant 0 : index
    %c135_447 = arith.constant 135 : index
    %600 = vector.load %arg6[%c0_446, %c135_447] : memref<8x768xbf16, #tpu.memory_space<vmem>>, vector<8x512xbf16>
    %c15_448 = arith.constant 15 : index
    %c0_449 = arith.constant 0 : index
    %c0_450 = arith.constant 0 : index
    %601 = vector.load %arg2[%c15_448, %c0_449, %c0_450] : memref<27x1x512xf32, #tpu.memory_space<vmem>>, vector<1x1x512xf32>
    %602 = vector.shape_cast %601 : vector<1x1x512xf32> to vector<1x512xf32>
    %cst_451 = arith.constant 5.000000e-01 : f32
    %603 = vector.broadcast %cst_451 : f32 to vector<1x512xf32>
    %604 = arith.cmpf ogt, %602, %603 : vector<1x512xf32>
    %cst_452 = arith.constant 0.000000e+00 : bf16
    %605 = vector.broadcast %cst_452 : bf16 to vector<8x512xbf16>
    %606 = vector.shape_cast %604 : vector<1x512xi1> to vector<1x512xi1>
    %607 = vector.broadcast %606 : vector<1x512xi1> to vector<8x512xi1>
    %608 = arith.select %607, %600, %605 : vector<8x512xi1>, vector<8x512xbf16>
    %c15_453 = arith.constant 15 : index
    %c0_454 = arith.constant 0 : index
    %c0_455 = arith.constant 0 : index
    %609 = vector.load %arg4[%c15_453, %c0_454, %c0_455] : memref<27x8x8xbf16, #tpu.memory_space<vmem>>, vector<1x8x8xbf16>
    %610 = vector.shape_cast %609 : vector<1x8x8xbf16> to vector<8x8xbf16>
    %cst_456 = arith.constant dense<0.000000e+00> : vector<8x512xf32>
    %611 = tpu.matmul %610, %608, %cst_456 {dimension_numbers = #tpu.dot_dimension_numbers<[1], [0], [0], [1], [0, 0, 1, 1], [], []>} : vector<8x8xbf16>, vector<8x512xbf16>, vector<8x512xf32> -> vector<8x512xf32>
    %612 = arith.addf %599, %611 : vector<8x512xf32>
    %c0_457 = arith.constant 0 : index
    %c136_458 = arith.constant 136 : index
    %613 = vector.load %arg6[%c0_457, %c136_458] : memref<8x768xbf16, #tpu.memory_space<vmem>>, vector<8x512xbf16>
    %c16_459 = arith.constant 16 : index
    %c0_460 = arith.constant 0 : index
    %c0_461 = arith.constant 0 : index
    %614 = vector.load %arg2[%c16_459, %c0_460, %c0_461] : memref<27x1x512xf32, #tpu.memory_space<vmem>>, vector<1x1x512xf32>
    %615 = vector.shape_cast %614 : vector<1x1x512xf32> to vector<1x512xf32>
    %cst_462 = arith.constant 5.000000e-01 : f32
    %616 = vector.broadcast %cst_462 : f32 to vector<1x512xf32>
    %617 = arith.cmpf ogt, %615, %616 : vector<1x512xf32>
    %cst_463 = arith.constant 0.000000e+00 : bf16
    %618 = vector.broadcast %cst_463 : bf16 to vector<8x512xbf16>
    %619 = vector.shape_cast %617 : vector<1x512xi1> to vector<1x512xi1>
    %620 = vector.broadcast %619 : vector<1x512xi1> to vector<8x512xi1>
    %621 = arith.select %620, %613, %618 : vector<8x512xi1>, vector<8x512xbf16>
    %c16_464 = arith.constant 16 : index
    %c0_465 = arith.constant 0 : index
    %c0_466 = arith.constant 0 : index
    %622 = vector.load %arg4[%c16_464, %c0_465, %c0_466] : memref<27x8x8xbf16, #tpu.memory_space<vmem>>, vector<1x8x8xbf16>
    %623 = vector.shape_cast %622 : vector<1x8x8xbf16> to vector<8x8xbf16>
    %cst_467 = arith.constant dense<0.000000e+00> : vector<8x512xf32>
    %624 = tpu.matmul %623, %621, %cst_467 {dimension_numbers = #tpu.dot_dimension_numbers<[1], [0], [0], [1], [0, 0, 1, 1], [], []>} : vector<8x8xbf16>, vector<8x512xbf16>, vector<8x512xf32> -> vector<8x512xf32>
    %625 = arith.addf %612, %624 : vector<8x512xf32>
    %c0_468 = arith.constant 0 : index
    %c137_469 = arith.constant 137 : index
    %626 = vector.load %arg6[%c0_468, %c137_469] : memref<8x768xbf16, #tpu.memory_space<vmem>>, vector<8x512xbf16>
    %c17_470 = arith.constant 17 : index
    %c0_471 = arith.constant 0 : index
    %c0_472 = arith.constant 0 : index
    %627 = vector.load %arg2[%c17_470, %c0_471, %c0_472] : memref<27x1x512xf32, #tpu.memory_space<vmem>>, vector<1x1x512xf32>
    %628 = vector.shape_cast %627 : vector<1x1x512xf32> to vector<1x512xf32>
    %cst_473 = arith.constant 5.000000e-01 : f32
    %629 = vector.broadcast %cst_473 : f32 to vector<1x512xf32>
    %630 = arith.cmpf ogt, %628, %629 : vector<1x512xf32>
    %cst_474 = arith.constant 0.000000e+00 : bf16
    %631 = vector.broadcast %cst_474 : bf16 to vector<8x512xbf16>
    %632 = vector.shape_cast %630 : vector<1x512xi1> to vector<1x512xi1>
    %633 = vector.broadcast %632 : vector<1x512xi1> to vector<8x512xi1>
    %634 = arith.select %633, %626, %631 : vector<8x512xi1>, vector<8x512xbf16>
    %c17_475 = arith.constant 17 : index
    %c0_476 = arith.constant 0 : index
    %c0_477 = arith.constant 0 : index
    %635 = vector.load %arg4[%c17_475, %c0_476, %c0_477] : memref<27x8x8xbf16, #tpu.memory_space<vmem>>, vector<1x8x8xbf16>
    %636 = vector.shape_cast %635 : vector<1x8x8xbf16> to vector<8x8xbf16>
    %cst_478 = arith.constant dense<0.000000e+00> : vector<8x512xf32>
    %637 = tpu.matmul %636, %634, %cst_478 {dimension_numbers = #tpu.dot_dimension_numbers<[1], [0], [0], [1], [0, 0, 1, 1], [], []>} : vector<8x8xbf16>, vector<8x512xbf16>, vector<8x512xf32> -> vector<8x512xf32>
    %638 = arith.addf %625, %637 : vector<8x512xf32>
    %c0_479 = arith.constant 0 : index
    %c183_480 = arith.constant 183 : index
    %639 = vector.load %arg6[%c0_479, %c183_480] : memref<8x768xbf16, #tpu.memory_space<vmem>>, vector<8x512xbf16>
    %c18_481 = arith.constant 18 : index
    %c0_482 = arith.constant 0 : index
    %c0_483 = arith.constant 0 : index
    %640 = vector.load %arg2[%c18_481, %c0_482, %c0_483] : memref<27x1x512xf32, #tpu.memory_space<vmem>>, vector<1x1x512xf32>
    %641 = vector.shape_cast %640 : vector<1x1x512xf32> to vector<1x512xf32>
    %cst_484 = arith.constant 5.000000e-01 : f32
    %642 = vector.broadcast %cst_484 : f32 to vector<1x512xf32>
    %643 = arith.cmpf ogt, %641, %642 : vector<1x512xf32>
    %cst_485 = arith.constant 0.000000e+00 : bf16
    %644 = vector.broadcast %cst_485 : bf16 to vector<8x512xbf16>
    %645 = vector.shape_cast %643 : vector<1x512xi1> to vector<1x512xi1>
    %646 = vector.broadcast %645 : vector<1x512xi1> to vector<8x512xi1>
    %647 = arith.select %646, %639, %644 : vector<8x512xi1>, vector<8x512xbf16>
    %c18_486 = arith.constant 18 : index
    %c0_487 = arith.constant 0 : index
    %c0_488 = arith.constant 0 : index
    %648 = vector.load %arg4[%c18_486, %c0_487, %c0_488] : memref<27x8x8xbf16, #tpu.memory_space<vmem>>, vector<1x8x8xbf16>
    %649 = vector.shape_cast %648 : vector<1x8x8xbf16> to vector<8x8xbf16>
    %cst_489 = arith.constant dense<0.000000e+00> : vector<8x512xf32>
    %650 = tpu.matmul %649, %647, %cst_489 {dimension_numbers = #tpu.dot_dimension_numbers<[1], [0], [0], [1], [0, 0, 1, 1], [], []>} : vector<8x8xbf16>, vector<8x512xbf16>, vector<8x512xf32> -> vector<8x512xf32>
    %651 = arith.addf %638, %650 : vector<8x512xf32>
    %c0_490 = arith.constant 0 : index
    %c184_491 = arith.constant 184 : index
    %652 = vector.load %arg6[%c0_490, %c184_491] : memref<8x768xbf16, #tpu.memory_space<vmem>>, vector<8x512xbf16>
    %c19_492 = arith.constant 19 : index
    %c0_493 = arith.constant 0 : index
    %c0_494 = arith.constant 0 : index
    %653 = vector.load %arg2[%c19_492, %c0_493, %c0_494] : memref<27x1x512xf32, #tpu.memory_space<vmem>>, vector<1x1x512xf32>
    %654 = vector.shape_cast %653 : vector<1x1x512xf32> to vector<1x512xf32>
    %cst_495 = arith.constant 5.000000e-01 : f32
    %655 = vector.broadcast %cst_495 : f32 to vector<1x512xf32>
    %656 = arith.cmpf ogt, %654, %655 : vector<1x512xf32>
    %cst_496 = arith.constant 0.000000e+00 : bf16
    %657 = vector.broadcast %cst_496 : bf16 to vector<8x512xbf16>
    %658 = vector.shape_cast %656 : vector<1x512xi1> to vector<1x512xi1>
    %659 = vector.broadcast %658 : vector<1x512xi1> to vector<8x512xi1>
    %660 = arith.select %659, %652, %657 : vector<8x512xi1>, vector<8x512xbf16>
    %c19_497 = arith.constant 19 : index
    %c0_498 = arith.constant 0 : index
    %c0_499 = arith.constant 0 : index
    %661 = vector.load %arg4[%c19_497, %c0_498, %c0_499] : memref<27x8x8xbf16, #tpu.memory_space<vmem>>, vector<1x8x8xbf16>
    %662 = vector.shape_cast %661 : vector<1x8x8xbf16> to vector<8x8xbf16>
    %cst_500 = arith.constant dense<0.000000e+00> : vector<8x512xf32>
    %663 = tpu.matmul %662, %660, %cst_500 {dimension_numbers = #tpu.dot_dimension_numbers<[1], [0], [0], [1], [0, 0, 1, 1], [], []>} : vector<8x8xbf16>, vector<8x512xbf16>, vector<8x512xf32> -> vector<8x512xf32>
    %664 = arith.addf %651, %663 : vector<8x512xf32>
    %c0_501 = arith.constant 0 : index
    %c185_502 = arith.constant 185 : index
    %665 = vector.load %arg6[%c0_501, %c185_502] : memref<8x768xbf16, #tpu.memory_space<vmem>>, vector<8x512xbf16>
    %c20_503 = arith.constant 20 : index
    %c0_504 = arith.constant 0 : index
    %c0_505 = arith.constant 0 : index
    %666 = vector.load %arg2[%c20_503, %c0_504, %c0_505] : memref<27x1x512xf32, #tpu.memory_space<vmem>>, vector<1x1x512xf32>
    %667 = vector.shape_cast %666 : vector<1x1x512xf32> to vector<1x512xf32>
    %cst_506 = arith.constant 5.000000e-01 : f32
    %668 = vector.broadcast %cst_506 : f32 to vector<1x512xf32>
    %669 = arith.cmpf ogt, %667, %668 : vector<1x512xf32>
    %cst_507 = arith.constant 0.000000e+00 : bf16
    %670 = vector.broadcast %cst_507 : bf16 to vector<8x512xbf16>
    %671 = vector.shape_cast %669 : vector<1x512xi1> to vector<1x512xi1>
    %672 = vector.broadcast %671 : vector<1x512xi1> to vector<8x512xi1>
    %673 = arith.select %672, %665, %670 : vector<8x512xi1>, vector<8x512xbf16>
    %c20_508 = arith.constant 20 : index
    %c0_509 = arith.constant 0 : index
    %c0_510 = arith.constant 0 : index
    %674 = vector.load %arg4[%c20_508, %c0_509, %c0_510] : memref<27x8x8xbf16, #tpu.memory_space<vmem>>, vector<1x8x8xbf16>
    %675 = vector.shape_cast %674 : vector<1x8x8xbf16> to vector<8x8xbf16>
    %cst_511 = arith.constant dense<0.000000e+00> : vector<8x512xf32>
    %676 = tpu.matmul %675, %673, %cst_511 {dimension_numbers = #tpu.dot_dimension_numbers<[1], [0], [0], [1], [0, 0, 1, 1], [], []>} : vector<8x8xbf16>, vector<8x512xbf16>, vector<8x512xf32> -> vector<8x512xf32>
    %677 = arith.addf %664, %676 : vector<8x512xf32>
    %c0_512 = arith.constant 0 : index
    %c191_513 = arith.constant 191 : index
    %678 = vector.load %arg6[%c0_512, %c191_513] : memref<8x768xbf16, #tpu.memory_space<vmem>>, vector<8x512xbf16>
    %c21_514 = arith.constant 21 : index
    %c0_515 = arith.constant 0 : index
    %c0_516 = arith.constant 0 : index
    %679 = vector.load %arg2[%c21_514, %c0_515, %c0_516] : memref<27x1x512xf32, #tpu.memory_space<vmem>>, vector<1x1x512xf32>
    %680 = vector.shape_cast %679 : vector<1x1x512xf32> to vector<1x512xf32>
    %cst_517 = arith.constant 5.000000e-01 : f32
    %681 = vector.broadcast %cst_517 : f32 to vector<1x512xf32>
    %682 = arith.cmpf ogt, %680, %681 : vector<1x512xf32>
    %cst_518 = arith.constant 0.000000e+00 : bf16
    %683 = vector.broadcast %cst_518 : bf16 to vector<8x512xbf16>
    %684 = vector.shape_cast %682 : vector<1x512xi1> to vector<1x512xi1>
    %685 = vector.broadcast %684 : vector<1x512xi1> to vector<8x512xi1>
    %686 = arith.select %685, %678, %683 : vector<8x512xi1>, vector<8x512xbf16>
    %c21_519 = arith.constant 21 : index
    %c0_520 = arith.constant 0 : index
    %c0_521 = arith.constant 0 : index
    %687 = vector.load %arg4[%c21_519, %c0_520, %c0_521] : memref<27x8x8xbf16, #tpu.memory_space<vmem>>, vector<1x8x8xbf16>
    %688 = vector.shape_cast %687 : vector<1x8x8xbf16> to vector<8x8xbf16>
    %cst_522 = arith.constant dense<0.000000e+00> : vector<8x512xf32>
    %689 = tpu.matmul %688, %686, %cst_522 {dimension_numbers = #tpu.dot_dimension_numbers<[1], [0], [0], [1], [0, 0, 1, 1], [], []>} : vector<8x8xbf16>, vector<8x512xbf16>, vector<8x512xf32> -> vector<8x512xf32>
    %690 = arith.addf %677, %689 : vector<8x512xf32>
    %c0_523 = arith.constant 0 : index
    %c192_524 = arith.constant 192 : index
    %691 = vector.load %arg6[%c0_523, %c192_524] : memref<8x768xbf16, #tpu.memory_space<vmem>>, vector<8x512xbf16>
    %c22_525 = arith.constant 22 : index
    %c0_526 = arith.constant 0 : index
    %c0_527 = arith.constant 0 : index
    %692 = vector.load %arg2[%c22_525, %c0_526, %c0_527] : memref<27x1x512xf32, #tpu.memory_space<vmem>>, vector<1x1x512xf32>
    %693 = vector.shape_cast %692 : vector<1x1x512xf32> to vector<1x512xf32>
    %cst_528 = arith.constant 5.000000e-01 : f32
    %694 = vector.broadcast %cst_528 : f32 to vector<1x512xf32>
    %695 = arith.cmpf ogt, %693, %694 : vector<1x512xf32>
    %cst_529 = arith.constant 0.000000e+00 : bf16
    %696 = vector.broadcast %cst_529 : bf16 to vector<8x512xbf16>
    %697 = vector.shape_cast %695 : vector<1x512xi1> to vector<1x512xi1>
    %698 = vector.broadcast %697 : vector<1x512xi1> to vector<8x512xi1>
    %699 = arith.select %698, %691, %696 : vector<8x512xi1>, vector<8x512xbf16>
    %c22_530 = arith.constant 22 : index
    %c0_531 = arith.constant 0 : index
    %c0_532 = arith.constant 0 : index
    %700 = vector.load %arg4[%c22_530, %c0_531, %c0_532] : memref<27x8x8xbf16, #tpu.memory_space<vmem>>, vector<1x8x8xbf16>
    %701 = vector.shape_cast %700 : vector<1x8x8xbf16> to vector<8x8xbf16>
    %cst_533 = arith.constant dense<0.000000e+00> : vector<8x512xf32>
    %702 = tpu.matmul %701, %699, %cst_533 {dimension_numbers = #tpu.dot_dimension_numbers<[1], [0], [0], [1], [0, 0, 1, 1], [], []>} : vector<8x8xbf16>, vector<8x512xbf16>, vector<8x512xf32> -> vector<8x512xf32>
    %703 = arith.addf %690, %702 : vector<8x512xf32>
    %c0_534 = arith.constant 0 : index
    %c193_535 = arith.constant 193 : index
    %704 = vector.load %arg6[%c0_534, %c193_535] : memref<8x768xbf16, #tpu.memory_space<vmem>>, vector<8x512xbf16>
    %c23_536 = arith.constant 23 : index
    %c0_537 = arith.constant 0 : index
    %c0_538 = arith.constant 0 : index
    %705 = vector.load %arg2[%c23_536, %c0_537, %c0_538] : memref<27x1x512xf32, #tpu.memory_space<vmem>>, vector<1x1x512xf32>
    %706 = vector.shape_cast %705 : vector<1x1x512xf32> to vector<1x512xf32>
    %cst_539 = arith.constant 5.000000e-01 : f32
    %707 = vector.broadcast %cst_539 : f32 to vector<1x512xf32>
    %708 = arith.cmpf ogt, %706, %707 : vector<1x512xf32>
    %cst_540 = arith.constant 0.000000e+00 : bf16
    %709 = vector.broadcast %cst_540 : bf16 to vector<8x512xbf16>
    %710 = vector.shape_cast %708 : vector<1x512xi1> to vector<1x512xi1>
    %711 = vector.broadcast %710 : vector<1x512xi1> to vector<8x512xi1>
    %712 = arith.select %711, %704, %709 : vector<8x512xi1>, vector<8x512xbf16>
    %c23_541 = arith.constant 23 : index
    %c0_542 = arith.constant 0 : index
    %c0_543 = arith.constant 0 : index
    %713 = vector.load %arg4[%c23_541, %c0_542, %c0_543] : memref<27x8x8xbf16, #tpu.memory_space<vmem>>, vector<1x8x8xbf16>
    %714 = vector.shape_cast %713 : vector<1x8x8xbf16> to vector<8x8xbf16>
    %cst_544 = arith.constant dense<0.000000e+00> : vector<8x512xf32>
    %715 = tpu.matmul %714, %712, %cst_544 {dimension_numbers = #tpu.dot_dimension_numbers<[1], [0], [0], [1], [0, 0, 1, 1], [], []>} : vector<8x8xbf16>, vector<8x512xbf16>, vector<8x512xf32> -> vector<8x512xf32>
    %716 = arith.addf %703, %715 : vector<8x512xf32>
    %c0_545 = arith.constant 0 : index
    %c199_546 = arith.constant 199 : index
    %717 = vector.load %arg6[%c0_545, %c199_546] : memref<8x768xbf16, #tpu.memory_space<vmem>>, vector<8x512xbf16>
    %c24_547 = arith.constant 24 : index
    %c0_548 = arith.constant 0 : index
    %c0_549 = arith.constant 0 : index
    %718 = vector.load %arg2[%c24_547, %c0_548, %c0_549] : memref<27x1x512xf32, #tpu.memory_space<vmem>>, vector<1x1x512xf32>
    %719 = vector.shape_cast %718 : vector<1x1x512xf32> to vector<1x512xf32>
    %cst_550 = arith.constant 5.000000e-01 : f32
    %720 = vector.broadcast %cst_550 : f32 to vector<1x512xf32>
    %721 = arith.cmpf ogt, %719, %720 : vector<1x512xf32>
    %cst_551 = arith.constant 0.000000e+00 : bf16
    %722 = vector.broadcast %cst_551 : bf16 to vector<8x512xbf16>
    %723 = vector.shape_cast %721 : vector<1x512xi1> to vector<1x512xi1>
    %724 = vector.broadcast %723 : vector<1x512xi1> to vector<8x512xi1>
    %725 = arith.select %724, %717, %722 : vector<8x512xi1>, vector<8x512xbf16>
    %c24_552 = arith.constant 24 : index
    %c0_553 = arith.constant 0 : index
    %c0_554 = arith.constant 0 : index
    %726 = vector.load %arg4[%c24_552, %c0_553, %c0_554] : memref<27x8x8xbf16, #tpu.memory_space<vmem>>, vector<1x8x8xbf16>
    %727 = vector.shape_cast %726 : vector<1x8x8xbf16> to vector<8x8xbf16>
    %cst_555 = arith.constant dense<0.000000e+00> : vector<8x512xf32>
    %728 = tpu.matmul %727, %725, %cst_555 {dimension_numbers = #tpu.dot_dimension_numbers<[1], [0], [0], [1], [0, 0, 1, 1], [], []>} : vector<8x8xbf16>, vector<8x512xbf16>, vector<8x512xf32> -> vector<8x512xf32>
    %729 = arith.addf %716, %728 : vector<8x512xf32>
    %c0_556 = arith.constant 0 : index
    %c200_557 = arith.constant 200 : index
    %730 = vector.load %arg6[%c0_556, %c200_557] : memref<8x768xbf16, #tpu.memory_space<vmem>>, vector<8x512xbf16>
    %c25_558 = arith.constant 25 : index
    %c0_559 = arith.constant 0 : index
    %c0_560 = arith.constant 0 : index
    %731 = vector.load %arg2[%c25_558, %c0_559, %c0_560] : memref<27x1x512xf32, #tpu.memory_space<vmem>>, vector<1x1x512xf32>
    %732 = vector.shape_cast %731 : vector<1x1x512xf32> to vector<1x512xf32>
    %cst_561 = arith.constant 5.000000e-01 : f32
    %733 = vector.broadcast %cst_561 : f32 to vector<1x512xf32>
    %734 = arith.cmpf ogt, %732, %733 : vector<1x512xf32>
    %cst_562 = arith.constant 0.000000e+00 : bf16
    %735 = vector.broadcast %cst_562 : bf16 to vector<8x512xbf16>
    %736 = vector.shape_cast %734 : vector<1x512xi1> to vector<1x512xi1>
    %737 = vector.broadcast %736 : vector<1x512xi1> to vector<8x512xi1>
    %738 = arith.select %737, %730, %735 : vector<8x512xi1>, vector<8x512xbf16>
    %c25_563 = arith.constant 25 : index
    %c0_564 = arith.constant 0 : index
    %c0_565 = arith.constant 0 : index
    %739 = vector.load %arg4[%c25_563, %c0_564, %c0_565] : memref<27x8x8xbf16, #tpu.memory_space<vmem>>, vector<1x8x8xbf16>
    %740 = vector.shape_cast %739 : vector<1x8x8xbf16> to vector<8x8xbf16>
    %cst_566 = arith.constant dense<0.000000e+00> : vector<8x512xf32>
    %741 = tpu.matmul %740, %738, %cst_566 {dimension_numbers = #tpu.dot_dimension_numbers<[1], [0], [0], [1], [0, 0, 1, 1], [], []>} : vector<8x8xbf16>, vector<8x512xbf16>, vector<8x512xf32> -> vector<8x512xf32>
    %742 = arith.addf %729, %741 : vector<8x512xf32>
    %c0_567 = arith.constant 0 : index
    %c201_568 = arith.constant 201 : index
    %743 = vector.load %arg6[%c0_567, %c201_568] : memref<8x768xbf16, #tpu.memory_space<vmem>>, vector<8x512xbf16>
    %c26_569 = arith.constant 26 : index
    %c0_570 = arith.constant 0 : index
    %c0_571 = arith.constant 0 : index
    %744 = vector.load %arg2[%c26_569, %c0_570, %c0_571] : memref<27x1x512xf32, #tpu.memory_space<vmem>>, vector<1x1x512xf32>
    %745 = vector.shape_cast %744 : vector<1x1x512xf32> to vector<1x512xf32>
    %cst_572 = arith.constant 5.000000e-01 : f32
    %746 = vector.broadcast %cst_572 : f32 to vector<1x512xf32>
    %747 = arith.cmpf ogt, %745, %746 : vector<1x512xf32>
    %cst_573 = arith.constant 0.000000e+00 : bf16
    %748 = vector.broadcast %cst_573 : bf16 to vector<8x512xbf16>
    %749 = vector.shape_cast %747 : vector<1x512xi1> to vector<1x512xi1>
    %750 = vector.broadcast %749 : vector<1x512xi1> to vector<8x512xi1>
    %751 = arith.select %750, %743, %748 : vector<8x512xi1>, vector<8x512xbf16>
    %c26_574 = arith.constant 26 : index
    %c0_575 = arith.constant 0 : index
    %c0_576 = arith.constant 0 : index
    %752 = vector.load %arg4[%c26_574, %c0_575, %c0_576] : memref<27x8x8xbf16, #tpu.memory_space<vmem>>, vector<1x8x8xbf16>
    %753 = vector.shape_cast %752 : vector<1x8x8xbf16> to vector<8x8xbf16>
    %cst_577 = arith.constant dense<0.000000e+00> : vector<8x512xf32>
    %754 = tpu.matmul %753, %751, %cst_577 {dimension_numbers = #tpu.dot_dimension_numbers<[1], [0], [0], [1], [0, 0, 1, 1], [], []>} : vector<8x8xbf16>, vector<8x512xbf16>, vector<8x512xf32> -> vector<8x512xf32>
    %755 = arith.addf %742, %754 : vector<8x512xf32>
    %cst_578 = arith.constant dense<0.000000e+00> : vector<8xf32>
    %756 = vector.multi_reduction <add>, %755, %cst_578 [1] : vector<8x512xf32> to vector<8xf32>
    %757 = vector.shape_cast %756 : vector<8xf32> to vector<8x1xf32>
    %cst_579 = arith.constant 0.001953125 : f32
    %758 = vector.broadcast %cst_579 : f32 to vector<8x1xf32>
    %759 = arith.mulf %757, %758 : vector<8x1xf32>
    %760 = vector.broadcast %759 : vector<8x1xf32> to vector<8x512xf32>
    %761 = arith.subf %755, %760 : vector<8x512xf32>
    %762 = arith.mulf %761, %761 : vector<8x512xf32>
    %cst_580 = arith.constant dense<0.000000e+00> : vector<8xf32>
    %763 = vector.multi_reduction <add>, %762, %cst_580 [1] : vector<8x512xf32> to vector<8xf32>
    %764 = vector.shape_cast %763 : vector<8xf32> to vector<8x1xf32>
    %cst_581 = arith.constant 0.001953125 : f32
    %765 = vector.broadcast %cst_581 : f32 to vector<8x1xf32>
    %766 = arith.mulf %764, %765 : vector<8x1xf32>
    %cst_582 = arith.constant 0.000000e+00 : f32
    %767 = vector.broadcast %cst_582 : f32 to vector<8x1xf32>
    %768 = arith.maximumf %766, %767 : vector<8x1xf32>
    %cst_583 = arith.constant 9.99999974E-6 : f32
    %769 = vector.broadcast %cst_583 : f32 to vector<8x1xf32>
    %770 = arith.addf %768, %769 : vector<8x1xf32>
    %771 = math.rsqrt %770 : vector<8x1xf32>
    %772 = vector.broadcast %771 : vector<8x1xf32> to vector<8x512xf32>
    %773 = arith.mulf %761, %772 : vector<8x512xf32>
    %cst_584 = arith.constant 0.000000e+00 : f32
    %774 = vector.broadcast %cst_584 : f32 to vector<8x512xf32>
    %775 = arith.cmpf ogt, %773, %774 : vector<8x512xf32>
    %cst_585 = arith.constant 0.00999999977 : f32
    %776 = vector.broadcast %cst_585 : f32 to vector<8x512xf32>
    %777 = arith.mulf %776, %773 : vector<8x512xf32>
    %778 = arith.select %775, %773, %777 : vector<8x512xi1>, vector<8x512xf32>
    %c0_586 = arith.constant 0 : index
    %c0_587 = arith.constant 0 : index
    %c0_588 = arith.constant 0 : index
    %779 = vector.load %arg5[%c0_586, %c0_587, %c0_588] : memref<1x8x512xf32, #tpu.memory_space<vmem>>, vector<1x8x512xf32>
    %780 = vector.shape_cast %779 : vector<1x8x512xf32> to vector<8x512xf32>
    %781 = vector.shape_cast %778 : vector<8x512xf32> to vector<1x8x512xf32>
    tpu.vector_store %arg5[%c0_586, %c0_587, %c0_588], %781 {strides = array<i32>} : memref<1x8x512xf32, #tpu.memory_space<vmem>>, vector<1x8x512xf32>,
    return
  }
  func.func @transform_0(%arg0: i32) -> (i32, i32, i32) {
    %c0_i32 = arith.constant 0 : i32
    %c0_i32_0 = arith.constant 0 : i32
    %c0_i32_1 = arith.constant 0 : i32
    return %arg0, %c0_i32, %c0_i32_0 : i32, i32, i32
  }
  func.func @transform_1(%arg0: i32) -> (i32, i32, i32) {
    %c0_i32 = arith.constant 0 : i32
    %c0_i32_0 = arith.constant 0 : i32
    %c0_i32_1 = arith.constant 0 : i32
    %c0_i32_2 = arith.constant 0 : i32
    return %c0_i32, %c0_i32_0, %c0_i32_1 : i32, i32, i32
  }
  func.func @transform_2(%arg0: i32) -> (i32, i32, i32) {
    %c0_i32 = arith.constant 0 : i32
    %c0_i32_0 = arith.constant 0 : i32
    %c0_i32_1 = arith.constant 0 : i32
    %c0_i32_2 = arith.constant 0 : i32
    return %c0_i32, %c0_i32_0, %c0_i32_1 : i32, i32, i32
  }
  func.func @transform_3(%arg0: i32) -> (i32, i32, i32) {
    %c0_i32 = arith.constant 0 : i32
    %c0_i32_0 = arith.constant 0 : i32
    %c0_i32_1 = arith.constant 0 : i32
    %c0_i32_2 = arith.constant 0 : i32
    return %c0_i32, %c0_i32_0, %c0_i32_1 : i32, i32, i32
  }
  func.func @transform_4(%arg0: i32) -> (i32, i32, i32) {
    %c0_i32 = arith.constant 0 : i32
    %c0_i32_0 = arith.constant 0 : i32
    %c0_i32_1 = arith.constant 0 : i32
    return %arg0, %c0_i32, %c0_i32_0 : i32, i32, i32
  }
}

</mosaic_0001>

<llo_original>
// kernel: tpu_custom_call.1
$region0: #{tpu_custom_call.1}
  #allocation0 [shape = 'u32[]', space=smem, size = 0x4, offset = 0x4, fixed_abs, tag = 'smem constant byte address 0x4 - core index']
  #allocation1 [shape = 'u32[144,128]{1,0:T(1,128)}', space=vmem, size = 0x12000, scoped, tag = 'internal scratch']
  #allocation2 [shape = 'bf16[8,768]{1,0:T(8,128)(2,1)}', space=vmem, size = 0x3000, scoped, tag = 'scratch operand']
  %s0 = inlined_call_operand.vmem [shape: bf16[2,8,768], index: 0, kind: input, shape index: {}]
  %s1 = inlined_call_operand.vmem [shape: f32[27,1,512], index: 1, kind: input, shape index: {}]
  %s2 = inlined_call_operand.vmem [shape: bf16[27,8,8], index: 2, kind: input, shape index: {}]
  %s3 = inlined_call_operand.vmem [shape: bf16[27,8,8], index: 3, kind: input, shape index: {}]
  %s4 = inlined_call_operand.hbm [shape: f32[2,8,512], index: 4, kind: output, shape index: {}]
  %s5 = sld [smem:[#allocation0]]
  $region49: #{tpu_custom_call.1} parent=0
    _
  %s7 = ssub.s32 1, %s5
  %s8 = scalar_select 0, %s7, %s5
  $region1: #{tpu_custom_call.1} parent=0
    #allocation3 [shape = 'u8[32768]{0}', space=vmem, size = 0x8000, scoped, tag = 'output window, operand 0']
    #allocation4 [shape = 's32[2]{0}', space=sflag, size = 0x8, scoped, tag = 'scoped memory for tpu_custom_call.1']
    %9 = vsyncpa [#allocation4], 0
    %s10 = scalar_lea.sflag [#allocation4], 1
    %11 = vsyncpa %s10, 0
    loop: start=0, step=1, limit=4
    $region2: #{tpu_custom_call.1} parent=1 // loop_pre_header
      _
    $region3: #{tpu_custom_call.1} parent=1 // loop_header
      %s13 = sphi 0, %s17
      %p14 = scmp.ge.s32.totalorder %s13, 4
      %s23 = sphi 0, %s25
      %s26 = sphi 0, %s23
      %s27 = sphi 0, %s26
      %s43 = sphi 0, %s27
      %s47 = sphi 0, %s47
      %s49 = sphi 0, %s47
      %s50 = sphi 0, %s49
      %s64 = sphi 0, %s50
      %s68 = sphi 0, %s68
      %s70 = sphi 0, %s68
      %s71 = sphi 0, %s70
      %s85 = sphi 0, %s71
      %s89 = sphi 0, %s89
      %s91 = sphi 0, %s89
      %s92 = sphi 0, %s91
      %s106 = sphi 0, %s92
      %s112 = sphi 0, %s114
      %s115 = sphi 0, %s112
      %s116 = sphi 0, %s115
      %s132 = sphi 0, %s116
    $region4: #{tpu_custom_call.1} parent=1 // loop_header_branch
      %16 = sbr.rel (%p14) target = $region8
    $region5: #{tpu_custom_call.1} parent=1 // loop_body
      %s18 = ssub.s32 %s13, 1
      %s19 = ssub.s32 %s13, 2
      %s20 = sadd.s32 %s13, 1
      %s21 = ssub.s32 %s13, %s20
      %p22 = scmp.eq.s32.totalorder %s21, 0
      %s24 = sadd.s32 %s23, 1
      %s25 = scalar_select %p22, %s23, %s24
      %p28 = pneg %p22
      %p29 = scmp.eq.s32.totalorder %s13, 1
      %p30 = por %p28, %p29
      %p31 = scmp.ne.s32.totalorder %s23, %s26
      %p32 = scmp.eq.s32.totalorder %s13, 0
      %p33 = por %p31, %p32
      %p34 = scmp.ne.s32.totalorder %s23, %s26
      %p35 = scmp.eq.s32.totalorder %s18, 1
      %p36 = por %p34, %p35
      %p37 = scmp.ne.s32.totalorder %s26, %s27
      %p38 = scmp.eq.s32.totalorder %s18, 0
      %p39 = por %p37, %p38
      %p40 = scmp.ne.s32.totalorder %s26, %s27
      %p41 = scmp.eq.s32.totalorder %s19, 1
      %p42 = por %p40, %p41
      %p44 = scmp.ne.s32.totalorder %s27, %s43
      %p45 = scmp.eq.s32.totalorder %s19, 0
      %p46 = por %p44, %p45
      %s48 = sadd.s32 %s47, 1
      %p51 = scmp.eq.s32.totalorder %s13, 1
      %p52 = scmp.ne.s32.totalorder %s47, %s49
      %p53 = scmp.eq.s32.totalorder %s13, 0
      %p54 = por %p52, %p53
      %p55 = scmp.ne.s32.totalorder %s47, %s49
      %p56 = scmp.eq.s32.totalorder %s18, 1
      %p57 = por %p55, %p56
      %p58 = scmp.ne.s32.totalorder %s49, %s50
      %p59 = scmp.eq.s32.totalorder %s18, 0
      %p60 = por %p58, %p59
      %p61 = scmp.ne.s32.totalorder %s49, %s50
      %p62 = scmp.eq.s32.totalorder %s19, 1
      %p63 = por %p61, %p62
      %p65 = scmp.ne.s32.totalorder %s50, %s64
      %p66 = scmp.eq.s32.totalorder %s19, 0
      %p67 = por %p65, %p66
      %s69 = sadd.s32 %s68, 1
      %p72 = scmp.eq.s32.totalorder %s13, 1
      %p73 = scmp.ne.s32.totalorder %s68, %s70
      %p74 = scmp.eq.s32.totalorder %s13, 0
      %p75 = por %p73, %p74
      %p76 = scmp.ne.s32.totalorder %s68, %s70
      %p77 = scmp.eq.s32.totalorder %s18, 1
      %p78 = por %p76, %p77
      %p79 = scmp.ne.s32.totalorder %s70, %s71
      %p80 = scmp.eq.s32.totalorder %s18, 0
      %p81 = por %p79, %p80
      %p82 = scmp.ne.s32.totalorder %s70, %s71
      %p83 = scmp.eq.s32.totalorder %s19, 1
      %p84 = por %p82, %p83
      %p86 = scmp.ne.s32.totalorder %s71, %s85
      %p87 = scmp.eq.s32.totalorder %s19, 0
      %p88 = por %p86, %p87
      %s90 = sadd.s32 %s89, 1
      %p93 = scmp.eq.s32.totalorder %s13, 1
      %p94 = scmp.ne.s32.totalorder %s89, %s91
      %p95 = scmp.eq.s32.totalorder %s13, 0
      %p96 = por %p94, %p95
      %p97 = scmp.ne.s32.totalorder %s89, %s91
      %p98 = scmp.eq.s32.totalorder %s18, 1
      %p99 = por %p97, %p98
      %p100 = scmp.ne.s32.totalorder %s91, %s92
      %p101 = scmp.eq.s32.totalorder %s18, 0
      %p102 = por %p100, %p101
      %p103 = scmp.ne.s32.totalorder %s91, %s92
      %p104 = scmp.eq.s32.totalorder %s19, 1
      %p105 = por %p103, %p104
      %p107 = scmp.ne.s32.totalorder %s92, %s106
      %p108 = scmp.eq.s32.totalorder %s19, 0
      %p109 = por %p107, %p108
      %s110 = ssub.s32 %s13, %s20
      %p111 = scmp.eq.s32.totalorder %s110, 0
      %s113 = sadd.s32 %s112, 1
      %s114 = scalar_select %p111, %s112, %s113
      %p117 = pneg %p111
      %p118 = scmp.eq.s32.totalorder %s13, 1
      %p119 = por %p117, %p118
      %p120 = scmp.ne.s32.totalorder %s112, %s115
      %p121 = scmp.eq.s32.totalorder %s13, 0
      %p122 = por %p120, %p121
      %p123 = scmp.ne.s32.totalorder %s112, %s115
      %p124 = scmp.eq.s32.totalorder %s18, 1
      %p125 = por %p123, %p124
      %p126 = scmp.ne.s32.totalorder %s115, %s116
      %p127 = scmp.eq.s32.totalorder %s18, 0
      %p128 = por %p126, %p127
      %p129 = scmp.ne.s32.totalorder %s115, %s116
      %p130 = scmp.eq.s32.totalorder %s19, 1
      %p131 = por %p129, %p130
      %p133 = scmp.ne.s32.totalorder %s116, %s132
      %p134 = scmp.eq.s32.totalorder %s19, 0
      %p135 = por %p133, %p134
      %p136 = scmp.le.s32.totalorder 1, %s13
      %p137 = scmp.lt.s32.totalorder %s13, 3
      %p138 = pnand %p136, %p137
      %p139 = pneg %p138
      // Predicated region
      $region9: #{tpu_custom_call.1} parent=5 // pred_check
        _
      $region10: #{tpu_custom_call.1} parent=5 // pred_check_branch
        %141 = sbr.rel (%p138) target = $region12
      $region11: #{tpu_custom_call.1} parent=5 // pred_region
        %s142 = ssub.s32 %s13, 1
        // Predicated region
        $region13: #{tpu_custom_call.1} parent=11 // pred_check
          %p143 = pneg %p60
        $region14: #{tpu_custom_call.1} parent=11 // pred_check_branch
          %145 = sbr.rel (%p143) target = $region16
        $region15: #{tpu_custom_call.1} parent=11 // pred_region
          _
        $region16: #{tpu_custom_call.1} parent=11 // pred_fallthru
          _
        // Predicated region
        $region17: #{tpu_custom_call.1} parent=11 // pred_check
          %p146 = pneg %p81
        $region18: #{tpu_custom_call.1} parent=11 // pred_check_branch
          %148 = sbr.rel (%p146) target = $region20
        $region19: #{tpu_custom_call.1} parent=11 // pred_region
          _
        $region20: #{tpu_custom_call.1} parent=11 // pred_fallthru
          _
        // Predicated region
        $region21: #{tpu_custom_call.1} parent=11 // pred_check
          %p149 = pneg %p102
        $region22: #{tpu_custom_call.1} parent=11 // pred_check_branch
          %151 = sbr.rel (%p149) target = $region24
        $region23: #{tpu_custom_call.1} parent=11 // pred_region
          _
        $region24: #{tpu_custom_call.1} parent=11 // pred_fallthru
          _
      $region12: #{tpu_custom_call.1} parent=5 // pred_fallthru
        _
      %p152 = scmp.lt.s32.totalorder %s13, 2
      // Predicated region
      $region25: #{tpu_custom_call.1} parent=5 // pred_check
        %p153 = pneg %p152
      $region26: #{tpu_custom_call.1} parent=5 // pred_check_branch
        %155 = sbr.rel (%p153) target = $region28
      $region27: #{tpu_custom_call.1} parent=5 // pred_region
        // Predicated region
        $region29: #{tpu_custom_call.1} parent=27 // pred_check
          %p156 = pneg %p33
        $region30: #{tpu_custom_call.1} parent=27 // pred_check_branch
          %158 = sbr.rel (%p156) target = $region32
        $region31: #{tpu_custom_call.1} parent=27 // pred_region
          %p159 = scmp.lt.s32.totalorder %s13, 1
          %s160 = scalar_select %p159, %s13, 1
          %s161 = smul.addr %s160, 6
          %s162 = smul.addr %s161, 4
          %s163 = scalar_lea.vmem %s0, %s162
        $region32: #{tpu_custom_call.1} parent=27 // pred_fallthru
          _
      $region28: #{tpu_custom_call.1} parent=5 // pred_fallthru
        _
      %p164 = scmp.le.s32.totalorder 1, %s13
      %p165 = scmp.lt.s32.totalorder %s13, 3
      %p166 = pnand %p164, %p165
      %p167 = pneg %p166
      // Predicated region
      $region33: #{tpu_custom_call.1} parent=5 // pred_check
        _
      $region34: #{tpu_custom_call.1} parent=5 // pred_check_branch
        %169 = sbr.rel (%p166) target = $region36
      $region35: #{tpu_custom_call.1} parent=5 // pred_region
        %s170 = ssub.s32 %s13, 1
        %p171 = scmp.lt.s32.totalorder %s18, 1
        %s172 = scalar_select %p171, %s18, 1
        %s173 = smul.addr %s172, 6
        %s174 = smul.addr %s173, 4
        %s175 = scalar_lea.vmem %s0, %s174
        %p176 = pneg %p39
        %p177 = pneg %p36
        %p178 = pneg %p60
        %p179 = pneg %p57
        %p180 = pneg %p81
        %p181 = pneg %p78
        %p182 = pneg %p102
        %p183 = pneg %p99
        %p184 = pneg %p128
        %p185 = pneg %p125
        %s186 = sand.u32 %s115, 1
        %s187 = scalar_lea.sflag [#allocation4], %s186
        %s188 = sand.u32 %s115, 1
        %s189 = smul.addr %s188, 32
        %s190 = scalar_lea.vmem [#allocation3], %s189
        %p191 = scmp.lt.s32.totalorder %s18, 1
        %s192 = scalar_select %p191, %s18, 1
        %s193 = smul.addr %s192, 6
        %s194 = smul.addr %s193, 4
        %s195 = scalar_lea.vmem %s0, %s194
        %v199 = vld [vmem:[%s195] sm:$0xff]
        %v200 = vld [vmem:[%s195 + $0x8] sm:$0xff]
        %v201 = vld [vmem:[%s195 + $0x10] sm:$0xf]
        %v202 = vld [vmem:[%s1] sm:$0xf]
        %vm203 = vcmp.gt.f32.partialorder %v202, 0.5
        %v204 = vsel %vm203, 1, 0
        %v205 = vlaneseq
        %v206 = vshrl.u32 %v205, 7
        %v207 = vsub.s32 0, %v206
        %v208 = vrot.slane %v204, %v207
        %v209 = vlaneseq
        %v210 = vshrl.u32 %v209, 7
        %v211 = vsub.s32 1, %v210
        %v212 = vrot.slane %v204, %v211
        %v213 = vlaneseq
        %v214 = vshrl.u32 %v213, 7
        %v215 = vsub.s32 2, %v214
        %v216 = vrot.slane %v204, %v215
        %v217 = vlaneseq
        %v218 = vshrl.u32 %v217, 7
        %v219 = vsub.s32 3, %v218
        %v220 = vrot.slane %v204, %v219
        %vm221 = vcmp.eq.s32.totalorder %v208, 1
        %vm222 = vcmp.eq.s32.totalorder %v212, 1
        %vm223 = vcmp.eq.s32.totalorder %v216, 1
        %vm224 = vcmp.eq.s32.totalorder %v220, 1
        %vm225 = vmpackc.low %vm222, %vm221
        %vm226 = vmpackc.low %vm224, %vm223
        %v227 = vsel %vm225, 65537, 0
        %v228 = vsel %vm226, 65537, 0
        %229 = vrot.lane.b32.xlu0 %v227, 55
        %v230 = vpop.permute.xlu0 %229
        %231 = vrot.lane.b32.xlu0 %v228, 55
        %v232 = vpop.permute.xlu0 %231
        %v233 = vrot.slane %v230, 4
        %v234 = vrot.slane %v232, 4
        %vm235 = vcmask 449536
        %v236 = vsel %vm235, %v233, %v230
        %vm237 = vcmask 1043456
        %v238 = vsel %vm237, %v233, %v234
        %v239 = vsel %vm235, %v238, %v232
        %vm240 = vcmp.ne.s16.totalorder %v236, 0
        %vm241 = vcmp.ne.s16.totalorder %v239, 0
        %vm242 = vcmp.ne.s16.totalorder %v234, 0
        %v243 = vsel %vm240, %v199, 0
        %v244 = vsel %vm241, %v200, 0
        %v245 = vsel %vm242, %v201, 0
        %v246 = vld [vmem:[%s2] sm:$0xf]
        %s247 = scalar_lea.vmem %s1, 4
        %v248 = vld [vmem:[%s247] sm:$0xf]
        %vm249 = vcmp.gt.f32.partialorder %v248, 0.5
        %v250 = vsel %vm249, 1, 0
        %v251 = vlaneseq
        %v252 = vshrl.u32 %v251, 7
        %v253 = vsub.s32 0, %v252
        %v254 = vrot.slane %v250, %v253
        %v255 = vlaneseq
        %v256 = vshrl.u32 %v255, 7
        %v257 = vsub.s32 1, %v256
        %v258 = vrot.slane %v250, %v257
        %v259 = vlaneseq
        %v260 = vshrl.u32 %v259, 7
        %v261 = vsub.s32 2, %v260
        %v262 = vrot.slane %v250, %v261
        %v263 = vlaneseq
        %v264 = vshrl.u32 %v263, 7
        %v265 = vsub.s32 3, %v264
        %v266 = vrot.slane %v250, %v265
        %vm267 = vcmp.eq.s32.totalorder %v254, 1
        %vm268 = vcmp.eq.s32.totalorder %v258, 1
        %vm269 = vcmp.eq.s32.totalorder %v262, 1
        %vm270 = vcmp.eq.s32.totalorder %v266, 1
        %vm271 = vmpackc.low %vm268, %vm267
        %vm272 = vmpackc.low %vm270, %vm269
        %v273 = vsel %vm271, 65537, 0
        %v274 = vsel %vm272, 65537, 0
        %275 = vrot.lane.b32.xlu0 %v273, 56
        %v276 = vpop.permute.xlu0 %275
        %277 = vrot.lane.b32.xlu0 %v274, 56
        %v278 = vpop.permute.xlu0 %277
        %v279 = vrot.slane %v276, 4
        %v280 = vrot.slane %v278, 4
        %vm281 = vcmask 457728
        %v282 = vsel %vm281, %v279, %v276
        %v283 = vsel %vm237, %v279, %v280
        %v284 = vsel %vm281, %v283, %v278
        %vm285 = vcmp.ne.s16.totalorder %v282, 0
        %vm286 = vcmp.ne.s16.totalorder %v284, 0
        %vm287 = vcmp.ne.s16.totalorder %v280, 0
        %v288 = vsel %vm285, %v199, 0
        %v289 = vsel %vm286, %v200, 0
        %v290 = vsel %vm287, %v201, 0
        %s291 = scalar_lea.vmem %s2, 4
        %v292 = vld [vmem:[%s291] sm:$0xf]
        %v296 = vunpack.c.l.b16 %v288
        %v297 = vunpack.c.h.b16 %v288
        %v298 = vunpack.c.l.b16 %v289
        %v299 = vunpack.c.h.b16 %v289
        %v300 = vunpack.c.l.b16 %v290
        %v301 = vpack.c.b16 %v296, %v296
        %v302 = vpack.c.b16 %v297, %v297
        %v303 = vpack.c.b16 %v298, %v298
        %v304 = vpack.c.b16 %v299, %v299
        %v305 = vpack.c.b16 %v300, %v300
        %306 = vrot.lane.b32.xlu0 %v301, 72
        %v307 = vpop.permute.xlu0 %306
        %308 = vrot.lane.b32.xlu0 %v302, 72
        %v309 = vpop.permute.xlu0 %308
        %310 = vrot.lane.b32.xlu0 %v303, 72
        %v311 = vpop.permute.xlu0 %310
        %312 = vrot.lane.b32.xlu0 %v304, 72
        %v313 = vpop.permute.xlu0 %312
        %314 = vrot.lane.b32.xlu0 %v305, 72
        %v315 = vpop.permute.xlu0 %314
        %vm316 = vcmask 588800
        %v317 = vsel %vm316, %v307, %v309
        %v318 = vsel %vm316, %v309, %v311
        %v319 = vsel %vm316, %v311, %v313
        %v320 = vsel %vm316, %v313, %v315
        %vm321 = vcmask 64512
        %v323 = vsel %vm321, %v292, 0
        %vm325 = vcmask 1043456
        %v327 = vsel %vm325, %v317, 0
        %v330 = vsel %vm325, %v318, 0
        %v333 = vsel %vm325, %v319, 0
        %v336 = vsel %vm325, %v320, 0
        %338 = vmatprep.subr.bf16.mxu0 %v330
        %339 = vmatpush1.bf16.msra.mxu0 %v327
        %340 = vmatprep.subr.bf16.mxu0 0
        %341 = vmatpush1.bf16.msra.mxu0 0
        %342 = vmatprep.subr.bf16.mxu0 0
        %343 = vmatpush1.bf16.msra.mxu0 0
        %344 = vmatprep.subr.bf16.mxu0 0
        %345 = vmatpush1.bf16.msra.mxu0 0
        %346 = vmatprep.subr.bf16.mxu0 0
        %347 = vmatpush1.bf16.msra.mxu0 0
        %348 = vmatprep.subr.bf16.mxu0 0
        %349 = vmatpush1.bf16.msra.mxu0 0
        %350 = vmatprep.subr.bf16.mxu0 0
        %351 = vmatpush1.bf16.msra.mxu0 0
        %352 = vmatprep.subr.bf16.mxu0 0
        %353 = vmatpush1.bf16.msra.mxu0 0
        %354 = vmatprep.subr.bf16.mxu0 0
        %355 = vmatpush1.bf16.msra.mxu0 0
        %356 = vmatprep.subr.bf16.mxu0 0
        %357 = vmatpush1.bf16.msra.mxu0 0
        %358 = vmatprep.subr.bf16.mxu0 0
        %359 = vmatpush1.bf16.msra.mxu0 0
        %360 = vmatprep.subr.bf16.mxu0 0
        %361 = vmatpush1.bf16.msra.mxu0 0
        %362 = vmatprep.subr.bf16.mxu0 0
        %363 = vmatpush1.bf16.msra.mxu0 0
        %364 = vmatprep.subr.bf16.mxu0 0
        %365 = vmatpush1.bf16.msra.mxu0 0
        %366 = vmatprep.subr.bf16.mxu0 0
        %367 = vmatpush1.bf16.msra.mxu0 0
        %368 = vmatprep.subr.bf16.mxu0 0
        %369 = vmatpush1.bf16.msra.mxu0 0
        %370 = vmatprep.mubr.bf16.mxu0 0
        %371 = vmatmul.mubr.bf16.gmra.mrb[0].mxu0 %v323
        %v372 = vpop.f32.mrb[0].mxu0
        %v373 = vadd.f32 0.0, %v372
        %v374 = vpop.f32.mrb[0].mxu0
        %v375 = vadd.f32 0.0, %v374
        %v376 = vpop.f32.mrb[0].mxu0
        %v377 = vpop.f32.mrb[0].mxu0
        %378 = vdwg.mxu0
        %379 = vmatprep.subr.bf16.mxu0 %v336
        %380 = vmatpush1.bf16.msra.mxu0 %v333
        %381 = vmatprep.subr.bf16.mxu0 0
        %382 = vmatpush1.bf16.msra.mxu0 0
        %383 = vmatprep.subr.bf16.mxu0 0
        %384 = vmatpush1.bf16.msra.mxu0 0
        %385 = vmatprep.subr.bf16.mxu0 0
        %386 = vmatpush1.bf16.msra.mxu0 0
        %387 = vmatprep.subr.bf16.mxu0 0
        %388 = vmatpush1.bf16.msra.mxu0 0
        %389 = vmatprep.subr.bf16.mxu0 0
        %390 = vmatpush1.bf16.msra.mxu0 0
        %391 = vmatprep.subr.bf16.mxu0 0
        %392 = vmatpush1.bf16.msra.mxu0 0
        %393 = vmatprep.subr.bf16.mxu0 0
        %394 = vmatpush1.bf16.msra.mxu0 0
        %395 = vmatprep.subr.bf16.mxu0 0
        %396 = vmatpush1.bf16.msra.mxu0 0
        %397 = vmatprep.subr.bf16.mxu0 0
        %398 = vmatpush1.bf16.msra.mxu0 0
        %399 = vmatprep.subr.bf16.mxu0 0
        %400 = vmatpush1.bf16.msra.mxu0 0
        %401 = vmatprep.subr.bf16.mxu0 0
        %402 = vmatpush1.bf16.msra.mxu0 0
        %403 = vmatprep.subr.bf16.mxu0 0
        %404 = vmatpush1.bf16.msra.mxu0 0
        %405 = vmatprep.subr.bf16.mxu0 0
        %406 = vmatpush1.bf16.msra.mxu0 0
        %407 = vmatprep.subr.bf16.mxu0 0
        %408 = vmatpush1.bf16.msra.mxu0 0
        %409 = vmatprep.subr.bf16.mxu0 0
        %410 = vmatpush1.bf16.msra.mxu0 0
        %411 = vmatprep.mubr.bf16.mxu0 0
        %412 = vmatmul.mubr.bf16.gmra.mrb[0].mxu0 %v323
        %v413 = vpop.f32.mrb[0].mxu0
        %v414 = vadd.f32 0.0, %v413
        %v415 = vpop.f32.mrb[0].mxu0
        %v416 = vadd.f32 0.0, %v415
        %v417 = vpop.f32.mrb[0].mxu0
        %v418 = vpop.f32.mrb[0].mxu0
        %419 = vdwg.mxu0
        %v423 = vunpack.c.l.b16 %v243
        %v424 = vunpack.c.h.b16 %v243
        %v425 = vunpack.c.l.b16 %v244
        %v426 = vunpack.c.h.b16 %v244
        %v427 = vunpack.c.l.b16 %v245
        %v428 = vpack.c.b16 %v423, %v423
        %v429 = vpack.c.b16 %v424, %v424
        %v430 = vpack.c.b16 %v425, %v425
        %v431 = vpack.c.b16 %v426, %v426
        %v432 = vpack.c.b16 %v427, %v427
        %433 = vrot.lane.b32.xlu0 %v428, 73
        %v434 = vpop.permute.xlu0 %433
        %435 = vrot.lane.b32.xlu0 %v429, 73
        %v436 = vpop.permute.xlu0 %435
        %437 = vrot.lane.b32.xlu0 %v430, 73
        %v438 = vpop.permute.xlu0 %437
        %439 = vrot.lane.b32.xlu0 %v431, 73
        %v440 = vpop.permute.xlu0 %439
        %441 = vrot.lane.b32.xlu0 %v432, 73
        %v442 = vpop.permute.xlu0 %441
        %vm443 = vcmask 596992
        %v444 = vsel %vm443, %v434, %v436
        %v445 = vsel %vm443, %v436, %v438
        %v446 = vsel %vm443, %v438, %v440
        %v447 = vsel %vm443, %v440, %v442
        %v449 = vsel %vm321, %v246, 0
        %v452 = vsel %vm325, %v444, 0
        %v455 = vsel %vm325, %v445, 0
        %v458 = vsel %vm325, %v446, 0
        %v461 = vsel %vm325, %v447, 0
        %463 = vmatprep.subr.bf16.mxu0 %v455
        %464 = vmatpush1.bf16.msra.mxu0 %v452
        %465 = vmatprep.subr.bf16.mxu0 0
        %466 = vmatpush1.bf16.msra.mxu0 0
        %467 = vmatprep.subr.bf16.mxu0 0
        %468 = vmatpush1.bf16.msra.mxu0 0
        %469 = vmatprep.subr.bf16.mxu0 0
        %470 = vmatpush1.bf16.msra.mxu0 0
        %471 = vmatprep.subr.bf16.mxu0 0
        %472 = vmatpush1.bf16.msra.mxu0 0
        %473 = vmatprep.subr.bf16.mxu0 0
        %474 = vmatpush1.bf16.msra.mxu0 0
        %475 = vmatprep.subr.bf16.mxu0 0
        %476 = vmatpush1.bf16.msra.mxu0 0
        %477 = vmatprep.subr.bf16.mxu0 0
        %478 = vmatpush1.bf16.msra.mxu0 0
        %479 = vmatprep.subr.bf16.mxu0 0
        %480 = vmatpush1.bf16.msra.mxu0 0
        %481 = vmatprep.subr.bf16.mxu0 0
        %482 = vmatpush1.bf16.msra.mxu0 0
        %483 = vmatprep.subr.bf16.mxu0 0
        %484 = vmatpush1.bf16.msra.mxu0 0
        %485 = vmatprep.subr.bf16.mxu0 0
        %486 = vmatpush1.bf16.msra.mxu0 0
        %487 = vmatprep.subr.bf16.mxu0 0
        %488 = vmatpush1.bf16.msra.mxu0 0
        %489 = vmatprep.subr.bf16.mxu0 0
        %490 = vmatpush1.bf16.msra.mxu0 0
        %491 = vmatprep.subr.bf16.mxu0 0
        %492 = vmatpush1.bf16.msra.mxu0 0
        %493 = vmatprep.subr.bf16.mxu0 0
        %494 = vmatpush1.bf16.msra.mxu0 0
        %495 = vmatprep.mubr.bf16.mxu0 0
        %496 = vmatmul.mubr.bf16.gmra.mrb[0].mxu0 %v449
        %v497 = vpop.f32.mrb[0].mxu0
        %v498 = vadd.f32 %v373, %v497
        %v499 = vpop.f32.mrb[0].mxu0
        %v500 = vadd.f32 %v375, %v499
        %v501 = vpop.f32.mrb[0].mxu0
        %v502 = vpop.f32.mrb[0].mxu0
        %503 = vdwg.mxu0
        %504 = vmatprep.subr.bf16.mxu0 %v461
        %505 = vmatpush1.bf16.msra.mxu0 %v458
        %506 = vmatprep.subr.bf16.mxu0 0
        %507 = vmatpush1.bf16.msra.mxu0 0
        %508 = vmatprep.subr.bf16.mxu0 0
        %509 = vmatpush1.bf16.msra.mxu0 0
        %510 = vmatprep.subr.bf16.mxu0 0
        %511 = vmatpush1.bf16.msra.mxu0 0
        %512 = vmatprep.subr.bf16.mxu0 0
        %513 = vmatpush1.bf16.msra.mxu0 0
        %514 = vmatprep.subr.bf16.mxu0 0
        %515 = vmatpush1.bf16.msra.mxu0 0
        %516 = vmatprep.subr.bf16.mxu0 0
        %517 = vmatpush1.bf16.msra.mxu0 0
        %518 = vmatprep.subr.bf16.mxu0 0
        %519 = vmatpush1.bf16.msra.mxu0 0
        %520 = vmatprep.subr.bf16.mxu0 0
        %521 = vmatpush1.bf16.msra.mxu0 0
        %522 = vmatprep.subr.bf16.mxu0 0
        %523 = vmatpush1.bf16.msra.mxu0 0
        %524 = vmatprep.subr.bf16.mxu0 0
        %525 = vmatpush1.bf16.msra.mxu0 0
        %526 = vmatprep.subr.bf16.mxu0 0
        %527 = vmatpush1.bf16.msra.mxu0 0
        %528 = vmatprep.subr.bf16.mxu0 0
        %529 = vmatpush1.bf16.msra.mxu0 0
        %530 = vmatprep.subr.bf16.mxu0 0
        %531 = vmatpush1.bf16.msra.mxu0 0
        %532 = vmatprep.subr.bf16.mxu0 0
        %533 = vmatpush1.bf16.msra.mxu0 0
        %534 = vmatprep.subr.bf16.mxu0 0
        %535 = vmatpush1.bf16.msra.mxu0 0
        %536 = vmatprep.mubr.bf16.mxu0 0
        %537 = vmatmul.mubr.bf16.gmra.mrb[0].mxu0 %v449
        %v538 = vpop.f32.mrb[0].mxu0
        %v539 = vadd.f32 %v414, %v538
        %v540 = vpop.f32.mrb[0].mxu0
        %v541 = vadd.f32 %v416, %v540
        %v542 = vpop.f32.mrb[0].mxu0
        %v543 = vpop.f32.mrb[0].mxu0
        %544 = vdwg.mxu0
        %s545 = scalar_lea.vmem %s1, 8
        %v546 = vld [vmem:[%s545] sm:$0xf]
        %vm547 = vcmp.gt.f32.partialorder %v546, 0.5
        %v548 = vsel %vm547, 1, 0
        %v549 = vlaneseq
        %v550 = vshrl.u32 %v549, 7
        %v551 = vsub.s32 0, %v550
        %v552 = vrot.slane %v548, %v551
        %v553 = vlaneseq
        %v554 = vshrl.u32 %v553, 7
        %v555 = vsub.s32 1, %v554
        %v556 = vrot.slane %v548, %v555
        %v557 = vlaneseq
        %v558 = vshrl.u32 %v557, 7
        %v559 = vsub.s32 2, %v558
        %v560 = vrot.slane %v548, %v559
        %v561 = vlaneseq
        %v562 = vshrl.u32 %v561, 7
        %v563 = vsub.s32 3, %v562
        %v564 = vrot.slane %v548, %v563
        %vm565 = vcmp.eq.s32.totalorder %v552, 1
        %vm566 = vcmp.eq.s32.totalorder %v556, 1
        %vm567 = vcmp.eq.s32.totalorder %v560, 1
        %vm568 = vcmp.eq.s32.totalorder %v564, 1
        %vm569 = vmpackc.low %vm566, %vm565
        %vm570 = vmpackc.low %vm568, %vm567
        %v571 = vsel %vm569, 65537, 0
        %v572 = vsel %vm570, 65537, 0
        %573 = vrot.lane.b32.xlu0 %v571, 57
        %v574 = vpop.permute.xlu0 %573
        %575 = vrot.lane.b32.xlu0 %v572, 57
        %v576 = vpop.permute.xlu0 %575
        %v577 = vrot.slane %v574, 4
        %v578 = vrot.slane %v576, 4
        %vm579 = vcmask 465920
        %v580 = vsel %vm579, %v577, %v574
        %v581 = vsel %vm237, %v577, %v578
        %v582 = vsel %vm579, %v581, %v576
        %vm583 = vcmp.ne.s16.totalorder %v580, 0
        %vm584 = vcmp.ne.s16.totalorder %v582, 0
        %vm585 = vcmp.ne.s16.totalorder %v578, 0
        %v586 = vsel %vm583, %v199, 0
        %v587 = vsel %vm584, %v200, 0
        %v588 = vsel %vm585, %v201, 0
        %s589 = scalar_lea.vmem %s2, 8
        %v590 = vld [vmem:[%s589] sm:$0xf]
        %v594 = vunpack.c.l.b16 %v586
        %v595 = vunpack.c.h.b16 %v586
        %v596 = vunpack.c.l.b16 %v587
        %v597 = vunpack.c.h.b16 %v587
        %v598 = vunpack.c.l.b16 %v588
        %v599 = vpack.c.b16 %v594, %v594
        %v600 = vpack.c.b16 %v595, %v595
        %v601 = vpack.c.b16 %v596, %v596
        %v602 = vpack.c.b16 %v597, %v597
        %v603 = vpack.c.b16 %v598, %v598
        %604 = vrot.lane.b32.xlu0 %v599, 71
        %v605 = vpop.permute.xlu0 %604
        %606 = vrot.lane.b32.xlu0 %v600, 71
        %v607 = vpop.permute.xlu0 %606
        %608 = vrot.lane.b32.xlu0 %v601, 71
        %v609 = vpop.permute.xlu0 %608
        %610 = vrot.lane.b32.xlu0 %v602, 71
        %v611 = vpop.permute.xlu0 %610
        %612 = vrot.lane.b32.xlu0 %v603, 71
        %v613 = vpop.permute.xlu0 %612
        %vm614 = vcmask 580608
        %v615 = vsel %vm614, %v605, %v607
        %v616 = vsel %vm614, %v607, %v609
        %v617 = vsel %vm614, %v609, %v611
        %v618 = vsel %vm614, %v611, %v613
        %v620 = vsel %vm321, %v590, 0
        %v623 = vsel %vm325, %v615, 0
        %v626 = vsel %vm325, %v616, 0
        %v629 = vsel %vm325, %v617, 0
        %v632 = vsel %vm325, %v618, 0
        %634 = vmatprep.subr.bf16.mxu0 %v626
        %635 = vmatpush1.bf16.msra.mxu0 %v623
        %636 = vmatprep.subr.bf16.mxu0 0
        %637 = vmatpush1.bf16.msra.mxu0 0
        %638 = vmatprep.subr.bf16.mxu0 0
        %639 = vmatpush1.bf16.msra.mxu0 0
        %640 = vmatprep.subr.bf16.mxu0 0
        %641 = vmatpush1.bf16.msra.mxu0 0
        %642 = vmatprep.subr.bf16.mxu0 0
        %643 = vmatpush1.bf16.msra.mxu0 0
        %644 = vmatprep.subr.bf16.mxu0 0
        %645 = vmatpush1.bf16.msra.mxu0 0
        %646 = vmatprep.subr.bf16.mxu0 0
        %647 = vmatpush1.bf16.msra.mxu0 0
        %648 = vmatprep.subr.bf16.mxu0 0
        %649 = vmatpush1.bf16.msra.mxu0 0
        %650 = vmatprep.subr.bf16.mxu0 0
        %651 = vmatpush1.bf16.msra.mxu0 0
        %652 = vmatprep.subr.bf16.mxu0 0
        %653 = vmatpush1.bf16.msra.mxu0 0
        %654 = vmatprep.subr.bf16.mxu0 0
        %655 = vmatpush1.bf16.msra.mxu0 0
        %656 = vmatprep.subr.bf16.mxu0 0
        %657 = vmatpush1.bf16.msra.mxu0 0
        %658 = vmatprep.subr.bf16.mxu0 0
        %659 = vmatpush1.bf16.msra.mxu0 0
        %660 = vmatprep.subr.bf16.mxu0 0
        %661 = vmatpush1.bf16.msra.mxu0 0
        %662 = vmatprep.subr.bf16.mxu0 0
        %663 = vmatpush1.bf16.msra.mxu0 0
        %664 = vmatprep.subr.bf16.mxu0 0
        %665 = vmatpush1.bf16.msra.mxu0 0
        %666 = vmatprep.mubr.bf16.mxu0 0
        %667 = vmatmul.mubr.bf16.gmra.mrb[0].mxu0 %v620
        %v668 = vpop.f32.mrb[0].mxu0
        %v669 = vadd.f32 0.0, %v668
        %v670 = vpop.f32.mrb[0].mxu0
        %v671 = vadd.f32 0.0, %v670
        %v672 = vpop.f32.mrb[0].mxu0
        %v673 = vpop.f32.mrb[0].mxu0
        %674 = vdwg.mxu0
        %675 = vmatprep.subr.bf16.mxu0 %v632
        %676 = vmatpush1.bf16.msra.mxu0 %v629
        %677 = vmatprep.subr.bf16.mxu0 0
        %678 = vmatpush1.bf16.msra.mxu0 0
        %679 = vmatprep.subr.bf16.mxu0 0
        %680 = vmatpush1.bf16.msra.mxu0 0
        %681 = vmatprep.subr.bf16.mxu0 0
        %682 = vmatpush1.bf16.msra.mxu0 0
        %683 = vmatprep.subr.bf16.mxu0 0
        %684 = vmatpush1.bf16.msra.mxu0 0
        %685 = vmatprep.subr.bf16.mxu0 0
        %686 = vmatpush1.bf16.msra.mxu0 0
        %687 = vmatprep.subr.bf16.mxu0 0
        %688 = vmatpush1.bf16.msra.mxu0 0
        %689 = vmatprep.subr.bf16.mxu0 0
        %690 = vmatpush1.bf16.msra.mxu0 0
        %691 = vmatprep.subr.bf16.mxu0 0
        %692 = vmatpush1.bf16.msra.mxu0 0
        %693 = vmatprep.subr.bf16.mxu0 0
        %694 = vmatpush1.bf16.msra.mxu0 0
        %695 = vmatprep.subr.bf16.mxu0 0
        %696 = vmatpush1.bf16.msra.mxu0 0
        %697 = vmatprep.subr.bf16.mxu0 0
        %698 = vmatpush1.bf16.msra.mxu0 0
        %699 = vmatprep.subr.bf16.mxu0 0
        %700 = vmatpush1.bf16.msra.mxu0 0
        %701 = vmatprep.subr.bf16.mxu0 0
        %702 = vmatpush1.bf16.msra.mxu0 0
        %703 = vmatprep.subr.bf16.mxu0 0
        %704 = vmatpush1.bf16.msra.mxu0 0
        %705 = vmatprep.subr.bf16.mxu0 0
        %706 = vmatpush1.bf16.msra.mxu0 0
        %707 = vmatprep.mubr.bf16.mxu0 0
        %708 = vmatmul.mubr.bf16.gmra.mrb[0].mxu0 %v620
        %v709 = vpop.f32.mrb[0].mxu0
        %v710 = vadd.f32 0.0, %v709
        %v711 = vpop.f32.mrb[0].mxu0
        %v712 = vadd.f32 0.0, %v711
        %v713 = vpop.f32.mrb[0].mxu0
        %v714 = vpop.f32.mrb[0].mxu0
        %715 = vdwg.mxu0
        %v716 = vadd.f32 %v498, %v669
        %v717 = vadd.f32 %v500, %v671
        %v718 = vadd.f32 %v539, %v710
        %v719 = vadd.f32 %v541, %v712
        %s720 = scalar_lea.vmem %s1, 12
        %v721 = vld [vmem:[%s720] sm:$0xf]
        %vm722 = vcmp.gt.f32.partialorder %v721, 0.5
        %v723 = vsel %vm722, 1, 0
        %v724 = vlaneseq
        %v725 = vshrl.u32 %v724, 7
        %v726 = vsub.s32 0, %v725
        %v727 = vrot.slane %v723, %v726
        %v728 = vlaneseq
        %v729 = vshrl.u32 %v728, 7
        %v730 = vsub.s32 1, %v729
        %v731 = vrot.slane %v723, %v730
        %v732 = vlaneseq
        %v733 = vshrl.u32 %v732, 7
        %v734 = vsub.s32 2, %v733
        %v735 = vrot.slane %v723, %v734
        %v736 = vlaneseq
        %v737 = vshrl.u32 %v736, 7
        %v738 = vsub.s32 3, %v737
        %v739 = vrot.slane %v723, %v738
        %vm740 = vcmp.eq.s32.totalorder %v727, 1
        %vm741 = vcmp.eq.s32.totalorder %v731, 1
        %vm742 = vcmp.eq.s32.totalorder %v735, 1
        %vm743 = vcmp.eq.s32.totalorder %v739, 1
        %vm744 = vmpackc.low %vm741, %vm740
        %vm745 = vmpackc.low %vm743, %vm742
        %v746 = vsel %vm744, 65537, 0
        %v747 = vsel %vm745, 65537, 0
        %748 = vrot.lane.b32.xlu0 %v746, 63
        %v749 = vpop.permute.xlu0 %748
        %750 = vrot.lane.b32.xlu0 %v747, 63
        %v751 = vpop.permute.xlu0 %750
        %v752 = vrot.slane %v749, 4
        %v753 = vrot.slane %v751, 4
        %vm754 = vcmask 515072
        %v755 = vsel %vm754, %v752, %v749
        %v756 = vsel %vm237, %v752, %v753
        %v757 = vsel %vm754, %v756, %v751
        %vm758 = vcmp.ne.s16.totalorder %v755, 0
        %vm759 = vcmp.ne.s16.totalorder %v757, 0
        %vm760 = vcmp.ne.s16.totalorder %v753, 0
        %v761 = vsel %vm758, %v199, 0
        %v762 = vsel %vm759, %v200, 0
        %v763 = vsel %vm760, %v201, 0
        %s764 = scalar_lea.vmem %s2, 12
        %v765 = vld [vmem:[%s764] sm:$0xf]
        %v769 = vunpack.c.l.b16 %v761
        %v770 = vunpack.c.h.b16 %v761
        %v771 = vunpack.c.l.b16 %v762
        %v772 = vunpack.c.h.b16 %v762
        %v773 = vunpack.c.l.b16 %v763
        %v774 = vpack.c.b16 %v769, %v769
        %v775 = vpack.c.b16 %v770, %v770
        %v776 = vpack.c.b16 %v771, %v771
        %v777 = vpack.c.b16 %v772, %v772
        %v778 = vpack.c.b16 %v773, %v773
        %779 = vrot.lane.b32.xlu0 %v774, 65
        %v780 = vpop.permute.xlu0 %779
        %781 = vrot.lane.b32.xlu0 %v775, 65
        %v782 = vpop.permute.xlu0 %781
        %783 = vrot.lane.b32.xlu0 %v776, 65
        %v784 = vpop.permute.xlu0 %783
        %785 = vrot.lane.b32.xlu0 %v777, 65
        %v786 = vpop.permute.xlu0 %785
        %787 = vrot.lane.b32.xlu0 %v778, 65
        %v788 = vpop.permute.xlu0 %787
        %vm789 = vcmask 531456
        %v790 = vsel %vm789, %v780, %v782
        %v791 = vsel %vm789, %v782, %v784
        %v792 = vsel %vm789, %v784, %v786
        %v793 = vsel %vm789, %v786, %v788
        %v795 = vsel %vm321, %v765, 0
        %v798 = vsel %vm325, %v790, 0
        %v801 = vsel %vm325, %v791, 0
        %v804 = vsel %vm325, %v792, 0
        %v807 = vsel %vm325, %v793, 0
        %809 = vmatprep.subr.bf16.mxu0 %v801
        %810 = vmatpush1.bf16.msra.mxu0 %v798
        %811 = vmatprep.subr.bf16.mxu0 0
        %812 = vmatpush1.bf16.msra.mxu0 0
        %813 = vmatprep.subr.bf16.mxu0 0
        %814 = vmatpush1.bf16.msra.mxu0 0
        %815 = vmatprep.subr.bf16.mxu0 0
        %816 = vmatpush1.bf16.msra.mxu0 0
        %817 = vmatprep.subr.bf16.mxu0 0
        %818 = vmatpush1.bf16.msra.mxu0 0
        %819 = vmatprep.subr.bf16.mxu0 0
        %820 = vmatpush1.bf16.msra.mxu0 0
        %821 = vmatprep.subr.bf16.mxu0 0
        %822 = vmatpush1.bf16.msra.mxu0 0
        %823 = vmatprep.subr.bf16.mxu0 0
        %824 = vmatpush1.bf16.msra.mxu0 0
        %825 = vmatprep.subr.bf16.mxu0 0
        %826 = vmatpush1.bf16.msra.mxu0 0
        %827 = vmatprep.subr.bf16.mxu0 0
        %828 = vmatpush1.bf16.msra.mxu0 0
        %829 = vmatprep.subr.bf16.mxu0 0
        %830 = vmatpush1.bf16.msra.mxu0 0
        %831 = vmatprep.subr.bf16.mxu0 0
        %832 = vmatpush1.bf16.msra.mxu0 0
        %833 = vmatprep.subr.bf16.mxu0 0
        %834 = vmatpush1.bf16.msra.mxu0 0
        %835 = vmatprep.subr.bf16.mxu0 0
        %836 = vmatpush1.bf16.msra.mxu0 0
        %837 = vmatprep.subr.bf16.mxu0 0
        %838 = vmatpush1.bf16.msra.mxu0 0
        %839 = vmatprep.subr.bf16.mxu0 0
        %840 = vmatpush1.bf16.msra.mxu0 0
        %841 = vmatprep.mubr.bf16.mxu0 0
        %842 = vmatmul.mubr.bf16.gmra.mrb[0].mxu0 %v795
        %v843 = vpop.f32.mrb[0].mxu0
        %v844 = vadd.f32 0.0, %v843
        %v845 = vpop.f32.mrb[0].mxu0
        %v846 = vadd.f32 0.0, %v845
        %v847 = vpop.f32.mrb[0].mxu0
        %v848 = vpop.f32.mrb[0].mxu0
        %849 = vdwg.mxu0
        %850 = vmatprep.subr.bf16.mxu0 %v807
        %851 = vmatpush1.bf16.msra.mxu0 %v804
        %852 = vmatprep.subr.bf16.mxu0 0
        %853 = vmatpush1.bf16.msra.mxu0 0
        %854 = vmatprep.subr.bf16.mxu0 0
        %855 = vmatpush1.bf16.msra.mxu0 0
        %856 = vmatprep.subr.bf16.mxu0 0
        %857 = vmatpush1.bf16.msra.mxu0 0
        %858 = vmatprep.subr.bf16.mxu0 0
        %859 = vmatpush1.bf16.msra.mxu0 0
        %860 = vmatprep.subr.bf16.mxu0 0
        %861 = vmatpush1.bf16.msra.mxu0 0
        %862 = vmatprep.subr.bf16.mxu0 0
        %863 = vmatpush1.bf16.msra.mxu0 0
        %864 = vmatprep.subr.bf16.mxu0 0
        %865 = vmatpush1.bf16.msra.mxu0 0
        %866 = vmatprep.subr.bf16.mxu0 0
        %867 = vmatpush1.bf16.msra.mxu0 0
        %868 = vmatprep.subr.bf16.mxu0 0
        %869 = vmatpush1.bf16.msra.mxu0 0
        %870 = vmatprep.subr.bf16.mxu0 0
        %871 = vmatpush1.bf16.msra.mxu0 0
        %872 = vmatprep.subr.bf16.mxu0 0
        %873 = vmatpush1.bf16.msra.mxu0 0
        %874 = vmatprep.subr.bf16.mxu0 0
        %875 = vmatpush1.bf16.msra.mxu0 0
        %876 = vmatprep.subr.bf16.mxu0 0
        %877 = vmatpush1.bf16.msra.mxu0 0
        %878 = vmatprep.subr.bf16.mxu0 0
        %879 = vmatpush1.bf16.msra.mxu0 0
        %880 = vmatprep.subr.bf16.mxu0 0
        %881 = vmatpush1.bf16.msra.mxu0 0
        %882 = vmatprep.mubr.bf16.mxu0 0
        %883 = vmatmul.mubr.bf16.gmra.mrb[0].mxu0 %v795
        %v884 = vpop.f32.mrb[0].mxu0
        %v885 = vadd.f32 0.0, %v884
        %v886 = vpop.f32.mrb[0].mxu0
        %v887 = vadd.f32 0.0, %v886
        %v888 = vpop.f32.mrb[0].mxu0
        %v889 = vpop.f32.mrb[0].mxu0
        %890 = vdwg.mxu0
        %v891 = vadd.f32 %v716, %v844
        %v892 = vadd.f32 %v717, %v846
        %v893 = vadd.f32 %v718, %v885
        %v894 = vadd.f32 %v719, %v887
        %s895 = scalar_lea.vmem %s1, 16
        %v896 = vld [vmem:[%s895] sm:$0xf]
        %vm897 = vcmp.gt.f32.partialorder %v896, 0.5
        %v898 = vsel %vm897, 1, 0
        %v899 = vlaneseq
        %v900 = vshrl.u32 %v899, 7
        %v901 = vsub.s32 0, %v900
        %v902 = vrot.slane %v898, %v901
        %v903 = vlaneseq
        %v904 = vshrl.u32 %v903, 7
        %v905 = vsub.s32 1, %v904
        %v906 = vrot.slane %v898, %v905
        %v907 = vlaneseq
        %v908 = vshrl.u32 %v907, 7
        %v909 = vsub.s32 2, %v908
        %v910 = vrot.slane %v898, %v909
        %v911 = vlaneseq
        %v912 = vshrl.u32 %v911, 7
        %v913 = vsub.s32 3, %v912
        %v914 = vrot.slane %v898, %v913
        %vm915 = vcmp.eq.s32.totalorder %v902, 1
        %vm916 = vcmp.eq.s32.totalorder %v906, 1
        %vm917 = vcmp.eq.s32.totalorder %v910, 1
        %vm918 = vcmp.eq.s32.totalorder %v914, 1
        %vm919 = vmpackc.low %vm916, %vm915
        %vm920 = vmpackc.low %vm918, %vm917
        %v921 = vsel %vm919, 65537, 0
        %v922 = vsel %vm920, 65537, 0
        %923 = vrot.lane.b32.xlu0 %v921, 64
        %v924 = vpop.permute.xlu0 %923
        %925 = vrot.lane.b32.xlu0 %v922, 64
        %v926 = vpop.permute.xlu0 %925
        %v927 = vrot.slane %v924, 4
        %v928 = vrot.slane %v926, 4
        %vm929 = vcmask 523264
        %v930 = vsel %vm929, %v927, %v924
        %v931 = vsel %vm237, %v927, %v928
        %v932 = vsel %vm929, %v931, %v926
        %vm933 = vcmp.ne.s16.totalorder %v930, 0
        %vm934 = vcmp.ne.s16.totalorder %v932, 0
        %vm935 = vcmp.ne.s16.totalorder %v928, 0
        %v936 = vsel %vm933, %v199, 0
        %v937 = vsel %vm934, %v200, 0
        %v938 = vsel %vm935, %v201, 0
        %s939 = scalar_lea.vmem %s2, 16
        %v940 = vld [vmem:[%s939] sm:$0xf]
        %v944 = vunpack.c.l.b16 %v936
        %v945 = vunpack.c.h.b16 %v936
        %v946 = vunpack.c.l.b16 %v937
        %v947 = vunpack.c.h.b16 %v937
        %v948 = vunpack.c.l.b16 %v938
        %v949 = vpack.c.b16 %v944, %v944
        %v950 = vpack.c.b16 %v945, %v945
        %v951 = vpack.c.b16 %v946, %v946
        %v952 = vpack.c.b16 %v947, %v947
        %v953 = vpack.c.b16 %v948, %v948
        %954 = vrot.lane.b32.xlu0 %v949, 64
        %v955 = vpop.permute.xlu0 %954
        %956 = vrot.lane.b32.xlu0 %v950, 64
        %v957 = vpop.permute.xlu0 %956
        %958 = vrot.lane.b32.xlu0 %v951, 64
        %v959 = vpop.permute.xlu0 %958
        %960 = vrot.lane.b32.xlu0 %v952, 64
        %v961 = vpop.permute.xlu0 %960
        %962 = vrot.lane.b32.xlu0 %v953, 64
        %v963 = vpop.permute.xlu0 %962
        %v964 = vsel %vm929, %v955, %v957
        %v965 = vsel %vm929, %v957, %v959
        %v966 = vsel %vm929, %v959, %v961
        %v967 = vsel %vm929, %v961, %v963
        %v969 = vsel %vm321, %v940, 0
        %v972 = vsel %vm325, %v964, 0
        %v975 = vsel %vm325, %v965, 0
        %v978 = vsel %vm325, %v966, 0
        %v981 = vsel %vm325, %v967, 0
        %983 = vmatprep.subr.bf16.mxu0 %v975
        %984 = vmatpush1.bf16.msra.mxu0 %v972
        %985 = vmatprep.subr.bf16.mxu0 0
        %986 = vmatpush1.bf16.msra.mxu0 0
        %987 = vmatprep.subr.bf16.mxu0 0
        %988 = vmatpush1.bf16.msra.mxu0 0
        %989 = vmatprep.subr.bf16.mxu0 0
        %990 = vmatpush1.bf16.msra.mxu0 0
        %991 = vmatprep.subr.bf16.mxu0 0
        %992 = vmatpush1.bf16.msra.mxu0 0
        %993 = vmatprep.subr.bf16.mxu0 0
        %994 = vmatpush1.bf16.msra.mxu0 0
        %995 = vmatprep.subr.bf16.mxu0 0
        %996 = vmatpush1.bf16.msra.mxu0 0
        %997 = vmatprep.subr.bf16.mxu0 0
        %998 = vmatpush1.bf16.msra.mxu0 0
        %999 = vmatprep.subr.bf16.mxu0 0
        %1000 = vmatpush1.bf16.msra.mxu0 0
        %1001 = vmatprep.subr.bf16.mxu0 0
        %1002 = vmatpush1.bf16.msra.mxu0 0
        %1003 = vmatprep.subr.bf16.mxu0 0
        %1004 = vmatpush1.bf16.msra.mxu0 0
        %1005 = vmatprep.subr.bf16.mxu0 0
        %1006 = vmatpush1.bf16.msra.mxu0 0
        %1007 = vmatprep.subr.bf16.mxu0 0
        %1008 = vmatpush1.bf16.msra.mxu0 0
        %1009 = vmatprep.subr.bf16.mxu0 0
        %1010 = vmatpush1.bf16.msra.mxu0 0
        %1011 = vmatprep.subr.bf16.mxu0 0
        %1012 = vmatpush1.bf16.msra.mxu0 0
        %1013 = vmatprep.subr.bf16.mxu0 0
        %1014 = vmatpush1.bf16.msra.mxu0 0
        %1015 = vmatprep.mubr.bf16.mxu0 0
        %1016 = vmatmul.mubr.bf16.gmra.mrb[0].mxu0 %v969
        %v1017 = vpop.f32.mrb[0].mxu0
        %v1018 = vadd.f32 0.0, %v1017
        %v1019 = vpop.f32.mrb[0].mxu0
        %v1020 = vadd.f32 0.0, %v1019
        %v1021 = vpop.f32.mrb[0].mxu0
        %v1022 = vpop.f32.mrb[0].mxu0
        %1023 = vdwg.mxu0
        %1024 = vmatprep.subr.bf16.mxu0 %v981
        %1025 = vmatpush1.bf16.msra.mxu0 %v978
        %1026 = vmatprep.subr.bf16.mxu0 0
        %1027 = vmatpush1.bf16.msra.mxu0 0
        %1028 = vmatprep.subr.bf16.mxu0 0
        %1029 = vmatpush1.bf16.msra.mxu0 0
        %1030 = vmatprep.subr.bf16.mxu0 0
        %1031 = vmatpush1.bf16.msra.mxu0 0
        %1032 = vmatprep.subr.bf16.mxu0 0
        %1033 = vmatpush1.bf16.msra.mxu0 0
        %1034 = vmatprep.subr.bf16.mxu0 0
        %1035 = vmatpush1.bf16.msra.mxu0 0
        %1036 = vmatprep.subr.bf16.mxu0 0
        %1037 = vmatpush1.bf16.msra.mxu0 0
        %1038 = vmatprep.subr.bf16.mxu0 0
        %1039 = vmatpush1.bf16.msra.mxu0 0
        %1040 = vmatprep.subr.bf16.mxu0 0
        %1041 = vmatpush1.bf16.msra.mxu0 0
        %1042 = vmatprep.subr.bf16.mxu0 0
        %1043 = vmatpush1.bf16.msra.mxu0 0
        %1044 = vmatprep.subr.bf16.mxu0 0
        %1045 = vmatpush1.bf16.msra.mxu0 0
        %1046 = vmatprep.subr.bf16.mxu0 0
        %1047 = vmatpush1.bf16.msra.mxu0 0
        %1048 = vmatprep.subr.bf16.mxu0 0
        %1049 = vmatpush1.bf16.msra.mxu0 0
        %1050 = vmatprep.subr.bf16.mxu0 0
        %1051 = vmatpush1.bf16.msra.mxu0 0
        %1052 = vmatprep.subr.bf16.mxu0 0
        %1053 = vmatpush1.bf16.msra.mxu0 0
        %1054 = vmatprep.subr.bf16.mxu0 0
        %1055 = vmatpush1.bf16.msra.mxu0 0
        %1056 = vmatprep.mubr.bf16.mxu0 0
        %1057 = vmatmul.mubr.bf16.gmra.mrb[0].mxu0 %v969
        %v1058 = vpop.f32.mrb[0].mxu0
        %v1059 = vadd.f32 0.0, %v1058
        %v1060 = vpop.f32.mrb[0].mxu0
        %v1061 = vadd.f32 0.0, %v1060
        %v1062 = vpop.f32.mrb[0].mxu0
        %v1063 = vpop.f32.mrb[0].mxu0
        %1064 = vdwg.mxu0
        %v1065 = vadd.f32 %v891, %v1018
        %v1066 = vadd.f32 %v892, %v1020
        %v1067 = vadd.f32 %v893, %v1059
        %v1068 = vadd.f32 %v894, %v1061
        %s1069 = scalar_lea.vmem %s1, 20
        %v1070 = vld [vmem:[%s1069] sm:$0xf]
        %vm1071 = vcmp.gt.f32.partialorder %v1070, 0.5
        %v1072 = vsel %vm1071, 1, 0
        %v1073 = vlaneseq
        %v1074 = vshrl.u32 %v1073, 7
        %v1075 = vsub.s32 0, %v1074
        %v1076 = vrot.slane %v1072, %v1075
        %v1077 = vlaneseq
        %v1078 = vshrl.u32 %v1077, 7
        %v1079 = vsub.s32 1, %v1078
        %v1080 = vrot.slane %v1072, %v1079
        %v1081 = vlaneseq
        %v1082 = vshrl.u32 %v1081, 7
        %v1083 = vsub.s32 2, %v1082
        %v1084 = vrot.slane %v1072, %v1083
        %v1085 = vlaneseq
        %v1086 = vshrl.u32 %v1085, 7
        %v1087 = vsub.s32 3, %v1086
        %v1088 = vrot.slane %v1072, %v1087
        %vm1089 = vcmp.eq.s32.totalorder %v1076, 1
        %vm1090 = vcmp.eq.s32.totalorder %v1080, 1
        %vm1091 = vcmp.eq.s32.totalorder %v1084, 1
        %vm1092 = vcmp.eq.s32.totalorder %v1088, 1
        %vm1093 = vmpackc.low %vm1090, %vm1089
        %vm1094 = vmpackc.low %vm1092, %vm1091
        %v1095 = vsel %vm1093, 65537, 0
        %v1096 = vsel %vm1094, 65537, 0
        %1097 = vrot.lane.b32.xlu0 %v1095, 65
        %v1098 = vpop.permute.xlu0 %1097
        %1099 = vrot.lane.b32.xlu0 %v1096, 65
        %v1100 = vpop.permute.xlu0 %1099
        %v1101 = vrot.slane %v1098, 4
        %v1102 = vrot.slane %v1100, 4
        %v1103 = vsel %vm789, %v1101, %v1098
        %v1104 = vsel %vm237, %v1101, %v1102
        %v1105 = vsel %vm789, %v1104, %v1100
        %vm1106 = vcmp.ne.s16.totalorder %v1103, 0
        %vm1107 = vcmp.ne.s16.totalorder %v1105, 0
        %vm1108 = vcmp.ne.s16.totalorder %v1102, 0
        %v1109 = vsel %vm1106, %v199, 0
        %v1110 = vsel %vm1107, %v200, 0
        %v1111 = vsel %vm1108, %v201, 0
        %s1112 = scalar_lea.vmem %s2, 20
        %v1113 = vld [vmem:[%s1112] sm:$0xf]
        %v1117 = vunpack.c.l.b16 %v1109
        %v1118 = vunpack.c.h.b16 %v1109
        %v1119 = vunpack.c.l.b16 %v1110
        %v1120 = vunpack.c.h.b16 %v1110
        %v1121 = vunpack.c.l.b16 %v1111
        %v1122 = vpack.c.b16 %v1117, %v1117
        %v1123 = vpack.c.b16 %v1118, %v1118
        %v1124 = vpack.c.b16 %v1119, %v1119
        %v1125 = vpack.c.b16 %v1120, %v1120
        %v1126 = vpack.c.b16 %v1121, %v1121
        %1127 = vrot.lane.b32.xlu0 %v1122, 63
        %v1128 = vpop.permute.xlu0 %1127
        %1129 = vrot.lane.b32.xlu0 %v1123, 63
        %v1130 = vpop.permute.xlu0 %1129
        %1131 = vrot.lane.b32.xlu0 %v1124, 63
        %v1132 = vpop.permute.xlu0 %1131
        %1133 = vrot.lane.b32.xlu0 %v1125, 63
        %v1134 = vpop.permute.xlu0 %1133
        %1135 = vrot.lane.b32.xlu0 %v1126, 63
        %v1136 = vpop.permute.xlu0 %1135
        %v1137 = vsel %vm754, %v1128, %v1130
        %v1138 = vsel %vm754, %v1130, %v1132
        %v1139 = vsel %vm754, %v1132, %v1134
        %v1140 = vsel %vm754, %v1134, %v1136
        %v1142 = vsel %vm321, %v1113, 0
        %v1145 = vsel %vm325, %v1137, 0
        %v1148 = vsel %vm325, %v1138, 0
        %v1151 = vsel %vm325, %v1139, 0
        %v1154 = vsel %vm325, %v1140, 0
        %1156 = vmatprep.subr.bf16.mxu0 %v1148
        %1157 = vmatpush1.bf16.msra.mxu0 %v1145
        %1158 = vmatprep.subr.bf16.mxu0 0
        %1159 = vmatpush1.bf16.msra.mxu0 0
        %1160 = vmatprep.subr.bf16.mxu0 0
        %1161 = vmatpush1.bf16.msra.mxu0 0
        %1162 = vmatprep.subr.bf16.mxu0 0
        %1163 = vmatpush1.bf16.msra.mxu0 0
        %1164 = vmatprep.subr.bf16.mxu0 0
        %1165 = vmatpush1.bf16.msra.mxu0 0
        %1166 = vmatprep.subr.bf16.mxu0 0
        %1167 = vmatpush1.bf16.msra.mxu0 0
        %1168 = vmatprep.subr.bf16.mxu0 0
        %1169 = vmatpush1.bf16.msra.mxu0 0
        %1170 = vmatprep.subr.bf16.mxu0 0
        %1171 = vmatpush1.bf16.msra.mxu0 0
        %1172 = vmatprep.subr.bf16.mxu0 0
        %1173 = vmatpush1.bf16.msra.mxu0 0
        %1174 = vmatprep.subr.bf16.mxu0 0
        %1175 = vmatpush1.bf16.msra.mxu0 0
        %1176 = vmatprep.subr.bf16.mxu0 0
        %1177 = vmatpush1.bf16.msra.mxu0 0
        %1178 = vmatprep.subr.bf16.mxu0 0
        %1179 = vmatpush1.bf16.msra.mxu0 0
        %1180 = vmatprep.subr.bf16.mxu0 0
        %1181 = vmatpush1.bf16.msra.mxu0 0
        %1182 = vmatprep.subr.bf16.mxu0 0
        %1183 = vmatpush1.bf16.msra.mxu0 0
        %1184 = vmatprep.subr.bf16.mxu0 0
        %1185 = vmatpush1.bf16.msra.mxu0 0
        %1186 = vmatprep.subr.bf16.mxu0 0
        %1187 = vmatpush1.bf16.msra.mxu0 0
        %1188 = vmatprep.mubr.bf16.mxu0 0
        %1189 = vmatmul.mubr.bf16.gmra.mrb[0].mxu0 %v1142
        %v1190 = vpop.f32.mrb[0].mxu0
        %v1191 = vadd.f32 0.0, %v1190
        %v1192 = vpop.f32.mrb[0].mxu0
        %v1193 = vadd.f32 0.0, %v1192
        %v1194 = vpop.f32.mrb[0].mxu0
        %v1195 = vpop.f32.mrb[0].mxu0
        %1196 = vdwg.mxu0
        %1197 = vmatprep.subr.bf16.mxu0 %v1154
        %1198 = vmatpush1.bf16.msra.mxu0 %v1151
        %1199 = vmatprep.subr.bf16.mxu0 0
        %1200 = vmatpush1.bf16.msra.mxu0 0
        %1201 = vmatprep.subr.bf16.mxu0 0
        %1202 = vmatpush1.bf16.msra.mxu0 0
        %1203 = vmatprep.subr.bf16.mxu0 0
        %1204 = vmatpush1.bf16.msra.mxu0 0
        %1205 = vmatprep.subr.bf16.mxu0 0
        %1206 = vmatpush1.bf16.msra.mxu0 0
        %1207 = vmatprep.subr.bf16.mxu0 0
        %1208 = vmatpush1.bf16.msra.mxu0 0
        %1209 = vmatprep.subr.bf16.mxu0 0
        %1210 = vmatpush1.bf16.msra.mxu0 0
        %1211 = vmatprep.subr.bf16.mxu0 0
        %1212 = vmatpush1.bf16.msra.mxu0 0
        %1213 = vmatprep.subr.bf16.mxu0 0
        %1214 = vmatpush1.bf16.msra.mxu0 0
        %1215 = vmatprep.subr.bf16.mxu0 0
        %1216 = vmatpush1.bf16.msra.mxu0 0
        %1217 = vmatprep.subr.bf16.mxu0 0
        %1218 = vmatpush1.bf16.msra.mxu0 0
        %1219 = vmatprep.subr.bf16.mxu0 0
        %1220 = vmatpush1.bf16.msra.mxu0 0
        %1221 = vmatprep.subr.bf16.mxu0 0
        %1222 = vmatpush1.bf16.msra.mxu0 0
        %1223 = vmatprep.subr.bf16.mxu0 0
        %1224 = vmatpush1.bf16.msra.mxu0 0
        %1225 = vmatprep.subr.bf16.mxu0 0
        %1226 = vmatpush1.bf16.msra.mxu0 0
        %1227 = vmatprep.subr.bf16.mxu0 0
        %1228 = vmatpush1.bf16.msra.mxu0 0
        %1229 = vmatprep.mubr.bf16.mxu0 0
        %1230 = vmatmul.mubr.bf16.gmra.mrb[0].mxu0 %v1142
        %v1231 = vpop.f32.mrb[0].mxu0
        %v1232 = vadd.f32 0.0, %v1231
        %v1233 = vpop.f32.mrb[0].mxu0
        %v1234 = vadd.f32 0.0, %v1233
        %v1235 = vpop.f32.mrb[0].mxu0
        %v1236 = vpop.f32.mrb[0].mxu0
        %1237 = vdwg.mxu0
        %v1238 = vadd.f32 %v1065, %v1191
        %v1239 = vadd.f32 %v1066, %v1193
        %v1240 = vadd.f32 %v1067, %v1232
        %v1241 = vadd.f32 %v1068, %v1234
        %s1242 = scalar_lea.vmem %s1, 24
        %v1243 = vld [vmem:[%s1242] sm:$0xf]
        %vm1244 = vcmp.gt.f32.partialorder %v1243, 0.5
        %v1245 = vsel %vm1244, 1, 0
        %v1246 = vlaneseq
        %v1247 = vshrl.u32 %v1246, 7
        %v1248 = vsub.s32 0, %v1247
        %v1249 = vrot.slane %v1245, %v1248
        %v1250 = vlaneseq
        %v1251 = vshrl.u32 %v1250, 7
        %v1252 = vsub.s32 1, %v1251
        %v1253 = vrot.slane %v1245, %v1252
        %v1254 = vlaneseq
        %v1255 = vshrl.u32 %v1254, 7
        %v1256 = vsub.s32 2, %v1255
        %v1257 = vrot.slane %v1245, %v1256
        %v1258 = vlaneseq
        %v1259 = vshrl.u32 %v1258, 7
        %v1260 = vsub.s32 3, %v1259
        %v1261 = vrot.slane %v1245, %v1260
        %vm1262 = vcmp.eq.s32.totalorder %v1249, 1
        %vm1263 = vcmp.eq.s32.totalorder %v1253, 1
        %vm1264 = vcmp.eq.s32.totalorder %v1257, 1
        %vm1265 = vcmp.eq.s32.totalorder %v1261, 1
        %vm1266 = vmpackc.low %vm1263, %vm1262
        %vm1267 = vmpackc.low %vm1265, %vm1264
        %v1268 = vsel %vm1266, 65537, 0
        %v1269 = vsel %vm1267, 65537, 0
        %1270 = vrot.lane.b32.xlu0 %v1268, 71
        %v1271 = vpop.permute.xlu0 %1270
        %1272 = vrot.lane.b32.xlu0 %v1269, 71
        %v1273 = vpop.permute.xlu0 %1272
        %v1274 = vrot.slane %v1271, 4
        %v1275 = vrot.slane %v1273, 4
        %v1276 = vsel %vm614, %v1274, %v1271
        %v1277 = vsel %vm237, %v1274, %v1275
        %v1278 = vsel %vm614, %v1277, %v1273
        %vm1279 = vcmp.ne.s16.totalorder %v1276, 0
        %vm1280 = vcmp.ne.s16.totalorder %v1278, 0
        %vm1281 = vcmp.ne.s16.totalorder %v1275, 0
        %v1282 = vsel %vm1279, %v199, 0
        %v1283 = vsel %vm1280, %v200, 0
        %v1284 = vsel %vm1281, %v201, 0
        %s1285 = scalar_lea.vmem %s2, 24
        %v1286 = vld [vmem:[%s1285] sm:$0xf]
        %v1290 = vunpack.c.l.b16 %v1282
        %v1291 = vunpack.c.h.b16 %v1282
        %v1292 = vunpack.c.l.b16 %v1283
        %v1293 = vunpack.c.h.b16 %v1283
        %v1294 = vunpack.c.l.b16 %v1284
        %v1295 = vpack.c.b16 %v1290, %v1290
        %v1296 = vpack.c.b16 %v1291, %v1291
        %v1297 = vpack.c.b16 %v1292, %v1292
        %v1298 = vpack.c.b16 %v1293, %v1293
        %v1299 = vpack.c.b16 %v1294, %v1294
        %1300 = vrot.lane.b32.xlu0 %v1295, 57
        %v1301 = vpop.permute.xlu0 %1300
        %1302 = vrot.lane.b32.xlu0 %v1296, 57
        %v1303 = vpop.permute.xlu0 %1302
        %1304 = vrot.lane.b32.xlu0 %v1297, 57
        %v1305 = vpop.permute.xlu0 %1304
        %1306 = vrot.lane.b32.xlu0 %v1298, 57
        %v1307 = vpop.permute.xlu0 %1306
        %1308 = vrot.lane.b32.xlu0 %v1299, 57
        %v1309 = vpop.permute.xlu0 %1308
        %v1310 = vsel %vm579, %v1301, %v1303
        %v1311 = vsel %vm579, %v1303, %v1305
        %v1312 = vsel %vm579, %v1305, %v1307
        %v1313 = vsel %vm579, %v1307, %v1309
        %v1315 = vsel %vm321, %v1286, 0
        %v1318 = vsel %vm325, %v1310, 0
        %v1321 = vsel %vm325, %v1311, 0
        %v1324 = vsel %vm325, %v1312, 0
        %v1327 = vsel %vm325, %v1313, 0
        %1329 = vmatprep.subr.bf16.mxu0 %v1321
        %1330 = vmatpush1.bf16.msra.mxu0 %v1318
        %1331 = vmatprep.subr.bf16.mxu0 0
        %1332 = vmatpush1.bf16.msra.mxu0 0
        %1333 = vmatprep.subr.bf16.mxu0 0
        %1334 = vmatpush1.bf16.msra.mxu0 0
        %1335 = vmatprep.subr.bf16.mxu0 0
        %1336 = vmatpush1.bf16.msra.mxu0 0
        %1337 = vmatprep.subr.bf16.mxu0 0
        %1338 = vmatpush1.bf16.msra.mxu0 0
        %1339 = vmatprep.subr.bf16.mxu0 0
        %1340 = vmatpush1.bf16.msra.mxu0 0
        %1341 = vmatprep.subr.bf16.mxu0 0
        %1342 = vmatpush1.bf16.msra.mxu0 0
        %1343 = vmatprep.subr.bf16.mxu0 0
        %1344 = vmatpush1.bf16.msra.mxu0 0
        %1345 = vmatprep.subr.bf16.mxu0 0
        %1346 = vmatpush1.bf16.msra.mxu0 0
        %1347 = vmatprep.subr.bf16.mxu0 0
        %1348 = vmatpush1.bf16.msra.mxu0 0
        %1349 = vmatprep.subr.bf16.mxu0 0
        %1350 = vmatpush1.bf16.msra.mxu0 0
        %1351 = vmatprep.subr.bf16.mxu0 0
        %1352 = vmatpush1.bf16.msra.mxu0 0
        %1353 = vmatprep.subr.bf16.mxu0 0
        %1354 = vmatpush1.bf16.msra.mxu0 0
        %1355 = vmatprep.subr.bf16.mxu0 0
        %1356 = vmatpush1.bf16.msra.mxu0 0
        %1357 = vmatprep.subr.bf16.mxu0 0
        %1358 = vmatpush1.bf16.msra.mxu0 0
        %1359 = vmatprep.subr.bf16.mxu0 0
        %1360 = vmatpush1.bf16.msra.mxu0 0
        %1361 = vmatprep.mubr.bf16.mxu0 0
        %1362 = vmatmul.mubr.bf16.gmra.mrb[0].mxu0 %v1315
        %v1363 = vpop.f32.mrb[0].mxu0
        %v1364 = vadd.f32 0.0, %v1363
        %v1365 = vpop.f32.mrb[0].mxu0
        %v1366 = vadd.f32 0.0, %v1365
        %v1367 = vpop.f32.mrb[0].mxu0
        %v1368 = vpop.f32.mrb[0].mxu0
        %1369 = vdwg.mxu0
        %1370 = vmatprep.subr.bf16.mxu0 %v1327
        %1371 = vmatpush1.bf16.msra.mxu0 %v1324
        %1372 = vmatprep.subr.bf16.mxu0 0
        %1373 = vmatpush1.bf16.msra.mxu0 0
        %1374 = vmatprep.subr.bf16.mxu0 0
        %1375 = vmatpush1.bf16.msra.mxu0 0
        %1376 = vmatprep.subr.bf16.mxu0 0
        %1377 = vmatpush1.bf16.msra.mxu0 0
        %1378 = vmatprep.subr.bf16.mxu0 0
        %1379 = vmatpush1.bf16.msra.mxu0 0
        %1380 = vmatprep.subr.bf16.mxu0 0
        %1381 = vmatpush1.bf16.msra.mxu0 0
        %1382 = vmatprep.subr.bf16.mxu0 0
        %1383 = vmatpush1.bf16.msra.mxu0 0
        %1384 = vmatprep.subr.bf16.mxu0 0
        %1385 = vmatpush1.bf16.msra.mxu0 0
        %1386 = vmatprep.subr.bf16.mxu0 0
        %1387 = vmatpush1.bf16.msra.mxu0 0
        %1388 = vmatprep.subr.bf16.mxu0 0
        %1389 = vmatpush1.bf16.msra.mxu0 0
        %1390 = vmatprep.subr.bf16.mxu0 0
        %1391 = vmatpush1.bf16.msra.mxu0 0
        %1392 = vmatprep.subr.bf16.mxu0 0
        %1393 = vmatpush1.bf16.msra.mxu0 0
        %1394 = vmatprep.subr.bf16.mxu0 0
        %1395 = vmatpush1.bf16.msra.mxu0 0
        %1396 = vmatprep.subr.bf16.mxu0 0
        %1397 = vmatpush1.bf16.msra.mxu0 0
        %1398 = vmatprep.subr.bf16.mxu0 0
        %1399 = vmatpush1.bf16.msra.mxu0 0
        %1400 = vmatprep.subr.bf16.mxu0 0
        %1401 = vmatpush1.bf16.msra.mxu0 0
        %1402 = vmatprep.mubr.bf16.mxu0 0
        %1403 = vmatmul.mubr.bf16.gmra.mrb[0].mxu0 %v1315
        %v1404 = vpop.f32.mrb[0].mxu0
        %v1405 = vadd.f32 0.0, %v1404
        %v1406 = vpop.f32.mrb[0].mxu0
        %v1407 = vadd.f32 0.0, %v1406
        %v1408 = vpop.f32.mrb[0].mxu0
        %v1409 = vpop.f32.mrb[0].mxu0
        %1410 = vdwg.mxu0
        %v1411 = vadd.f32 %v1238, %v1364
        %v1412 = vadd.f32 %v1239, %v1366
        %v1413 = vadd.f32 %v1240, %v1405
        %v1414 = vadd.f32 %v1241, %v1407
        %s1415 = scalar_lea.vmem %s1, 28
        %v1416 = vld [vmem:[%s1415] sm:$0xf]
        %vm1417 = vcmp.gt.f32.partialorder %v1416, 0.5
        %v1418 = vsel %vm1417, 1, 0
        %v1419 = vlaneseq
        %v1420 = vshrl.u32 %v1419, 7
        %v1421 = vsub.s32 0, %v1420
        %v1422 = vrot.slane %v1418, %v1421
        %v1423 = vlaneseq
        %v1424 = vshrl.u32 %v1423, 7
        %v1425 = vsub.s32 1, %v1424
        %v1426 = vrot.slane %v1418, %v1425
        %v1427 = vlaneseq
        %v1428 = vshrl.u32 %v1427, 7
        %v1429 = vsub.s32 2, %v1428
        %v1430 = vrot.slane %v1418, %v1429
        %v1431 = vlaneseq
        %v1432 = vshrl.u32 %v1431, 7
        %v1433 = vsub.s32 3, %v1432
        %v1434 = vrot.slane %v1418, %v1433
        %vm1435 = vcmp.eq.s32.totalorder %v1422, 1
        %vm1436 = vcmp.eq.s32.totalorder %v1426, 1
        %vm1437 = vcmp.eq.s32.totalorder %v1430, 1
        %vm1438 = vcmp.eq.s32.totalorder %v1434, 1
        %vm1439 = vmpackc.low %vm1436, %vm1435
        %vm1440 = vmpackc.low %vm1438, %vm1437
        %v1441 = vsel %vm1439, 65537, 0
        %v1442 = vsel %vm1440, 65537, 0
        %1443 = vrot.lane.b32.xlu0 %v1441, 72
        %v1444 = vpop.permute.xlu0 %1443
        %1445 = vrot.lane.b32.xlu0 %v1442, 72
        %v1446 = vpop.permute.xlu0 %1445
        %v1447 = vrot.slane %v1444, 4
        %v1448 = vrot.slane %v1446, 4
        %v1449 = vsel %vm316, %v1447, %v1444
        %v1450 = vsel %vm237, %v1447, %v1448
        %v1451 = vsel %vm316, %v1450, %v1446
        %vm1452 = vcmp.ne.s16.totalorder %v1449, 0
        %vm1453 = vcmp.ne.s16.totalorder %v1451, 0
        %vm1454 = vcmp.ne.s16.totalorder %v1448, 0
        %v1455 = vsel %vm1452, %v199, 0
        %v1456 = vsel %vm1453, %v200, 0
        %v1457 = vsel %vm1454, %v201, 0
        %s1458 = scalar_lea.vmem %s2, 28
        %v1459 = vld [vmem:[%s1458] sm:$0xf]
        %v1463 = vunpack.c.l.b16 %v1455
        %v1464 = vunpack.c.h.b16 %v1455
        %v1465 = vunpack.c.l.b16 %v1456
        %v1466 = vunpack.c.h.b16 %v1456
        %v1467 = vunpack.c.l.b16 %v1457
        %v1468 = vpack.c.b16 %v1463, %v1463
        %v1469 = vpack.c.b16 %v1464, %v1464
        %v1470 = vpack.c.b16 %v1465, %v1465
        %v1471 = vpack.c.b16 %v1466, %v1466
        %v1472 = vpack.c.b16 %v1467, %v1467
        %1473 = vrot.lane.b32.xlu0 %v1468, 56
        %v1474 = vpop.permute.xlu0 %1473
        %1475 = vrot.lane.b32.xlu0 %v1469, 56
        %v1476 = vpop.permute.xlu0 %1475
        %1477 = vrot.lane.b32.xlu0 %v1470, 56
        %v1478 = vpop.permute.xlu0 %1477
        %1479 = vrot.lane.b32.xlu0 %v1471, 56
        %v1480 = vpop.permute.xlu0 %1479
        %1481 = vrot.lane.b32.xlu0 %v1472, 56
        %v1482 = vpop.permute.xlu0 %1481
        %v1483 = vsel %vm281, %v1474, %v1476
        %v1484 = vsel %vm281, %v1476, %v1478
        %v1485 = vsel %vm281, %v1478, %v1480
        %v1486 = vsel %vm281, %v1480, %v1482
        %v1488 = vsel %vm321, %v1459, 0
        %v1491 = vsel %vm325, %v1483, 0
        %v1494 = vsel %vm325, %v1484, 0
        %v1497 = vsel %vm325, %v1485, 0
        %v1500 = vsel %vm325, %v1486, 0
        %1502 = vmatprep.subr.bf16.mxu0 %v1494
        %1503 = vmatpush1.bf16.msra.mxu0 %v1491
        %1504 = vmatprep.subr.bf16.mxu0 0
        %1505 = vmatpush1.bf16.msra.mxu0 0
        %1506 = vmatprep.subr.bf16.mxu0 0
        %1507 = vmatpush1.bf16.msra.mxu0 0
        %1508 = vmatprep.subr.bf16.mxu0 0
        %1509 = vmatpush1.bf16.msra.mxu0 0
        %1510 = vmatprep.subr.bf16.mxu0 0
        %1511 = vmatpush1.bf16.msra.mxu0 0
        %1512 = vmatprep.subr.bf16.mxu0 0
        %1513 = vmatpush1.bf16.msra.mxu0 0
        %1514 = vmatprep.subr.bf16.mxu0 0
        %1515 = vmatpush1.bf16.msra.mxu0 0
        %1516 = vmatprep.subr.bf16.mxu0 0
        %1517 = vmatpush1.bf16.msra.mxu0 0
        %1518 = vmatprep.subr.bf16.mxu0 0
        %1519 = vmatpush1.bf16.msra.mxu0 0
        %1520 = vmatprep.subr.bf16.mxu0 0
        %1521 = vmatpush1.bf16.msra.mxu0 0
        %1522 = vmatprep.subr.bf16.mxu0 0
        %1523 = vmatpush1.bf16.msra.mxu0 0
        %1524 = vmatprep.subr.bf16.mxu0 0
        %1525 = vmatpush1.bf16.msra.mxu0 0
        %1526 = vmatprep.subr.bf16.mxu0 0
        %1527 = vmatpush1.bf16.msra.mxu0 0
        %1528 = vmatprep.subr.bf16.mxu0 0
        %1529 = vmatpush1.bf16.msra.mxu0 0
        %1530 = vmatprep.subr.bf16.mxu0 0
        %1531 = vmatpush1.bf16.msra.mxu0 0
        %1532 = vmatprep.subr.bf16.mxu0 0
        %1533 = vmatpush1.bf16.msra.mxu0 0
        %1534 = vmatprep.mubr.bf16.mxu0 0
        %1535 = vmatmul.mubr.bf16.gmra.mrb[0].mxu0 %v1488
        %v1536 = vpop.f32.mrb[0].mxu0
        %v1537 = vadd.f32 0.0, %v1536
        %v1538 = vpop.f32.mrb[0].mxu0
        %v1539 = vadd.f32 0.0, %v1538
        %v1540 = vpop.f32.mrb[0].mxu0
        %v1541 = vpop.f32.mrb[0].mxu0
        %1542 = vdwg.mxu0
        %1543 = vmatprep.subr.bf16.mxu0 %v1500
        %1544 = vmatpush1.bf16.msra.mxu0 %v1497
        %1545 = vmatprep.subr.bf16.mxu0 0
        %1546 = vmatpush1.bf16.msra.mxu0 0
        %1547 = vmatprep.subr.bf16.mxu0 0
        %1548 = vmatpush1.bf16.msra.mxu0 0
        %1549 = vmatprep.subr.bf16.mxu0 0
        %1550 = vmatpush1.bf16.msra.mxu0 0
        %1551 = vmatprep.subr.bf16.mxu0 0
        %1552 = vmatpush1.bf16.msra.mxu0 0
        %1553 = vmatprep.subr.bf16.mxu0 0
        %1554 = vmatpush1.bf16.msra.mxu0 0
        %1555 = vmatprep.subr.bf16.mxu0 0
        %1556 = vmatpush1.bf16.msra.mxu0 0
        %1557 = vmatprep.subr.bf16.mxu0 0
        %1558 = vmatpush1.bf16.msra.mxu0 0
        %1559 = vmatprep.subr.bf16.mxu0 0
        %1560 = vmatpush1.bf16.msra.mxu0 0
        %1561 = vmatprep.subr.bf16.mxu0 0
        %1562 = vmatpush1.bf16.msra.mxu0 0
        %1563 = vmatprep.subr.bf16.mxu0 0
        %1564 = vmatpush1.bf16.msra.mxu0 0
        %1565 = vmatprep.subr.bf16.mxu0 0
        %1566 = vmatpush1.bf16.msra.mxu0 0
        %1567 = vmatprep.subr.bf16.mxu0 0
        %1568 = vmatpush1.bf16.msra.mxu0 0
        %1569 = vmatprep.subr.bf16.mxu0 0
        %1570 = vmatpush1.bf16.msra.mxu0 0
        %1571 = vmatprep.subr.bf16.mxu0 0
        %1572 = vmatpush1.bf16.msra.mxu0 0
        %1573 = vmatprep.subr.bf16.mxu0 0
        %1574 = vmatpush1.bf16.msra.mxu0 0
        %1575 = vmatprep.mubr.bf16.mxu0 0
        %1576 = vmatmul.mubr.bf16.gmra.mrb[0].mxu0 %v1488
        %v1577 = vpop.f32.mrb[0].mxu0
        %v1578 = vadd.f32 0.0, %v1577
        %v1579 = vpop.f32.mrb[0].mxu0
        %v1580 = vadd.f32 0.0, %v1579
        %v1581 = vpop.f32.mrb[0].mxu0
        %v1582 = vpop.f32.mrb[0].mxu0
        %1583 = vdwg.mxu0
        %v1584 = vadd.f32 %v1411, %v1537
        %v1585 = vadd.f32 %v1412, %v1539
        %v1586 = vadd.f32 %v1413, %v1578
        %v1587 = vadd.f32 %v1414, %v1580
        %s1588 = scalar_lea.vmem %s1, 32
        %v1589 = vld [vmem:[%s1588] sm:$0xf]
        %vm1590 = vcmp.gt.f32.partialorder %v1589, 0.5
        %v1591 = vsel %vm1590, 1, 0
        %v1592 = vlaneseq
        %v1593 = vshrl.u32 %v1592, 7
        %v1594 = vsub.s32 0, %v1593
        %v1595 = vrot.slane %v1591, %v1594
        %v1596 = vlaneseq
        %v1597 = vshrl.u32 %v1596, 7
        %v1598 = vsub.s32 1, %v1597
        %v1599 = vrot.slane %v1591, %v1598
        %v1600 = vlaneseq
        %v1601 = vshrl.u32 %v1600, 7
        %v1602 = vsub.s32 2, %v1601
        %v1603 = vrot.slane %v1591, %v1602
        %v1604 = vlaneseq
        %v1605 = vshrl.u32 %v1604, 7
        %v1606 = vsub.s32 3, %v1605
        %v1607 = vrot.slane %v1591, %v1606
        %vm1608 = vcmp.eq.s32.totalorder %v1595, 1
        %vm1609 = vcmp.eq.s32.totalorder %v1599, 1
        %vm1610 = vcmp.eq.s32.totalorder %v1603, 1
        %vm1611 = vcmp.eq.s32.totalorder %v1607, 1
        %vm1612 = vmpackc.low %vm1609, %vm1608
        %vm1613 = vmpackc.low %vm1611, %vm1610
        %v1614 = vsel %vm1612, 65537, 0
        %v1615 = vsel %vm1613, 65537, 0
        %1616 = vrot.lane.b32.xlu0 %v1614, 73
        %v1617 = vpop.permute.xlu0 %1616
        %1618 = vrot.lane.b32.xlu0 %v1615, 73
        %v1619 = vpop.permute.xlu0 %1618
        %v1620 = vrot.slane %v1617, 4
        %v1621 = vrot.slane %v1619, 4
        %v1622 = vsel %vm443, %v1620, %v1617
        %v1623 = vsel %vm237, %v1620, %v1621
        %v1624 = vsel %vm443, %v1623, %v1619
        %vm1625 = vcmp.ne.s16.totalorder %v1622, 0
        %vm1626 = vcmp.ne.s16.totalorder %v1624, 0
        %vm1627 = vcmp.ne.s16.totalorder %v1621, 0
        %v1628 = vsel %vm1625, %v199, 0
        %v1629 = vsel %vm1626, %v200, 0
        %v1630 = vsel %vm1627, %v201, 0
        %s1631 = scalar_lea.vmem %s2, 32
        %v1632 = vld [vmem:[%s1631] sm:$0xf]
        %v1636 = vunpack.c.l.b16 %v1628
        %v1637 = vunpack.c.h.b16 %v1628
        %v1638 = vunpack.c.l.b16 %v1629
        %v1639 = vunpack.c.h.b16 %v1629
        %v1640 = vunpack.c.l.b16 %v1630
        %v1641 = vpack.c.b16 %v1636, %v1636
        %v1642 = vpack.c.b16 %v1637, %v1637
        %v1643 = vpack.c.b16 %v1638, %v1638
        %v1644 = vpack.c.b16 %v1639, %v1639
        %v1645 = vpack.c.b16 %v1640, %v1640
        %1646 = vrot.lane.b32.xlu0 %v1641, 55
        %v1647 = vpop.permute.xlu0 %1646
        %1648 = vrot.lane.b32.xlu0 %v1642, 55
        %v1649 = vpop.permute.xlu0 %1648
        %1650 = vrot.lane.b32.xlu0 %v1643, 55
        %v1651 = vpop.permute.xlu0 %1650
        %1652 = vrot.lane.b32.xlu0 %v1644, 55
        %v1653 = vpop.permute.xlu0 %1652
        %1654 = vrot.lane.b32.xlu0 %v1645, 55
        %v1655 = vpop.permute.xlu0 %1654
        %v1656 = vsel %vm235, %v1647, %v1649
        %v1657 = vsel %vm235, %v1649, %v1651
        %v1658 = vsel %vm235, %v1651, %v1653
        %v1659 = vsel %vm235, %v1653, %v1655
        %v1661 = vsel %vm321, %v1632, 0
        %v1664 = vsel %vm325, %v1656, 0
        %v1667 = vsel %vm325, %v1657, 0
        %v1670 = vsel %vm325, %v1658, 0
        %v1673 = vsel %vm325, %v1659, 0
        %1675 = vmatprep.subr.bf16.mxu0 %v1667
        %1676 = vmatpush1.bf16.msra.mxu0 %v1664
        %1677 = vmatprep.subr.bf16.mxu0 0
        %1678 = vmatpush1.bf16.msra.mxu0 0
        %1679 = vmatprep.subr.bf16.mxu0 0
        %1680 = vmatpush1.bf16.msra.mxu0 0
        %1681 = vmatprep.subr.bf16.mxu0 0
        %1682 = vmatpush1.bf16.msra.mxu0 0
        %1683 = vmatprep.subr.bf16.mxu0 0
        %1684 = vmatpush1.bf16.msra.mxu0 0
        %1685 = vmatprep.subr.bf16.mxu0 0
        %1686 = vmatpush1.bf16.msra.mxu0 0
        %1687 = vmatprep.subr.bf16.mxu0 0
        %1688 = vmatpush1.bf16.msra.mxu0 0
        %1689 = vmatprep.subr.bf16.mxu0 0
        %1690 = vmatpush1.bf16.msra.mxu0 0
        %1691 = vmatprep.subr.bf16.mxu0 0
        %1692 = vmatpush1.bf16.msra.mxu0 0
        %1693 = vmatprep.subr.bf16.mxu0 0
        %1694 = vmatpush1.bf16.msra.mxu0 0
        %1695 = vmatprep.subr.bf16.mxu0 0
        %1696 = vmatpush1.bf16.msra.mxu0 0
        %1697 = vmatprep.subr.bf16.mxu0 0
        %1698 = vmatpush1.bf16.msra.mxu0 0
        %1699 = vmatprep.subr.bf16.mxu0 0
        %1700 = vmatpush1.bf16.msra.mxu0 0
        %1701 = vmatprep.subr.bf16.mxu0 0
        %1702 = vmatpush1.bf16.msra.mxu0 0
        %1703 = vmatprep.subr.bf16.mxu0 0
        %1704 = vmatpush1.bf16.msra.mxu0 0
        %1705 = vmatprep.subr.bf16.mxu0 0
        %1706 = vmatpush1.bf16.msra.mxu0 0
        %1707 = vmatprep.mubr.bf16.mxu0 0
        %1708 = vmatmul.mubr.bf16.gmra.mrb[0].mxu0 %v1661
        %v1709 = vpop.f32.mrb[0].mxu0
        %v1710 = vadd.f32 0.0, %v1709
        %v1711 = vpop.f32.mrb[0].mxu0
        %v1712 = vadd.f32 0.0, %v1711
        %v1713 = vpop.f32.mrb[0].mxu0
        %v1714 = vpop.f32.mrb[0].mxu0
        %1715 = vdwg.mxu0
        %1716 = vmatprep.subr.bf16.mxu0 %v1673
        %1717 = vmatpush1.bf16.msra.mxu0 %v1670
        %1718 = vmatprep.subr.bf16.mxu0 0
        %1719 = vmatpush1.bf16.msra.mxu0 0
        %1720 = vmatprep.subr.bf16.mxu0 0
        %1721 = vmatpush1.bf16.msra.mxu0 0
        %1722 = vmatprep.subr.bf16.mxu0 0
        %1723 = vmatpush1.bf16.msra.mxu0 0
        %1724 = vmatprep.subr.bf16.mxu0 0
        %1725 = vmatpush1.bf16.msra.mxu0 0
        %1726 = vmatprep.subr.bf16.mxu0 0
        %1727 = vmatpush1.bf16.msra.mxu0 0
        %1728 = vmatprep.subr.bf16.mxu0 0
        %1729 = vmatpush1.bf16.msra.mxu0 0
        %1730 = vmatprep.subr.bf16.mxu0 0
        %1731 = vmatpush1.bf16.msra.mxu0 0
        %1732 = vmatprep.subr.bf16.mxu0 0
        %1733 = vmatpush1.bf16.msra.mxu0 0
        %1734 = vmatprep.subr.bf16.mxu0 0
        %1735 = vmatpush1.bf16.msra.mxu0 0
        %1736 = vmatprep.subr.bf16.mxu0 0
        %1737 = vmatpush1.bf16.msra.mxu0 0
        %1738 = vmatprep.subr.bf16.mxu0 0
        %1739 = vmatpush1.bf16.msra.mxu0 0
        %1740 = vmatprep.subr.bf16.mxu0 0
        %1741 = vmatpush1.bf16.msra.mxu0 0
        %1742 = vmatprep.subr.bf16.mxu0 0
        %1743 = vmatpush1.bf16.msra.mxu0 0
        %1744 = vmatprep.subr.bf16.mxu0 0
        %1745 = vmatpush1.bf16.msra.mxu0 0
        %1746 = vmatprep.subr.bf16.mxu0 0
        %1747 = vmatpush1.bf16.msra.mxu0 0
        %1748 = vmatprep.mubr.bf16.mxu0 0
        %1749 = vmatmul.mubr.bf16.gmra.mrb[0].mxu0 %v1661
        %v1750 = vpop.f32.mrb[0].mxu0
        %v1751 = vadd.f32 0.0, %v1750
        %v1752 = vpop.f32.mrb[0].mxu0
        %v1753 = vadd.f32 0.0, %v1752
        %v1754 = vpop.f32.mrb[0].mxu0
        %v1755 = vpop.f32.mrb[0].mxu0
        %1756 = vdwg.mxu0
        %v1757 = vadd.f32 %v1584, %v1710
        %v1758 = vadd.f32 %v1585, %v1712
        %v1759 = vadd.f32 %v1586, %v1751
        %v1760 = vadd.f32 %v1587, %v1753
        %s1761 = scalar_lea.vmem %s1, 36
        %v1762 = vld [vmem:[%s1761] sm:$0xf]
        %vm1763 = vcmp.gt.f32.partialorder %v1762, 0.5
        %v1764 = vsel %vm1763, 1, 0
        %v1765 = vlaneseq
        %v1766 = vshrl.u32 %v1765, 7
        %v1767 = vsub.s32 0, %v1766
        %v1768 = vrot.slane %v1764, %v1767
        %v1769 = vlaneseq
        %v1770 = vshrl.u32 %v1769, 7
        %v1771 = vsub.s32 1, %v1770
        %v1772 = vrot.slane %v1764, %v1771
        %v1773 = vlaneseq
        %v1774 = vshrl.u32 %v1773, 7
        %v1775 = vsub.s32 2, %v1774
        %v1776 = vrot.slane %v1764, %v1775
        %v1777 = vlaneseq
        %v1778 = vshrl.u32 %v1777, 7
        %v1779 = vsub.s32 3, %v1778
        %v1780 = vrot.slane %v1764, %v1779
        %vm1781 = vcmp.eq.s32.totalorder %v1768, 1
        %vm1782 = vcmp.eq.s32.totalorder %v1772, 1
        %vm1783 = vcmp.eq.s32.totalorder %v1776, 1
        %vm1784 = vcmp.eq.s32.totalorder %v1780, 1
        %vm1785 = vmpackc.low %vm1782, %vm1781
        %vm1786 = vmpackc.low %vm1784, %vm1783
        %v1787 = vsel %vm1785, 65537, 0
        %v1788 = vsel %vm1786, 65537, 0
        %1789 = vrot.lane.b32.xlu0 %v1787, 119
        %v1790 = vpop.permute.xlu0 %1789
        %1791 = vrot.lane.b32.xlu0 %v1788, 119
        %v1792 = vpop.permute.xlu0 %1791
        %v1793 = vrot.slane %v1790, 4
        %v1794 = vrot.slane %v1792, 4
        %vm1795 = vcmask 973824
        %v1796 = vsel %vm1795, %v1793, %v1790
        %v1797 = vsel %vm237, %v1793, %v1794
        %v1798 = vsel %vm1795, %v1797, %v1792
        %vm1799 = vcmp.ne.s16.totalorder %v1796, 0
        %vm1800 = vcmp.ne.s16.totalorder %v1798, 0
        %vm1801 = vcmp.ne.s16.totalorder %v1794, 0
        %v1802 = vsel %vm1799, %v199, 0
        %v1803 = vsel %vm1800, %v200, 0
        %v1804 = vsel %vm1801, %v201, 0
        %s1805 = scalar_lea.vmem %s2, 36
        %v1806 = vld [vmem:[%s1805] sm:$0xf]
        %v1810 = vunpack.c.l.b16 %v1802
        %v1811 = vunpack.c.h.b16 %v1802
        %v1812 = vunpack.c.l.b16 %v1803
        %v1813 = vunpack.c.h.b16 %v1803
        %v1814 = vunpack.c.l.b16 %v1804
        %v1815 = vpack.c.b16 %v1810, %v1810
        %v1816 = vpack.c.b16 %v1811, %v1811
        %v1817 = vpack.c.b16 %v1812, %v1812
        %v1818 = vpack.c.b16 %v1813, %v1813
        %v1819 = vpack.c.b16 %v1814, %v1814
        %1820 = vrot.lane.b32.xlu0 %v1815, 9
        %v1821 = vpop.permute.xlu0 %1820
        %1822 = vrot.lane.b32.xlu0 %v1816, 9
        %v1823 = vpop.permute.xlu0 %1822
        %1824 = vrot.lane.b32.xlu0 %v1817, 9
        %v1825 = vpop.permute.xlu0 %1824
        %1826 = vrot.lane.b32.xlu0 %v1818, 9
        %v1827 = vpop.permute.xlu0 %1826
        %1828 = vrot.lane.b32.xlu0 %v1819, 9
        %v1829 = vpop.permute.xlu0 %1828
        %vm1830 = vcmask 72704
        %v1831 = vsel %vm1830, %v1821, %v1823
        %v1832 = vsel %vm1830, %v1823, %v1825
        %v1833 = vsel %vm1830, %v1825, %v1827
        %v1834 = vsel %vm1830, %v1827, %v1829
        %v1836 = vsel %vm321, %v1806, 0
        %v1839 = vsel %vm325, %v1831, 0
        %v1842 = vsel %vm325, %v1832, 0
        %v1845 = vsel %vm325, %v1833, 0
        %v1848 = vsel %vm325, %v1834, 0
        %1850 = vmatprep.subr.bf16.mxu0 %v1842
        %1851 = vmatpush1.bf16.msra.mxu0 %v1839
        %1852 = vmatprep.subr.bf16.mxu0 0
        %1853 = vmatpush1.bf16.msra.mxu0 0
        %1854 = vmatprep.subr.bf16.mxu0 0
        %1855 = vmatpush1.bf16.msra.mxu0 0
        %1856 = vmatprep.subr.bf16.mxu0 0
        %1857 = vmatpush1.bf16.msra.mxu0 0
        %1858 = vmatprep.subr.bf16.mxu0 0
        %1859 = vmatpush1.bf16.msra.mxu0 0
        %1860 = vmatprep.subr.bf16.mxu0 0
        %1861 = vmatpush1.bf16.msra.mxu0 0
        %1862 = vmatprep.subr.bf16.mxu0 0
        %1863 = vmatpush1.bf16.msra.mxu0 0
        %1864 = vmatprep.subr.bf16.mxu0 0
        %1865 = vmatpush1.bf16.msra.mxu0 0
        %1866 = vmatprep.subr.bf16.mxu0 0
        %1867 = vmatpush1.bf16.msra.mxu0 0
        %1868 = vmatprep.subr.bf16.mxu0 0
        %1869 = vmatpush1.bf16.msra.mxu0 0
        %1870 = vmatprep.subr.bf16.mxu0 0
        %1871 = vmatpush1.bf16.msra.mxu0 0
        %1872 = vmatprep.subr.bf16.mxu0 0
        %1873 = vmatpush1.bf16.msra.mxu0 0
        %1874 = vmatprep.subr.bf16.mxu0 0
        %1875 = vmatpush1.bf16.msra.mxu0 0
        %1876 = vmatprep.subr.bf16.mxu0 0
        %1877 = vmatpush1.bf16.msra.mxu0 0
        %1878 = vmatprep.subr.bf16.mxu0 0
        %1879 = vmatpush1.bf16.msra.mxu0 0
        %1880 = vmatprep.subr.bf16.mxu0 0
        %1881 = vmatpush1.bf16.msra.mxu0 0
        %1882 = vmatprep.mubr.bf16.mxu0 0
        %1883 = vmatmul.mubr.bf16.gmra.mrb[0].mxu0 %v1836
        %v1884 = vpop.f32.mrb[0].mxu0
        %v1885 = vadd.f32 0.0, %v1884
        %v1886 = vpop.f32.mrb[0].mxu0
        %v1887 = vadd.f32 0.0, %v1886
        %v1888 = vpop.f32.mrb[0].mxu0
        %v1889 = vpop.f32.mrb[0].mxu0
        %1890 = vdwg.mxu0
        %1891 = vmatprep.subr.bf16.mxu0 %v1848
        %1892 = vmatpush1.bf16.msra.mxu0 %v1845
        %1893 = vmatprep.subr.bf16.mxu0 0
        %1894 = vmatpush1.bf16.msra.mxu0 0
        %1895 = vmatprep.subr.bf16.mxu0 0
        %1896 = vmatpush1.bf16.msra.mxu0 0
        %1897 = vmatprep.subr.bf16.mxu0 0
        %1898 = vmatpush1.bf16.msra.mxu0 0
        %1899 = vmatprep.subr.bf16.mxu0 0
        %1900 = vmatpush1.bf16.msra.mxu0 0
        %1901 = vmatprep.subr.bf16.mxu0 0
        %1902 = vmatpush1.bf16.msra.mxu0 0
        %1903 = vmatprep.subr.bf16.mxu0 0
        %1904 = vmatpush1.bf16.msra.mxu0 0
        %1905 = vmatprep.subr.bf16.mxu0 0
        %1906 = vmatpush1.bf16.msra.mxu0 0
        %1907 = vmatprep.subr.bf16.mxu0 0
        %1908 = vmatpush1.bf16.msra.mxu0 0
        %1909 = vmatprep.subr.bf16.mxu0 0
        %1910 = vmatpush1.bf16.msra.mxu0 0
        %1911 = vmatprep.subr.bf16.mxu0 0
        %1912 = vmatpush1.bf16.msra.mxu0 0
        %1913 = vmatprep.subr.bf16.mxu0 0
        %1914 = vmatpush1.bf16.msra.mxu0 0
        %1915 = vmatprep.subr.bf16.mxu0 0
        %1916 = vmatpush1.bf16.msra.mxu0 0
        %1917 = vmatprep.subr.bf16.mxu0 0
        %1918 = vmatpush1.bf16.msra.mxu0 0
        %1919 = vmatprep.subr.bf16.mxu0 0
        %1920 = vmatpush1.bf16.msra.mxu0 0
        %1921 = vmatprep.subr.bf16.mxu0 0
        %1922 = vmatpush1.bf16.msra.mxu0 0
        %1923 = vmatprep.mubr.bf16.mxu0 0
        %1924 = vmatmul.mubr.bf16.gmra.mrb[0].mxu0 %v1836
        %v1925 = vpop.f32.mrb[0].mxu0
        %v1926 = vadd.f32 0.0, %v1925
        %v1927 = vpop.f32.mrb[0].mxu0
        %v1928 = vadd.f32 0.0, %v1927
        %v1929 = vpop.f32.mrb[0].mxu0
        %v1930 = vpop.f32.mrb[0].mxu0
        %1931 = vdwg.mxu0
        %v1932 = vadd.f32 %v1757, %v1885
        %v1933 = vadd.f32 %v1758, %v1887
        %v1934 = vadd.f32 %v1759, %v1926
        %v1935 = vadd.f32 %v1760, %v1928
        %s1936 = scalar_lea.vmem %s1, 40
        %v1937 = vld [vmem:[%s1936] sm:$0xf]
        %vm1938 = vcmp.gt.f32.partialorder %v1937, 0.5
        %v1939 = vsel %vm1938, 1, 0
        %v1940 = vlaneseq
        %v1941 = vshrl.u32 %v1940, 7
        %v1942 = vsub.s32 0, %v1941
        %v1943 = vrot.slane %v1939, %v1942
        %v1944 = vlaneseq
        %v1945 = vshrl.u32 %v1944, 7
        %v1946 = vsub.s32 1, %v1945
        %v1947 = vrot.slane %v1939, %v1946
        %v1948 = vlaneseq
        %v1949 = vshrl.u32 %v1948, 7
        %v1950 = vsub.s32 2, %v1949
        %v1951 = vrot.slane %v1939, %v1950
        %v1952 = vlaneseq
        %v1953 = vshrl.u32 %v1952, 7
        %v1954 = vsub.s32 3, %v1953
        %v1955 = vrot.slane %v1939, %v1954
        %vm1956 = vcmp.eq.s32.totalorder %v1943, 1
        %vm1957 = vcmp.eq.s32.totalorder %v1947, 1
        %vm1958 = vcmp.eq.s32.totalorder %v1951, 1
        %vm1959 = vcmp.eq.s32.totalorder %v1955, 1
        %vm1960 = vmpackc.low %vm1957, %vm1956
        %vm1961 = vmpackc.low %vm1959, %vm1958
        %v1962 = vsel %vm1960, 65537, 0
        %v1963 = vsel %vm1961, 65537, 0
        %1964 = vrot.lane.b32.xlu0 %v1962, 120
        %v1965 = vpop.permute.xlu0 %1964
        %1966 = vrot.lane.b32.xlu0 %v1963, 120
        %v1967 = vpop.permute.xlu0 %1966
        %v1968 = vrot.slane %v1965, 4
        %v1969 = vrot.slane %v1967, 4
        %vm1970 = vcmask 982016
        %v1971 = vsel %vm1970, %v1968, %v1965
        %v1972 = vsel %vm237, %v1968, %v1969
        %v1973 = vsel %vm1970, %v1972, %v1967
        %vm1974 = vcmp.ne.s16.totalorder %v1971, 0
        %vm1975 = vcmp.ne.s16.totalorder %v1973, 0
        %vm1976 = vcmp.ne.s16.totalorder %v1969, 0
        %v1977 = vsel %vm1974, %v199, 0
        %v1978 = vsel %vm1975, %v200, 0
        %v1979 = vsel %vm1976, %v201, 0
        %s1980 = scalar_lea.vmem %s2, 40
        %v1981 = vld [vmem:[%s1980] sm:$0xf]
        %v1985 = vunpack.c.l.b16 %v1977
        %v1986 = vunpack.c.h.b16 %v1977
        %v1987 = vunpack.c.l.b16 %v1978
        %v1988 = vunpack.c.h.b16 %v1978
        %v1989 = vunpack.c.l.b16 %v1979
        %v1990 = vpack.c.b16 %v1985, %v1985
        %v1991 = vpack.c.b16 %v1986, %v1986
        %v1992 = vpack.c.b16 %v1987, %v1987
        %v1993 = vpack.c.b16 %v1988, %v1988
        %v1994 = vpack.c.b16 %v1989, %v1989
        %1995 = vrot.lane.b32.xlu0 %v1990, 8
        %v1996 = vpop.permute.xlu0 %1995
        %1997 = vrot.lane.b32.xlu0 %v1991, 8
        %v1998 = vpop.permute.xlu0 %1997
        %1999 = vrot.lane.b32.xlu0 %v1992, 8
        %v2000 = vpop.permute.xlu0 %1999
        %2001 = vrot.lane.b32.xlu0 %v1993, 8
        %v2002 = vpop.permute.xlu0 %2001
        %2003 = vrot.lane.b32.xlu0 %v1994, 8
        %v2004 = vpop.permute.xlu0 %2003
        %vm2005 = vcmask 64512
        %v2006 = vsel %vm2005, %v1996, %v1998
        %v2007 = vsel %vm2005, %v1998, %v2000
        %v2008 = vsel %vm2005, %v2000, %v2002
        %v2009 = vsel %vm2005, %v2002, %v2004
        %v2011 = vsel %vm321, %v1981, 0
        %v2014 = vsel %vm325, %v2006, 0
        %v2017 = vsel %vm325, %v2007, 0
        %v2020 = vsel %vm325, %v2008, 0
        %v2023 = vsel %vm325, %v2009, 0
        %2025 = vmatprep.subr.bf16.mxu0 %v2017
        %2026 = vmatpush1.bf16.msra.mxu0 %v2014
        %2027 = vmatprep.subr.bf16.mxu0 0
        %2028 = vmatpush1.bf16.msra.mxu0 0
        %2029 = vmatprep.subr.bf16.mxu0 0
        %2030 = vmatpush1.bf16.msra.mxu0 0
        %2031 = vmatprep.subr.bf16.mxu0 0
        %2032 = vmatpush1.bf16.msra.mxu0 0
        %2033 = vmatprep.subr.bf16.mxu0 0
        %2034 = vmatpush1.bf16.msra.mxu0 0
        %2035 = vmatprep.subr.bf16.mxu0 0
        %2036 = vmatpush1.bf16.msra.mxu0 0
        %2037 = vmatprep.subr.bf16.mxu0 0
        %2038 = vmatpush1.bf16.msra.mxu0 0
        %2039 = vmatprep.subr.bf16.mxu0 0
        %2040 = vmatpush1.bf16.msra.mxu0 0
        %2041 = vmatprep.subr.bf16.mxu0 0
        %2042 = vmatpush1.bf16.msra.mxu0 0
        %2043 = vmatprep.subr.bf16.mxu0 0
        %2044 = vmatpush1.bf16.msra.mxu0 0
        %2045 = vmatprep.subr.bf16.mxu0 0
        %2046 = vmatpush1.bf16.msra.mxu0 0
        %2047 = vmatprep.subr.bf16.mxu0 0
        %2048 = vmatpush1.bf16.msra.mxu0 0
        %2049 = vmatprep.subr.bf16.mxu0 0
        %2050 = vmatpush1.bf16.msra.mxu0 0
        %2051 = vmatprep.subr.bf16.mxu0 0
        %2052 = vmatpush1.bf16.msra.mxu0 0
        %2053 = vmatprep.subr.bf16.mxu0 0
        %2054 = vmatpush1.bf16.msra.mxu0 0
        %2055 = vmatprep.subr.bf16.mxu0 0
        %2056 = vmatpush1.bf16.msra.mxu0 0
        %2057 = vmatprep.mubr.bf16.mxu0 0
        %2058 = vmatmul.mubr.bf16.gmra.mrb[0].mxu0 %v2011
        %v2059 = vpop.f32.mrb[0].mxu0
        %v2060 = vadd.f32 0.0, %v2059
        %v2061 = vpop.f32.mrb[0].mxu0
        %v2062 = vadd.f32 0.0, %v2061
        %v2063 = vpop.f32.mrb[0].mxu0
        %v2064 = vpop.f32.mrb[0].mxu0
        %2065 = vdwg.mxu0
        %2066 = vmatprep.subr.bf16.mxu0 %v2023
        %2067 = vmatpush1.bf16.msra.mxu0 %v2020
        %2068 = vmatprep.subr.bf16.mxu0 0
        %2069 = vmatpush1.bf16.msra.mxu0 0
        %2070 = vmatprep.subr.bf16.mxu0 0
        %2071 = vmatpush1.bf16.msra.mxu0 0
        %2072 = vmatprep.subr.bf16.mxu0 0
        %2073 = vmatpush1.bf16.msra.mxu0 0
        %2074 = vmatprep.subr.bf16.mxu0 0
        %2075 = vmatpush1.bf16.msra.mxu0 0
        %2076 = vmatprep.subr.bf16.mxu0 0
        %2077 = vmatpush1.bf16.msra.mxu0 0
        %2078 = vmatprep.subr.bf16.mxu0 0
        %2079 = vmatpush1.bf16.msra.mxu0 0
        %2080 = vmatprep.subr.bf16.mxu0 0
        %2081 = vmatpush1.bf16.msra.mxu0 0
        %2082 = vmatprep.subr.bf16.mxu0 0
        %2083 = vmatpush1.bf16.msra.mxu0 0
        %2084 = vmatprep.subr.bf16.mxu0 0
        %2085 = vmatpush1.bf16.msra.mxu0 0
        %2086 = vmatprep.subr.bf16.mxu0 0
        %2087 = vmatpush1.bf16.msra.mxu0 0
        %2088 = vmatprep.subr.bf16.mxu0 0
        %2089 = vmatpush1.bf16.msra.mxu0 0
        %2090 = vmatprep.subr.bf16.mxu0 0
        %2091 = vmatpush1.bf16.msra.mxu0 0
        %2092 = vmatprep.subr.bf16.mxu0 0
        %2093 = vmatpush1.bf16.msra.mxu0 0
        %2094 = vmatprep.subr.bf16.mxu0 0
        %2095 = vmatpush1.bf16.msra.mxu0 0
        %2096 = vmatprep.subr.bf16.mxu0 0
        %2097 = vmatpush1.bf16.msra.mxu0 0
        %2098 = vmatprep.mubr.bf16.mxu0 0
        %2099 = vmatmul.mubr.bf16.gmra.mrb[0].mxu0 %v2011
        %v2100 = vpop.f32.mrb[0].mxu0
        %v2101 = vadd.f32 0.0, %v2100
        %v2102 = vpop.f32.mrb[0].mxu0
        %v2103 = vadd.f32 0.0, %v2102
        %v2104 = vpop.f32.mrb[0].mxu0
        %v2105 = vpop.f32.mrb[0].mxu0
        %2106 = vdwg.mxu0
        %v2107 = vadd.f32 %v1932, %v2060
        %v2108 = vadd.f32 %v1933, %v2062
        %v2109 = vadd.f32 %v1934, %v2101
        %v2110 = vadd.f32 %v1935, %v2103
        %s2111 = scalar_lea.vmem %s1, 44
        %v2112 = vld [vmem:[%s2111] sm:$0xf]
        %vm2113 = vcmp.gt.f32.partialorder %v2112, 0.5
        %v2114 = vsel %vm2113, 1, 0
        %v2115 = vlaneseq
        %v2116 = vshrl.u32 %v2115, 7
        %v2117 = vsub.s32 0, %v2116
        %v2118 = vrot.slane %v2114, %v2117
        %v2119 = vlaneseq
        %v2120 = vshrl.u32 %v2119, 7
        %v2121 = vsub.s32 1, %v2120
        %v2122 = vrot.slane %v2114, %v2121
        %v2123 = vlaneseq
        %v2124 = vshrl.u32 %v2123, 7
        %v2125 = vsub.s32 2, %v2124
        %v2126 = vrot.slane %v2114, %v2125
        %v2127 = vlaneseq
        %v2128 = vshrl.u32 %v2127, 7
        %v2129 = vsub.s32 3, %v2128
        %v2130 = vrot.slane %v2114, %v2129
        %vm2131 = vcmp.eq.s32.totalorder %v2118, 1
        %vm2132 = vcmp.eq.s32.totalorder %v2122, 1
        %vm2133 = vcmp.eq.s32.totalorder %v2126, 1
        %vm2134 = vcmp.eq.s32.totalorder %v2130, 1
        %vm2135 = vmpackc.low %vm2132, %vm2131
        %vm2136 = vmpackc.low %vm2134, %vm2133
        %v2137 = vsel %vm2135, 65537, 0
        %v2138 = vsel %vm2136, 65537, 0
        %2139 = vrot.lane.b32.xlu0 %v2137, 121
        %v2140 = vpop.permute.xlu0 %2139
        %2141 = vrot.lane.b32.xlu0 %v2138, 121
        %v2142 = vpop.permute.xlu0 %2141
        %v2143 = vrot.slane %v2140, 4
        %v2144 = vrot.slane %v2142, 4
        %vm2145 = vcmask 990208
        %v2146 = vsel %vm2145, %v2143, %v2140
        %v2147 = vsel %vm237, %v2143, %v2144
        %v2148 = vsel %vm2145, %v2147, %v2142
        %vm2149 = vcmp.ne.s16.totalorder %v2146, 0
        %vm2150 = vcmp.ne.s16.totalorder %v2148, 0
        %vm2151 = vcmp.ne.s16.totalorder %v2144, 0
        %v2152 = vsel %vm2149, %v199, 0
        %v2153 = vsel %vm2150, %v200, 0
        %v2154 = vsel %vm2151, %v201, 0
        %s2155 = scalar_lea.vmem %s2, 44
        %v2156 = vld [vmem:[%s2155] sm:$0xf]
        %v2160 = vunpack.c.l.b16 %v2152
        %v2161 = vunpack.c.h.b16 %v2152
        %v2162 = vunpack.c.l.b16 %v2153
        %v2163 = vunpack.c.h.b16 %v2153
        %v2164 = vunpack.c.l.b16 %v2154
        %v2165 = vpack.c.b16 %v2160, %v2160
        %v2166 = vpack.c.b16 %v2161, %v2161
        %v2167 = vpack.c.b16 %v2162, %v2162
        %v2168 = vpack.c.b16 %v2163, %v2163
        %v2169 = vpack.c.b16 %v2164, %v2164
        %2170 = vrot.lane.b32.xlu0 %v2165, 7
        %v2171 = vpop.permute.xlu0 %2170
        %2172 = vrot.lane.b32.xlu0 %v2166, 7
        %v2173 = vpop.permute.xlu0 %2172
        %2174 = vrot.lane.b32.xlu0 %v2167, 7
        %v2175 = vpop.permute.xlu0 %2174
        %2176 = vrot.lane.b32.xlu0 %v2168, 7
        %v2177 = vpop.permute.xlu0 %2176
        %2178 = vrot.lane.b32.xlu0 %v2169, 7
        %v2179 = vpop.permute.xlu0 %2178
        %vm2180 = vcmask 56320
        %v2181 = vsel %vm2180, %v2171, %v2173
        %v2182 = vsel %vm2180, %v2173, %v2175
        %v2183 = vsel %vm2180, %v2175, %v2177
        %v2184 = vsel %vm2180, %v2177, %v2179
        %v2186 = vsel %vm321, %v2156, 0
        %v2189 = vsel %vm325, %v2181, 0
        %v2192 = vsel %vm325, %v2182, 0
        %v2195 = vsel %vm325, %v2183, 0
        %v2198 = vsel %vm325, %v2184, 0
        %2200 = vmatprep.subr.bf16.mxu0 %v2192
        %2201 = vmatpush1.bf16.msra.mxu0 %v2189
        %2202 = vmatprep.subr.bf16.mxu0 0
        %2203 = vmatpush1.bf16.msra.mxu0 0
        %2204 = vmatprep.subr.bf16.mxu0 0
        %2205 = vmatpush1.bf16.msra.mxu0 0
        %2206 = vmatprep.subr.bf16.mxu0 0
        %2207 = vmatpush1.bf16.msra.mxu0 0
        %2208 = vmatprep.subr.bf16.mxu0 0
        %2209 = vmatpush1.bf16.msra.mxu0 0
        %2210 = vmatprep.subr.bf16.mxu0 0
        %2211 = vmatpush1.bf16.msra.mxu0 0
        %2212 = vmatprep.subr.bf16.mxu0 0
        %2213 = vmatpush1.bf16.msra.mxu0 0
        %2214 = vmatprep.subr.bf16.mxu0 0
        %2215 = vmatpush1.bf16.msra.mxu0 0
        %2216 = vmatprep.subr.bf16.mxu0 0
        %2217 = vmatpush1.bf16.msra.mxu0 0
        %2218 = vmatprep.subr.bf16.mxu0 0
        %2219 = vmatpush1.bf16.msra.mxu0 0
        %2220 = vmatprep.subr.bf16.mxu0 0
        %2221 = vmatpush1.bf16.msra.mxu0 0
        %2222 = vmatprep.subr.bf16.mxu0 0
        %2223 = vmatpush1.bf16.msra.mxu0 0
        %2224 = vmatprep.subr.bf16.mxu0 0
        %2225 = vmatpush1.bf16.msra.mxu0 0
        %2226 = vmatprep.subr.bf16.mxu0 0
        %2227 = vmatpush1.bf16.msra.mxu0 0
        %2228 = vmatprep.subr.bf16.mxu0 0
        %2229 = vmatpush1.bf16.msra.mxu0 0
        %2230 = vmatprep.subr.bf16.mxu0 0
        %2231 = vmatpush1.bf16.msra.mxu0 0
        %2232 = vmatprep.mubr.bf16.mxu0 0
        %2233 = vmatmul.mubr.bf16.gmra.mrb[0].mxu0 %v2186
        %v2234 = vpop.f32.mrb[0].mxu0
        %v2235 = vadd.f32 0.0, %v2234
        %v2236 = vpop.f32.mrb[0].mxu0
        %v2237 = vadd.f32 0.0, %v2236
        %v2238 = vpop.f32.mrb[0].mxu0
        %v2239 = vpop.f32.mrb[0].mxu0
        %2240 = vdwg.mxu0
        %2241 = vmatprep.subr.bf16.mxu0 %v2198
        %2242 = vmatpush1.bf16.msra.mxu0 %v2195
        %2243 = vmatprep.subr.bf16.mxu0 0
        %2244 = vmatpush1.bf16.msra.mxu0 0
        %2245 = vmatprep.subr.bf16.mxu0 0
        %2246 = vmatpush1.bf16.msra.mxu0 0
        %2247 = vmatprep.subr.bf16.mxu0 0
        %2248 = vmatpush1.bf16.msra.mxu0 0
        %2249 = vmatprep.subr.bf16.mxu0 0
        %2250 = vmatpush1.bf16.msra.mxu0 0
        %2251 = vmatprep.subr.bf16.mxu0 0
        %2252 = vmatpush1.bf16.msra.mxu0 0
        %2253 = vmatprep.subr.bf16.mxu0 0
        %2254 = vmatpush1.bf16.msra.mxu0 0
        %2255 = vmatprep.subr.bf16.mxu0 0
        %2256 = vmatpush1.bf16.msra.mxu0 0
        %2257 = vmatprep.subr.bf16.mxu0 0
        %2258 = vmatpush1.bf16.msra.mxu0 0
        %2259 = vmatprep.subr.bf16.mxu0 0
        %2260 = vmatpush1.bf16.msra.mxu0 0
        %2261 = vmatprep.subr.bf16.mxu0 0
        %2262 = vmatpush1.bf16.msra.mxu0 0
        %2263 = vmatprep.subr.bf16.mxu0 0
        %2264 = vmatpush1.bf16.msra.mxu0 0
        %2265 = vmatprep.subr.bf16.mxu0 0
        %2266 = vmatpush1.bf16.msra.mxu0 0
        %2267 = vmatprep.subr.bf16.mxu0 0
        %2268 = vmatpush1.bf16.msra.mxu0 0
        %2269 = vmatprep.subr.bf16.mxu0 0
        %2270 = vmatpush1.bf16.msra.mxu0 0
        %2271 = vmatprep.subr.bf16.mxu0 0
        %2272 = vmatpush1.bf16.msra.mxu0 0
        %2273 = vmatprep.mubr.bf16.mxu0 0
        %2274 = vmatmul.mubr.bf16.gmra.mrb[0].mxu0 %v2186
        %v2275 = vpop.f32.mrb[0].mxu0
        %v2276 = vadd.f32 0.0, %v2275
        %v2277 = vpop.f32.mrb[0].mxu0
        %v2278 = vadd.f32 0.0, %v2277
        %v2279 = vpop.f32.mrb[0].mxu0
        %v2280 = vpop.f32.mrb[0].mxu0
        %2281 = vdwg.mxu0
        %v2282 = vadd.f32 %v2107, %v2235
        %v2283 = vadd.f32 %v2108, %v2237
        %v2284 = vadd.f32 %v2109, %v2276
        %v2285 = vadd.f32 %v2110, %v2278
        %s2286 = scalar_lea.vmem %s1, 48
        %v2287 = vld [vmem:[%s2286] sm:$0xf]
        %vm2288 = vcmp.gt.f32.partialorder %v2287, 0.5
        %v2289 = vsel %vm2288, 1, 0
        %v2290 = vlaneseq
        %v2291 = vshrl.u32 %v2290, 7
        %v2292 = vsub.s32 0, %v2291
        %v2293 = vrot.slane %v2289, %v2292
        %v2294 = vlaneseq
        %v2295 = vshrl.u32 %v2294, 7
        %v2296 = vsub.s32 1, %v2295
        %v2297 = vrot.slane %v2289, %v2296
        %v2298 = vlaneseq
        %v2299 = vshrl.u32 %v2298, 7
        %v2300 = vsub.s32 2, %v2299
        %v2301 = vrot.slane %v2289, %v2300
        %v2302 = vlaneseq
        %v2303 = vshrl.u32 %v2302, 7
        %v2304 = vsub.s32 3, %v2303
        %v2305 = vrot.slane %v2289, %v2304
        %vm2306 = vcmp.eq.s32.totalorder %v2293, 1
        %vm2307 = vcmp.eq.s32.totalorder %v2297, 1
        %vm2308 = vcmp.eq.s32.totalorder %v2301, 1
        %vm2309 = vcmp.eq.s32.totalorder %v2305, 1
        %vm2310 = vmpackc.low %vm2307, %vm2306
        %vm2311 = vmpackc.low %vm2309, %vm2308
        %v2312 = vsel %vm2310, 65537, 0
        %v2313 = vsel %vm2311, 65537, 0
        %2314 = vrot.lane.b32.xlu0 %v2312, 127
        %v2315 = vpop.permute.xlu0 %2314
        %2316 = vrot.lane.b32.xlu0 %v2313, 127
        %v2317 = vpop.permute.xlu0 %2316
        %v2318 = vrot.slane %v2315, 4
        %v2319 = vrot.slane %v2317, 4
        %vm2320 = vcmask 1039360
        %v2321 = vsel %vm2320, %v2318, %v2315
        %v2322 = vsel %vm237, %v2318, %v2319
        %v2323 = vsel %vm2320, %v2322, %v2317
        %vm2324 = vcmp.ne.s16.totalorder %v2321, 0
        %vm2325 = vcmp.ne.s16.totalorder %v2323, 0
        %vm2326 = vcmp.ne.s16.totalorder %v2319, 0
        %v2327 = vsel %vm2324, %v199, 0
        %v2328 = vsel %vm2325, %v200, 0
        %v2329 = vsel %vm2326, %v201, 0
        %s2330 = scalar_lea.vmem %s2, 48
        %v2331 = vld [vmem:[%s2330] sm:$0xf]
        %v2335 = vunpack.c.l.b16 %v2327
        %v2336 = vunpack.c.h.b16 %v2327
        %v2337 = vunpack.c.l.b16 %v2328
        %v2338 = vunpack.c.h.b16 %v2328
        %v2339 = vunpack.c.l.b16 %v2329
        %v2340 = vpack.c.b16 %v2335, %v2335
        %v2341 = vpack.c.b16 %v2336, %v2336
        %v2342 = vpack.c.b16 %v2337, %v2337
        %v2343 = vpack.c.b16 %v2338, %v2338
        %v2344 = vpack.c.b16 %v2339, %v2339
        %2345 = vrot.lane.b32.xlu0 %v2340, 1
        %v2346 = vpop.permute.xlu0 %2345
        %2347 = vrot.lane.b32.xlu0 %v2341, 1
        %v2348 = vpop.permute.xlu0 %2347
        %2349 = vrot.lane.b32.xlu0 %v2342, 1
        %v2350 = vpop.permute.xlu0 %2349
        %2351 = vrot.lane.b32.xlu0 %v2343, 1
        %v2352 = vpop.permute.xlu0 %2351
        %2353 = vrot.lane.b32.xlu0 %v2344, 1
        %v2354 = vpop.permute.xlu0 %2353
        %vm2355 = vcmask 7168
        %v2356 = vsel %vm2355, %v2346, %v2348
        %v2357 = vsel %vm2355, %v2348, %v2350
        %v2358 = vsel %vm2355, %v2350, %v2352
        %v2359 = vsel %vm2355, %v2352, %v2354
        %v2361 = vsel %vm321, %v2331, 0
        %v2364 = vsel %vm325, %v2356, 0
        %v2367 = vsel %vm325, %v2357, 0
        %v2370 = vsel %vm325, %v2358, 0
        %v2373 = vsel %vm325, %v2359, 0
        %2375 = vmatprep.subr.bf16.mxu0 %v2367
        %2376 = vmatpush1.bf16.msra.mxu0 %v2364
        %2377 = vmatprep.subr.bf16.mxu0 0
        %2378 = vmatpush1.bf16.msra.mxu0 0
        %2379 = vmatprep.subr.bf16.mxu0 0
        %2380 = vmatpush1.bf16.msra.mxu0 0
        %2381 = vmatprep.subr.bf16.mxu0 0
        %2382 = vmatpush1.bf16.msra.mxu0 0
        %2383 = vmatprep.subr.bf16.mxu0 0
        %2384 = vmatpush1.bf16.msra.mxu0 0
        %2385 = vmatprep.subr.bf16.mxu0 0
        %2386 = vmatpush1.bf16.msra.mxu0 0
        %2387 = vmatprep.subr.bf16.mxu0 0
        %2388 = vmatpush1.bf16.msra.mxu0 0
        %2389 = vmatprep.subr.bf16.mxu0 0
        %2390 = vmatpush1.bf16.msra.mxu0 0
        %2391 = vmatprep.subr.bf16.mxu0 0
        %2392 = vmatpush1.bf16.msra.mxu0 0
        %2393 = vmatprep.subr.bf16.mxu0 0
        %2394 = vmatpush1.bf16.msra.mxu0 0
        %2395 = vmatprep.subr.bf16.mxu0 0
        %2396 = vmatpush1.bf16.msra.mxu0 0
        %2397 = vmatprep.subr.bf16.mxu0 0
        %2398 = vmatpush1.bf16.msra.mxu0 0
        %2399 = vmatprep.subr.bf16.mxu0 0
        %2400 = vmatpush1.bf16.msra.mxu0 0
        %2401 = vmatprep.subr.bf16.mxu0 0
        %2402 = vmatpush1.bf16.msra.mxu0 0
        %2403 = vmatprep.subr.bf16.mxu0 0
        %2404 = vmatpush1.bf16.msra.mxu0 0
        %2405 = vmatprep.subr.bf16.mxu0 0
        %2406 = vmatpush1.bf16.msra.mxu0 0
        %2407 = vmatprep.mubr.bf16.mxu0 0
        %2408 = vmatmul.mubr.bf16.gmra.mrb[0].mxu0 %v2361
        %v2409 = vpop.f32.mrb[0].mxu0
        %v2410 = vadd.f32 0.0, %v2409
        %v2411 = vpop.f32.mrb[0].mxu0
        %v2412 = vadd.f32 0.0, %v2411
        %v2413 = vpop.f32.mrb[0].mxu0
        %v2414 = vpop.f32.mrb[0].mxu0
        %2415 = vdwg.mxu0
        %2416 = vmatprep.subr.bf16.mxu0 %v2373
        %2417 = vmatpush1.bf16.msra.mxu0 %v2370
        %2418 = vmatprep.subr.bf16.mxu0 0
        %2419 = vmatpush1.bf16.msra.mxu0 0
        %2420 = vmatprep.subr.bf16.mxu0 0
        %2421 = vmatpush1.bf16.msra.mxu0 0
        %2422 = vmatprep.subr.bf16.mxu0 0
        %2423 = vmatpush1.bf16.msra.mxu0 0
        %2424 = vmatprep.subr.bf16.mxu0 0
        %2425 = vmatpush1.bf16.msra.mxu0 0
        %2426 = vmatprep.subr.bf16.mxu0 0
        %2427 = vmatpush1.bf16.msra.mxu0 0
        %2428 = vmatprep.subr.bf16.mxu0 0
        %2429 = vmatpush1.bf16.msra.mxu0 0
        %2430 = vmatprep.subr.bf16.mxu0 0
        %2431 = vmatpush1.bf16.msra.mxu0 0
        %2432 = vmatprep.subr.bf16.mxu0 0
        %2433 = vmatpush1.bf16.msra.mxu0 0
        %2434 = vmatprep.subr.bf16.mxu0 0
        %2435 = vmatpush1.bf16.msra.mxu0 0
        %2436 = vmatprep.subr.bf16.mxu0 0
        %2437 = vmatpush1.bf16.msra.mxu0 0
        %2438 = vmatprep.subr.bf16.mxu0 0
        %2439 = vmatpush1.bf16.msra.mxu0 0
        %2440 = vmatprep.subr.bf16.mxu0 0
        %2441 = vmatpush1.bf16.msra.mxu0 0
        %2442 = vmatprep.subr.bf16.mxu0 0
        %2443 = vmatpush1.bf16.msra.mxu0 0
        %2444 = vmatprep.subr.bf16.mxu0 0
        %2445 = vmatpush1.bf16.msra.mxu0 0
        %2446 = vmatprep.subr.bf16.mxu0 0
        %2447 = vmatpush1.bf16.msra.mxu0 0
        %2448 = vmatprep.mubr.bf16.mxu0 0
        %2449 = vmatmul.mubr.bf16.gmra.mrb[0].mxu0 %v2361
        %v2450 = vpop.f32.mrb[0].mxu0
        %v2451 = vadd.f32 0.0, %v2450
        %v2452 = vpop.f32.mrb[0].mxu0
        %v2453 = vadd.f32 0.0, %v2452
        %v2454 = vpop.f32.mrb[0].mxu0
        %v2455 = vpop.f32.mrb[0].mxu0
        %2456 = vdwg.mxu0
        %v2457 = vadd.f32 %v2282, %v2410
        %v2458 = vadd.f32 %v2283, %v2412
        %v2459 = vadd.f32 %v2284, %v2451
        %v2460 = vadd.f32 %v2285, %v2453
        %v2461 = vld [vmem:[%s195 + $0x4] sm:$0xff]
        %v2462 = vld [vmem:[%s195 + $0xc] sm:$0xff]
        %s2463 = scalar_lea.vmem %s1, 52
        %v2464 = vld [vmem:[%s2463] sm:$0xf]
        %vm2465 = vcmp.gt.f32.partialorder %v2464, 0.5
        %v2466 = vsel %vm2465, 1, 0
        %v2467 = vlaneseq
        %v2468 = vshrl.u32 %v2467, 7
        %v2469 = vsub.s32 0, %v2468
        %v2470 = vrot.slane %v2466, %v2469
        %v2471 = vlaneseq
        %v2472 = vshrl.u32 %v2471, 7
        %v2473 = vsub.s32 1, %v2472
        %v2474 = vrot.slane %v2466, %v2473
        %v2475 = vlaneseq
        %v2476 = vshrl.u32 %v2475, 7
        %v2477 = vsub.s32 2, %v2476
        %v2478 = vrot.slane %v2466, %v2477
        %v2479 = vlaneseq
        %v2480 = vshrl.u32 %v2479, 7
        %v2481 = vsub.s32 3, %v2480
        %v2482 = vrot.slane %v2466, %v2481
        %vm2483 = vcmp.eq.s32.totalorder %v2470, 1
        %vm2484 = vcmp.eq.s32.totalorder %v2474, 1
        %vm2485 = vcmp.eq.s32.totalorder %v2478, 1
        %vm2486 = vcmp.eq.s32.totalorder %v2482, 1
        %vm2487 = vmpackc.low %vm2484, %vm2483
        %vm2488 = vmpackc.low %vm2486, %vm2485
        %v2489 = vsel %vm2487, %v2461, 0
        %v2490 = vsel %vm2488, %v2462, 0
        %s2491 = scalar_lea.vmem %s2, 52
        %v2492 = vld [vmem:[%s2491] sm:$0xf]
        %v2495 = vunpack.c.l.b16 %v2489
        %v2496 = vunpack.c.h.b16 %v2489
        %v2497 = vunpack.c.l.b16 %v2490
        %v2498 = vunpack.c.h.b16 %v2490
        %v2499 = vpack.c.b16 %v2495, %v2495
        %v2500 = vpack.c.b16 %v2496, %v2496
        %v2501 = vpack.c.b16 %v2497, %v2497
        %v2502 = vpack.c.b16 %v2498, %v2498
        %v2504 = vsel %vm321, %v2492, 0
        %v2507 = vsel %vm325, %v2499, 0
        %v2510 = vsel %vm325, %v2500, 0
        %v2513 = vsel %vm325, %v2501, 0
        %v2516 = vsel %vm325, %v2502, 0
        %2518 = vmatprep.subr.bf16.mxu0 %v2510
        %2519 = vmatpush1.bf16.msra.mxu0 %v2507
        %2520 = vmatprep.subr.bf16.mxu0 0
        %2521 = vmatpush1.bf16.msra.mxu0 0
        %2522 = vmatprep.subr.bf16.mxu0 0
        %2523 = vmatpush1.bf16.msra.mxu0 0
        %2524 = vmatprep.subr.bf16.mxu0 0
        %2525 = vmatpush1.bf16.msra.mxu0 0
        %2526 = vmatprep.subr.bf16.mxu0 0
        %2527 = vmatpush1.bf16.msra.mxu0 0
        %2528 = vmatprep.subr.bf16.mxu0 0
        %2529 = vmatpush1.bf16.msra.mxu0 0
        %2530 = vmatprep.subr.bf16.mxu0 0
        %2531 = vmatpush1.bf16.msra.mxu0 0
        %2532 = vmatprep.subr.bf16.mxu0 0
        %2533 = vmatpush1.bf16.msra.mxu0 0
        %2534 = vmatprep.subr.bf16.mxu0 0
        %2535 = vmatpush1.bf16.msra.mxu0 0
        %2536 = vmatprep.subr.bf16.mxu0 0
        %2537 = vmatpush1.bf16.msra.mxu0 0
        %2538 = vmatprep.subr.bf16.mxu0 0
        %2539 = vmatpush1.bf16.msra.mxu0 0
        %2540 = vmatprep.subr.bf16.mxu0 0
        %2541 = vmatpush1.bf16.msra.mxu0 0
        %2542 = vmatprep.subr.bf16.mxu0 0
        %2543 = vmatpush1.bf16.msra.mxu0 0
        %2544 = vmatprep.subr.bf16.mxu0 0
        %2545 = vmatpush1.bf16.msra.mxu0 0
        %2546 = vmatprep.subr.bf16.mxu0 0
        %2547 = vmatpush1.bf16.msra.mxu0 0
        %2548 = vmatprep.subr.bf16.mxu0 0
        %2549 = vmatpush1.bf16.msra.mxu0 0
        %2550 = vmatprep.mubr.bf16.mxu0 0
        %2551 = vmatmul.mubr.bf16.gmra.mrb[0].mxu0 %v2504
        %v2552 = vpop.f32.mrb[0].mxu0
        %v2553 = vadd.f32 0.0, %v2552
        %v2554 = vpop.f32.mrb[0].mxu0
        %v2555 = vadd.f32 0.0, %v2554
        %v2556 = vpop.f32.mrb[0].mxu0
        %v2557 = vpop.f32.mrb[0].mxu0
        %2558 = vdwg.mxu0
        %2559 = vmatprep.subr.bf16.mxu0 %v2516
        %2560 = vmatpush1.bf16.msra.mxu0 %v2513
        %2561 = vmatprep.subr.bf16.mxu0 0
        %2562 = vmatpush1.bf16.msra.mxu0 0
        %2563 = vmatprep.subr.bf16.mxu0 0
        %2564 = vmatpush1.bf16.msra.mxu0 0
        %2565 = vmatprep.subr.bf16.mxu0 0
        %2566 = vmatpush1.bf16.msra.mxu0 0
        %2567 = vmatprep.subr.bf16.mxu0 0
        %2568 = vmatpush1.bf16.msra.mxu0 0
        %2569 = vmatprep.subr.bf16.mxu0 0
        %2570 = vmatpush1.bf16.msra.mxu0 0
        %2571 = vmatprep.subr.bf16.mxu0 0
        %2572 = vmatpush1.bf16.msra.mxu0 0
        %2573 = vmatprep.subr.bf16.mxu0 0
        %2574 = vmatpush1.bf16.msra.mxu0 0
        %2575 = vmatprep.subr.bf16.mxu0 0
        %2576 = vmatpush1.bf16.msra.mxu0 0
        %2577 = vmatprep.subr.bf16.mxu0 0
        %2578 = vmatpush1.bf16.msra.mxu0 0
        %2579 = vmatprep.subr.bf16.mxu0 0
        %2580 = vmatpush1.bf16.msra.mxu0 0
        %2581 = vmatprep.subr.bf16.mxu0 0
        %2582 = vmatpush1.bf16.msra.mxu0 0
        %2583 = vmatprep.subr.bf16.mxu0 0
        %2584 = vmatpush1.bf16.msra.mxu0 0
        %2585 = vmatprep.subr.bf16.mxu0 0
        %2586 = vmatpush1.bf16.msra.mxu0 0
        %2587 = vmatprep.subr.bf16.mxu0 0
        %2588 = vmatpush1.bf16.msra.mxu0 0
        %2589 = vmatprep.subr.bf16.mxu0 0
        %2590 = vmatpush1.bf16.msra.mxu0 0
        %2591 = vmatprep.mubr.bf16.mxu0 0
        %2592 = vmatmul.mubr.bf16.gmra.mrb[0].mxu0 %v2504
        %v2593 = vpop.f32.mrb[0].mxu0
        %v2594 = vadd.f32 0.0, %v2593
        %v2595 = vpop.f32.mrb[0].mxu0
        %v2596 = vadd.f32 0.0, %v2595
        %v2597 = vpop.f32.mrb[0].mxu0
        %v2598 = vpop.f32.mrb[0].mxu0
        %2599 = vdwg.mxu0
        %v2600 = vadd.f32 %v2457, %v2553
        %v2601 = vadd.f32 %v2458, %v2555
        %v2602 = vadd.f32 %v2459, %v2594
        %v2603 = vadd.f32 %v2460, %v2596
        %v2604 = vld [vmem:[%s195 + $0x4] sm:$0xff]
        %v2605 = vld [vmem:[%s195 + $0xc] sm:$0xff]
        %v2606 = vld [vmem:[%s195 + $0x14] sm:$0xf]
        %s2607 = scalar_lea.vmem %s1, 56
        %v2608 = vld [vmem:[%s2607] sm:$0xf]
        %vm2609 = vcmp.gt.f32.partialorder %v2608, 0.5
        %v2610 = vsel %vm2609, 1, 0
        %v2611 = vlaneseq
        %v2612 = vshrl.u32 %v2611, 7
        %v2613 = vsub.s32 0, %v2612
        %v2614 = vrot.slane %v2610, %v2613
        %v2615 = vlaneseq
        %v2616 = vshrl.u32 %v2615, 7
        %v2617 = vsub.s32 1, %v2616
        %v2618 = vrot.slane %v2610, %v2617
        %v2619 = vlaneseq
        %v2620 = vshrl.u32 %v2619, 7
        %v2621 = vsub.s32 2, %v2620
        %v2622 = vrot.slane %v2610, %v2621
        %v2623 = vlaneseq
        %v2624 = vshrl.u32 %v2623, 7
        %v2625 = vsub.s32 3, %v2624
        %v2626 = vrot.slane %v2610, %v2625
        %vm2627 = vcmp.eq.s32.totalorder %v2614, 1
        %vm2628 = vcmp.eq.s32.totalorder %v2618, 1
        %vm2629 = vcmp.eq.s32.totalorder %v2622, 1
        %vm2630 = vcmp.eq.s32.totalorder %v2626, 1
        %vm2631 = vmpackc.low %vm2628, %vm2627
        %vm2632 = vmpackc.low %vm2630, %vm2629
        %v2633 = vsel %vm2631, 65537, 0
        %v2634 = vsel %vm2632, 65537, 0
        %2635 = vrot.lane.b32.xlu0 %v2633, 1
        %v2636 = vpop.permute.xlu0 %2635
        %2637 = vrot.lane.b32.xlu0 %v2634, 1
        %v2638 = vpop.permute.xlu0 %2637
        %v2639 = vrot.slane %v2636, 4
        %v2640 = vrot.slane %v2638, 4
        %v2641 = vsel %vm2355, %v2639, %v2636
        %v2642 = vsel %vm237, %v2639, %v2640
        %v2643 = vsel %vm2355, %v2642, %v2638
        %vm2644 = vcmp.ne.s16.totalorder %v2641, 0
        %vm2645 = vcmp.ne.s16.totalorder %v2643, 0
        %vm2646 = vcmp.ne.s16.totalorder %v2640, 0
        %v2647 = vsel %vm2644, %v2604, 0
        %v2648 = vsel %vm2645, %v2605, 0
        %v2649 = vsel %vm2646, %v2606, 0
        %s2650 = scalar_lea.vmem %s2, 56
        %v2651 = vld [vmem:[%s2650] sm:$0xf]
        %v2655 = vunpack.c.l.b16 %v2647
        %v2656 = vunpack.c.h.b16 %v2647
        %v2657 = vunpack.c.l.b16 %v2648
        %v2658 = vunpack.c.h.b16 %v2648
        %v2659 = vunpack.c.l.b16 %v2649
        %v2660 = vpack.c.b16 %v2655, %v2655
        %v2661 = vpack.c.b16 %v2656, %v2656
        %v2662 = vpack.c.b16 %v2657, %v2657
        %v2663 = vpack.c.b16 %v2658, %v2658
        %v2664 = vpack.c.b16 %v2659, %v2659
        %2665 = vrot.lane.b32.xlu0 %v2660, 127
        %v2666 = vpop.permute.xlu0 %2665
        %2667 = vrot.lane.b32.xlu0 %v2661, 127
        %v2668 = vpop.permute.xlu0 %2667
        %2669 = vrot.lane.b32.xlu0 %v2662, 127
        %v2670 = vpop.permute.xlu0 %2669
        %2671 = vrot.lane.b32.xlu0 %v2663, 127
        %v2672 = vpop.permute.xlu0 %2671
        %2673 = vrot.lane.b32.xlu0 %v2664, 127
        %v2674 = vpop.permute.xlu0 %2673
        %v2675 = vsel %vm2320, %v2666, %v2668
        %v2676 = vsel %vm2320, %v2668, %v2670
        %v2677 = vsel %vm2320, %v2670, %v2672
        %v2678 = vsel %vm2320, %v2672, %v2674
        %v2680 = vsel %vm321, %v2651, 0
        %v2683 = vsel %vm325, %v2675, 0
        %v2686 = vsel %vm325, %v2676, 0
        %v2689 = vsel %vm325, %v2677, 0
        %v2692 = vsel %vm325, %v2678, 0
        %2694 = vmatprep.subr.bf16.mxu0 %v2686
        %2695 = vmatpush1.bf16.msra.mxu0 %v2683
        %2696 = vmatprep.subr.bf16.mxu0 0
        %2697 = vmatpush1.bf16.msra.mxu0 0
        %2698 = vmatprep.subr.bf16.mxu0 0
        %2699 = vmatpush1.bf16.msra.mxu0 0
        %2700 = vmatprep.subr.bf16.mxu0 0
        %2701 = vmatpush1.bf16.msra.mxu0 0
        %2702 = vmatprep.subr.bf16.mxu0 0
        %2703 = vmatpush1.bf16.msra.mxu0 0
        %2704 = vmatprep.subr.bf16.mxu0 0
        %2705 = vmatpush1.bf16.msra.mxu0 0
        %2706 = vmatprep.subr.bf16.mxu0 0
        %2707 = vmatpush1.bf16.msra.mxu0 0
        %2708 = vmatprep.subr.bf16.mxu0 0
        %2709 = vmatpush1.bf16.msra.mxu0 0
        %2710 = vmatprep.subr.bf16.mxu0 0
        %2711 = vmatpush1.bf16.msra.mxu0 0
        %2712 = vmatprep.subr.bf16.mxu0 0
        %2713 = vmatpush1.bf16.msra.mxu0 0
        %2714 = vmatprep.subr.bf16.mxu0 0
        %2715 = vmatpush1.bf16.msra.mxu0 0
        %2716 = vmatprep.subr.bf16.mxu0 0
        %2717 = vmatpush1.bf16.msra.mxu0 0
        %2718 = vmatprep.subr.bf16.mxu0 0
        %2719 = vmatpush1.bf16.msra.mxu0 0
        %2720 = vmatprep.subr.bf16.mxu0 0
        %2721 = vmatpush1.bf16.msra.mxu0 0
        %2722 = vmatprep.subr.bf16.mxu0 0
        %2723 = vmatpush1.bf16.msra.mxu0 0
        %2724 = vmatprep.subr.bf16.mxu0 0
        %2725 = vmatpush1.bf16.msra.mxu0 0
        %2726 = vmatprep.mubr.bf16.mxu0 0
        %2727 = vmatmul.mubr.bf16.gmra.mrb[0].mxu0 %v2680
        %v2728 = vpop.f32.mrb[0].mxu0
        %v2729 = vadd.f32 0.0, %v2728
        %v2730 = vpop.f32.mrb[0].mxu0
        %v2731 = vadd.f32 0.0, %v2730
        %v2732 = vpop.f32.mrb[0].mxu0
        %v2733 = vpop.f32.mrb[0].mxu0
        %2734 = vdwg.mxu0
        %2735 = vmatprep.subr.bf16.mxu0 %v2692
        %2736 = vmatpush1.bf16.msra.mxu0 %v2689
        %2737 = vmatprep.subr.bf16.mxu0 0
        %2738 = vmatpush1.bf16.msra.mxu0 0
        %2739 = vmatprep.subr.bf16.mxu0 0
        %2740 = vmatpush1.bf16.msra.mxu0 0
        %2741 = vmatprep.subr.bf16.mxu0 0
        %2742 = vmatpush1.bf16.msra.mxu0 0
        %2743 = vmatprep.subr.bf16.mxu0 0
        %2744 = vmatpush1.bf16.msra.mxu0 0
        %2745 = vmatprep.subr.bf16.mxu0 0
        %2746 = vmatpush1.bf16.msra.mxu0 0
        %2747 = vmatprep.subr.bf16.mxu0 0
        %2748 = vmatpush1.bf16.msra.mxu0 0
        %2749 = vmatprep.subr.bf16.mxu0 0
        %2750 = vmatpush1.bf16.msra.mxu0 0
        %2751 = vmatprep.subr.bf16.mxu0 0
        %2752 = vmatpush1.bf16.msra.mxu0 0
        %2753 = vmatprep.subr.bf16.mxu0 0
        %2754 = vmatpush1.bf16.msra.mxu0 0
        %2755 = vmatprep.subr.bf16.mxu0 0
        %2756 = vmatpush1.bf16.msra.mxu0 0
        %2757 = vmatprep.subr.bf16.mxu0 0
        %2758 = vmatpush1.bf16.msra.mxu0 0
        %2759 = vmatprep.subr.bf16.mxu0 0
        %2760 = vmatpush1.bf16.msra.mxu0 0
        %2761 = vmatprep.subr.bf16.mxu0 0
        %2762 = vmatpush1.bf16.msra.mxu0 0
        %2763 = vmatprep.subr.bf16.mxu0 0
        %2764 = vmatpush1.bf16.msra.mxu0 0
        %2765 = vmatprep.subr.bf16.mxu0 0
        %2766 = vmatpush1.bf16.msra.mxu0 0
        %2767 = vmatprep.mubr.bf16.mxu0 0
        %2768 = vmatmul.mubr.bf16.gmra.mrb[0].mxu0 %v2680
        %v2769 = vpop.f32.mrb[0].mxu0
        %v2770 = vadd.f32 0.0, %v2769
        %v2771 = vpop.f32.mrb[0].mxu0
        %v2772 = vadd.f32 0.0, %v2771
        %v2773 = vpop.f32.mrb[0].mxu0
        %v2774 = vpop.f32.mrb[0].mxu0
        %2775 = vdwg.mxu0
        %v2776 = vadd.f32 %v2600, %v2729
        %v2777 = vadd.f32 %v2601, %v2731
        %v2778 = vadd.f32 %v2602, %v2770
        %v2779 = vadd.f32 %v2603, %v2772
        %s2780 = scalar_lea.vmem %s1, 60
        %v2781 = vld [vmem:[%s2780] sm:$0xf]
        %vm2782 = vcmp.gt.f32.partialorder %v2781, 0.5
        %v2783 = vsel %vm2782, 1, 0
        %v2784 = vlaneseq
        %v2785 = vshrl.u32 %v2784, 7
        %v2786 = vsub.s32 0, %v2785
        %v2787 = vrot.slane %v2783, %v2786
        %v2788 = vlaneseq
        %v2789 = vshrl.u32 %v2788, 7
        %v2790 = vsub.s32 1, %v2789
        %v2791 = vrot.slane %v2783, %v2790
        %v2792 = vlaneseq
        %v2793 = vshrl.u32 %v2792, 7
        %v2794 = vsub.s32 2, %v2793
        %v2795 = vrot.slane %v2783, %v2794
        %v2796 = vlaneseq
        %v2797 = vshrl.u32 %v2796, 7
        %v2798 = vsub.s32 3, %v2797
        %v2799 = vrot.slane %v2783, %v2798
        %vm2800 = vcmp.eq.s32.totalorder %v2787, 1
        %vm2801 = vcmp.eq.s32.totalorder %v2791, 1
        %vm2802 = vcmp.eq.s32.totalorder %v2795, 1
        %vm2803 = vcmp.eq.s32.totalorder %v2799, 1
        %vm2804 = vmpackc.low %vm2801, %vm2800
        %vm2805 = vmpackc.low %vm2803, %vm2802
        %v2806 = vsel %vm2804, 65537, 0
        %v2807 = vsel %vm2805, 65537, 0
        %2808 = vrot.lane.b32.xlu0 %v2806, 7
        %v2809 = vpop.permute.xlu0 %2808
        %2810 = vrot.lane.b32.xlu0 %v2807, 7
        %v2811 = vpop.permute.xlu0 %2810
        %v2812 = vrot.slane %v2809, 4
        %v2813 = vrot.slane %v2811, 4
        %v2814 = vsel %vm2180, %v2812, %v2809
        %v2815 = vsel %vm237, %v2812, %v2813
        %v2816 = vsel %vm2180, %v2815, %v2811
        %vm2817 = vcmp.ne.s16.totalorder %v2814, 0
        %vm2818 = vcmp.ne.s16.totalorder %v2816, 0
        %vm2819 = vcmp.ne.s16.totalorder %v2813, 0
        %v2820 = vsel %vm2817, %v2604, 0
        %v2821 = vsel %vm2818, %v2605, 0
        %v2822 = vsel %vm2819, %v2606, 0
        %s2823 = scalar_lea.vmem %s2, 60
        %v2824 = vld [vmem:[%s2823] sm:$0xf]
        %v2828 = vunpack.c.l.b16 %v2820
        %v2829 = vunpack.c.h.b16 %v2820
        %v2830 = vunpack.c.l.b16 %v2821
        %v2831 = vunpack.c.h.b16 %v2821
        %v2832 = vunpack.c.l.b16 %v2822
        %v2833 = vpack.c.b16 %v2828, %v2828
        %v2834 = vpack.c.b16 %v2829, %v2829
        %v2835 = vpack.c.b16 %v2830, %v2830
        %v2836 = vpack.c.b16 %v2831, %v2831
        %v2837 = vpack.c.b16 %v2832, %v2832
        %2838 = vrot.lane.b32.xlu0 %v2833, 121
        %v2839 = vpop.permute.xlu0 %2838
        %2840 = vrot.lane.b32.xlu0 %v2834, 121
        %v2841 = vpop.permute.xlu0 %2840
        %2842 = vrot.lane.b32.xlu0 %v2835, 121
        %v2843 = vpop.permute.xlu0 %2842
        %2844 = vrot.lane.b32.xlu0 %v2836, 121
        %v2845 = vpop.permute.xlu0 %2844
        %2846 = vrot.lane.b32.xlu0 %v2837, 121
        %v2847 = vpop.permute.xlu0 %2846
        %v2848 = vsel %vm2145, %v2839, %v2841
        %v2849 = vsel %vm2145, %v2841, %v2843
        %v2850 = vsel %vm2145, %v2843, %v2845
        %v2851 = vsel %vm2145, %v2845, %v2847
        %v2853 = vsel %vm321, %v2824, 0
        %v2856 = vsel %vm325, %v2848, 0
        %v2859 = vsel %vm325, %v2849, 0
        %v2862 = vsel %vm325, %v2850, 0
        %v2865 = vsel %vm325, %v2851, 0
        %2867 = vmatprep.subr.bf16.mxu0 %v2859
        %2868 = vmatpush1.bf16.msra.mxu0 %v2856
        %2869 = vmatprep.subr.bf16.mxu0 0
        %2870 = vmatpush1.bf16.msra.mxu0 0
        %2871 = vmatprep.subr.bf16.mxu0 0
        %2872 = vmatpush1.bf16.msra.mxu0 0
        %2873 = vmatprep.subr.bf16.mxu0 0
        %2874 = vmatpush1.bf16.msra.mxu0 0
        %2875 = vmatprep.subr.bf16.mxu0 0
        %2876 = vmatpush1.bf16.msra.mxu0 0
        %2877 = vmatprep.subr.bf16.mxu0 0
        %2878 = vmatpush1.bf16.msra.mxu0 0
        %2879 = vmatprep.subr.bf16.mxu0 0
        %2880 = vmatpush1.bf16.msra.mxu0 0
        %2881 = vmatprep.subr.bf16.mxu0 0
        %2882 = vmatpush1.bf16.msra.mxu0 0
        %2883 = vmatprep.subr.bf16.mxu0 0
        %2884 = vmatpush1.bf16.msra.mxu0 0
        %2885 = vmatprep.subr.bf16.mxu0 0
        %2886 = vmatpush1.bf16.msra.mxu0 0
        %2887 = vmatprep.subr.bf16.mxu0 0
        %2888 = vmatpush1.bf16.msra.mxu0 0
        %2889 = vmatprep.subr.bf16.mxu0 0
        %2890 = vmatpush1.bf16.msra.mxu0 0
        %2891 = vmatprep.subr.bf16.mxu0 0
        %2892 = vmatpush1.bf16.msra.mxu0 0
        %2893 = vmatprep.subr.bf16.mxu0 0
        %2894 = vmatpush1.bf16.msra.mxu0 0
        %2895 = vmatprep.subr.bf16.mxu0 0
        %2896 = vmatpush1.bf16.msra.mxu0 0
        %2897 = vmatprep.subr.bf16.mxu0 0
        %2898 = vmatpush1.bf16.msra.mxu0 0
        %2899 = vmatprep.mubr.bf16.mxu0 0
        %2900 = vmatmul.mubr.bf16.gmra.mrb[0].mxu0 %v2853
        %v2901 = vpop.f32.mrb[0].mxu0
        %v2902 = vadd.f32 0.0, %v2901
        %v2903 = vpop.f32.mrb[0].mxu0
        %v2904 = vadd.f32 0.0, %v2903
        %v2905 = vpop.f32.mrb[0].mxu0
        %v2906 = vpop.f32.mrb[0].mxu0
        %2907 = vdwg.mxu0
        %2908 = vmatprep.subr.bf16.mxu0 %v2865
        %2909 = vmatpush1.bf16.msra.mxu0 %v2862
        %2910 = vmatprep.subr.bf16.mxu0 0
        %2911 = vmatpush1.bf16.msra.mxu0 0
        %2912 = vmatprep.subr.bf16.mxu0 0
        %2913 = vmatpush1.bf16.msra.mxu0 0
        %2914 = vmatprep.subr.bf16.mxu0 0
        %2915 = vmatpush1.bf16.msra.mxu0 0
        %2916 = vmatprep.subr.bf16.mxu0 0
        %2917 = vmatpush1.bf16.msra.mxu0 0
        %2918 = vmatprep.subr.bf16.mxu0 0
        %2919 = vmatpush1.bf16.msra.mxu0 0
        %2920 = vmatprep.subr.bf16.mxu0 0
        %2921 = vmatpush1.bf16.msra.mxu0 0
        %2922 = vmatprep.subr.bf16.mxu0 0
        %2923 = vmatpush1.bf16.msra.mxu0 0
        %2924 = vmatprep.subr.bf16.mxu0 0
        %2925 = vmatpush1.bf16.msra.mxu0 0
        %2926 = vmatprep.subr.bf16.mxu0 0
        %2927 = vmatpush1.bf16.msra.mxu0 0
        %2928 = vmatprep.subr.bf16.mxu0 0
        %2929 = vmatpush1.bf16.msra.mxu0 0
        %2930 = vmatprep.subr.bf16.mxu0 0
        %2931 = vmatpush1.bf16.msra.mxu0 0
        %2932 = vmatprep.subr.bf16.mxu0 0
        %2933 = vmatpush1.bf16.msra.mxu0 0
        %2934 = vmatprep.subr.bf16.mxu0 0
        %2935 = vmatpush1.bf16.msra.mxu0 0
        %2936 = vmatprep.subr.bf16.mxu0 0
        %2937 = vmatpush1.bf16.msra.mxu0 0
        %2938 = vmatprep.subr.bf16.mxu0 0
        %2939 = vmatpush1.bf16.msra.mxu0 0
        %2940 = vmatprep.mubr.bf16.mxu0 0
        %2941 = vmatmul.mubr.bf16.gmra.mrb[0].mxu0 %v2853
        %v2942 = vpop.f32.mrb[0].mxu0
        %v2943 = vadd.f32 0.0, %v2942
        %v2944 = vpop.f32.mrb[0].mxu0
        %v2945 = vadd.f32 0.0, %v2944
        %v2946 = vpop.f32.mrb[0].mxu0
        %v2947 = vpop.f32.mrb[0].mxu0
        %2948 = vdwg.mxu0
        %v2949 = vadd.f32 %v2776, %v2902
        %v2950 = vadd.f32 %v2777, %v2904
        %v2951 = vadd.f32 %v2778, %v2943
        %v2952 = vadd.f32 %v2779, %v2945
        %s2953 = scalar_lea.vmem %s1, 64
        %v2954 = vld [vmem:[%s2953] sm:$0xf]
        %vm2955 = vcmp.gt.f32.partialorder %v2954, 0.5
        %v2956 = vsel %vm2955, 1, 0
        %v2957 = vlaneseq
        %v2958 = vshrl.u32 %v2957, 7
        %v2959 = vsub.s32 0, %v2958
        %v2960 = vrot.slane %v2956, %v2959
        %v2961 = vlaneseq
        %v2962 = vshrl.u32 %v2961, 7
        %v2963 = vsub.s32 1, %v2962
        %v2964 = vrot.slane %v2956, %v2963
        %v2965 = vlaneseq
        %v2966 = vshrl.u32 %v2965, 7
        %v2967 = vsub.s32 2, %v2966
        %v2968 = vrot.slane %v2956, %v2967
        %v2969 = vlaneseq
        %v2970 = vshrl.u32 %v2969, 7
        %v2971 = vsub.s32 3, %v2970
        %v2972 = vrot.slane %v2956, %v2971
        %vm2973 = vcmp.eq.s32.totalorder %v2960, 1
        %vm2974 = vcmp.eq.s32.totalorder %v2964, 1
        %vm2975 = vcmp.eq.s32.totalorder %v2968, 1
        %vm2976 = vcmp.eq.s32.totalorder %v2972, 1
        %vm2977 = vmpackc.low %vm2974, %vm2973
        %vm2978 = vmpackc.low %vm2976, %vm2975
        %v2979 = vsel %vm2977, 65537, 0
        %v2980 = vsel %vm2978, 65537, 0
        %2981 = vrot.lane.b32.xlu0 %v2979, 8
        %v2982 = vpop.permute.xlu0 %2981
        %2983 = vrot.lane.b32.xlu0 %v2980, 8
        %v2984 = vpop.permute.xlu0 %2983
        %v2985 = vrot.slane %v2982, 4
        %v2986 = vrot.slane %v2984, 4
        %v2987 = vsel %vm2005, %v2985, %v2982
        %v2988 = vsel %vm237, %v2985, %v2986
        %v2989 = vsel %vm2005, %v2988, %v2984
        %vm2990 = vcmp.ne.s16.totalorder %v2987, 0
        %vm2991 = vcmp.ne.s16.totalorder %v2989, 0
        %vm2992 = vcmp.ne.s16.totalorder %v2986, 0
        %v2993 = vsel %vm2990, %v2604, 0
        %v2994 = vsel %vm2991, %v2605, 0
        %v2995 = vsel %vm2992, %v2606, 0
        %s2996 = scalar_lea.vmem %s2, 64
        %v2997 = vld [vmem:[%s2996] sm:$0xf]
        %v3001 = vunpack.c.l.b16 %v2993
        %v3002 = vunpack.c.h.b16 %v2993
        %v3003 = vunpack.c.l.b16 %v2994
        %v3004 = vunpack.c.h.b16 %v2994
        %v3005 = vunpack.c.l.b16 %v2995
        %v3006 = vpack.c.b16 %v3001, %v3001
        %v3007 = vpack.c.b16 %v3002, %v3002
        %v3008 = vpack.c.b16 %v3003, %v3003
        %v3009 = vpack.c.b16 %v3004, %v3004
        %v3010 = vpack.c.b16 %v3005, %v3005
        %3011 = vrot.lane.b32.xlu0 %v3006, 120
        %v3012 = vpop.permute.xlu0 %3011
        %3013 = vrot.lane.b32.xlu0 %v3007, 120
        %v3014 = vpop.permute.xlu0 %3013
        %3015 = vrot.lane.b32.xlu0 %v3008, 120
        %v3016 = vpop.permute.xlu0 %3015
        %3017 = vrot.lane.b32.xlu0 %v3009, 120
        %v3018 = vpop.permute.xlu0 %3017
        %3019 = vrot.lane.b32.xlu0 %v3010, 120
        %v3020 = vpop.permute.xlu0 %3019
        %v3021 = vsel %vm1970, %v3012, %v3014
        %v3022 = vsel %vm1970, %v3014, %v3016
        %v3023 = vsel %vm1970, %v3016, %v3018
        %v3024 = vsel %vm1970, %v3018, %v3020
        %v3026 = vsel %vm321, %v2997, 0
        %v3029 = vsel %vm325, %v3021, 0
        %v3032 = vsel %vm325, %v3022, 0
        %v3035 = vsel %vm325, %v3023, 0
        %v3038 = vsel %vm325, %v3024, 0
        %3040 = vmatprep.subr.bf16.mxu0 %v3032
        %3041 = vmatpush1.bf16.msra.mxu0 %v3029
        %3042 = vmatprep.subr.bf16.mxu0 0
        %3043 = vmatpush1.bf16.msra.mxu0 0
        %3044 = vmatprep.subr.bf16.mxu0 0
        %3045 = vmatpush1.bf16.msra.mxu0 0
        %3046 = vmatprep.subr.bf16.mxu0 0
        %3047 = vmatpush1.bf16.msra.mxu0 0
        %3048 = vmatprep.subr.bf16.mxu0 0
        %3049 = vmatpush1.bf16.msra.mxu0 0
        %3050 = vmatprep.subr.bf16.mxu0 0
        %3051 = vmatpush1.bf16.msra.mxu0 0
        %3052 = vmatprep.subr.bf16.mxu0 0
        %3053 = vmatpush1.bf16.msra.mxu0 0
        %3054 = vmatprep.subr.bf16.mxu0 0
        %3055 = vmatpush1.bf16.msra.mxu0 0
        %3056 = vmatprep.subr.bf16.mxu0 0
        %3057 = vmatpush1.bf16.msra.mxu0 0
        %3058 = vmatprep.subr.bf16.mxu0 0
        %3059 = vmatpush1.bf16.msra.mxu0 0
        %3060 = vmatprep.subr.bf16.mxu0 0
        %3061 = vmatpush1.bf16.msra.mxu0 0
        %3062 = vmatprep.subr.bf16.mxu0 0
        %3063 = vmatpush1.bf16.msra.mxu0 0
        %3064 = vmatprep.subr.bf16.mxu0 0
        %3065 = vmatpush1.bf16.msra.mxu0 0
        %3066 = vmatprep.subr.bf16.mxu0 0
        %3067 = vmatpush1.bf16.msra.mxu0 0
        %3068 = vmatprep.subr.bf16.mxu0 0
        %3069 = vmatpush1.bf16.msra.mxu0 0
        %3070 = vmatprep.subr.bf16.mxu0 0
        %3071 = vmatpush1.bf16.msra.mxu0 0
        %3072 = vmatprep.mubr.bf16.mxu0 0
        %3073 = vmatmul.mubr.bf16.gmra.mrb[0].mxu0 %v3026
        %v3074 = vpop.f32.mrb[0].mxu0
        %v3075 = vadd.f32 0.0, %v3074
        %v3076 = vpop.f32.mrb[0].mxu0
        %v3077 = vadd.f32 0.0, %v3076
        %v3078 = vpop.f32.mrb[0].mxu0
        %v3079 = vpop.f32.mrb[0].mxu0
        %3080 = vdwg.mxu0
        %3081 = vmatprep.subr.bf16.mxu0 %v3038
        %3082 = vmatpush1.bf16.msra.mxu0 %v3035
        %3083 = vmatprep.subr.bf16.mxu0 0
        %3084 = vmatpush1.bf16.msra.mxu0 0
        %3085 = vmatprep.subr.bf16.mxu0 0
        %3086 = vmatpush1.bf16.msra.mxu0 0
        %3087 = vmatprep.subr.bf16.mxu0 0
        %3088 = vmatpush1.bf16.msra.mxu0 0
        %3089 = vmatprep.subr.bf16.mxu0 0
        %3090 = vmatpush1.bf16.msra.mxu0 0
        %3091 = vmatprep.subr.bf16.mxu0 0
        %3092 = vmatpush1.bf16.msra.mxu0 0
        %3093 = vmatprep.subr.bf16.mxu0 0
        %3094 = vmatpush1.bf16.msra.mxu0 0
        %3095 = vmatprep.subr.bf16.mxu0 0
        %3096 = vmatpush1.bf16.msra.mxu0 0
        %3097 = vmatprep.subr.bf16.mxu0 0
        %3098 = vmatpush1.bf16.msra.mxu0 0
        %3099 = vmatprep.subr.bf16.mxu0 0
        %3100 = vmatpush1.bf16.msra.mxu0 0
        %3101 = vmatprep.subr.bf16.mxu0 0
        %3102 = vmatpush1.bf16.msra.mxu0 0
        %3103 = vmatprep.subr.bf16.mxu0 0
        %3104 = vmatpush1.bf16.msra.mxu0 0
        %3105 = vmatprep.subr.bf16.mxu0 0
        %3106 = vmatpush1.bf16.msra.mxu0 0
        %3107 = vmatprep.subr.bf16.mxu0 0
        %3108 = vmatpush1.bf16.msra.mxu0 0
        %3109 = vmatprep.subr.bf16.mxu0 0
        %3110 = vmatpush1.bf16.msra.mxu0 0
        %3111 = vmatprep.subr.bf16.mxu0 0
        %3112 = vmatpush1.bf16.msra.mxu0 0
        %3113 = vmatprep.mubr.bf16.mxu0 0
        %3114 = vmatmul.mubr.bf16.gmra.mrb[0].mxu0 %v3026
        %v3115 = vpop.f32.mrb[0].mxu0
        %v3116 = vadd.f32 0.0, %v3115
        %v3117 = vpop.f32.mrb[0].mxu0
        %v3118 = vadd.f32 0.0, %v3117
        %v3119 = vpop.f32.mrb[0].mxu0
        %v3120 = vpop.f32.mrb[0].mxu0
        %3121 = vdwg.mxu0
        %v3122 = vadd.f32 %v2949, %v3075
        %v3123 = vadd.f32 %v2950, %v3077
        %v3124 = vadd.f32 %v2951, %v3116
        %v3125 = vadd.f32 %v2952, %v3118
        %s3126 = scalar_lea.vmem %s1, 68
        %v3127 = vld [vmem:[%s3126] sm:$0xf]
        %vm3128 = vcmp.gt.f32.partialorder %v3127, 0.5
        %v3129 = vsel %vm3128, 1, 0
        %v3130 = vlaneseq
        %v3131 = vshrl.u32 %v3130, 7
        %v3132 = vsub.s32 0, %v3131
        %v3133 = vrot.slane %v3129, %v3132
        %v3134 = vlaneseq
        %v3135 = vshrl.u32 %v3134, 7
        %v3136 = vsub.s32 1, %v3135
        %v3137 = vrot.slane %v3129, %v3136
        %v3138 = vlaneseq
        %v3139 = vshrl.u32 %v3138, 7
        %v3140 = vsub.s32 2, %v3139
        %v3141 = vrot.slane %v3129, %v3140
        %v3142 = vlaneseq
        %v3143 = vshrl.u32 %v3142, 7
        %v3144 = vsub.s32 3, %v3143
        %v3145 = vrot.slane %v3129, %v3144
        %vm3146 = vcmp.eq.s32.totalorder %v3133, 1
        %vm3147 = vcmp.eq.s32.totalorder %v3137, 1
        %vm3148 = vcmp.eq.s32.totalorder %v3141, 1
        %vm3149 = vcmp.eq.s32.totalorder %v3145, 1
        %vm3150 = vmpackc.low %vm3147, %vm3146
        %vm3151 = vmpackc.low %vm3149, %vm3148
        %v3152 = vsel %vm3150, 65537, 0
        %v3153 = vsel %vm3151, 65537, 0
        %3154 = vrot.lane.b32.xlu0 %v3152, 9
        %v3155 = vpop.permute.xlu0 %3154
        %3156 = vrot.lane.b32.xlu0 %v3153, 9
        %v3157 = vpop.permute.xlu0 %3156
        %v3158 = vrot.slane %v3155, 4
        %v3159 = vrot.slane %v3157, 4
        %v3160 = vsel %vm1830, %v3158, %v3155
        %v3161 = vsel %vm237, %v3158, %v3159
        %v3162 = vsel %vm1830, %v3161, %v3157
        %vm3163 = vcmp.ne.s16.totalorder %v3160, 0
        %vm3164 = vcmp.ne.s16.totalorder %v3162, 0
        %vm3165 = vcmp.ne.s16.totalorder %v3159, 0
        %v3166 = vsel %vm3163, %v2604, 0
        %v3167 = vsel %vm3164, %v2605, 0
        %v3168 = vsel %vm3165, %v2606, 0
        %s3169 = scalar_lea.vmem %s2, 68
        %v3170 = vld [vmem:[%s3169] sm:$0xf]
        %v3174 = vunpack.c.l.b16 %v3166
        %v3175 = vunpack.c.h.b16 %v3166
        %v3176 = vunpack.c.l.b16 %v3167
        %v3177 = vunpack.c.h.b16 %v3167
        %v3178 = vunpack.c.l.b16 %v3168
        %v3179 = vpack.c.b16 %v3174, %v3174
        %v3180 = vpack.c.b16 %v3175, %v3175
        %v3181 = vpack.c.b16 %v3176, %v3176
        %v3182 = vpack.c.b16 %v3177, %v3177
        %v3183 = vpack.c.b16 %v3178, %v3178
        %3184 = vrot.lane.b32.xlu0 %v3179, 119
        %v3185 = vpop.permute.xlu0 %3184
        %3186 = vrot.lane.b32.xlu0 %v3180, 119
        %v3187 = vpop.permute.xlu0 %3186
        %3188 = vrot.lane.b32.xlu0 %v3181, 119
        %v3189 = vpop.permute.xlu0 %3188
        %3190 = vrot.lane.b32.xlu0 %v3182, 119
        %v3191 = vpop.permute.xlu0 %3190
        %3192 = vrot.lane.b32.xlu0 %v3183, 119
        %v3193 = vpop.permute.xlu0 %3192
        %v3194 = vsel %vm1795, %v3185, %v3187
        %v3195 = vsel %vm1795, %v3187, %v3189
        %v3196 = vsel %vm1795, %v3189, %v3191
        %v3197 = vsel %vm1795, %v3191, %v3193
        %v3199 = vsel %vm321, %v3170, 0
        %v3202 = vsel %vm325, %v3194, 0
        %v3205 = vsel %vm325, %v3195, 0
        %v3208 = vsel %vm325, %v3196, 0
        %v3211 = vsel %vm325, %v3197, 0
        %3213 = vmatprep.subr.bf16.mxu0 %v3205
        %3214 = vmatpush1.bf16.msra.mxu0 %v3202
        %3215 = vmatprep.subr.bf16.mxu0 0
        %3216 = vmatpush1.bf16.msra.mxu0 0
        %3217 = vmatprep.subr.bf16.mxu0 0
        %3218 = vmatpush1.bf16.msra.mxu0 0
        %3219 = vmatprep.subr.bf16.mxu0 0
        %3220 = vmatpush1.bf16.msra.mxu0 0
        %3221 = vmatprep.subr.bf16.mxu0 0
        %3222 = vmatpush1.bf16.msra.mxu0 0
        %3223 = vmatprep.subr.bf16.mxu0 0
        %3224 = vmatpush1.bf16.msra.mxu0 0
        %3225 = vmatprep.subr.bf16.mxu0 0
        %3226 = vmatpush1.bf16.msra.mxu0 0
        %3227 = vmatprep.subr.bf16.mxu0 0
        %3228 = vmatpush1.bf16.msra.mxu0 0
        %3229 = vmatprep.subr.bf16.mxu0 0
        %3230 = vmatpush1.bf16.msra.mxu0 0
        %3231 = vmatprep.subr.bf16.mxu0 0
        %3232 = vmatpush1.bf16.msra.mxu0 0
        %3233 = vmatprep.subr.bf16.mxu0 0
        %3234 = vmatpush1.bf16.msra.mxu0 0
        %3235 = vmatprep.subr.bf16.mxu0 0
        %3236 = vmatpush1.bf16.msra.mxu0 0
        %3237 = vmatprep.subr.bf16.mxu0 0
        %3238 = vmatpush1.bf16.msra.mxu0 0
        %3239 = vmatprep.subr.bf16.mxu0 0
        %3240 = vmatpush1.bf16.msra.mxu0 0
        %3241 = vmatprep.subr.bf16.mxu0 0
        %3242 = vmatpush1.bf16.msra.mxu0 0
        %3243 = vmatprep.subr.bf16.mxu0 0
        %3244 = vmatpush1.bf16.msra.mxu0 0
        %3245 = vmatprep.mubr.bf16.mxu0 0
        %3246 = vmatmul.mubr.bf16.gmra.mrb[0].mxu0 %v3199
        %v3247 = vpop.f32.mrb[0].mxu0
        %v3248 = vadd.f32 0.0, %v3247
        %v3249 = vpop.f32.mrb[0].mxu0
        %v3250 = vadd.f32 0.0, %v3249
        %v3251 = vpop.f32.mrb[0].mxu0
        %v3252 = vpop.f32.mrb[0].mxu0
        %3253 = vdwg.mxu0
        %3254 = vmatprep.subr.bf16.mxu0 %v3211
        %3255 = vmatpush1.bf16.msra.mxu0 %v3208
        %3256 = vmatprep.subr.bf16.mxu0 0
        %3257 = vmatpush1.bf16.msra.mxu0 0
        %3258 = vmatprep.subr.bf16.mxu0 0
        %3259 = vmatpush1.bf16.msra.mxu0 0
        %3260 = vmatprep.subr.bf16.mxu0 0
        %3261 = vmatpush1.bf16.msra.mxu0 0
        %3262 = vmatprep.subr.bf16.mxu0 0
        %3263 = vmatpush1.bf16.msra.mxu0 0
        %3264 = vmatprep.subr.bf16.mxu0 0
        %3265 = vmatpush1.bf16.msra.mxu0 0
        %3266 = vmatprep.subr.bf16.mxu0 0
        %3267 = vmatpush1.bf16.msra.mxu0 0
        %3268 = vmatprep.subr.bf16.mxu0 0
        %3269 = vmatpush1.bf16.msra.mxu0 0
        %3270 = vmatprep.subr.bf16.mxu0 0
        %3271 = vmatpush1.bf16.msra.mxu0 0
        %3272 = vmatprep.subr.bf16.mxu0 0
        %3273 = vmatpush1.bf16.msra.mxu0 0
        %3274 = vmatprep.subr.bf16.mxu0 0
        %3275 = vmatpush1.bf16.msra.mxu0 0
        %3276 = vmatprep.subr.bf16.mxu0 0
        %3277 = vmatpush1.bf16.msra.mxu0 0
        %3278 = vmatprep.subr.bf16.mxu0 0
        %3279 = vmatpush1.bf16.msra.mxu0 0
        %3280 = vmatprep.subr.bf16.mxu0 0
        %3281 = vmatpush1.bf16.msra.mxu0 0
        %3282 = vmatprep.subr.bf16.mxu0 0
        %3283 = vmatpush1.bf16.msra.mxu0 0
        %3284 = vmatprep.subr.bf16.mxu0 0
        %3285 = vmatpush1.bf16.msra.mxu0 0
        %3286 = vmatprep.mubr.bf16.mxu0 0
        %3287 = vmatmul.mubr.bf16.gmra.mrb[0].mxu0 %v3199
        %v3288 = vpop.f32.mrb[0].mxu0
        %v3289 = vadd.f32 0.0, %v3288
        %v3290 = vpop.f32.mrb[0].mxu0
        %v3291 = vadd.f32 0.0, %v3290
        %v3292 = vpop.f32.mrb[0].mxu0
        %v3293 = vpop.f32.mrb[0].mxu0
        %3294 = vdwg.mxu0
        %v3295 = vadd.f32 %v3122, %v3248
        %v3296 = vadd.f32 %v3123, %v3250
        %v3297 = vadd.f32 %v3124, %v3289
        %v3298 = vadd.f32 %v3125, %v3291
        %s3299 = scalar_lea.vmem %s1, 72
        %v3300 = vld [vmem:[%s3299] sm:$0xf]
        %vm3301 = vcmp.gt.f32.partialorder %v3300, 0.5
        %v3302 = vsel %vm3301, 1, 0
        %v3303 = vlaneseq
        %v3304 = vshrl.u32 %v3303, 7
        %v3305 = vsub.s32 0, %v3304
        %v3306 = vrot.slane %v3302, %v3305
        %v3307 = vlaneseq
        %v3308 = vshrl.u32 %v3307, 7
        %v3309 = vsub.s32 1, %v3308
        %v3310 = vrot.slane %v3302, %v3309
        %v3311 = vlaneseq
        %v3312 = vshrl.u32 %v3311, 7
        %v3313 = vsub.s32 2, %v3312
        %v3314 = vrot.slane %v3302, %v3313
        %v3315 = vlaneseq
        %v3316 = vshrl.u32 %v3315, 7
        %v3317 = vsub.s32 3, %v3316
        %v3318 = vrot.slane %v3302, %v3317
        %vm3319 = vcmp.eq.s32.totalorder %v3306, 1
        %vm3320 = vcmp.eq.s32.totalorder %v3310, 1
        %vm3321 = vcmp.eq.s32.totalorder %v3314, 1
        %vm3322 = vcmp.eq.s32.totalorder %v3318, 1
        %vm3323 = vmpackc.low %vm3320, %vm3319
        %vm3324 = vmpackc.low %vm3322, %vm3321
        %v3325 = vsel %vm3323, 65537, 0
        %v3326 = vsel %vm3324, 65537, 0
        %3327 = vrot.lane.b32.xlu0 %v3325, 55
        %v3328 = vpop.permute.xlu0 %3327
        %3329 = vrot.lane.b32.xlu0 %v3326, 55
        %v3330 = vpop.permute.xlu0 %3329
        %v3331 = vrot.slane %v3328, 4
        %v3332 = vrot.slane %v3330, 4
        %v3333 = vsel %vm235, %v3331, %v3328
        %v3334 = vsel %vm237, %v3331, %v3332
        %v3335 = vsel %vm235, %v3334, %v3330
        %vm3336 = vcmp.ne.s16.totalorder %v3333, 0
        %vm3337 = vcmp.ne.s16.totalorder %v3335, 0
        %vm3338 = vcmp.ne.s16.totalorder %v3332, 0
        %v3339 = vsel %vm3336, %v2604, 0
        %v3340 = vsel %vm3337, %v2605, 0
        %v3341 = vsel %vm3338, %v2606, 0
        %s3342 = scalar_lea.vmem %s2, 72
        %v3343 = vld [vmem:[%s3342] sm:$0xf]
        %v3347 = vunpack.c.l.b16 %v3339
        %v3348 = vunpack.c.h.b16 %v3339
        %v3349 = vunpack.c.l.b16 %v3340
        %v3350 = vunpack.c.h.b16 %v3340
        %v3351 = vunpack.c.l.b16 %v3341
        %v3352 = vpack.c.b16 %v3347, %v3347
        %v3353 = vpack.c.b16 %v3348, %v3348
        %v3354 = vpack.c.b16 %v3349, %v3349
        %v3355 = vpack.c.b16 %v3350, %v3350
        %v3356 = vpack.c.b16 %v3351, %v3351
        %3357 = vrot.lane.b32.xlu0 %v3352, 73
        %v3358 = vpop.permute.xlu0 %3357
        %3359 = vrot.lane.b32.xlu0 %v3353, 73
        %v3360 = vpop.permute.xlu0 %3359
        %3361 = vrot.lane.b32.xlu0 %v3354, 73
        %v3362 = vpop.permute.xlu0 %3361
        %3363 = vrot.lane.b32.xlu0 %v3355, 73
        %v3364 = vpop.permute.xlu0 %3363
        %3365 = vrot.lane.b32.xlu0 %v3356, 73
        %v3366 = vpop.permute.xlu0 %3365
        %v3367 = vsel %vm443, %v3358, %v3360
        %v3368 = vsel %vm443, %v3360, %v3362
        %v3369 = vsel %vm443, %v3362, %v3364
        %v3370 = vsel %vm443, %v3364, %v3366
        %v3372 = vsel %vm321, %v3343, 0
        %v3375 = vsel %vm325, %v3367, 0
        %v3378 = vsel %vm325, %v3368, 0
        %v3381 = vsel %vm325, %v3369, 0
        %v3384 = vsel %vm325, %v3370, 0
        %3386 = vmatprep.subr.bf16.mxu0 %v3378
        %3387 = vmatpush1.bf16.msra.mxu0 %v3375
        %3388 = vmatprep.subr.bf16.mxu0 0
        %3389 = vmatpush1.bf16.msra.mxu0 0
        %3390 = vmatprep.subr.bf16.mxu0 0
        %3391 = vmatpush1.bf16.msra.mxu0 0
        %3392 = vmatprep.subr.bf16.mxu0 0
        %3393 = vmatpush1.bf16.msra.mxu0 0
        %3394 = vmatprep.subr.bf16.mxu0 0
        %3395 = vmatpush1.bf16.msra.mxu0 0
        %3396 = vmatprep.subr.bf16.mxu0 0
        %3397 = vmatpush1.bf16.msra.mxu0 0
        %3398 = vmatprep.subr.bf16.mxu0 0
        %3399 = vmatpush1.bf16.msra.mxu0 0
        %3400 = vmatprep.subr.bf16.mxu0 0
        %3401 = vmatpush1.bf16.msra.mxu0 0
        %3402 = vmatprep.subr.bf16.mxu0 0
        %3403 = vmatpush1.bf16.msra.mxu0 0
        %3404 = vmatprep.subr.bf16.mxu0 0
        %3405 = vmatpush1.bf16.msra.mxu0 0
        %3406 = vmatprep.subr.bf16.mxu0 0
        %3407 = vmatpush1.bf16.msra.mxu0 0
        %3408 = vmatprep.subr.bf16.mxu0 0
        %3409 = vmatpush1.bf16.msra.mxu0 0
        %3410 = vmatprep.subr.bf16.mxu0 0
        %3411 = vmatpush1.bf16.msra.mxu0 0
        %3412 = vmatprep.subr.bf16.mxu0 0
        %3413 = vmatpush1.bf16.msra.mxu0 0
        %3414 = vmatprep.subr.bf16.mxu0 0
        %3415 = vmatpush1.bf16.msra.mxu0 0
        %3416 = vmatprep.subr.bf16.mxu0 0
        %3417 = vmatpush1.bf16.msra.mxu0 0
        %3418 = vmatprep.mubr.bf16.mxu0 0
        %3419 = vmatmul.mubr.bf16.gmra.mrb[0].mxu0 %v3372
        %v3420 = vpop.f32.mrb[0].mxu0
        %v3421 = vadd.f32 0.0, %v3420
        %v3422 = vpop.f32.mrb[0].mxu0
        %v3423 = vadd.f32 0.0, %v3422
        %v3424 = vpop.f32.mrb[0].mxu0
        %v3425 = vpop.f32.mrb[0].mxu0
        %3426 = vdwg.mxu0
        %3427 = vmatprep.subr.bf16.mxu0 %v3384
        %3428 = vmatpush1.bf16.msra.mxu0 %v3381
        %3429 = vmatprep.subr.bf16.mxu0 0
        %3430 = vmatpush1.bf16.msra.mxu0 0
        %3431 = vmatprep.subr.bf16.mxu0 0
        %3432 = vmatpush1.bf16.msra.mxu0 0
        %3433 = vmatprep.subr.bf16.mxu0 0
        %3434 = vmatpush1.bf16.msra.mxu0 0
        %3435 = vmatprep.subr.bf16.mxu0 0
        %3436 = vmatpush1.bf16.msra.mxu0 0
        %3437 = vmatprep.subr.bf16.mxu0 0
        %3438 = vmatpush1.bf16.msra.mxu0 0
        %3439 = vmatprep.subr.bf16.mxu0 0
        %3440 = vmatpush1.bf16.msra.mxu0 0
        %3441 = vmatprep.subr.bf16.mxu0 0
        %3442 = vmatpush1.bf16.msra.mxu0 0
        %3443 = vmatprep.subr.bf16.mxu0 0
        %3444 = vmatpush1.bf16.msra.mxu0 0
        %3445 = vmatprep.subr.bf16.mxu0 0
        %3446 = vmatpush1.bf16.msra.mxu0 0
        %3447 = vmatprep.subr.bf16.mxu0 0
        %3448 = vmatpush1.bf16.msra.mxu0 0
        %3449 = vmatprep.subr.bf16.mxu0 0
        %3450 = vmatpush1.bf16.msra.mxu0 0
        %3451 = vmatprep.subr.bf16.mxu0 0
        %3452 = vmatpush1.bf16.msra.mxu0 0
        %3453 = vmatprep.subr.bf16.mxu0 0
        %3454 = vmatpush1.bf16.msra.mxu0 0
        %3455 = vmatprep.subr.bf16.mxu0 0
        %3456 = vmatpush1.bf16.msra.mxu0 0
        %3457 = vmatprep.subr.bf16.mxu0 0
        %3458 = vmatpush1.bf16.msra.mxu0 0
        %3459 = vmatprep.mubr.bf16.mxu0 0
        %3460 = vmatmul.mubr.bf16.gmra.mrb[0].mxu0 %v3372
        %v3461 = vpop.f32.mrb[0].mxu0
        %v3462 = vadd.f32 0.0, %v3461
        %v3463 = vpop.f32.mrb[0].mxu0
        %v3464 = vadd.f32 0.0, %v3463
        %v3465 = vpop.f32.mrb[0].mxu0
        %v3466 = vpop.f32.mrb[0].mxu0
        %3467 = vdwg.mxu0
        %v3468 = vadd.f32 %v3295, %v3421
        %v3469 = vadd.f32 %v3296, %v3423
        %v3470 = vadd.f32 %v3297, %v3462
        %v3471 = vadd.f32 %v3298, %v3464
        %s3472 = scalar_lea.vmem %s1, 76
        %v3473 = vld [vmem:[%s3472] sm:$0xf]
        %vm3474 = vcmp.gt.f32.partialorder %v3473, 0.5
        %v3475 = vsel %vm3474, 1, 0
        %v3476 = vlaneseq
        %v3477 = vshrl.u32 %v3476, 7
        %v3478 = vsub.s32 0, %v3477
        %v3479 = vrot.slane %v3475, %v3478
        %v3480 = vlaneseq
        %v3481 = vshrl.u32 %v3480, 7
        %v3482 = vsub.s32 1, %v3481
        %v3483 = vrot.slane %v3475, %v3482
        %v3484 = vlaneseq
        %v3485 = vshrl.u32 %v3484, 7
        %v3486 = vsub.s32 2, %v3485
        %v3487 = vrot.slane %v3475, %v3486
        %v3488 = vlaneseq
        %v3489 = vshrl.u32 %v3488, 7
        %v3490 = vsub.s32 3, %v3489
        %v3491 = vrot.slane %v3475, %v3490
        %vm3492 = vcmp.eq.s32.totalorder %v3479, 1
        %vm3493 = vcmp.eq.s32.totalorder %v3483, 1
        %vm3494 = vcmp.eq.s32.totalorder %v3487, 1
        %vm3495 = vcmp.eq.s32.totalorder %v3491, 1
        %vm3496 = vmpackc.low %vm3493, %vm3492
        %vm3497 = vmpackc.low %vm3495, %vm3494
        %v3498 = vsel %vm3496, 65537, 0
        %v3499 = vsel %vm3497, 65537, 0
        %3500 = vrot.lane.b32.xlu0 %v3498, 56
        %v3501 = vpop.permute.xlu0 %3500
        %3502 = vrot.lane.b32.xlu0 %v3499, 56
        %v3503 = vpop.permute.xlu0 %3502
        %v3504 = vrot.slane %v3501, 4
        %v3505 = vrot.slane %v3503, 4
        %v3506 = vsel %vm281, %v3504, %v3501
        %v3507 = vsel %vm237, %v3504, %v3505
        %v3508 = vsel %vm281, %v3507, %v3503
        %vm3509 = vcmp.ne.s16.totalorder %v3506, 0
        %vm3510 = vcmp.ne.s16.totalorder %v3508, 0
        %vm3511 = vcmp.ne.s16.totalorder %v3505, 0
        %v3512 = vsel %vm3509, %v2604, 0
        %v3513 = vsel %vm3510, %v2605, 0
        %v3514 = vsel %vm3511, %v2606, 0
        %s3515 = scalar_lea.vmem %s2, 76
        %v3516 = vld [vmem:[%s3515] sm:$0xf]
        %v3520 = vunpack.c.l.b16 %v3512
        %v3521 = vunpack.c.h.b16 %v3512
        %v3522 = vunpack.c.l.b16 %v3513
        %v3523 = vunpack.c.h.b16 %v3513
        %v3524 = vunpack.c.l.b16 %v3514
        %v3525 = vpack.c.b16 %v3520, %v3520
        %v3526 = vpack.c.b16 %v3521, %v3521
        %v3527 = vpack.c.b16 %v3522, %v3522
        %v3528 = vpack.c.b16 %v3523, %v3523
        %v3529 = vpack.c.b16 %v3524, %v3524
        %3530 = vrot.lane.b32.xlu0 %v3525, 72
        %v3531 = vpop.permute.xlu0 %3530
        %3532 = vrot.lane.b32.xlu0 %v3526, 72
        %v3533 = vpop.permute.xlu0 %3532
        %3534 = vrot.lane.b32.xlu0 %v3527, 72
        %v3535 = vpop.permute.xlu0 %3534
        %3536 = vrot.lane.b32.xlu0 %v3528, 72
        %v3537 = vpop.permute.xlu0 %3536
        %3538 = vrot.lane.b32.xlu0 %v3529, 72
        %v3539 = vpop.permute.xlu0 %3538
        %v3540 = vsel %vm316, %v3531, %v3533
        %v3541 = vsel %vm316, %v3533, %v3535
        %v3542 = vsel %vm316, %v3535, %v3537
        %v3543 = vsel %vm316, %v3537, %v3539
        %v3545 = vsel %vm321, %v3516, 0
        %v3548 = vsel %vm325, %v3540, 0
        %v3551 = vsel %vm325, %v3541, 0
        %v3554 = vsel %vm325, %v3542, 0
        %v3557 = vsel %vm325, %v3543, 0
        %3559 = vmatprep.subr.bf16.mxu0 %v3551
        %3560 = vmatpush1.bf16.msra.mxu0 %v3548
        %3561 = vmatprep.subr.bf16.mxu0 0
        %3562 = vmatpush1.bf16.msra.mxu0 0
        %3563 = vmatprep.subr.bf16.mxu0 0
        %3564 = vmatpush1.bf16.msra.mxu0 0
        %3565 = vmatprep.subr.bf16.mxu0 0
        %3566 = vmatpush1.bf16.msra.mxu0 0
        %3567 = vmatprep.subr.bf16.mxu0 0
        %3568 = vmatpush1.bf16.msra.mxu0 0
        %3569 = vmatprep.subr.bf16.mxu0 0
        %3570 = vmatpush1.bf16.msra.mxu0 0
        %3571 = vmatprep.subr.bf16.mxu0 0
        %3572 = vmatpush1.bf16.msra.mxu0 0
        %3573 = vmatprep.subr.bf16.mxu0 0
        %3574 = vmatpush1.bf16.msra.mxu0 0
        %3575 = vmatprep.subr.bf16.mxu0 0
        %3576 = vmatpush1.bf16.msra.mxu0 0
        %3577 = vmatprep.subr.bf16.mxu0 0
        %3578 = vmatpush1.bf16.msra.mxu0 0
        %3579 = vmatprep.subr.bf16.mxu0 0
        %3580 = vmatpush1.bf16.msra.mxu0 0
        %3581 = vmatprep.subr.bf16.mxu0 0
        %3582 = vmatpush1.bf16.msra.mxu0 0
        %3583 = vmatprep.subr.bf16.mxu0 0
        %3584 = vmatpush1.bf16.msra.mxu0 0
        %3585 = vmatprep.subr.bf16.mxu0 0
        %3586 = vmatpush1.bf16.msra.mxu0 0
        %3587 = vmatprep.subr.bf16.mxu0 0
        %3588 = vmatpush1.bf16.msra.mxu0 0
        %3589 = vmatprep.subr.bf16.mxu0 0
        %3590 = vmatpush1.bf16.msra.mxu0 0
        %3591 = vmatprep.mubr.bf16.mxu0 0
        %3592 = vmatmul.mubr.bf16.gmra.mrb[0].mxu0 %v3545
        %v3593 = vpop.f32.mrb[0].mxu0
        %v3594 = vadd.f32 0.0, %v3593
        %v3595 = vpop.f32.mrb[0].mxu0
        %v3596 = vadd.f32 0.0, %v3595
        %v3597 = vpop.f32.mrb[0].mxu0
        %v3598 = vpop.f32.mrb[0].mxu0
        %3599 = vdwg.mxu0
        %3600 = vmatprep.subr.bf16.mxu0 %v3557
        %3601 = vmatpush1.bf16.msra.mxu0 %v3554
        %3602 = vmatprep.subr.bf16.mxu0 0
        %3603 = vmatpush1.bf16.msra.mxu0 0
        %3604 = vmatprep.subr.bf16.mxu0 0
        %3605 = vmatpush1.bf16.msra.mxu0 0
        %3606 = vmatprep.subr.bf16.mxu0 0
        %3607 = vmatpush1.bf16.msra.mxu0 0
        %3608 = vmatprep.subr.bf16.mxu0 0
        %3609 = vmatpush1.bf16.msra.mxu0 0
        %3610 = vmatprep.subr.bf16.mxu0 0
        %3611 = vmatpush1.bf16.msra.mxu0 0
        %3612 = vmatprep.subr.bf16.mxu0 0
        %3613 = vmatpush1.bf16.msra.mxu0 0
        %3614 = vmatprep.subr.bf16.mxu0 0
        %3615 = vmatpush1.bf16.msra.mxu0 0
        %3616 = vmatprep.subr.bf16.mxu0 0
        %3617 = vmatpush1.bf16.msra.mxu0 0
        %3618 = vmatprep.subr.bf16.mxu0 0
        %3619 = vmatpush1.bf16.msra.mxu0 0
        %3620 = vmatprep.subr.bf16.mxu0 0
        %3621 = vmatpush1.bf16.msra.mxu0 0
        %3622 = vmatprep.subr.bf16.mxu0 0
        %3623 = vmatpush1.bf16.msra.mxu0 0
        %3624 = vmatprep.subr.bf16.mxu0 0
        %3625 = vmatpush1.bf16.msra.mxu0 0
        %3626 = vmatprep.subr.bf16.mxu0 0
        %3627 = vmatpush1.bf16.msra.mxu0 0
        %3628 = vmatprep.subr.bf16.mxu0 0
        %3629 = vmatpush1.bf16.msra.mxu0 0
        %3630 = vmatprep.subr.bf16.mxu0 0
        %3631 = vmatpush1.bf16.msra.mxu0 0
        %3632 = vmatprep.mubr.bf16.mxu0 0
        %3633 = vmatmul.mubr.bf16.gmra.mrb[0].mxu0 %v3545
        %v3634 = vpop.f32.mrb[0].mxu0
        %v3635 = vadd.f32 0.0, %v3634
        %v3636 = vpop.f32.mrb[0].mxu0
        %v3637 = vadd.f32 0.0, %v3636
        %v3638 = vpop.f32.mrb[0].mxu0
        %v3639 = vpop.f32.mrb[0].mxu0
        %3640 = vdwg.mxu0
        %v3641 = vadd.f32 %v3468, %v3594
        %v3642 = vadd.f32 %v3469, %v3596
        %v3643 = vadd.f32 %v3470, %v3635
        %v3644 = vadd.f32 %v3471, %v3637
        %s3645 = scalar_lea.vmem %s1, 80
        %v3646 = vld [vmem:[%s3645] sm:$0xf]
        %vm3647 = vcmp.gt.f32.partialorder %v3646, 0.5
        %v3648 = vsel %vm3647, 1, 0
        %v3649 = vlaneseq
        %v3650 = vshrl.u32 %v3649, 7
        %v3651 = vsub.s32 0, %v3650
        %v3652 = vrot.slane %v3648, %v3651
        %v3653 = vlaneseq
        %v3654 = vshrl.u32 %v3653, 7
        %v3655 = vsub.s32 1, %v3654
        %v3656 = vrot.slane %v3648, %v3655
        %v3657 = vlaneseq
        %v3658 = vshrl.u32 %v3657, 7
        %v3659 = vsub.s32 2, %v3658
        %v3660 = vrot.slane %v3648, %v3659
        %v3661 = vlaneseq
        %v3662 = vshrl.u32 %v3661, 7
        %v3663 = vsub.s32 3, %v3662
        %v3664 = vrot.slane %v3648, %v3663
        %vm3665 = vcmp.eq.s32.totalorder %v3652, 1
        %vm3666 = vcmp.eq.s32.totalorder %v3656, 1
        %vm3667 = vcmp.eq.s32.totalorder %v3660, 1
        %vm3668 = vcmp.eq.s32.totalorder %v3664, 1
        %vm3669 = vmpackc.low %vm3666, %vm3665
        %vm3670 = vmpackc.low %vm3668, %vm3667
        %v3671 = vsel %vm3669, 65537, 0
        %v3672 = vsel %vm3670, 65537, 0
        %3673 = vrot.lane.b32.xlu0 %v3671, 57
        %v3674 = vpop.permute.xlu0 %3673
        %3675 = vrot.lane.b32.xlu0 %v3672, 57
        %v3676 = vpop.permute.xlu0 %3675
        %v3677 = vrot.slane %v3674, 4
        %v3678 = vrot.slane %v3676, 4
        %v3679 = vsel %vm579, %v3677, %v3674
        %v3680 = vsel %vm237, %v3677, %v3678
        %v3681 = vsel %vm579, %v3680, %v3676
        %vm3682 = vcmp.ne.s16.totalorder %v3679, 0
        %vm3683 = vcmp.ne.s16.totalorder %v3681, 0
        %vm3684 = vcmp.ne.s16.totalorder %v3678, 0
        %v3685 = vsel %vm3682, %v2604, 0
        %v3686 = vsel %vm3683, %v2605, 0
        %v3687 = vsel %vm3684, %v2606, 0
        %s3688 = scalar_lea.vmem %s2, 80
        %v3689 = vld [vmem:[%s3688] sm:$0xf]
        %v3693 = vunpack.c.l.b16 %v3685
        %v3694 = vunpack.c.h.b16 %v3685
        %v3695 = vunpack.c.l.b16 %v3686
        %v3696 = vunpack.c.h.b16 %v3686
        %v3697 = vunpack.c.l.b16 %v3687
        %v3698 = vpack.c.b16 %v3693, %v3693
        %v3699 = vpack.c.b16 %v3694, %v3694
        %v3700 = vpack.c.b16 %v3695, %v3695
        %v3701 = vpack.c.b16 %v3696, %v3696
        %v3702 = vpack.c.b16 %v3697, %v3697
        %3703 = vrot.lane.b32.xlu0 %v3698, 71
        %v3704 = vpop.permute.xlu0 %3703
        %3705 = vrot.lane.b32.xlu0 %v3699, 71
        %v3706 = vpop.permute.xlu0 %3705
        %3707 = vrot.lane.b32.xlu0 %v3700, 71
        %v3708 = vpop.permute.xlu0 %3707
        %3709 = vrot.lane.b32.xlu0 %v3701, 71
        %v3710 = vpop.permute.xlu0 %3709
        %3711 = vrot.lane.b32.xlu0 %v3702, 71
        %v3712 = vpop.permute.xlu0 %3711
        %v3713 = vsel %vm614, %v3704, %v3706
        %v3714 = vsel %vm614, %v3706, %v3708
        %v3715 = vsel %vm614, %v3708, %v3710
        %v3716 = vsel %vm614, %v3710, %v3712
        %v3718 = vsel %vm321, %v3689, 0
        %v3721 = vsel %vm325, %v3713, 0
        %v3724 = vsel %vm325, %v3714, 0
        %v3727 = vsel %vm325, %v3715, 0
        %v3730 = vsel %vm325, %v3716, 0
        %3732 = vmatprep.subr.bf16.mxu0 %v3724
        %3733 = vmatpush1.bf16.msra.mxu0 %v3721
        %3734 = vmatprep.subr.bf16.mxu0 0
        %3735 = vmatpush1.bf16.msra.mxu0 0
        %3736 = vmatprep.subr.bf16.mxu0 0
        %3737 = vmatpush1.bf16.msra.mxu0 0
        %3738 = vmatprep.subr.bf16.mxu0 0
        %3739 = vmatpush1.bf16.msra.mxu0 0
        %3740 = vmatprep.subr.bf16.mxu0 0
        %3741 = vmatpush1.bf16.msra.mxu0 0
        %3742 = vmatprep.subr.bf16.mxu0 0
        %3743 = vmatpush1.bf16.msra.mxu0 0
        %3744 = vmatprep.subr.bf16.mxu0 0
        %3745 = vmatpush1.bf16.msra.mxu0 0
        %3746 = vmatprep.subr.bf16.mxu0 0
        %3747 = vmatpush1.bf16.msra.mxu0 0
        %3748 = vmatprep.subr.bf16.mxu0 0
        %3749 = vmatpush1.bf16.msra.mxu0 0
        %3750 = vmatprep.subr.bf16.mxu0 0
        %3751 = vmatpush1.bf16.msra.mxu0 0
        %3752 = vmatprep.subr.bf16.mxu0 0
        %3753 = vmatpush1.bf16.msra.mxu0 0
        %3754 = vmatprep.subr.bf16.mxu0 0
        %3755 = vmatpush1.bf16.msra.mxu0 0
        %3756 = vmatprep.subr.bf16.mxu0 0
        %3757 = vmatpush1.bf16.msra.mxu0 0
        %3758 = vmatprep.subr.bf16.mxu0 0
        %3759 = vmatpush1.bf16.msra.mxu0 0
        %3760 = vmatprep.subr.bf16.mxu0 0
        %3761 = vmatpush1.bf16.msra.mxu0 0
        %3762 = vmatprep.subr.bf16.mxu0 0
        %3763 = vmatpush1.bf16.msra.mxu0 0
        %3764 = vmatprep.mubr.bf16.mxu0 0
        %3765 = vmatmul.mubr.bf16.gmra.mrb[0].mxu0 %v3718
        %v3766 = vpop.f32.mrb[0].mxu0
        %v3767 = vadd.f32 0.0, %v3766
        %v3768 = vpop.f32.mrb[0].mxu0
        %v3769 = vadd.f32 0.0, %v3768
        %v3770 = vpop.f32.mrb[0].mxu0
        %v3771 = vpop.f32.mrb[0].mxu0
        %3772 = vdwg.mxu0
        %3773 = vmatprep.subr.bf16.mxu0 %v3730
        %3774 = vmatpush1.bf16.msra.mxu0 %v3727
        %3775 = vmatprep.subr.bf16.mxu0 0
        %3776 = vmatpush1.bf16.msra.mxu0 0
        %3777 = vmatprep.subr.bf16.mxu0 0
        %3778 = vmatpush1.bf16.msra.mxu0 0
        %3779 = vmatprep.subr.bf16.mxu0 0
        %3780 = vmatpush1.bf16.msra.mxu0 0
        %3781 = vmatprep.subr.bf16.mxu0 0
        %3782 = vmatpush1.bf16.msra.mxu0 0
        %3783 = vmatprep.subr.bf16.mxu0 0
        %3784 = vmatpush1.bf16.msra.mxu0 0
        %3785 = vmatprep.subr.bf16.mxu0 0
        %3786 = vmatpush1.bf16.msra.mxu0 0
        %3787 = vmatprep.subr.bf16.mxu0 0
        %3788 = vmatpush1.bf16.msra.mxu0 0
        %3789 = vmatprep.subr.bf16.mxu0 0
        %3790 = vmatpush1.bf16.msra.mxu0 0
        %3791 = vmatprep.subr.bf16.mxu0 0
        %3792 = vmatpush1.bf16.msra.mxu0 0
        %3793 = vmatprep.subr.bf16.mxu0 0
        %3794 = vmatpush1.bf16.msra.mxu0 0
        %3795 = vmatprep.subr.bf16.mxu0 0
        %3796 = vmatpush1.bf16.msra.mxu0 0
        %3797 = vmatprep.subr.bf16.mxu0 0
        %3798 = vmatpush1.bf16.msra.mxu0 0
        %3799 = vmatprep.subr.bf16.mxu0 0
        %3800 = vmatpush1.bf16.msra.mxu0 0
        %3801 = vmatprep.subr.bf16.mxu0 0
        %3802 = vmatpush1.bf16.msra.mxu0 0
        %3803 = vmatprep.subr.bf16.mxu0 0
        %3804 = vmatpush1.bf16.msra.mxu0 0
        %3805 = vmatprep.mubr.bf16.mxu0 0
        %3806 = vmatmul.mubr.bf16.gmra.mrb[0].mxu0 %v3718
        %v3807 = vpop.f32.mrb[0].mxu0
        %v3808 = vadd.f32 0.0, %v3807
        %v3809 = vpop.f32.mrb[0].mxu0
        %v3810 = vadd.f32 0.0, %v3809
        %v3811 = vpop.f32.mrb[0].mxu0
        %v3812 = vpop.f32.mrb[0].mxu0
        %3813 = vdwg.mxu0
        %v3814 = vadd.f32 %v3641, %v3767
        %v3815 = vadd.f32 %v3642, %v3769
        %v3816 = vadd.f32 %v3643, %v3808
        %v3817 = vadd.f32 %v3644, %v3810
        %s3818 = scalar_lea.vmem %s1, 84
        %v3819 = vld [vmem:[%s3818] sm:$0xf]
        %vm3820 = vcmp.gt.f32.partialorder %v3819, 0.5
        %v3821 = vsel %vm3820, 1, 0
        %v3822 = vlaneseq
        %v3823 = vshrl.u32 %v3822, 7
        %v3824 = vsub.s32 0, %v3823
        %v3825 = vrot.slane %v3821, %v3824
        %v3826 = vlaneseq
        %v3827 = vshrl.u32 %v3826, 7
        %v3828 = vsub.s32 1, %v3827
        %v3829 = vrot.slane %v3821, %v3828
        %v3830 = vlaneseq
        %v3831 = vshrl.u32 %v3830, 7
        %v3832 = vsub.s32 2, %v3831
        %v3833 = vrot.slane %v3821, %v3832
        %v3834 = vlaneseq
        %v3835 = vshrl.u32 %v3834, 7
        %v3836 = vsub.s32 3, %v3835
        %v3837 = vrot.slane %v3821, %v3836
        %vm3838 = vcmp.eq.s32.totalorder %v3825, 1
        %vm3839 = vcmp.eq.s32.totalorder %v3829, 1
        %vm3840 = vcmp.eq.s32.totalorder %v3833, 1
        %vm3841 = vcmp.eq.s32.totalorder %v3837, 1
        %vm3842 = vmpackc.low %vm3839, %vm3838
        %vm3843 = vmpackc.low %vm3841, %vm3840
        %v3844 = vsel %vm3842, 65537, 0
        %v3845 = vsel %vm3843, 65537, 0
        %3846 = vrot.lane.b32.xlu0 %v3844, 63
        %v3847 = vpop.permute.xlu0 %3846
        %3848 = vrot.lane.b32.xlu0 %v3845, 63
        %v3849 = vpop.permute.xlu0 %3848
        %v3850 = vrot.slane %v3847, 4
        %v3851 = vrot.slane %v3849, 4
        %v3852 = vsel %vm754, %v3850, %v3847
        %v3853 = vsel %vm237, %v3850, %v3851
        %v3854 = vsel %vm754, %v3853, %v3849
        %vm3855 = vcmp.ne.s16.totalorder %v3852, 0
        %vm3856 = vcmp.ne.s16.totalorder %v3854, 0
        %vm3857 = vcmp.ne.s16.totalorder %v3851, 0
        %v3858 = vsel %vm3855, %v2604, 0
        %v3859 = vsel %vm3856, %v2605, 0
        %v3860 = vsel %vm3857, %v2606, 0
        %s3861 = scalar_lea.vmem %s2, 84
        %v3862 = vld [vmem:[%s3861] sm:$0xf]
        %v3866 = vunpack.c.l.b16 %v3858
        %v3867 = vunpack.c.h.b16 %v3858
        %v3868 = vunpack.c.l.b16 %v3859
        %v3869 = vunpack.c.h.b16 %v3859
        %v3870 = vunpack.c.l.b16 %v3860
        %v3871 = vpack.c.b16 %v3866, %v3866
        %v3872 = vpack.c.b16 %v3867, %v3867
        %v3873 = vpack.c.b16 %v3868, %v3868
        %v3874 = vpack.c.b16 %v3869, %v3869
        %v3875 = vpack.c.b16 %v3870, %v3870
        %3876 = vrot.lane.b32.xlu0 %v3871, 65
        %v3877 = vpop.permute.xlu0 %3876
        %3878 = vrot.lane.b32.xlu0 %v3872, 65
        %v3879 = vpop.permute.xlu0 %3878
        %3880 = vrot.lane.b32.xlu0 %v3873, 65
        %v3881 = vpop.permute.xlu0 %3880
        %3882 = vrot.lane.b32.xlu0 %v3874, 65
        %v3883 = vpop.permute.xlu0 %3882
        %3884 = vrot.lane.b32.xlu0 %v3875, 65
        %v3885 = vpop.permute.xlu0 %3884
        %v3886 = vsel %vm789, %v3877, %v3879
        %v3887 = vsel %vm789, %v3879, %v3881
        %v3888 = vsel %vm789, %v3881, %v3883
        %v3889 = vsel %vm789, %v3883, %v3885
        %v3891 = vsel %vm321, %v3862, 0
        %v3894 = vsel %vm325, %v3886, 0
        %v3897 = vsel %vm325, %v3887, 0
        %v3900 = vsel %vm325, %v3888, 0
        %v3903 = vsel %vm325, %v3889, 0
        %3905 = vmatprep.subr.bf16.mxu0 %v3897
        %3906 = vmatpush1.bf16.msra.mxu0 %v3894
        %3907 = vmatprep.subr.bf16.mxu0 0
        %3908 = vmatpush1.bf16.msra.mxu0 0
        %3909 = vmatprep.subr.bf16.mxu0 0
        %3910 = vmatpush1.bf16.msra.mxu0 0
        %3911 = vmatprep.subr.bf16.mxu0 0
        %3912 = vmatpush1.bf16.msra.mxu0 0
        %3913 = vmatprep.subr.bf16.mxu0 0
        %3914 = vmatpush1.bf16.msra.mxu0 0
        %3915 = vmatprep.subr.bf16.mxu0 0
        %3916 = vmatpush1.bf16.msra.mxu0 0
        %3917 = vmatprep.subr.bf16.mxu0 0
        %3918 = vmatpush1.bf16.msra.mxu0 0
        %3919 = vmatprep.subr.bf16.mxu0 0
        %3920 = vmatpush1.bf16.msra.mxu0 0
        %3921 = vmatprep.subr.bf16.mxu0 0
        %3922 = vmatpush1.bf16.msra.mxu0 0
        %3923 = vmatprep.subr.bf16.mxu0 0
        %3924 = vmatpush1.bf16.msra.mxu0 0
        %3925 = vmatprep.subr.bf16.mxu0 0
        %3926 = vmatpush1.bf16.msra.mxu0 0
        %3927 = vmatprep.subr.bf16.mxu0 0
        %3928 = vmatpush1.bf16.msra.mxu0 0
        %3929 = vmatprep.subr.bf16.mxu0 0
        %3930 = vmatpush1.bf16.msra.mxu0 0
        %3931 = vmatprep.subr.bf16.mxu0 0
        %3932 = vmatpush1.bf16.msra.mxu0 0
        %3933 = vmatprep.subr.bf16.mxu0 0
        %3934 = vmatpush1.bf16.msra.mxu0 0
        %3935 = vmatprep.subr.bf16.mxu0 0
        %3936 = vmatpush1.bf16.msra.mxu0 0
        %3937 = vmatprep.mubr.bf16.mxu0 0
        %3938 = vmatmul.mubr.bf16.gmra.mrb[0].mxu0 %v3891
        %v3939 = vpop.f32.mrb[0].mxu0
        %v3940 = vadd.f32 0.0, %v3939
        %v3941 = vpop.f32.mrb[0].mxu0
        %v3942 = vadd.f32 0.0, %v3941
        %v3943 = vpop.f32.mrb[0].mxu0
        %v3944 = vpop.f32.mrb[0].mxu0
        %3945 = vdwg.mxu0
        %3946 = vmatprep.subr.bf16.mxu0 %v3903
        %3947 = vmatpush1.bf16.msra.mxu0 %v3900
        %3948 = vmatprep.subr.bf16.mxu0 0
        %3949 = vmatpush1.bf16.msra.mxu0 0
        %3950 = vmatprep.subr.bf16.mxu0 0
        %3951 = vmatpush1.bf16.msra.mxu0 0
        %3952 = vmatprep.subr.bf16.mxu0 0
        %3953 = vmatpush1.bf16.msra.mxu0 0
        %3954 = vmatprep.subr.bf16.mxu0 0
        %3955 = vmatpush1.bf16.msra.mxu0 0
        %3956 = vmatprep.subr.bf16.mxu0 0
        %3957 = vmatpush1.bf16.msra.mxu0 0
        %3958 = vmatprep.subr.bf16.mxu0 0
        %3959 = vmatpush1.bf16.msra.mxu0 0
        %3960 = vmatprep.subr.bf16.mxu0 0
        %3961 = vmatpush1.bf16.msra.mxu0 0
        %3962 = vmatprep.subr.bf16.mxu0 0
        %3963 = vmatpush1.bf16.msra.mxu0 0
        %3964 = vmatprep.subr.bf16.mxu0 0
        %3965 = vmatpush1.bf16.msra.mxu0 0
        %3966 = vmatprep.subr.bf16.mxu0 0
        %3967 = vmatpush1.bf16.msra.mxu0 0
        %3968 = vmatprep.subr.bf16.mxu0 0
        %3969 = vmatpush1.bf16.msra.mxu0 0
        %3970 = vmatprep.subr.bf16.mxu0 0
        %3971 = vmatpush1.bf16.msra.mxu0 0
        %3972 = vmatprep.subr.bf16.mxu0 0
        %3973 = vmatpush1.bf16.msra.mxu0 0
        %3974 = vmatprep.subr.bf16.mxu0 0
        %3975 = vmatpush1.bf16.msra.mxu0 0
        %3976 = vmatprep.subr.bf16.mxu0 0
        %3977 = vmatpush1.bf16.msra.mxu0 0
        %3978 = vmatprep.mubr.bf16.mxu0 0
        %3979 = vmatmul.mubr.bf16.gmra.mrb[0].mxu0 %v3891
        %v3980 = vpop.f32.mrb[0].mxu0
        %v3981 = vadd.f32 0.0, %v3980
        %v3982 = vpop.f32.mrb[0].mxu0
        %v3983 = vadd.f32 0.0, %v3982
        %v3984 = vpop.f32.mrb[0].mxu0
        %v3985 = vpop.f32.mrb[0].mxu0
        %3986 = vdwg.mxu0
        %v3987 = vadd.f32 %v3814, %v3940
        %v3988 = vadd.f32 %v3815, %v3942
        %v3989 = vadd.f32 %v3816, %v3981
        %v3990 = vadd.f32 %v3817, %v3983
        %s3991 = scalar_lea.vmem %s1, 88
        %v3992 = vld [vmem:[%s3991] sm:$0xf]
        %vm3993 = vcmp.gt.f32.partialorder %v3992, 0.5
        %v3994 = vsel %vm3993, 1, 0
        %v3995 = vlaneseq
        %v3996 = vshrl.u32 %v3995, 7
        %v3997 = vsub.s32 0, %v3996
        %v3998 = vrot.slane %v3994, %v3997
        %v3999 = vlaneseq
        %v4000 = vshrl.u32 %v3999, 7
        %v4001 = vsub.s32 1, %v4000
        %v4002 = vrot.slane %v3994, %v4001
        %v4003 = vlaneseq
        %v4004 = vshrl.u32 %v4003, 7
        %v4005 = vsub.s32 2, %v4004
        %v4006 = vrot.slane %v3994, %v4005
        %v4007 = vlaneseq
        %v4008 = vshrl.u32 %v4007, 7
        %v4009 = vsub.s32 3, %v4008
        %v4010 = vrot.slane %v3994, %v4009
        %vm4011 = vcmp.eq.s32.totalorder %v3998, 1
        %vm4012 = vcmp.eq.s32.totalorder %v4002, 1
        %vm4013 = vcmp.eq.s32.totalorder %v4006, 1
        %vm4014 = vcmp.eq.s32.totalorder %v4010, 1
        %vm4015 = vmpackc.low %vm4012, %vm4011
        %vm4016 = vmpackc.low %vm4014, %vm4013
        %v4017 = vsel %vm4015, 65537, 0
        %v4018 = vsel %vm4016, 65537, 0
        %4019 = vrot.lane.b32.xlu0 %v4017, 64
        %v4020 = vpop.permute.xlu0 %4019
        %4021 = vrot.lane.b32.xlu0 %v4018, 64
        %v4022 = vpop.permute.xlu0 %4021
        %v4023 = vrot.slane %v4020, 4
        %v4024 = vrot.slane %v4022, 4
        %v4025 = vsel %vm929, %v4023, %v4020
        %v4026 = vsel %vm237, %v4023, %v4024
        %v4027 = vsel %vm929, %v4026, %v4022
        %vm4028 = vcmp.ne.s16.totalorder %v4025, 0
        %vm4029 = vcmp.ne.s16.totalorder %v4027, 0
        %vm4030 = vcmp.ne.s16.totalorder %v4024, 0
        %v4031 = vsel %vm4028, %v2604, 0
        %v4032 = vsel %vm4029, %v2605, 0
        %v4033 = vsel %vm4030, %v2606, 0
        %s4034 = scalar_lea.vmem %s2, 88
        %v4035 = vld [vmem:[%s4034] sm:$0xf]
        %v4039 = vunpack.c.l.b16 %v4031
        %v4040 = vunpack.c.h.b16 %v4031
        %v4041 = vunpack.c.l.b16 %v4032
        %v4042 = vunpack.c.h.b16 %v4032
        %v4043 = vunpack.c.l.b16 %v4033
        %v4044 = vpack.c.b16 %v4039, %v4039
        %v4045 = vpack.c.b16 %v4040, %v4040
        %v4046 = vpack.c.b16 %v4041, %v4041
        %v4047 = vpack.c.b16 %v4042, %v4042
        %v4048 = vpack.c.b16 %v4043, %v4043
        %4049 = vrot.lane.b32.xlu0 %v4044, 64
        %v4050 = vpop.permute.xlu0 %4049
        %4051 = vrot.lane.b32.xlu0 %v4045, 64
        %v4052 = vpop.permute.xlu0 %4051
        %4053 = vrot.lane.b32.xlu0 %v4046, 64
        %v4054 = vpop.permute.xlu0 %4053
        %4055 = vrot.lane.b32.xlu0 %v4047, 64
        %v4056 = vpop.permute.xlu0 %4055
        %4057 = vrot.lane.b32.xlu0 %v4048, 64
        %v4058 = vpop.permute.xlu0 %4057
        %v4059 = vsel %vm929, %v4050, %v4052
        %v4060 = vsel %vm929, %v4052, %v4054
        %v4061 = vsel %vm929, %v4054, %v4056
        %v4062 = vsel %vm929, %v4056, %v4058
        %v4064 = vsel %vm321, %v4035, 0
        %v4067 = vsel %vm325, %v4059, 0
        %v4070 = vsel %vm325, %v4060, 0
        %v4073 = vsel %vm325, %v4061, 0
        %v4076 = vsel %vm325, %v4062, 0
        %4078 = vmatprep.subr.bf16.mxu0 %v4070
        %4079 = vmatpush1.bf16.msra.mxu0 %v4067
        %4080 = vmatprep.subr.bf16.mxu0 0
        %4081 = vmatpush1.bf16.msra.mxu0 0
        %4082 = vmatprep.subr.bf16.mxu0 0
        %4083 = vmatpush1.bf16.msra.mxu0 0
        %4084 = vmatprep.subr.bf16.mxu0 0
        %4085 = vmatpush1.bf16.msra.mxu0 0
        %4086 = vmatprep.subr.bf16.mxu0 0
        %4087 = vmatpush1.bf16.msra.mxu0 0
        %4088 = vmatprep.subr.bf16.mxu0 0
        %4089 = vmatpush1.bf16.msra.mxu0 0
        %4090 = vmatprep.subr.bf16.mxu0 0
        %4091 = vmatpush1.bf16.msra.mxu0 0
        %4092 = vmatprep.subr.bf16.mxu0 0
        %4093 = vmatpush1.bf16.msra.mxu0 0
        %4094 = vmatprep.subr.bf16.mxu0 0
        %4095 = vmatpush1.bf16.msra.mxu0 0
        %4096 = vmatprep.subr.bf16.mxu0 0
        %4097 = vmatpush1.bf16.msra.mxu0 0
        %4098 = vmatprep.subr.bf16.mxu0 0
        %4099 = vmatpush1.bf16.msra.mxu0 0
        %4100 = vmatprep.subr.bf16.mxu0 0
        %4101 = vmatpush1.bf16.msra.mxu0 0
        %4102 = vmatprep.subr.bf16.mxu0 0
        %4103 = vmatpush1.bf16.msra.mxu0 0
        %4104 = vmatprep.subr.bf16.mxu0 0
        %4105 = vmatpush1.bf16.msra.mxu0 0
        %4106 = vmatprep.subr.bf16.mxu0 0
        %4107 = vmatpush1.bf16.msra.mxu0 0
        %4108 = vmatprep.subr.bf16.mxu0 0
        %4109 = vmatpush1.bf16.msra.mxu0 0
        %4110 = vmatprep.mubr.bf16.mxu0 0
        %4111 = vmatmul.mubr.bf16.gmra.mrb[0].mxu0 %v4064
        %v4112 = vpop.f32.mrb[0].mxu0
        %v4113 = vadd.f32 0.0, %v4112
        %v4114 = vpop.f32.mrb[0].mxu0
        %v4115 = vadd.f32 0.0, %v4114
        %v4116 = vpop.f32.mrb[0].mxu0
        %v4117 = vpop.f32.mrb[0].mxu0
        %4118 = vdwg.mxu0
        %4119 = vmatprep.subr.bf16.mxu0 %v4076
        %4120 = vmatpush1.bf16.msra.mxu0 %v4073
        %4121 = vmatprep.subr.bf16.mxu0 0
        %4122 = vmatpush1.bf16.msra.mxu0 0
        %4123 = vmatprep.subr.bf16.mxu0 0
        %4124 = vmatpush1.bf16.msra.mxu0 0
        %4125 = vmatprep.subr.bf16.mxu0 0
        %4126 = vmatpush1.bf16.msra.mxu0 0
        %4127 = vmatprep.subr.bf16.mxu0 0
        %4128 = vmatpush1.bf16.msra.mxu0 0
        %4129 = vmatprep.subr.bf16.mxu0 0
        %4130 = vmatpush1.bf16.msra.mxu0 0
        %4131 = vmatprep.subr.bf16.mxu0 0
        %4132 = vmatpush1.bf16.msra.mxu0 0
        %4133 = vmatprep.subr.bf16.mxu0 0
        %4134 = vmatpush1.bf16.msra.mxu0 0
        %4135 = vmatprep.subr.bf16.mxu0 0
        %4136 = vmatpush1.bf16.msra.mxu0 0
        %4137 = vmatprep.subr.bf16.mxu0 0
        %4138 = vmatpush1.bf16.msra.mxu0 0
        %4139 = vmatprep.subr.bf16.mxu0 0
        %4140 = vmatpush1.bf16.msra.mxu0 0
        %4141 = vmatprep.subr.bf16.mxu0 0
        %4142 = vmatpush1.bf16.msra.mxu0 0
        %4143 = vmatprep.subr.bf16.mxu0 0
        %4144 = vmatpush1.bf16.msra.mxu0 0
        %4145 = vmatprep.subr.bf16.mxu0 0
        %4146 = vmatpush1.bf16.msra.mxu0 0
        %4147 = vmatprep.subr.bf16.mxu0 0
        %4148 = vmatpush1.bf16.msra.mxu0 0
        %4149 = vmatprep.subr.bf16.mxu0 0
        %4150 = vmatpush1.bf16.msra.mxu0 0
        %4151 = vmatprep.mubr.bf16.mxu0 0
        %4152 = vmatmul.mubr.bf16.gmra.mrb[0].mxu0 %v4064
        %v4153 = vpop.f32.mrb[0].mxu0
        %v4154 = vadd.f32 0.0, %v4153
        %v4155 = vpop.f32.mrb[0].mxu0
        %v4156 = vadd.f32 0.0, %v4155
        %v4157 = vpop.f32.mrb[0].mxu0
        %v4158 = vpop.f32.mrb[0].mxu0
        %4159 = vdwg.mxu0
        %v4160 = vadd.f32 %v3987, %v4113
        %v4161 = vadd.f32 %v3988, %v4115
        %v4162 = vadd.f32 %v3989, %v4154
        %v4163 = vadd.f32 %v3990, %v4156
        %s4164 = scalar_lea.vmem %s1, 92
        %v4165 = vld [vmem:[%s4164] sm:$0xf]
        %vm4166 = vcmp.gt.f32.partialorder %v4165, 0.5
        %v4167 = vsel %vm4166, 1, 0
        %v4168 = vlaneseq
        %v4169 = vshrl.u32 %v4168, 7
        %v4170 = vsub.s32 0, %v4169
        %v4171 = vrot.slane %v4167, %v4170
        %v4172 = vlaneseq
        %v4173 = vshrl.u32 %v4172, 7
        %v4174 = vsub.s32 1, %v4173
        %v4175 = vrot.slane %v4167, %v4174
        %v4176 = vlaneseq
        %v4177 = vshrl.u32 %v4176, 7
        %v4178 = vsub.s32 2, %v4177
        %v4179 = vrot.slane %v4167, %v4178
        %v4180 = vlaneseq
        %v4181 = vshrl.u32 %v4180, 7
        %v4182 = vsub.s32 3, %v4181
        %v4183 = vrot.slane %v4167, %v4182
        %vm4184 = vcmp.eq.s32.totalorder %v4171, 1
        %vm4185 = vcmp.eq.s32.totalorder %v4175, 1
        %vm4186 = vcmp.eq.s32.totalorder %v4179, 1
        %vm4187 = vcmp.eq.s32.totalorder %v4183, 1
        %vm4188 = vmpackc.low %vm4185, %vm4184
        %vm4189 = vmpackc.low %vm4187, %vm4186
        %v4190 = vsel %vm4188, 65537, 0
        %v4191 = vsel %vm4189, 65537, 0
        %4192 = vrot.lane.b32.xlu0 %v4190, 65
        %v4193 = vpop.permute.xlu0 %4192
        %4194 = vrot.lane.b32.xlu0 %v4191, 65
        %v4195 = vpop.permute.xlu0 %4194
        %v4196 = vrot.slane %v4193, 4
        %v4197 = vrot.slane %v4195, 4
        %v4198 = vsel %vm789, %v4196, %v4193
        %v4199 = vsel %vm237, %v4196, %v4197
        %v4200 = vsel %vm789, %v4199, %v4195
        %vm4201 = vcmp.ne.s16.totalorder %v4198, 0
        %vm4202 = vcmp.ne.s16.totalorder %v4200, 0
        %vm4203 = vcmp.ne.s16.totalorder %v4197, 0
        %v4204 = vsel %vm4201, %v2604, 0
        %v4205 = vsel %vm4202, %v2605, 0
        %v4206 = vsel %vm4203, %v2606, 0
        %s4207 = scalar_lea.vmem %s2, 92
        %v4208 = vld [vmem:[%s4207] sm:$0xf]
        %v4212 = vunpack.c.l.b16 %v4204
        %v4213 = vunpack.c.h.b16 %v4204
        %v4214 = vunpack.c.l.b16 %v4205
        %v4215 = vunpack.c.h.b16 %v4205
        %v4216 = vunpack.c.l.b16 %v4206
        %v4217 = vpack.c.b16 %v4212, %v4212
        %v4218 = vpack.c.b16 %v4213, %v4213
        %v4219 = vpack.c.b16 %v4214, %v4214
        %v4220 = vpack.c.b16 %v4215, %v4215
        %v4221 = vpack.c.b16 %v4216, %v4216
        %4222 = vrot.lane.b32.xlu0 %v4217, 63
        %v4223 = vpop.permute.xlu0 %4222
        %4224 = vrot.lane.b32.xlu0 %v4218, 63
        %v4225 = vpop.permute.xlu0 %4224
        %4226 = vrot.lane.b32.xlu0 %v4219, 63
        %v4227 = vpop.permute.xlu0 %4226
        %4228 = vrot.lane.b32.xlu0 %v4220, 63
        %v4229 = vpop.permute.xlu0 %4228
        %4230 = vrot.lane.b32.xlu0 %v4221, 63
        %v4231 = vpop.permute.xlu0 %4230
        %v4232 = vsel %vm754, %v4223, %v4225
        %v4233 = vsel %vm754, %v4225, %v4227
        %v4234 = vsel %vm754, %v4227, %v4229
        %v4235 = vsel %vm754, %v4229, %v4231
        %v4237 = vsel %vm321, %v4208, 0
        %v4240 = vsel %vm325, %v4232, 0
        %v4243 = vsel %vm325, %v4233, 0
        %v4246 = vsel %vm325, %v4234, 0
        %v4249 = vsel %vm325, %v4235, 0
        %4251 = vmatprep.subr.bf16.mxu0 %v4243
        %4252 = vmatpush1.bf16.msra.mxu0 %v4240
        %4253 = vmatprep.subr.bf16.mxu0 0
        %4254 = vmatpush1.bf16.msra.mxu0 0
        %4255 = vmatprep.subr.bf16.mxu0 0
        %4256 = vmatpush1.bf16.msra.mxu0 0
        %4257 = vmatprep.subr.bf16.mxu0 0
        %4258 = vmatpush1.bf16.msra.mxu0 0
        %4259 = vmatprep.subr.bf16.mxu0 0
        %4260 = vmatpush1.bf16.msra.mxu0 0
        %4261 = vmatprep.subr.bf16.mxu0 0
        %4262 = vmatpush1.bf16.msra.mxu0 0
        %4263 = vmatprep.subr.bf16.mxu0 0
        %4264 = vmatpush1.bf16.msra.mxu0 0
        %4265 = vmatprep.subr.bf16.mxu0 0
        %4266 = vmatpush1.bf16.msra.mxu0 0
        %4267 = vmatprep.subr.bf16.mxu0 0
        %4268 = vmatpush1.bf16.msra.mxu0 0
        %4269 = vmatprep.subr.bf16.mxu0 0
        %4270 = vmatpush1.bf16.msra.mxu0 0
        %4271 = vmatprep.subr.bf16.mxu0 0
        %4272 = vmatpush1.bf16.msra.mxu0 0
        %4273 = vmatprep.subr.bf16.mxu0 0
        %4274 = vmatpush1.bf16.msra.mxu0 0
        %4275 = vmatprep.subr.bf16.mxu0 0
        %4276 = vmatpush1.bf16.msra.mxu0 0
        %4277 = vmatprep.subr.bf16.mxu0 0
        %4278 = vmatpush1.bf16.msra.mxu0 0
        %4279 = vmatprep.subr.bf16.mxu0 0
        %4280 = vmatpush1.bf16.msra.mxu0 0
        %4281 = vmatprep.subr.bf16.mxu0 0
        %4282 = vmatpush1.bf16.msra.mxu0 0
        %4283 = vmatprep.mubr.bf16.mxu0 0
        %4284 = vmatmul.mubr.bf16.gmra.mrb[0].mxu0 %v4237
        %v4285 = vpop.f32.mrb[0].mxu0
        %v4286 = vadd.f32 0.0, %v4285
        %v4287 = vpop.f32.mrb[0].mxu0
        %v4288 = vadd.f32 0.0, %v4287
        %v4289 = vpop.f32.mrb[0].mxu0
        %v4290 = vpop.f32.mrb[0].mxu0
        %4291 = vdwg.mxu0
        %4292 = vmatprep.subr.bf16.mxu0 %v4249
        %4293 = vmatpush1.bf16.msra.mxu0 %v4246
        %4294 = vmatprep.subr.bf16.mxu0 0
        %4295 = vmatpush1.bf16.msra.mxu0 0
        %4296 = vmatprep.subr.bf16.mxu0 0
        %4297 = vmatpush1.bf16.msra.mxu0 0
        %4298 = vmatprep.subr.bf16.mxu0 0
        %4299 = vmatpush1.bf16.msra.mxu0 0
        %4300 = vmatprep.subr.bf16.mxu0 0
        %4301 = vmatpush1.bf16.msra.mxu0 0
        %4302 = vmatprep.subr.bf16.mxu0 0
        %4303 = vmatpush1.bf16.msra.mxu0 0
        %4304 = vmatprep.subr.bf16.mxu0 0
        %4305 = vmatpush1.bf16.msra.mxu0 0
        %4306 = vmatprep.subr.bf16.mxu0 0
        %4307 = vmatpush1.bf16.msra.mxu0 0
        %4308 = vmatprep.subr.bf16.mxu0 0
        %4309 = vmatpush1.bf16.msra.mxu0 0
        %4310 = vmatprep.subr.bf16.mxu0 0
        %4311 = vmatpush1.bf16.msra.mxu0 0
        %4312 = vmatprep.subr.bf16.mxu0 0
        %4313 = vmatpush1.bf16.msra.mxu0 0
        %4314 = vmatprep.subr.bf16.mxu0 0
        %4315 = vmatpush1.bf16.msra.mxu0 0
        %4316 = vmatprep.subr.bf16.mxu0 0
        %4317 = vmatpush1.bf16.msra.mxu0 0
        %4318 = vmatprep.subr.bf16.mxu0 0
        %4319 = vmatpush1.bf16.msra.mxu0 0
        %4320 = vmatprep.subr.bf16.mxu0 0
        %4321 = vmatpush1.bf16.msra.mxu0 0
        %4322 = vmatprep.subr.bf16.mxu0 0
        %4323 = vmatpush1.bf16.msra.mxu0 0
        %4324 = vmatprep.mubr.bf16.mxu0 0
        %4325 = vmatmul.mubr.bf16.gmra.mrb[0].mxu0 %v4237
        %v4326 = vpop.f32.mrb[0].mxu0
        %v4327 = vadd.f32 0.0, %v4326
        %v4328 = vpop.f32.mrb[0].mxu0
        %v4329 = vadd.f32 0.0, %v4328
        %v4330 = vpop.f32.mrb[0].mxu0
        %v4331 = vpop.f32.mrb[0].mxu0
        %4332 = vdwg.mxu0
        %v4333 = vadd.f32 %v4160, %v4286
        %v4334 = vadd.f32 %v4161, %v4288
        %v4335 = vadd.f32 %v4162, %v4327
        %v4336 = vadd.f32 %v4163, %v4329
        %s4337 = scalar_lea.vmem %s1, 96
        %v4338 = vld [vmem:[%s4337] sm:$0xf]
        %vm4339 = vcmp.gt.f32.partialorder %v4338, 0.5
        %v4340 = vsel %vm4339, 1, 0
        %v4341 = vlaneseq
        %v4342 = vshrl.u32 %v4341, 7
        %v4343 = vsub.s32 0, %v4342
        %v4344 = vrot.slane %v4340, %v4343
        %v4345 = vlaneseq
        %v4346 = vshrl.u32 %v4345, 7
        %v4347 = vsub.s32 1, %v4346
        %v4348 = vrot.slane %v4340, %v4347
        %v4349 = vlaneseq
        %v4350 = vshrl.u32 %v4349, 7
        %v4351 = vsub.s32 2, %v4350
        %v4352 = vrot.slane %v4340, %v4351
        %v4353 = vlaneseq
        %v4354 = vshrl.u32 %v4353, 7
        %v4355 = vsub.s32 3, %v4354
        %v4356 = vrot.slane %v4340, %v4355
        %vm4357 = vcmp.eq.s32.totalorder %v4344, 1
        %vm4358 = vcmp.eq.s32.totalorder %v4348, 1
        %vm4359 = vcmp.eq.s32.totalorder %v4352, 1
        %vm4360 = vcmp.eq.s32.totalorder %v4356, 1
        %vm4361 = vmpackc.low %vm4358, %vm4357
        %vm4362 = vmpackc.low %vm4360, %vm4359
        %v4363 = vsel %vm4361, 65537, 0
        %v4364 = vsel %vm4362, 65537, 0
        %4365 = vrot.lane.b32.xlu0 %v4363, 71
        %v4366 = vpop.permute.xlu0 %4365
        %4367 = vrot.lane.b32.xlu0 %v4364, 71
        %v4368 = vpop.permute.xlu0 %4367
        %v4369 = vrot.slane %v4366, 4
        %v4370 = vrot.slane %v4368, 4
        %v4371 = vsel %vm614, %v4369, %v4366
        %v4372 = vsel %vm237, %v4369, %v4370
        %v4373 = vsel %vm614, %v4372, %v4368
        %vm4374 = vcmp.ne.s16.totalorder %v4371, 0
        %vm4375 = vcmp.ne.s16.totalorder %v4373, 0
        %vm4376 = vcmp.ne.s16.totalorder %v4370, 0
        %v4377 = vsel %vm4374, %v2604, 0
        %v4378 = vsel %vm4375, %v2605, 0
        %v4379 = vsel %vm4376, %v2606, 0
        %s4380 = scalar_lea.vmem %s2, 96
        %v4381 = vld [vmem:[%s4380] sm:$0xf]
        %v4385 = vunpack.c.l.b16 %v4377
        %v4386 = vunpack.c.h.b16 %v4377
        %v4387 = vunpack.c.l.b16 %v4378
        %v4388 = vunpack.c.h.b16 %v4378
        %v4389 = vunpack.c.l.b16 %v4379
        %v4390 = vpack.c.b16 %v4385, %v4385
        %v4391 = vpack.c.b16 %v4386, %v4386
        %v4392 = vpack.c.b16 %v4387, %v4387
        %v4393 = vpack.c.b16 %v4388, %v4388
        %v4394 = vpack.c.b16 %v4389, %v4389
        %4395 = vrot.lane.b32.xlu0 %v4390, 57
        %v4396 = vpop.permute.xlu0 %4395
        %4397 = vrot.lane.b32.xlu0 %v4391, 57
        %v4398 = vpop.permute.xlu0 %4397
        %4399 = vrot.lane.b32.xlu0 %v4392, 57
        %v4400 = vpop.permute.xlu0 %4399
        %4401 = vrot.lane.b32.xlu0 %v4393, 57
        %v4402 = vpop.permute.xlu0 %4401
        %4403 = vrot.lane.b32.xlu0 %v4394, 57
        %v4404 = vpop.permute.xlu0 %4403
        %v4405 = vsel %vm579, %v4396, %v4398
        %v4406 = vsel %vm579, %v4398, %v4400
        %v4407 = vsel %vm579, %v4400, %v4402
        %v4408 = vsel %vm579, %v4402, %v4404
        %v4410 = vsel %vm321, %v4381, 0
        %v4413 = vsel %vm325, %v4405, 0
        %v4416 = vsel %vm325, %v4406, 0
        %v4419 = vsel %vm325, %v4407, 0
        %v4422 = vsel %vm325, %v4408, 0
        %4424 = vmatprep.subr.bf16.mxu0 %v4416
        %4425 = vmatpush1.bf16.msra.mxu0 %v4413
        %4426 = vmatprep.subr.bf16.mxu0 0
        %4427 = vmatpush1.bf16.msra.mxu0 0
        %4428 = vmatprep.subr.bf16.mxu0 0
        %4429 = vmatpush1.bf16.msra.mxu0 0
        %4430 = vmatprep.subr.bf16.mxu0 0
        %4431 = vmatpush1.bf16.msra.mxu0 0
        %4432 = vmatprep.subr.bf16.mxu0 0
        %4433 = vmatpush1.bf16.msra.mxu0 0
        %4434 = vmatprep.subr.bf16.mxu0 0
        %4435 = vmatpush1.bf16.msra.mxu0 0
        %4436 = vmatprep.subr.bf16.mxu0 0
        %4437 = vmatpush1.bf16.msra.mxu0 0
        %4438 = vmatprep.subr.bf16.mxu0 0
        %4439 = vmatpush1.bf16.msra.mxu0 0
        %4440 = vmatprep.subr.bf16.mxu0 0
        %4441 = vmatpush1.bf16.msra.mxu0 0
        %4442 = vmatprep.subr.bf16.mxu0 0
        %4443 = vmatpush1.bf16.msra.mxu0 0
        %4444 = vmatprep.subr.bf16.mxu0 0
        %4445 = vmatpush1.bf16.msra.mxu0 0
        %4446 = vmatprep.subr.bf16.mxu0 0
        %4447 = vmatpush1.bf16.msra.mxu0 0
        %4448 = vmatprep.subr.bf16.mxu0 0
        %4449 = vmatpush1.bf16.msra.mxu0 0
        %4450 = vmatprep.subr.bf16.mxu0 0
        %4451 = vmatpush1.bf16.msra.mxu0 0
        %4452 = vmatprep.subr.bf16.mxu0 0
        %4453 = vmatpush1.bf16.msra.mxu0 0
        %4454 = vmatprep.subr.bf16.mxu0 0
        %4455 = vmatpush1.bf16.msra.mxu0 0
        %4456 = vmatprep.mubr.bf16.mxu0 0
        %4457 = vmatmul.mubr.bf16.gmra.mrb[0].mxu0 %v4410
        %v4458 = vpop.f32.mrb[0].mxu0
        %v4459 = vadd.f32 0.0, %v4458
        %v4460 = vpop.f32.mrb[0].mxu0
        %v4461 = vadd.f32 0.0, %v4460
        %v4462 = vpop.f32.mrb[0].mxu0
        %v4463 = vpop.f32.mrb[0].mxu0
        %4464 = vdwg.mxu0
        %4465 = vmatprep.subr.bf16.mxu0 %v4422
        %4466 = vmatpush1.bf16.msra.mxu0 %v4419
        %4467 = vmatprep.subr.bf16.mxu0 0
        %4468 = vmatpush1.bf16.msra.mxu0 0
        %4469 = vmatprep.subr.bf16.mxu0 0
        %4470 = vmatpush1.bf16.msra.mxu0 0
        %4471 = vmatprep.subr.bf16.mxu0 0
        %4472 = vmatpush1.bf16.msra.mxu0 0
        %4473 = vmatprep.subr.bf16.mxu0 0
        %4474 = vmatpush1.bf16.msra.mxu0 0
        %4475 = vmatprep.subr.bf16.mxu0 0
        %4476 = vmatpush1.bf16.msra.mxu0 0
        %4477 = vmatprep.subr.bf16.mxu0 0
        %4478 = vmatpush1.bf16.msra.mxu0 0
        %4479 = vmatprep.subr.bf16.mxu0 0
        %4480 = vmatpush1.bf16.msra.mxu0 0
        %4481 = vmatprep.subr.bf16.mxu0 0
        %4482 = vmatpush1.bf16.msra.mxu0 0
        %4483 = vmatprep.subr.bf16.mxu0 0
        %4484 = vmatpush1.bf16.msra.mxu0 0
        %4485 = vmatprep.subr.bf16.mxu0 0
        %4486 = vmatpush1.bf16.msra.mxu0 0
        %4487 = vmatprep.subr.bf16.mxu0 0
        %4488 = vmatpush1.bf16.msra.mxu0 0
        %4489 = vmatprep.subr.bf16.mxu0 0
        %4490 = vmatpush1.bf16.msra.mxu0 0
        %4491 = vmatprep.subr.bf16.mxu0 0
        %4492 = vmatpush1.bf16.msra.mxu0 0
        %4493 = vmatprep.subr.bf16.mxu0 0
        %4494 = vmatpush1.bf16.msra.mxu0 0
        %4495 = vmatprep.subr.bf16.mxu0 0
        %4496 = vmatpush1.bf16.msra.mxu0 0
        %4497 = vmatprep.mubr.bf16.mxu0 0
        %4498 = vmatmul.mubr.bf16.gmra.mrb[0].mxu0 %v4410
        %v4499 = vpop.f32.mrb[0].mxu0
        %v4500 = vadd.f32 0.0, %v4499
        %v4501 = vpop.f32.mrb[0].mxu0
        %v4502 = vadd.f32 0.0, %v4501
        %v4503 = vpop.f32.mrb[0].mxu0
        %v4504 = vpop.f32.mrb[0].mxu0
        %4505 = vdwg.mxu0
        %v4506 = vadd.f32 %v4333, %v4459
        %v4507 = vadd.f32 %v4334, %v4461
        %v4508 = vadd.f32 %v4335, %v4500
        %v4509 = vadd.f32 %v4336, %v4502
        %s4510 = scalar_lea.vmem %s1, 100
        %v4511 = vld [vmem:[%s4510] sm:$0xf]
        %vm4512 = vcmp.gt.f32.partialorder %v4511, 0.5
        %v4513 = vsel %vm4512, 1, 0
        %v4514 = vlaneseq
        %v4515 = vshrl.u32 %v4514, 7
        %v4516 = vsub.s32 0, %v4515
        %v4517 = vrot.slane %v4513, %v4516
        %v4518 = vlaneseq
        %v4519 = vshrl.u32 %v4518, 7
        %v4520 = vsub.s32 1, %v4519
        %v4521 = vrot.slane %v4513, %v4520
        %v4522 = vlaneseq
        %v4523 = vshrl.u32 %v4522, 7
        %v4524 = vsub.s32 2, %v4523
        %v4525 = vrot.slane %v4513, %v4524
        %v4526 = vlaneseq
        %v4527 = vshrl.u32 %v4526, 7
        %v4528 = vsub.s32 3, %v4527
        %v4529 = vrot.slane %v4513, %v4528
        %vm4530 = vcmp.eq.s32.totalorder %v4517, 1
        %vm4531 = vcmp.eq.s32.totalorder %v4521, 1
        %vm4532 = vcmp.eq.s32.totalorder %v4525, 1
        %vm4533 = vcmp.eq.s32.totalorder %v4529, 1
        %vm4534 = vmpackc.low %vm4531, %vm4530
        %vm4535 = vmpackc.low %vm4533, %vm4532
        %v4536 = vsel %vm4534, 65537, 0
        %v4537 = vsel %vm4535, 65537, 0
        %4538 = vrot.lane.b32.xlu0 %v4536, 72
        %v4539 = vpop.permute.xlu0 %4538
        %4540 = vrot.lane.b32.xlu0 %v4537, 72
        %v4541 = vpop.permute.xlu0 %4540
        %v4542 = vrot.slane %v4539, 4
        %v4543 = vrot.slane %v4541, 4
        %v4544 = vsel %vm316, %v4542, %v4539
        %v4545 = vsel %vm237, %v4542, %v4543
        %v4546 = vsel %vm316, %v4545, %v4541
        %vm4547 = vcmp.ne.s16.totalorder %v4544, 0
        %vm4548 = vcmp.ne.s16.totalorder %v4546, 0
        %vm4549 = vcmp.ne.s16.totalorder %v4543, 0
        %v4550 = vsel %vm4547, %v2604, 0
        %v4551 = vsel %vm4548, %v2605, 0
        %v4552 = vsel %vm4549, %v2606, 0
        %s4553 = scalar_lea.vmem %s2, 100
        %v4554 = vld [vmem:[%s4553] sm:$0xf]
        %v4558 = vunpack.c.l.b16 %v4550
        %v4559 = vunpack.c.h.b16 %v4550
        %v4560 = vunpack.c.l.b16 %v4551
        %v4561 = vunpack.c.h.b16 %v4551
        %v4562 = vunpack.c.l.b16 %v4552
        %v4563 = vpack.c.b16 %v4558, %v4558
        %v4564 = vpack.c.b16 %v4559, %v4559
        %v4565 = vpack.c.b16 %v4560, %v4560
        %v4566 = vpack.c.b16 %v4561, %v4561
        %v4567 = vpack.c.b16 %v4562, %v4562
        %4568 = vrot.lane.b32.xlu0 %v4563, 56
        %v4569 = vpop.permute.xlu0 %4568
        %4570 = vrot.lane.b32.xlu0 %v4564, 56
        %v4571 = vpop.permute.xlu0 %4570
        %4572 = vrot.lane.b32.xlu0 %v4565, 56
        %v4573 = vpop.permute.xlu0 %4572
        %4574 = vrot.lane.b32.xlu0 %v4566, 56
        %v4575 = vpop.permute.xlu0 %4574
        %4576 = vrot.lane.b32.xlu0 %v4567, 56
        %v4577 = vpop.permute.xlu0 %4576
        %v4578 = vsel %vm281, %v4569, %v4571
        %v4579 = vsel %vm281, %v4571, %v4573
        %v4580 = vsel %vm281, %v4573, %v4575
        %v4581 = vsel %vm281, %v4575, %v4577
        %v4583 = vsel %vm321, %v4554, 0
        %v4586 = vsel %vm325, %v4578, 0
        %v4589 = vsel %vm325, %v4579, 0
        %v4592 = vsel %vm325, %v4580, 0
        %v4595 = vsel %vm325, %v4581, 0
        %4597 = vmatprep.subr.bf16.mxu0 %v4589
        %4598 = vmatpush1.bf16.msra.mxu0 %v4586
        %4599 = vmatprep.subr.bf16.mxu0 0
        %4600 = vmatpush1.bf16.msra.mxu0 0
        %4601 = vmatprep.subr.bf16.mxu0 0
        %4602 = vmatpush1.bf16.msra.mxu0 0
        %4603 = vmatprep.subr.bf16.mxu0 0
        %4604 = vmatpush1.bf16.msra.mxu0 0
        %4605 = vmatprep.subr.bf16.mxu0 0
        %4606 = vmatpush1.bf16.msra.mxu0 0
        %4607 = vmatprep.subr.bf16.mxu0 0
        %4608 = vmatpush1.bf16.msra.mxu0 0
        %4609 = vmatprep.subr.bf16.mxu0 0
        %4610 = vmatpush1.bf16.msra.mxu0 0
        %4611 = vmatprep.subr.bf16.mxu0 0
        %4612 = vmatpush1.bf16.msra.mxu0 0
        %4613 = vmatprep.subr.bf16.mxu0 0
        %4614 = vmatpush1.bf16.msra.mxu0 0
        %4615 = vmatprep.subr.bf16.mxu0 0
        %4616 = vmatpush1.bf16.msra.mxu0 0
        %4617 = vmatprep.subr.bf16.mxu0 0
        %4618 = vmatpush1.bf16.msra.mxu0 0
        %4619 = vmatprep.subr.bf16.mxu0 0
        %4620 = vmatpush1.bf16.msra.mxu0 0
        %4621 = vmatprep.subr.bf16.mxu0 0
        %4622 = vmatpush1.bf16.msra.mxu0 0
        %4623 = vmatprep.subr.bf16.mxu0 0
        %4624 = vmatpush1.bf16.msra.mxu0 0
        %4625 = vmatprep.subr.bf16.mxu0 0
        %4626 = vmatpush1.bf16.msra.mxu0 0
        %4627 = vmatprep.subr.bf16.mxu0 0
        %4628 = vmatpush1.bf16.msra.mxu0 0
        %4629 = vmatprep.mubr.bf16.mxu0 0
        %4630 = vmatmul.mubr.bf16.gmra.mrb[0].mxu0 %v4583
        %v4631 = vpop.f32.mrb[0].mxu0
        %v4632 = vadd.f32 0.0, %v4631
        %v4633 = vpop.f32.mrb[0].mxu0
        %v4634 = vadd.f32 0.0, %v4633
        %v4635 = vpop.f32.mrb[0].mxu0
        %v4636 = vpop.f32.mrb[0].mxu0
        %4637 = vdwg.mxu0
        %4638 = vmatprep.subr.bf16.mxu0 %v4595
        %4639 = vmatpush1.bf16.msra.mxu0 %v4592
        %4640 = vmatprep.subr.bf16.mxu0 0
        %4641 = vmatpush1.bf16.msra.mxu0 0
        %4642 = vmatprep.subr.bf16.mxu0 0
        %4643 = vmatpush1.bf16.msra.mxu0 0
        %4644 = vmatprep.subr.bf16.mxu0 0
        %4645 = vmatpush1.bf16.msra.mxu0 0
        %4646 = vmatprep.subr.bf16.mxu0 0
        %4647 = vmatpush1.bf16.msra.mxu0 0
        %4648 = vmatprep.subr.bf16.mxu0 0
        %4649 = vmatpush1.bf16.msra.mxu0 0
        %4650 = vmatprep.subr.bf16.mxu0 0
        %4651 = vmatpush1.bf16.msra.mxu0 0
        %4652 = vmatprep.subr.bf16.mxu0 0
        %4653 = vmatpush1.bf16.msra.mxu0 0
        %4654 = vmatprep.subr.bf16.mxu0 0
        %4655 = vmatpush1.bf16.msra.mxu0 0
        %4656 = vmatprep.subr.bf16.mxu0 0
        %4657 = vmatpush1.bf16.msra.mxu0 0
        %4658 = vmatprep.subr.bf16.mxu0 0
        %4659 = vmatpush1.bf16.msra.mxu0 0
        %4660 = vmatprep.subr.bf16.mxu0 0
        %4661 = vmatpush1.bf16.msra.mxu0 0
        %4662 = vmatprep.subr.bf16.mxu0 0
        %4663 = vmatpush1.bf16.msra.mxu0 0
        %4664 = vmatprep.subr.bf16.mxu0 0
        %4665 = vmatpush1.bf16.msra.mxu0 0
        %4666 = vmatprep.subr.bf16.mxu0 0
        %4667 = vmatpush1.bf16.msra.mxu0 0
        %4668 = vmatprep.subr.bf16.mxu0 0
        %4669 = vmatpush1.bf16.msra.mxu0 0
        %4670 = vmatprep.mubr.bf16.mxu0 0
        %4671 = vmatmul.mubr.bf16.gmra.mrb[0].mxu0 %v4583
        %v4672 = vpop.f32.mrb[0].mxu0
        %v4673 = vadd.f32 0.0, %v4672
        %v4674 = vpop.f32.mrb[0].mxu0
        %v4675 = vadd.f32 0.0, %v4674
        %v4676 = vpop.f32.mrb[0].mxu0
        %v4677 = vpop.f32.mrb[0].mxu0
        %4678 = vdwg.mxu0
        %v4679 = vadd.f32 %v4506, %v4632
        %v4680 = vadd.f32 %v4507, %v4634
        %v4681 = vadd.f32 %v4508, %v4673
        %v4682 = vadd.f32 %v4509, %v4675
        %s4683 = scalar_lea.vmem %s1, 104
        %v4684 = vld [vmem:[%s4683] sm:$0xf]
        %vm4685 = vcmp.gt.f32.partialorder %v4684, 0.5
        %v4686 = vsel %vm4685, 1, 0
        %v4687 = vlaneseq
        %v4688 = vshrl.u32 %v4687, 7
        %v4689 = vsub.s32 0, %v4688
        %v4690 = vrot.slane %v4686, %v4689
        %v4691 = vlaneseq
        %v4692 = vshrl.u32 %v4691, 7
        %v4693 = vsub.s32 1, %v4692
        %v4694 = vrot.slane %v4686, %v4693
        %v4695 = vlaneseq
        %v4696 = vshrl.u32 %v4695, 7
        %v4697 = vsub.s32 2, %v4696
        %v4698 = vrot.slane %v4686, %v4697
        %v4699 = vlaneseq
        %v4700 = vshrl.u32 %v4699, 7
        %v4701 = vsub.s32 3, %v4700
        %v4702 = vrot.slane %v4686, %v4701
        %vm4703 = vcmp.eq.s32.totalorder %v4690, 1
        %vm4704 = vcmp.eq.s32.totalorder %v4694, 1
        %vm4705 = vcmp.eq.s32.totalorder %v4698, 1
        %vm4706 = vcmp.eq.s32.totalorder %v4702, 1
        %vm4707 = vmpackc.low %vm4704, %vm4703
        %vm4708 = vmpackc.low %vm4706, %vm4705
        %v4709 = vsel %vm4707, 65537, 0
        %v4710 = vsel %vm4708, 65537, 0
        %4711 = vrot.lane.b32.xlu0 %v4709, 73
        %v4712 = vpop.permute.xlu0 %4711
        %4713 = vrot.lane.b32.xlu0 %v4710, 73
        %v4714 = vpop.permute.xlu0 %4713
        %v4715 = vrot.slane %v4712, 4
        %v4716 = vrot.slane %v4714, 4
        %v4717 = vsel %vm443, %v4715, %v4712
        %v4718 = vsel %vm237, %v4715, %v4716
        %v4719 = vsel %vm443, %v4718, %v4714
        %vm4720 = vcmp.ne.s16.totalorder %v4717, 0
        %vm4721 = vcmp.ne.s16.totalorder %v4719, 0
        %vm4722 = vcmp.ne.s16.totalorder %v4716, 0
        %v4723 = vsel %vm4720, %v2604, 0
        %v4724 = vsel %vm4721, %v2605, 0
        %v4725 = vsel %vm4722, %v2606, 0
        %s4726 = scalar_lea.vmem %s2, 104
        %v4727 = vld [vmem:[%s4726] sm:$0xf]
        %v4731 = vunpack.c.l.b16 %v4723
        %v4732 = vunpack.c.h.b16 %v4723
        %v4733 = vunpack.c.l.b16 %v4724
        %v4734 = vunpack.c.h.b16 %v4724
        %v4735 = vunpack.c.l.b16 %v4725
        %v4736 = vpack.c.b16 %v4731, %v4731
        %v4737 = vpack.c.b16 %v4732, %v4732
        %v4738 = vpack.c.b16 %v4733, %v4733
        %v4739 = vpack.c.b16 %v4734, %v4734
        %v4740 = vpack.c.b16 %v4735, %v4735
        %4741 = vrot.lane.b32.xlu0 %v4736, 55
        %v4742 = vpop.permute.xlu0 %4741
        %4743 = vrot.lane.b32.xlu0 %v4737, 55
        %v4744 = vpop.permute.xlu0 %4743
        %4745 = vrot.lane.b32.xlu0 %v4738, 55
        %v4746 = vpop.permute.xlu0 %4745
        %4747 = vrot.lane.b32.xlu0 %v4739, 55
        %v4748 = vpop.permute.xlu0 %4747
        %4749 = vrot.lane.b32.xlu0 %v4740, 55
        %v4750 = vpop.permute.xlu0 %4749
        %v4751 = vsel %vm235, %v4742, %v4744
        %v4752 = vsel %vm235, %v4744, %v4746
        %v4753 = vsel %vm235, %v4746, %v4748
        %v4754 = vsel %vm235, %v4748, %v4750
        %v4756 = vsel %vm321, %v4727, 0
        %v4759 = vsel %vm325, %v4751, 0
        %v4762 = vsel %vm325, %v4752, 0
        %v4765 = vsel %vm325, %v4753, 0
        %v4768 = vsel %vm325, %v4754, 0
        %4770 = vmatprep.subr.bf16.mxu0 %v4762
        %4771 = vmatpush1.bf16.msra.mxu0 %v4759
        %4772 = vmatprep.subr.bf16.mxu0 0
        %4773 = vmatpush1.bf16.msra.mxu0 0
        %4774 = vmatprep.subr.bf16.mxu0 0
        %4775 = vmatpush1.bf16.msra.mxu0 0
        %4776 = vmatprep.subr.bf16.mxu0 0
        %4777 = vmatpush1.bf16.msra.mxu0 0
        %4778 = vmatprep.subr.bf16.mxu0 0
        %4779 = vmatpush1.bf16.msra.mxu0 0
        %4780 = vmatprep.subr.bf16.mxu0 0
        %4781 = vmatpush1.bf16.msra.mxu0 0
        %4782 = vmatprep.subr.bf16.mxu0 0
        %4783 = vmatpush1.bf16.msra.mxu0 0
        %4784 = vmatprep.subr.bf16.mxu0 0
        %4785 = vmatpush1.bf16.msra.mxu0 0
        %4786 = vmatprep.subr.bf16.mxu0 0
        %4787 = vmatpush1.bf16.msra.mxu0 0
        %4788 = vmatprep.subr.bf16.mxu0 0
        %4789 = vmatpush1.bf16.msra.mxu0 0
        %4790 = vmatprep.subr.bf16.mxu0 0
        %4791 = vmatpush1.bf16.msra.mxu0 0
        %4792 = vmatprep.subr.bf16.mxu0 0
        %4793 = vmatpush1.bf16.msra.mxu0 0
        %4794 = vmatprep.subr.bf16.mxu0 0
        %4795 = vmatpush1.bf16.msra.mxu0 0
        %4796 = vmatprep.subr.bf16.mxu0 0
        %4797 = vmatpush1.bf16.msra.mxu0 0
        %4798 = vmatprep.subr.bf16.mxu0 0
        %4799 = vmatpush1.bf16.msra.mxu0 0
        %4800 = vmatprep.subr.bf16.mxu0 0
        %4801 = vmatpush1.bf16.msra.mxu0 0
        %4802 = vmatprep.mubr.bf16.mxu0 0
        %4803 = vmatmul.mubr.bf16.gmra.mrb[0].mxu0 %v4756
        %v4804 = vpop.f32.mrb[0].mxu0
        %v4805 = vadd.f32 0.0, %v4804
        %v4806 = vpop.f32.mrb[0].mxu0
        %v4807 = vadd.f32 0.0, %v4806
        %v4808 = vpop.f32.mrb[0].mxu0
        %v4809 = vpop.f32.mrb[0].mxu0
        %4810 = vdwg.mxu0
        %4811 = vmatprep.subr.bf16.mxu0 %v4768
        %4812 = vmatpush1.bf16.msra.mxu0 %v4765
        %4813 = vmatprep.subr.bf16.mxu0 0
        %4814 = vmatpush1.bf16.msra.mxu0 0
        %4815 = vmatprep.subr.bf16.mxu0 0
        %4816 = vmatpush1.bf16.msra.mxu0 0
        %4817 = vmatprep.subr.bf16.mxu0 0
        %4818 = vmatpush1.bf16.msra.mxu0 0
        %4819 = vmatprep.subr.bf16.mxu0 0
        %4820 = vmatpush1.bf16.msra.mxu0 0
        %4821 = vmatprep.subr.bf16.mxu0 0
        %4822 = vmatpush1.bf16.msra.mxu0 0
        %4823 = vmatprep.subr.bf16.mxu0 0
        %4824 = vmatpush1.bf16.msra.mxu0 0
        %4825 = vmatprep.subr.bf16.mxu0 0
        %4826 = vmatpush1.bf16.msra.mxu0 0
        %4827 = vmatprep.subr.bf16.mxu0 0
        %4828 = vmatpush1.bf16.msra.mxu0 0
        %4829 = vmatprep.subr.bf16.mxu0 0
        %4830 = vmatpush1.bf16.msra.mxu0 0
        %4831 = vmatprep.subr.bf16.mxu0 0
        %4832 = vmatpush1.bf16.msra.mxu0 0
        %4833 = vmatprep.subr.bf16.mxu0 0
        %4834 = vmatpush1.bf16.msra.mxu0 0
        %4835 = vmatprep.subr.bf16.mxu0 0
        %4836 = vmatpush1.bf16.msra.mxu0 0
        %4837 = vmatprep.subr.bf16.mxu0 0
        %4838 = vmatpush1.bf16.msra.mxu0 0
        %4839 = vmatprep.subr.bf16.mxu0 0
        %4840 = vmatpush1.bf16.msra.mxu0 0
        %4841 = vmatprep.subr.bf16.mxu0 0
        %4842 = vmatpush1.bf16.msra.mxu0 0
        %4843 = vmatprep.mubr.bf16.mxu0 0
        %4844 = vmatmul.mubr.bf16.gmra.mrb[0].mxu0 %v4756
        %v4845 = vpop.f32.mrb[0].mxu0
        %v4846 = vadd.f32 0.0, %v4845
        %v4847 = vpop.f32.mrb[0].mxu0
        %v4848 = vadd.f32 0.0, %v4847
        %v4849 = vpop.f32.mrb[0].mxu0
        %v4850 = vpop.f32.mrb[0].mxu0
        %4851 = vdwg.mxu0
        %v4852 = vadd.f32 %v4679, %v4805
        %v4853 = vadd.f32 %v4680, %v4807
        %v4854 = vadd.f32 %v4681, %v4846
        %v4855 = vadd.f32 %v4682, %v4848
        %v4856 = vadd.f32 %v4852, %v4853
        %v4857 = vadd.f32 %v4856, %v4854
        %v4858 = vadd.f32 %v4857, %v4855
        %4859 = vadd.xlane.f32.xlu0 %v4858
        %v4860 = vpop.xlane.xlu0 %4859
        %v4861 = vmul.f32 %v4860, 0.001953125
        %v4862 = vsub.f32 %v4852, %v4861
        %v4863 = vsub.f32 %v4853, %v4861
        %v4864 = vsub.f32 %v4854, %v4861
        %v4865 = vsub.f32 %v4855, %v4861
        %v4866 = vmul.f32 %v4862, %v4862
        %v4867 = vmul.f32 %v4863, %v4863
        %v4868 = vmul.f32 %v4864, %v4864
        %v4869 = vmul.f32 %v4865, %v4865
        %v4870 = vadd.f32 %v4866, %v4867
        %v4871 = vadd.f32 %v4870, %v4868
        %v4872 = vadd.f32 %v4871, %v4869
        %4873 = vadd.xlane.f32.xlu0 %v4872
        %v4874 = vpop.xlane.xlu0 %4873
        %v4875 = vmul.f32 %v4874, 0.001953125
        %v4876 = vmax.f32 %v4875, 0.0
        %v4877 = vadd.f32 %v4876, 1e-05
        %v4878 = vrsqrt.pop %v4877
        %v4879 = vmul.f32 %v4862, %v4878
        %v4880 = vmul.f32 %v4863, %v4878
        %v4881 = vmul.f32 %v4864, %v4878
        %v4882 = vmul.f32 %v4865, %v4878
        %vm4883 = vcmp.gt.f32.partialorder %v4879, 0.0
        %vm4884 = vcmp.gt.f32.partialorder %v4880, 0.0
        %vm4885 = vcmp.gt.f32.partialorder %v4881, 0.0
        %vm4886 = vcmp.gt.f32.partialorder %v4882, 0.0
        %v4887 = vmul.f32 %v4879, 0.01
        %v4888 = vmul.f32 %v4880, 0.01
        %v4889 = vmul.f32 %v4881, 0.01
        %v4890 = vmul.f32 %v4882, 0.01
        %v4891 = vsel %vm4883, %v4879, %v4887
        %v4892 = vsel %vm4884, %v4880, %v4888
        %v4893 = vsel %vm4885, %v4881, %v4889
        %v4894 = vsel %vm4886, %v4882, %v4890
        %v4895 = vpack.c.bf16 %v4891, %v4891
        %v4896 = vpack.c.bf16 %v4892, %v4892
        %v4897 = vpack.c.bf16 %v4893, %v4893
        %v4898 = vpack.c.bf16 %v4894, %v4894
        %v4903 = vunpack.c.l.b16 %v4895
        %v4904 = vunpack.c.l.b16 %v4896
        %v4905 = vunpack.c.l.b16 %v4897
        %v4906 = vunpack.c.l.b16 %v4898
        %v4907 = vpack.c.b16 %v4904, %v4903
        %v4908 = vpack.c.b16 %v4906, %v4905
        %4911 = vst [vmem:[#allocation2 + $0x4] sm:$0xff] %v4907
        %4912 = vst [vmem:[#allocation2 + $0xc] sm:$0xff] %v4908
        %v4913 = vld [vmem:[#allocation2] sm:$0xff]
        %v4914 = vld [vmem:[#allocation2 + $0x8] sm:$0xff]
        %v4915 = vld [vmem:[#allocation2 + $0x10] sm:$0xf]
        %v4916 = vld [vmem:[%s1] sm:$0xf]
        %vm4917 = vcmp.gt.f32.partialorder %v4916, 0.5
        %v4918 = vsel %vm4917, 1, 0
        %v4919 = vlaneseq
        %v4920 = vshrl.u32 %v4919, 7
        %v4921 = vsub.s32 0, %v4920
        %v4922 = vrot.slane %v4918, %v4921
        %v4923 = vlaneseq
        %v4924 = vshrl.u32 %v4923, 7
        %v4925 = vsub.s32 1, %v4924
        %v4926 = vrot.slane %v4918, %v4925
        %v4927 = vlaneseq
        %v4928 = vshrl.u32 %v4927, 7
        %v4929 = vsub.s32 2, %v4928
        %v4930 = vrot.slane %v4918, %v4929
        %v4931 = vlaneseq
        %v4932 = vshrl.u32 %v4931, 7
        %v4933 = vsub.s32 3, %v4932
        %v4934 = vrot.slane %v4918, %v4933
        %vm4935 = vcmp.eq.s32.totalorder %v4922, 1
        %vm4936 = vcmp.eq.s32.totalorder %v4926, 1
        %vm4937 = vcmp.eq.s32.totalorder %v4930, 1
        %vm4938 = vcmp.eq.s32.totalorder %v4934, 1
        %vm4939 = vmpackc.low %vm4936, %vm4935
        %vm4940 = vmpackc.low %vm4938, %vm4937
        %v4941 = vsel %vm4939, 65537, 0
        %v4942 = vsel %vm4940, 65537, 0
        %4943 = vrot.lane.b32.xlu0 %v4941, 55
        %v4944 = vpop.permute.xlu0 %4943
        %4945 = vrot.lane.b32.xlu0 %v4942, 55
        %v4946 = vpop.permute.xlu0 %4945
        %v4947 = vrot.slane %v4944, 4
        %v4948 = vrot.slane %v4946, 4
        %v4949 = vsel %vm235, %v4947, %v4944
        %v4950 = vsel %vm237, %v4947, %v4948
        %v4951 = vsel %vm235, %v4950, %v4946
        %vm4952 = vcmp.ne.s16.totalorder %v4949, 0
        %vm4953 = vcmp.ne.s16.totalorder %v4951, 0
        %vm4954 = vcmp.ne.s16.totalorder %v4948, 0
        %v4955 = vsel %vm4952, %v4913, 0
        %v4956 = vsel %vm4953, %v4914, 0
        %v4957 = vsel %vm4954, %v4915, 0
        %v4958 = vld [vmem:[%s3] sm:$0xf]
        %v4959 = vld [vmem:[%s247] sm:$0xf]
        %vm4960 = vcmp.gt.f32.partialorder %v4959, 0.5
        %v4961 = vsel %vm4960, 1, 0
        %v4962 = vlaneseq
        %v4963 = vshrl.u32 %v4962, 7
        %v4964 = vsub.s32 0, %v4963
        %v4965 = vrot.slane %v4961, %v4964
        %v4966 = vlaneseq
        %v4967 = vshrl.u32 %v4966, 7
        %v4968 = vsub.s32 1, %v4967
        %v4969 = vrot.slane %v4961, %v4968
        %v4970 = vlaneseq
        %v4971 = vshrl.u32 %v4970, 7
        %v4972 = vsub.s32 2, %v4971
        %v4973 = vrot.slane %v4961, %v4972
        %v4974 = vlaneseq
        %v4975 = vshrl.u32 %v4974, 7
        %v4976 = vsub.s32 3, %v4975
        %v4977 = vrot.slane %v4961, %v4976
        %vm4978 = vcmp.eq.s32.totalorder %v4965, 1
        %vm4979 = vcmp.eq.s32.totalorder %v4969, 1
        %vm4980 = vcmp.eq.s32.totalorder %v4973, 1
        %vm4981 = vcmp.eq.s32.totalorder %v4977, 1
        %vm4982 = vmpackc.low %vm4979, %vm4978
        %vm4983 = vmpackc.low %vm4981, %vm4980
        %v4984 = vsel %vm4982, 65537, 0
        %v4985 = vsel %vm4983, 65537, 0
        %4986 = vrot.lane.b32.xlu0 %v4984, 56
        %v4987 = vpop.permute.xlu0 %4986
        %4988 = vrot.lane.b32.xlu0 %v4985, 56
        %v4989 = vpop.permute.xlu0 %4988
        %v4990 = vrot.slane %v4987, 4
        %v4991 = vrot.slane %v4989, 4
        %v4992 = vsel %vm281, %v4990, %v4987
        %v4993 = vsel %vm237, %v4990, %v4991
        %v4994 = vsel %vm281, %v4993, %v4989
        %vm4995 = vcmp.ne.s16.totalorder %v4992, 0
        %vm4996 = vcmp.ne.s16.totalorder %v4994, 0
        %vm4997 = vcmp.ne.s16.totalorder %v4991, 0
        %v4998 = vsel %vm4995, %v4913, 0
        %v4999 = vsel %vm4996, %v4914, 0
        %v5000 = vsel %vm4997, %v4915, 0
        %s5001 = scalar_lea.vmem %s3, 4
        %v5002 = vld [vmem:[%s5001] sm:$0xf]
        %v5006 = vunpack.c.l.b16 %v4998
        %v5007 = vunpack.c.h.b16 %v4998
        %v5008 = vunpack.c.l.b16 %v4999
        %v5009 = vunpack.c.h.b16 %v4999
        %v5010 = vunpack.c.l.b16 %v5000
        %v5011 = vpack.c.b16 %v5006, %v5006
        %v5012 = vpack.c.b16 %v5007, %v5007
        %v5013 = vpack.c.b16 %v5008, %v5008
        %v5014 = vpack.c.b16 %v5009, %v5009
        %v5015 = vpack.c.b16 %v5010, %v5010
        %5016 = vrot.lane.b32.xlu0 %v5011, 72
        %v5017 = vpop.permute.xlu0 %5016
        %5018 = vrot.lane.b32.xlu0 %v5012, 72
        %v5019 = vpop.permute.xlu0 %5018
        %5020 = vrot.lane.b32.xlu0 %v5013, 72
        %v5021 = vpop.permute.xlu0 %5020
        %5022 = vrot.lane.b32.xlu0 %v5014, 72
        %v5023 = vpop.permute.xlu0 %5022
        %5024 = vrot.lane.b32.xlu0 %v5015, 72
        %v5025 = vpop.permute.xlu0 %5024
        %v5026 = vsel %vm316, %v5017, %v5019
        %v5027 = vsel %vm316, %v5019, %v5021
        %v5028 = vsel %vm316, %v5021, %v5023
        %v5029 = vsel %vm316, %v5023, %v5025
        %v5031 = vsel %vm321, %v5002, 0
        %v5034 = vsel %vm325, %v5026, 0
        %v5037 = vsel %vm325, %v5027, 0
        %v5040 = vsel %vm325, %v5028, 0
        %v5043 = vsel %vm325, %v5029, 0
        %5045 = vmatprep.subr.bf16.mxu0 %v5037
        %5046 = vmatpush1.bf16.msra.mxu0 %v5034
        %5047 = vmatprep.subr.bf16.mxu0 0
        %5048 = vmatpush1.bf16.msra.mxu0 0
        %5049 = vmatprep.subr.bf16.mxu0 0
        %5050 = vmatpush1.bf16.msra.mxu0 0
        %5051 = vmatprep.subr.bf16.mxu0 0
        %5052 = vmatpush1.bf16.msra.mxu0 0
        %5053 = vmatprep.subr.bf16.mxu0 0
        %5054 = vmatpush1.bf16.msra.mxu0 0
        %5055 = vmatprep.subr.bf16.mxu0 0
        %5056 = vmatpush1.bf16.msra.mxu0 0
        %5057 = vmatprep.subr.bf16.mxu0 0
        %5058 = vmatpush1.bf16.msra.mxu0 0
        %5059 = vmatprep.subr.bf16.mxu0 0
        %5060 = vmatpush1.bf16.msra.mxu0 0
        %5061 = vmatprep.subr.bf16.mxu0 0
        %5062 = vmatpush1.bf16.msra.mxu0 0
        %5063 = vmatprep.subr.bf16.mxu0 0
        %5064 = vmatpush1.bf16.msra.mxu0 0
        %5065 = vmatprep.subr.bf16.mxu0 0
        %5066 = vmatpush1.bf16.msra.mxu0 0
        %5067 = vmatprep.subr.bf16.mxu0 0
        %5068 = vmatpush1.bf16.msra.mxu0 0
        %5069 = vmatprep.subr.bf16.mxu0 0
        %5070 = vmatpush1.bf16.msra.mxu0 0
        %5071 = vmatprep.subr.bf16.mxu0 0
        %5072 = vmatpush1.bf16.msra.mxu0 0
        %5073 = vmatprep.subr.bf16.mxu0 0
        %5074 = vmatpush1.bf16.msra.mxu0 0
        %5075 = vmatprep.subr.bf16.mxu0 0
        %5076 = vmatpush1.bf16.msra.mxu0 0
        %5077 = vmatprep.mubr.bf16.mxu0 0
        %5078 = vmatmul.mubr.bf16.gmra.mrb[0].mxu0 %v5031
        %v5079 = vpop.f32.mrb[0].mxu0
        %v5080 = vadd.f32 0.0, %v5079
        %v5081 = vpop.f32.mrb[0].mxu0
        %v5082 = vadd.f32 0.0, %v5081
        %v5083 = vpop.f32.mrb[0].mxu0
        %v5084 = vpop.f32.mrb[0].mxu0
        %5085 = vdwg.mxu0
        %5086 = vmatprep.subr.bf16.mxu0 %v5043
        %5087 = vmatpush1.bf16.msra.mxu0 %v5040
        %5088 = vmatprep.subr.bf16.mxu0 0
        %5089 = vmatpush1.bf16.msra.mxu0 0
        %5090 = vmatprep.subr.bf16.mxu0 0
        %5091 = vmatpush1.bf16.msra.mxu0 0
        %5092 = vmatprep.subr.bf16.mxu0 0
        %5093 = vmatpush1.bf16.msra.mxu0 0
        %5094 = vmatprep.subr.bf16.mxu0 0
        %5095 = vmatpush1.bf16.msra.mxu0 0
        %5096 = vmatprep.subr.bf16.mxu0 0
        %5097 = vmatpush1.bf16.msra.mxu0 0
        %5098 = vmatprep.subr.bf16.mxu0 0
        %5099 = vmatpush1.bf16.msra.mxu0 0
        %5100 = vmatprep.subr.bf16.mxu0 0
        %5101 = vmatpush1.bf16.msra.mxu0 0
        %5102 = vmatprep.subr.bf16.mxu0 0
        %5103 = vmatpush1.bf16.msra.mxu0 0
        %5104 = vmatprep.subr.bf16.mxu0 0
        %5105 = vmatpush1.bf16.msra.mxu0 0
        %5106 = vmatprep.subr.bf16.mxu0 0
        %5107 = vmatpush1.bf16.msra.mxu0 0
        %5108 = vmatprep.subr.bf16.mxu0 0
        %5109 = vmatpush1.bf16.msra.mxu0 0
        %5110 = vmatprep.subr.bf16.mxu0 0
        %5111 = vmatpush1.bf16.msra.mxu0 0
        %5112 = vmatprep.subr.bf16.mxu0 0
        %5113 = vmatpush1.bf16.msra.mxu0 0
        %5114 = vmatprep.subr.bf16.mxu0 0
        %5115 = vmatpush1.bf16.msra.mxu0 0
        %5116 = vmatprep.subr.bf16.mxu0 0
        %5117 = vmatpush1.bf16.msra.mxu0 0
        %5118 = vmatprep.mubr.bf16.mxu0 0
        %5119 = vmatmul.mubr.bf16.gmra.mrb[0].mxu0 %v5031
        %v5120 = vpop.f32.mrb[0].mxu0
        %v5121 = vadd.f32 0.0, %v5120
        %v5122 = vpop.f32.mrb[0].mxu0
        %v5123 = vadd.f32 0.0, %v5122
        %v5124 = vpop.f32.mrb[0].mxu0
        %v5125 = vpop.f32.mrb[0].mxu0
        %5126 = vdwg.mxu0
        %v5130 = vunpack.c.l.b16 %v4955
        %v5131 = vunpack.c.h.b16 %v4955
        %v5132 = vunpack.c.l.b16 %v4956
        %v5133 = vunpack.c.h.b16 %v4956
        %v5134 = vunpack.c.l.b16 %v4957
        %v5135 = vpack.c.b16 %v5130, %v5130
        %v5136 = vpack.c.b16 %v5131, %v5131
        %v5137 = vpack.c.b16 %v5132, %v5132
        %v5138 = vpack.c.b16 %v5133, %v5133
        %v5139 = vpack.c.b16 %v5134, %v5134
        %5140 = vrot.lane.b32.xlu0 %v5135, 73
        %v5141 = vpop.permute.xlu0 %5140
        %5142 = vrot.lane.b32.xlu0 %v5136, 73
        %v5143 = vpop.permute.xlu0 %5142
        %5144 = vrot.lane.b32.xlu0 %v5137, 73
        %v5145 = vpop.permute.xlu0 %5144
        %5146 = vrot.lane.b32.xlu0 %v5138, 73
        %v5147 = vpop.permute.xlu0 %5146
        %5148 = vrot.lane.b32.xlu0 %v5139, 73
        %v5149 = vpop.permute.xlu0 %5148
        %v5150 = vsel %vm443, %v5141, %v5143
        %v5151 = vsel %vm443, %v5143, %v5145
        %v5152 = vsel %vm443, %v5145, %v5147
        %v5153 = vsel %vm443, %v5147, %v5149
        %v5155 = vsel %vm321, %v4958, 0
        %v5158 = vsel %vm325, %v5150, 0
        %v5161 = vsel %vm325, %v5151, 0
        %v5164 = vsel %vm325, %v5152, 0
        %v5167 = vsel %vm325, %v5153, 0
        %5169 = vmatprep.subr.bf16.mxu0 %v5161
        %5170 = vmatpush1.bf16.msra.mxu0 %v5158
        %5171 = vmatprep.subr.bf16.mxu0 0
        %5172 = vmatpush1.bf16.msra.mxu0 0
        %5173 = vmatprep.subr.bf16.mxu0 0
        %5174 = vmatpush1.bf16.msra.mxu0 0
        %5175 = vmatprep.subr.bf16.mxu0 0
        %5176 = vmatpush1.bf16.msra.mxu0 0
        %5177 = vmatprep.subr.bf16.mxu0 0
        %5178 = vmatpush1.bf16.msra.mxu0 0
        %5179 = vmatprep.subr.bf16.mxu0 0
        %5180 = vmatpush1.bf16.msra.mxu0 0
        %5181 = vmatprep.subr.bf16.mxu0 0
        %5182 = vmatpush1.bf16.msra.mxu0 0
        %5183 = vmatprep.subr.bf16.mxu0 0
        %5184 = vmatpush1.bf16.msra.mxu0 0
        %5185 = vmatprep.subr.bf16.mxu0 0
        %5186 = vmatpush1.bf16.msra.mxu0 0
        %5187 = vmatprep.subr.bf16.mxu0 0
        %5188 = vmatpush1.bf16.msra.mxu0 0
        %5189 = vmatprep.subr.bf16.mxu0 0
        %5190 = vmatpush1.bf16.msra.mxu0 0
        %5191 = vmatprep.subr.bf16.mxu0 0
        %5192 = vmatpush1.bf16.msra.mxu0 0
        %5193 = vmatprep.subr.bf16.mxu0 0
        %5194 = vmatpush1.bf16.msra.mxu0 0
        %5195 = vmatprep.subr.bf16.mxu0 0
        %5196 = vmatpush1.bf16.msra.mxu0 0
        %5197 = vmatprep.subr.bf16.mxu0 0
        %5198 = vmatpush1.bf16.msra.mxu0 0
        %5199 = vmatprep.subr.bf16.mxu0 0
        %5200 = vmatpush1.bf16.msra.mxu0 0
        %5201 = vmatprep.mubr.bf16.mxu0 0
        %5202 = vmatmul.mubr.bf16.gmra.mrb[0].mxu0 %v5155
        %v5203 = vpop.f32.mrb[0].mxu0
        %v5204 = vadd.f32 %v5080, %v5203
        %v5205 = vpop.f32.mrb[0].mxu0
        %v5206 = vadd.f32 %v5082, %v5205
        %v5207 = vpop.f32.mrb[0].mxu0
        %v5208 = vpop.f32.mrb[0].mxu0
        %5209 = vdwg.mxu0
        %5210 = vmatprep.subr.bf16.mxu0 %v5167
        %5211 = vmatpush1.bf16.msra.mxu0 %v5164
        %5212 = vmatprep.subr.bf16.mxu0 0
        %5213 = vmatpush1.bf16.msra.mxu0 0
        %5214 = vmatprep.subr.bf16.mxu0 0
        %5215 = vmatpush1.bf16.msra.mxu0 0
        %5216 = vmatprep.subr.bf16.mxu0 0
        %5217 = vmatpush1.bf16.msra.mxu0 0
        %5218 = vmatprep.subr.bf16.mxu0 0
        %5219 = vmatpush1.bf16.msra.mxu0 0
        %5220 = vmatprep.subr.bf16.mxu0 0
        %5221 = vmatpush1.bf16.msra.mxu0 0
        %5222 = vmatprep.subr.bf16.mxu0 0
        %5223 = vmatpush1.bf16.msra.mxu0 0
        %5224 = vmatprep.subr.bf16.mxu0 0
        %5225 = vmatpush1.bf16.msra.mxu0 0
        %5226 = vmatprep.subr.bf16.mxu0 0
        %5227 = vmatpush1.bf16.msra.mxu0 0
        %5228 = vmatprep.subr.bf16.mxu0 0
        %5229 = vmatpush1.bf16.msra.mxu0 0
        %5230 = vmatprep.subr.bf16.mxu0 0
        %5231 = vmatpush1.bf16.msra.mxu0 0
        %5232 = vmatprep.subr.bf16.mxu0 0
        %5233 = vmatpush1.bf16.msra.mxu0 0
        %5234 = vmatprep.subr.bf16.mxu0 0
        %5235 = vmatpush1.bf16.msra.mxu0 0
        %5236 = vmatprep.subr.bf16.mxu0 0
        %5237 = vmatpush1.bf16.msra.mxu0 0
        %5238 = vmatprep.subr.bf16.mxu0 0
        %5239 = vmatpush1.bf16.msra.mxu0 0
        %5240 = vmatprep.subr.bf16.mxu0 0
        %5241 = vmatpush1.bf16.msra.mxu0 0
        %5242 = vmatprep.mubr.bf16.mxu0 0
        %5243 = vmatmul.mubr.bf16.gmra.mrb[0].mxu0 %v5155
        %v5244 = vpop.f32.mrb[0].mxu0
        %v5245 = vadd.f32 %v5121, %v5244
        %v5246 = vpop.f32.mrb[0].mxu0
        %v5247 = vadd.f32 %v5123, %v5246
        %v5248 = vpop.f32.mrb[0].mxu0
        %v5249 = vpop.f32.mrb[0].mxu0
        %5250 = vdwg.mxu0
        %v5251 = vld [vmem:[%s545] sm:$0xf]
        %vm5252 = vcmp.gt.f32.partialorder %v5251, 0.5
        %v5253 = vsel %vm5252, 1, 0
        %v5254 = vlaneseq
        %v5255 = vshrl.u32 %v5254, 7
        %v5256 = vsub.s32 0, %v5255
        %v5257 = vrot.slane %v5253, %v5256
        %v5258 = vlaneseq
        %v5259 = vshrl.u32 %v5258, 7
        %v5260 = vsub.s32 1, %v5259
        %v5261 = vrot.slane %v5253, %v5260
        %v5262 = vlaneseq
        %v5263 = vshrl.u32 %v5262, 7
        %v5264 = vsub.s32 2, %v5263
        %v5265 = vrot.slane %v5253, %v5264
        %v5266 = vlaneseq
        %v5267 = vshrl.u32 %v5266, 7
        %v5268 = vsub.s32 3, %v5267
        %v5269 = vrot.slane %v5253, %v5268
        %vm5270 = vcmp.eq.s32.totalorder %v5257, 1
        %vm5271 = vcmp.eq.s32.totalorder %v5261, 1
        %vm5272 = vcmp.eq.s32.totalorder %v5265, 1
        %vm5273 = vcmp.eq.s32.totalorder %v5269, 1
        %vm5274 = vmpackc.low %vm5271, %vm5270
        %vm5275 = vmpackc.low %vm5273, %vm5272
        %v5276 = vsel %vm5274, 65537, 0
        %v5277 = vsel %vm5275, 65537, 0
        %5278 = vrot.lane.b32.xlu0 %v5276, 57
        %v5279 = vpop.permute.xlu0 %5278
        %5280 = vrot.lane.b32.xlu0 %v5277, 57
        %v5281 = vpop.permute.xlu0 %5280
        %v5282 = vrot.slane %v5279, 4
        %v5283 = vrot.slane %v5281, 4
        %v5284 = vsel %vm579, %v5282, %v5279
        %v5285 = vsel %vm237, %v5282, %v5283
        %v5286 = vsel %vm579, %v5285, %v5281
        %vm5287 = vcmp.ne.s16.totalorder %v5284, 0
        %vm5288 = vcmp.ne.s16.totalorder %v5286, 0
        %vm5289 = vcmp.ne.s16.totalorder %v5283, 0
        %v5290 = vsel %vm5287, %v4913, 0
        %v5291 = vsel %vm5288, %v4914, 0
        %v5292 = vsel %vm5289, %v4915, 0
        %s5293 = scalar_lea.vmem %s3, 8
        %v5294 = vld [vmem:[%s5293] sm:$0xf]
        %v5298 = vunpack.c.l.b16 %v5290
        %v5299 = vunpack.c.h.b16 %v5290
        %v5300 = vunpack.c.l.b16 %v5291
        %v5301 = vunpack.c.h.b16 %v5291
        %v5302 = vunpack.c.l.b16 %v5292
        %v5303 = vpack.c.b16 %v5298, %v5298
        %v5304 = vpack.c.b16 %v5299, %v5299
        %v5305 = vpack.c.b16 %v5300, %v5300
        %v5306 = vpack.c.b16 %v5301, %v5301
        %v5307 = vpack.c.b16 %v5302, %v5302
        %5308 = vrot.lane.b32.xlu0 %v5303, 71
        %v5309 = vpop.permute.xlu0 %5308
        %5310 = vrot.lane.b32.xlu0 %v5304, 71
        %v5311 = vpop.permute.xlu0 %5310
        %5312 = vrot.lane.b32.xlu0 %v5305, 71
        %v5313 = vpop.permute.xlu0 %5312
        %5314 = vrot.lane.b32.xlu0 %v5306, 71
        %v5315 = vpop.permute.xlu0 %5314
        %5316 = vrot.lane.b32.xlu0 %v5307, 71
        %v5317 = vpop.permute.xlu0 %5316
        %v5318 = vsel %vm614, %v5309, %v5311
        %v5319 = vsel %vm614, %v5311, %v5313
        %v5320 = vsel %vm614, %v5313, %v5315
        %v5321 = vsel %vm614, %v5315, %v5317
        %v5323 = vsel %vm321, %v5294, 0
        %v5326 = vsel %vm325, %v5318, 0
        %v5329 = vsel %vm325, %v5319, 0
        %v5332 = vsel %vm325, %v5320, 0
        %v5335 = vsel %vm325, %v5321, 0
        %5337 = vmatprep.subr.bf16.mxu0 %v5329
        %5338 = vmatpush1.bf16.msra.mxu0 %v5326
        %5339 = vmatprep.subr.bf16.mxu0 0
        %5340 = vmatpush1.bf16.msra.mxu0 0
        %5341 = vmatprep.subr.bf16.mxu0 0
        %5342 = vmatpush1.bf16.msra.mxu0 0
        %5343 = vmatprep.subr.bf16.mxu0 0
        %5344 = vmatpush1.bf16.msra.mxu0 0
        %5345 = vmatprep.subr.bf16.mxu0 0
        %5346 = vmatpush1.bf16.msra.mxu0 0
        %5347 = vmatprep.subr.bf16.mxu0 0
        %5348 = vmatpush1.bf16.msra.mxu0 0
        %5349 = vmatprep.subr.bf16.mxu0 0
        %5350 = vmatpush1.bf16.msra.mxu0 0
        %5351 = vmatprep.subr.bf16.mxu0 0
        %5352 = vmatpush1.bf16.msra.mxu0 0
        %5353 = vmatprep.subr.bf16.mxu0 0
        %5354 = vmatpush1.bf16.msra.mxu0 0
        %5355 = vmatprep.subr.bf16.mxu0 0
        %5356 = vmatpush1.bf16.msra.mxu0 0
        %5357 = vmatprep.subr.bf16.mxu0 0
        %5358 = vmatpush1.bf16.msra.mxu0 0
        %5359 = vmatprep.subr.bf16.mxu0 0
        %5360 = vmatpush1.bf16.msra.mxu0 0
        %5361 = vmatprep.subr.bf16.mxu0 0
        %5362 = vmatpush1.bf16.msra.mxu0 0
        %5363 = vmatprep.subr.bf16.mxu0 0
        %5364 = vmatpush1.bf16.msra.mxu0 0
        %5365 = vmatprep.subr.bf16.mxu0 0
        %5366 = vmatpush1.bf16.msra.mxu0 0
        %5367 = vmatprep.subr.bf16.mxu0 0
        %5368 = vmatpush1.bf16.msra.mxu0 0
        %5369 = vmatprep.mubr.bf16.mxu0 0
        %5370 = vmatmul.mubr.bf16.gmra.mrb[0].mxu0 %v5323
        %v5371 = vpop.f32.mrb[0].mxu0
        %v5372 = vadd.f32 0.0, %v5371
        %v5373 = vpop.f32.mrb[0].mxu0
        %v5374 = vadd.f32 0.0, %v5373
        %v5375 = vpop.f32.mrb[0].mxu0
        %v5376 = vpop.f32.mrb[0].mxu0
        %5377 = vdwg.mxu0
        %5378 = vmatprep.subr.bf16.mxu0 %v5335
        %5379 = vmatpush1.bf16.msra.mxu0 %v5332
        %5380 = vmatprep.subr.bf16.mxu0 0
        %5381 = vmatpush1.bf16.msra.mxu0 0
        %5382 = vmatprep.subr.bf16.mxu0 0
        %5383 = vmatpush1.bf16.msra.mxu0 0
        %5384 = vmatprep.subr.bf16.mxu0 0
        %5385 = vmatpush1.bf16.msra.mxu0 0
        %5386 = vmatprep.subr.bf16.mxu0 0
        %5387 = vmatpush1.bf16.msra.mxu0 0
        %5388 = vmatprep.subr.bf16.mxu0 0
        %5389 = vmatpush1.bf16.msra.mxu0 0
        %5390 = vmatprep.subr.bf16.mxu0 0
        %5391 = vmatpush1.bf16.msra.mxu0 0
        %5392 = vmatprep.subr.bf16.mxu0 0
        %5393 = vmatpush1.bf16.msra.mxu0 0
        %5394 = vmatprep.subr.bf16.mxu0 0
        %5395 = vmatpush1.bf16.msra.mxu0 0
        %5396 = vmatprep.subr.bf16.mxu0 0
        %5397 = vmatpush1.bf16.msra.mxu0 0
        %5398 = vmatprep.subr.bf16.mxu0 0
        %5399 = vmatpush1.bf16.msra.mxu0 0
        %5400 = vmatprep.subr.bf16.mxu0 0
        %5401 = vmatpush1.bf16.msra.mxu0 0
        %5402 = vmatprep.subr.bf16.mxu0 0
        %5403 = vmatpush1.bf16.msra.mxu0 0
        %5404 = vmatprep.subr.bf16.mxu0 0
        %5405 = vmatpush1.bf16.msra.mxu0 0
        %5406 = vmatprep.subr.bf16.mxu0 0
        %5407 = vmatpush1.bf16.msra.mxu0 0
        %5408 = vmatprep.subr.bf16.mxu0 0
        %5409 = vmatpush1.bf16.msra.mxu0 0
        %5410 = vmatprep.mubr.bf16.mxu0 0
        %5411 = vmatmul.mubr.bf16.gmra.mrb[0].mxu0 %v5323
        %v5412 = vpop.f32.mrb[0].mxu0
        %v5413 = vadd.f32 0.0, %v5412
        %v5414 = vpop.f32.mrb[0].mxu0
        %v5415 = vadd.f32 0.0, %v5414
        %v5416 = vpop.f32.mrb[0].mxu0
        %v5417 = vpop.f32.mrb[0].mxu0
        %5418 = vdwg.mxu0
        %v5419 = vadd.f32 %v5204, %v5372
        %v5420 = vadd.f32 %v5206, %v5374
        %v5421 = vadd.f32 %v5245, %v5413
        %v5422 = vadd.f32 %v5247, %v5415
        %v5423 = vld [vmem:[%s720] sm:$0xf]
        %vm5424 = vcmp.gt.f32.partialorder %v5423, 0.5
        %v5425 = vsel %vm5424, 1, 0
        %v5426 = vlaneseq
        %v5427 = vshrl.u32 %v5426, 7
        %v5428 = vsub.s32 0, %v5427
        %v5429 = vrot.slane %v5425, %v5428
        %v5430 = vlaneseq
        %v5431 = vshrl.u32 %v5430, 7
        %v5432 = vsub.s32 1, %v5431
        %v5433 = vrot.slane %v5425, %v5432
        %v5434 = vlaneseq
        %v5435 = vshrl.u32 %v5434, 7
        %v5436 = vsub.s32 2, %v5435
        %v5437 = vrot.slane %v5425, %v5436
        %v5438 = vlaneseq
        %v5439 = vshrl.u32 %v5438, 7
        %v5440 = vsub.s32 3, %v5439
        %v5441 = vrot.slane %v5425, %v5440
        %vm5442 = vcmp.eq.s32.totalorder %v5429, 1
        %vm5443 = vcmp.eq.s32.totalorder %v5433, 1
        %vm5444 = vcmp.eq.s32.totalorder %v5437, 1
        %vm5445 = vcmp.eq.s32.totalorder %v5441, 1
        %vm5446 = vmpackc.low %vm5443, %vm5442
        %vm5447 = vmpackc.low %vm5445, %vm5444
        %v5448 = vsel %vm5446, 65537, 0
        %v5449 = vsel %vm5447, 65537, 0
        %5450 = vrot.lane.b32.xlu0 %v5448, 63
        %v5451 = vpop.permute.xlu0 %5450
        %5452 = vrot.lane.b32.xlu0 %v5449, 63
        %v5453 = vpop.permute.xlu0 %5452
        %v5454 = vrot.slane %v5451, 4
        %v5455 = vrot.slane %v5453, 4
        %v5456 = vsel %vm754, %v5454, %v5451
        %v5457 = vsel %vm237, %v5454, %v5455
        %v5458 = vsel %vm754, %v5457, %v5453
        %vm5459 = vcmp.ne.s16.totalorder %v5456, 0
        %vm5460 = vcmp.ne.s16.totalorder %v5458, 0
        %vm5461 = vcmp.ne.s16.totalorder %v5455, 0
        %v5462 = vsel %vm5459, %v4913, 0
        %v5463 = vsel %vm5460, %v4914, 0
        %v5464 = vsel %vm5461, %v4915, 0
        %s5465 = scalar_lea.vmem %s3, 12
        %v5466 = vld [vmem:[%s5465] sm:$0xf]
        %v5470 = vunpack.c.l.b16 %v5462
        %v5471 = vunpack.c.h.b16 %v5462
        %v5472 = vunpack.c.l.b16 %v5463
        %v5473 = vunpack.c.h.b16 %v5463
        %v5474 = vunpack.c.l.b16 %v5464
        %v5475 = vpack.c.b16 %v5470, %v5470
        %v5476 = vpack.c.b16 %v5471, %v5471
        %v5477 = vpack.c.b16 %v5472, %v5472
        %v5478 = vpack.c.b16 %v5473, %v5473
        %v5479 = vpack.c.b16 %v5474, %v5474
        %5480 = vrot.lane.b32.xlu0 %v5475, 65
        %v5481 = vpop.permute.xlu0 %5480
        %5482 = vrot.lane.b32.xlu0 %v5476, 65
        %v5483 = vpop.permute.xlu0 %5482
        %5484 = vrot.lane.b32.xlu0 %v5477, 65
        %v5485 = vpop.permute.xlu0 %5484
        %5486 = vrot.lane.b32.xlu0 %v5478, 65
        %v5487 = vpop.permute.xlu0 %5486
        %5488 = vrot.lane.b32.xlu0 %v5479, 65
        %v5489 = vpop.permute.xlu0 %5488
        %v5490 = vsel %vm789, %v5481, %v5483
        %v5491 = vsel %vm789, %v5483, %v5485
        %v5492 = vsel %vm789, %v5485, %v5487
        %v5493 = vsel %vm789, %v5487, %v5489
        %v5495 = vsel %vm321, %v5466, 0
        %v5498 = vsel %vm325, %v5490, 0
        %v5501 = vsel %vm325, %v5491, 0
        %v5504 = vsel %vm325, %v5492, 0
        %v5507 = vsel %vm325, %v5493, 0
        %5509 = vmatprep.subr.bf16.mxu0 %v5501
        %5510 = vmatpush1.bf16.msra.mxu0 %v5498
        %5511 = vmatprep.subr.bf16.mxu0 0
        %5512 = vmatpush1.bf16.msra.mxu0 0
        %5513 = vmatprep.subr.bf16.mxu0 0
        %5514 = vmatpush1.bf16.msra.mxu0 0
        %5515 = vmatprep.subr.bf16.mxu0 0
        %5516 = vmatpush1.bf16.msra.mxu0 0
        %5517 = vmatprep.subr.bf16.mxu0 0
        %5518 = vmatpush1.bf16.msra.mxu0 0
        %5519 = vmatprep.subr.bf16.mxu0 0
        %5520 = vmatpush1.bf16.msra.mxu0 0
        %5521 = vmatprep.subr.bf16.mxu0 0
        %5522 = vmatpush1.bf16.msra.mxu0 0
        %5523 = vmatprep.subr.bf16.mxu0 0
        %5524 = vmatpush1.bf16.msra.mxu0 0
        %5525 = vmatprep.subr.bf16.mxu0 0
        %5526 = vmatpush1.bf16.msra.mxu0 0
        %5527 = vmatprep.subr.bf16.mxu0 0
        %5528 = vmatpush1.bf16.msra.mxu0 0
        %5529 = vmatprep.subr.bf16.mxu0 0
        %5530 = vmatpush1.bf16.msra.mxu0 0
        %5531 = vmatprep.subr.bf16.mxu0 0
        %5532 = vmatpush1.bf16.msra.mxu0 0
        %5533 = vmatprep.subr.bf16.mxu0 0
        %5534 = vmatpush1.bf16.msra.mxu0 0
        %5535 = vmatprep.subr.bf16.mxu0 0
        %5536 = vmatpush1.bf16.msra.mxu0 0
        %5537 = vmatprep.subr.bf16.mxu0 0
        %5538 = vmatpush1.bf16.msra.mxu0 0
        %5539 = vmatprep.subr.bf16.mxu0 0
        %5540 = vmatpush1.bf16.msra.mxu0 0
        %5541 = vmatprep.mubr.bf16.mxu0 0
        %5542 = vmatmul.mubr.bf16.gmra.mrb[0].mxu0 %v5495
        %v5543 = vpop.f32.mrb[0].mxu0
        %v5544 = vadd.f32 0.0, %v5543
        %v5545 = vpop.f32.mrb[0].mxu0
        %v5546 = vadd.f32 0.0, %v5545
        %v5547 = vpop.f32.mrb[0].mxu0
        %v5548 = vpop.f32.mrb[0].mxu0
        %5549 = vdwg.mxu0
        %5550 = vmatprep.subr.bf16.mxu0 %v5507
        %5551 = vmatpush1.bf16.msra.mxu0 %v5504
        %5552 = vmatprep.subr.bf16.mxu0 0
        %5553 = vmatpush1.bf16.msra.mxu0 0
        %5554 = vmatprep.subr.bf16.mxu0 0
        %5555 = vmatpush1.bf16.msra.mxu0 0
        %5556 = vmatprep.subr.bf16.mxu0 0
        %5557 = vmatpush1.bf16.msra.mxu0 0
        %5558 = vmatprep.subr.bf16.mxu0 0
        %5559 = vmatpush1.bf16.msra.mxu0 0
        %5560 = vmatprep.subr.bf16.mxu0 0
        %5561 = vmatpush1.bf16.msra.mxu0 0
        %5562 = vmatprep.subr.bf16.mxu0 0
        %5563 = vmatpush1.bf16.msra.mxu0 0
        %5564 = vmatprep.subr.bf16.mxu0 0
        %5565 = vmatpush1.bf16.msra.mxu0 0
        %5566 = vmatprep.subr.bf16.mxu0 0
        %5567 = vmatpush1.bf16.msra.mxu0 0
        %5568 = vmatprep.subr.bf16.mxu0 0
        %5569 = vmatpush1.bf16.msra.mxu0 0
        %5570 = vmatprep.subr.bf16.mxu0 0
        %5571 = vmatpush1.bf16.msra.mxu0 0
        %5572 = vmatprep.subr.bf16.mxu0 0
        %5573 = vmatpush1.bf16.msra.mxu0 0
        %5574 = vmatprep.subr.bf16.mxu0 0
        %5575 = vmatpush1.bf16.msra.mxu0 0
        %5576 = vmatprep.subr.bf16.mxu0 0
        %5577 = vmatpush1.bf16.msra.mxu0 0
        %5578 = vmatprep.subr.bf16.mxu0 0
        %5579 = vmatpush1.bf16.msra.mxu0 0
        %5580 = vmatprep.subr.bf16.mxu0 0
        %5581 = vmatpush1.bf16.msra.mxu0 0
        %5582 = vmatprep.mubr.bf16.mxu0 0
        %5583 = vmatmul.mubr.bf16.gmra.mrb[0].mxu0 %v5495
        %v5584 = vpop.f32.mrb[0].mxu0
        %v5585 = vadd.f32 0.0, %v5584
        %v5586 = vpop.f32.mrb[0].mxu0
        %v5587 = vadd.f32 0.0, %v5586
        %v5588 = vpop.f32.mrb[0].mxu0
        %v5589 = vpop.f32.mrb[0].mxu0
        %5590 = vdwg.mxu0
        %v5591 = vadd.f32 %v5419, %v5544
        %v5592 = vadd.f32 %v5420, %v5546
        %v5593 = vadd.f32 %v5421, %v5585
        %v5594 = vadd.f32 %v5422, %v5587
        %v5595 = vld [vmem:[%s895] sm:$0xf]
        %vm5596 = vcmp.gt.f32.partialorder %v5595, 0.5
        %v5597 = vsel %vm5596, 1, 0
        %v5598 = vlaneseq
        %v5599 = vshrl.u32 %v5598, 7
        %v5600 = vsub.s32 0, %v5599
        %v5601 = vrot.slane %v5597, %v5600
        %v5602 = vlaneseq
        %v5603 = vshrl.u32 %v5602, 7
        %v5604 = vsub.s32 1, %v5603
        %v5605 = vrot.slane %v5597, %v5604
        %v5606 = vlaneseq
        %v5607 = vshrl.u32 %v5606, 7
        %v5608 = vsub.s32 2, %v5607
        %v5609 = vrot.slane %v5597, %v5608
        %v5610 = vlaneseq
        %v5611 = vshrl.u32 %v5610, 7
        %v5612 = vsub.s32 3, %v5611
        %v5613 = vrot.slane %v5597, %v5612
        %vm5614 = vcmp.eq.s32.totalorder %v5601, 1
        %vm5615 = vcmp.eq.s32.totalorder %v5605, 1
        %vm5616 = vcmp.eq.s32.totalorder %v5609, 1
        %vm5617 = vcmp.eq.s32.totalorder %v5613, 1
        %vm5618 = vmpackc.low %vm5615, %vm5614
        %vm5619 = vmpackc.low %vm5617, %vm5616
        %v5620 = vsel %vm5618, 65537, 0
        %v5621 = vsel %vm5619, 65537, 0
        %5622 = vrot.lane.b32.xlu0 %v5620, 64
        %v5623 = vpop.permute.xlu0 %5622
        %5624 = vrot.lane.b32.xlu0 %v5621, 64
        %v5625 = vpop.permute.xlu0 %5624
        %v5626 = vrot.slane %v5623, 4
        %v5627 = vrot.slane %v5625, 4
        %v5628 = vsel %vm929, %v5626, %v5623
        %v5629 = vsel %vm237, %v5626, %v5627
        %v5630 = vsel %vm929, %v5629, %v5625
        %vm5631 = vcmp.ne.s16.totalorder %v5628, 0
        %vm5632 = vcmp.ne.s16.totalorder %v5630, 0
        %vm5633 = vcmp.ne.s16.totalorder %v5627, 0
        %v5634 = vsel %vm5631, %v4913, 0
        %v5635 = vsel %vm5632, %v4914, 0
        %v5636 = vsel %vm5633, %v4915, 0
        %s5637 = scalar_lea.vmem %s3, 16
        %v5638 = vld [vmem:[%s5637] sm:$0xf]
        %v5642 = vunpack.c.l.b16 %v5634
        %v5643 = vunpack.c.h.b16 %v5634
        %v5644 = vunpack.c.l.b16 %v5635
        %v5645 = vunpack.c.h.b16 %v5635
        %v5646 = vunpack.c.l.b16 %v5636
        %v5647 = vpack.c.b16 %v5642, %v5642
        %v5648 = vpack.c.b16 %v5643, %v5643
        %v5649 = vpack.c.b16 %v5644, %v5644
        %v5650 = vpack.c.b16 %v5645, %v5645
        %v5651 = vpack.c.b16 %v5646, %v5646
        %5652 = vrot.lane.b32.xlu0 %v5647, 64
        %v5653 = vpop.permute.xlu0 %5652
        %5654 = vrot.lane.b32.xlu0 %v5648, 64
        %v5655 = vpop.permute.xlu0 %5654
        %5656 = vrot.lane.b32.xlu0 %v5649, 64
        %v5657 = vpop.permute.xlu0 %5656
        %5658 = vrot.lane.b32.xlu0 %v5650, 64
        %v5659 = vpop.permute.xlu0 %5658
        %5660 = vrot.lane.b32.xlu0 %v5651, 64
        %v5661 = vpop.permute.xlu0 %5660
        %v5662 = vsel %vm929, %v5653, %v5655
        %v5663 = vsel %vm929, %v5655, %v5657
        %v5664 = vsel %vm929, %v5657, %v5659
        %v5665 = vsel %vm929, %v5659, %v5661
        %v5667 = vsel %vm321, %v5638, 0
        %v5670 = vsel %vm325, %v5662, 0
        %v5673 = vsel %vm325, %v5663, 0
        %v5676 = vsel %vm325, %v5664, 0
        %v5679 = vsel %vm325, %v5665, 0
        %5681 = vmatprep.subr.bf16.mxu0 %v5673
        %5682 = vmatpush1.bf16.msra.mxu0 %v5670
        %5683 = vmatprep.subr.bf16.mxu0 0
        %5684 = vmatpush1.bf16.msra.mxu0 0
        %5685 = vmatprep.subr.bf16.mxu0 0
        %5686 = vmatpush1.bf16.msra.mxu0 0
        %5687 = vmatprep.subr.bf16.mxu0 0
        %5688 = vmatpush1.bf16.msra.mxu0 0
        %5689 = vmatprep.subr.bf16.mxu0 0
        %5690 = vmatpush1.bf16.msra.mxu0 0
        %5691 = vmatprep.subr.bf16.mxu0 0
        %5692 = vmatpush1.bf16.msra.mxu0 0
        %5693 = vmatprep.subr.bf16.mxu0 0
        %5694 = vmatpush1.bf16.msra.mxu0 0
        %5695 = vmatprep.subr.bf16.mxu0 0
        %5696 = vmatpush1.bf16.msra.mxu0 0
        %5697 = vmatprep.subr.bf16.mxu0 0
        %5698 = vmatpush1.bf16.msra.mxu0 0
        %5699 = vmatprep.subr.bf16.mxu0 0
        %5700 = vmatpush1.bf16.msra.mxu0 0
        %5701 = vmatprep.subr.bf16.mxu0 0
        %5702 = vmatpush1.bf16.msra.mxu0 0
        %5703 = vmatprep.subr.bf16.mxu0 0
        %5704 = vmatpush1.bf16.msra.mxu0 0
        %5705 = vmatprep.subr.bf16.mxu0 0
        %5706 = vmatpush1.bf16.msra.mxu0 0
        %5707 = vmatprep.subr.bf16.mxu0 0
        %5708 = vmatpush1.bf16.msra.mxu0 0
        %5709 = vmatprep.subr.bf16.mxu0 0
        %5710 = vmatpush1.bf16.msra.mxu0 0
        %5711 = vmatprep.subr.bf16.mxu0 0
        %5712 = vmatpush1.bf16.msra.mxu0 0
        %5713 = vmatprep.mubr.bf16.mxu0 0
        %5714 = vmatmul.mubr.bf16.gmra.mrb[0].mxu0 %v5667
        %v5715 = vpop.f32.mrb[0].mxu0
        %v5716 = vadd.f32 0.0, %v5715
        %v5717 = vpop.f32.mrb[0].mxu0
        %v5718 = vadd.f32 0.0, %v5717
        %v5719 = vpop.f32.mrb[0].mxu0
        %v5720 = vpop.f32.mrb[0].mxu0
        %5721 = vdwg.mxu0
        %5722 = vmatprep.subr.bf16.mxu0 %v5679
        %5723 = vmatpush1.bf16.msra.mxu0 %v5676
        %5724 = vmatprep.subr.bf16.mxu0 0
        %5725 = vmatpush1.bf16.msra.mxu0 0
        %5726 = vmatprep.subr.bf16.mxu0 0
        %5727 = vmatpush1.bf16.msra.mxu0 0
        %5728 = vmatprep.subr.bf16.mxu0 0
        %5729 = vmatpush1.bf16.msra.mxu0 0
        %5730 = vmatprep.subr.bf16.mxu0 0
        %5731 = vmatpush1.bf16.msra.mxu0 0
        %5732 = vmatprep.subr.bf16.mxu0 0
        %5733 = vmatpush1.bf16.msra.mxu0 0
        %5734 = vmatprep.subr.bf16.mxu0 0
        %5735 = vmatpush1.bf16.msra.mxu0 0
        %5736 = vmatprep.subr.bf16.mxu0 0
        %5737 = vmatpush1.bf16.msra.mxu0 0
        %5738 = vmatprep.subr.bf16.mxu0 0
        %5739 = vmatpush1.bf16.msra.mxu0 0
        %5740 = vmatprep.subr.bf16.mxu0 0
        %5741 = vmatpush1.bf16.msra.mxu0 0
        %5742 = vmatprep.subr.bf16.mxu0 0
        %5743 = vmatpush1.bf16.msra.mxu0 0
        %5744 = vmatprep.subr.bf16.mxu0 0
        %5745 = vmatpush1.bf16.msra.mxu0 0
        %5746 = vmatprep.subr.bf16.mxu0 0
        %5747 = vmatpush1.bf16.msra.mxu0 0
        %5748 = vmatprep.subr.bf16.mxu0 0
        %5749 = vmatpush1.bf16.msra.mxu0 0
        %5750 = vmatprep.subr.bf16.mxu0 0
        %5751 = vmatpush1.bf16.msra.mxu0 0
        %5752 = vmatprep.subr.bf16.mxu0 0
        %5753 = vmatpush1.bf16.msra.mxu0 0
        %5754 = vmatprep.mubr.bf16.mxu0 0
        %5755 = vmatmul.mubr.bf16.gmra.mrb[0].mxu0 %v5667
        %v5756 = vpop.f32.mrb[0].mxu0
        %v5757 = vadd.f32 0.0, %v5756
        %v5758 = vpop.f32.mrb[0].mxu0
        %v5759 = vadd.f32 0.0, %v5758
        %v5760 = vpop.f32.mrb[0].mxu0
        %v5761 = vpop.f32.mrb[0].mxu0
        %5762 = vdwg.mxu0
        %v5763 = vadd.f32 %v5591, %v5716
        %v5764 = vadd.f32 %v5592, %v5718
        %v5765 = vadd.f32 %v5593, %v5757
        %v5766 = vadd.f32 %v5594, %v5759
        %v5767 = vld [vmem:[%s1069] sm:$0xf]
        %vm5768 = vcmp.gt.f32.partialorder %v5767, 0.5
        %v5769 = vsel %vm5768, 1, 0
        %v5770 = vlaneseq
        %v5771 = vshrl.u32 %v5770, 7
        %v5772 = vsub.s32 0, %v5771
        %v5773 = vrot.slane %v5769, %v5772
        %v5774 = vlaneseq
        %v5775 = vshrl.u32 %v5774, 7
        %v5776 = vsub.s32 1, %v5775
        %v5777 = vrot.slane %v5769, %v5776
        %v5778 = vlaneseq
        %v5779 = vshrl.u32 %v5778, 7
        %v5780 = vsub.s32 2, %v5779
        %v5781 = vrot.slane %v5769, %v5780
        %v5782 = vlaneseq
        %v5783 = vshrl.u32 %v5782, 7
        %v5784 = vsub.s32 3, %v5783
        %v5785 = vrot.slane %v5769, %v5784
        %vm5786 = vcmp.eq.s32.totalorder %v5773, 1
        %vm5787 = vcmp.eq.s32.totalorder %v5777, 1
        %vm5788 = vcmp.eq.s32.totalorder %v5781, 1
        %vm5789 = vcmp.eq.s32.totalorder %v5785, 1
        %vm5790 = vmpackc.low %vm5787, %vm5786
        %vm5791 = vmpackc.low %vm5789, %vm5788
        %v5792 = vsel %vm5790, 65537, 0
        %v5793 = vsel %vm5791, 65537, 0
        %5794 = vrot.lane.b32.xlu0 %v5792, 65
        %v5795 = vpop.permute.xlu0 %5794
        %5796 = vrot.lane.b32.xlu0 %v5793, 65
        %v5797 = vpop.permute.xlu0 %5796
        %v5798 = vrot.slane %v5795, 4
        %v5799 = vrot.slane %v5797, 4
        %v5800 = vsel %vm789, %v5798, %v5795
        %v5801 = vsel %vm237, %v5798, %v5799
        %v5802 = vsel %vm789, %v5801, %v5797
        %vm5803 = vcmp.ne.s16.totalorder %v5800, 0
        %vm5804 = vcmp.ne.s16.totalorder %v5802, 0
        %vm5805 = vcmp.ne.s16.totalorder %v5799, 0
        %v5806 = vsel %vm5803, %v4913, 0
        %v5807 = vsel %vm5804, %v4914, 0
        %v5808 = vsel %vm5805, %v4915, 0
        %s5809 = scalar_lea.vmem %s3, 20
        %v5810 = vld [vmem:[%s5809] sm:$0xf]
        %v5814 = vunpack.c.l.b16 %v5806
        %v5815 = vunpack.c.h.b16 %v5806
        %v5816 = vunpack.c.l.b16 %v5807
        %v5817 = vunpack.c.h.b16 %v5807
        %v5818 = vunpack.c.l.b16 %v5808
        %v5819 = vpack.c.b16 %v5814, %v5814
        %v5820 = vpack.c.b16 %v5815, %v5815
        %v5821 = vpack.c.b16 %v5816, %v5816
        %v5822 = vpack.c.b16 %v5817, %v5817
        %v5823 = vpack.c.b16 %v5818, %v5818
        %5824 = vrot.lane.b32.xlu0 %v5819, 63
        %v5825 = vpop.permute.xlu0 %5824
        %5826 = vrot.lane.b32.xlu0 %v5820, 63
        %v5827 = vpop.permute.xlu0 %5826
        %5828 = vrot.lane.b32.xlu0 %v5821, 63
        %v5829 = vpop.permute.xlu0 %5828
        %5830 = vrot.lane.b32.xlu0 %v5822, 63
        %v5831 = vpop.permute.xlu0 %5830
        %5832 = vrot.lane.b32.xlu0 %v5823, 63
        %v5833 = vpop.permute.xlu0 %5832
        %v5834 = vsel %vm754, %v5825, %v5827
        %v5835 = vsel %vm754, %v5827, %v5829
        %v5836 = vsel %vm754, %v5829, %v5831
        %v5837 = vsel %vm754, %v5831, %v5833
        %v5839 = vsel %vm321, %v5810, 0
        %v5842 = vsel %vm325, %v5834, 0
        %v5845 = vsel %vm325, %v5835, 0
        %v5848 = vsel %vm325, %v5836, 0
        %v5851 = vsel %vm325, %v5837, 0
        %5853 = vmatprep.subr.bf16.mxu0 %v5845
        %5854 = vmatpush1.bf16.msra.mxu0 %v5842
        %5855 = vmatprep.subr.bf16.mxu0 0
        %5856 = vmatpush1.bf16.msra.mxu0 0
        %5857 = vmatprep.subr.bf16.mxu0 0
        %5858 = vmatpush1.bf16.msra.mxu0 0
        %5859 = vmatprep.subr.bf16.mxu0 0
        %5860 = vmatpush1.bf16.msra.mxu0 0
        %5861 = vmatprep.subr.bf16.mxu0 0
        %5862 = vmatpush1.bf16.msra.mxu0 0
        %5863 = vmatprep.subr.bf16.mxu0 0
        %5864 = vmatpush1.bf16.msra.mxu0 0
        %5865 = vmatprep.subr.bf16.mxu0 0
        %5866 = vmatpush1.bf16.msra.mxu0 0
        %5867 = vmatprep.subr.bf16.mxu0 0
        %5868 = vmatpush1.bf16.msra.mxu0 0
        %5869 = vmatprep.subr.bf16.mxu0 0
        %5870 = vmatpush1.bf16.msra.mxu0 0
        %5871 = vmatprep.subr.bf16.mxu0 0
        %5872 = vmatpush1.bf16.msra.mxu0 0
        %5873 = vmatprep.subr.bf16.mxu0 0
        %5874 = vmatpush1.bf16.msra.mxu0 0
        %5875 = vmatprep.subr.bf16.mxu0 0
        %5876 = vmatpush1.bf16.msra.mxu0 0
        %5877 = vmatprep.subr.bf16.mxu0 0
        %5878 = vmatpush1.bf16.msra.mxu0 0
        %5879 = vmatprep.subr.bf16.mxu0 0
        %5880 = vmatpush1.bf16.msra.mxu0 0
        %5881 = vmatprep.subr.bf16.mxu0 0
        %5882 = vmatpush1.bf16.msra.mxu0 0
        %5883 = vmatprep.subr.bf16.mxu0 0
        %5884 = vmatpush1.bf16.msra.mxu0 0
        %5885 = vmatprep.mubr.bf16.mxu0 0
        %5886 = vmatmul.mubr.bf16.gmra.mrb[0].mxu0 %v5839
        %v5887 = vpop.f32.mrb[0].mxu0
        %v5888 = vadd.f32 0.0, %v5887
        %v5889 = vpop.f32.mrb[0].mxu0
        %v5890 = vadd.f32 0.0, %v5889
        %v5891 = vpop.f32.mrb[0].mxu0
        %v5892 = vpop.f32.mrb[0].mxu0
        %5893 = vdwg.mxu0
        %5894 = vmatprep.subr.bf16.mxu0 %v5851
        %5895 = vmatpush1.bf16.msra.mxu0 %v5848
        %5896 = vmatprep.subr.bf16.mxu0 0
        %5897 = vmatpush1.bf16.msra.mxu0 0
        %5898 = vmatprep.subr.bf16.mxu0 0
        %5899 = vmatpush1.bf16.msra.mxu0 0
        %5900 = vmatprep.subr.bf16.mxu0 0
        %5901 = vmatpush1.bf16.msra.mxu0 0
        %5902 = vmatprep.subr.bf16.mxu0 0
        %5903 = vmatpush1.bf16.msra.mxu0 0
        %5904 = vmatprep.subr.bf16.mxu0 0
        %5905 = vmatpush1.bf16.msra.mxu0 0
        %5906 = vmatprep.subr.bf16.mxu0 0
        %5907 = vmatpush1.bf16.msra.mxu0 0
        %5908 = vmatprep.subr.bf16.mxu0 0
        %5909 = vmatpush1.bf16.msra.mxu0 0
        %5910 = vmatprep.subr.bf16.mxu0 0
        %5911 = vmatpush1.bf16.msra.mxu0 0
        %5912 = vmatprep.subr.bf16.mxu0 0
        %5913 = vmatpush1.bf16.msra.mxu0 0
        %5914 = vmatprep.subr.bf16.mxu0 0
        %5915 = vmatpush1.bf16.msra.mxu0 0
        %5916 = vmatprep.subr.bf16.mxu0 0
        %5917 = vmatpush1.bf16.msra.mxu0 0
        %5918 = vmatprep.subr.bf16.mxu0 0
        %5919 = vmatpush1.bf16.msra.mxu0 0
        %5920 = vmatprep.subr.bf16.mxu0 0
        %5921 = vmatpush1.bf16.msra.mxu0 0
        %5922 = vmatprep.subr.bf16.mxu0 0
        %5923 = vmatpush1.bf16.msra.mxu0 0
        %5924 = vmatprep.subr.bf16.mxu0 0
        %5925 = vmatpush1.bf16.msra.mxu0 0
        %5926 = vmatprep.mubr.bf16.mxu0 0
        %5927 = vmatmul.mubr.bf16.gmra.mrb[0].mxu0 %v5839
        %v5928 = vpop.f32.mrb[0].mxu0
        %v5929 = vadd.f32 0.0, %v5928
        %v5930 = vpop.f32.mrb[0].mxu0
        %v5931 = vadd.f32 0.0, %v5930
        %v5932 = vpop.f32.mrb[0].mxu0
        %v5933 = vpop.f32.mrb[0].mxu0
        %5934 = vdwg.mxu0
        %v5935 = vadd.f32 %v5763, %v5888
        %v5936 = vadd.f32 %v5764, %v5890
        %v5937 = vadd.f32 %v5765, %v5929
        %v5938 = vadd.f32 %v5766, %v5931
        %v5939 = vld [vmem:[%s1242] sm:$0xf]
        %vm5940 = vcmp.gt.f32.partialorder %v5939, 0.5
        %v5941 = vsel %vm5940, 1, 0
        %v5942 = vlaneseq
        %v5943 = vshrl.u32 %v5942, 7
        %v5944 = vsub.s32 0, %v5943
        %v5945 = vrot.slane %v5941, %v5944
        %v5946 = vlaneseq
        %v5947 = vshrl.u32 %v5946, 7
        %v5948 = vsub.s32 1, %v5947
        %v5949 = vrot.slane %v5941, %v5948
        %v5950 = vlaneseq
        %v5951 = vshrl.u32 %v5950, 7
        %v5952 = vsub.s32 2, %v5951
        %v5953 = vrot.slane %v5941, %v5952
        %v5954 = vlaneseq
        %v5955 = vshrl.u32 %v5954, 7
        %v5956 = vsub.s32 3, %v5955
        %v5957 = vrot.slane %v5941, %v5956
        %vm5958 = vcmp.eq.s32.totalorder %v5945, 1
        %vm5959 = vcmp.eq.s32.totalorder %v5949, 1
        %vm5960 = vcmp.eq.s32.totalorder %v5953, 1
        %vm5961 = vcmp.eq.s32.totalorder %v5957, 1
        %vm5962 = vmpackc.low %vm5959, %vm5958
        %vm5963 = vmpackc.low %vm5961, %vm5960
        %v5964 = vsel %vm5962, 65537, 0
        %v5965 = vsel %vm5963, 65537, 0
        %5966 = vrot.lane.b32.xlu0 %v5964, 71
        %v5967 = vpop.permute.xlu0 %5966
        %5968 = vrot.lane.b32.xlu0 %v5965, 71
        %v5969 = vpop.permute.xlu0 %5968
        %v5970 = vrot.slane %v5967, 4
        %v5971 = vrot.slane %v5969, 4
        %v5972 = vsel %vm614, %v5970, %v5967
        %v5973 = vsel %vm237, %v5970, %v5971
        %v5974 = vsel %vm614, %v5973, %v5969
        %vm5975 = vcmp.ne.s16.totalorder %v5972, 0
        %vm5976 = vcmp.ne.s16.totalorder %v5974, 0
        %vm5977 = vcmp.ne.s16.totalorder %v5971, 0
        %v5978 = vsel %vm5975, %v4913, 0
        %v5979 = vsel %vm5976, %v4914, 0
        %v5980 = vsel %vm5977, %v4915, 0
        %s5981 = scalar_lea.vmem %s3, 24
        %v5982 = vld [vmem:[%s5981] sm:$0xf]
        %v5986 = vunpack.c.l.b16 %v5978
        %v5987 = vunpack.c.h.b16 %v5978
        %v5988 = vunpack.c.l.b16 %v5979
        %v5989 = vunpack.c.h.b16 %v5979
        %v5990 = vunpack.c.l.b16 %v5980
        %v5991 = vpack.c.b16 %v5986, %v5986
        %v5992 = vpack.c.b16 %v5987, %v5987
        %v5993 = vpack.c.b16 %v5988, %v5988
        %v5994 = vpack.c.b16 %v5989, %v5989
        %v5995 = vpack.c.b16 %v5990, %v5990
        %5996 = vrot.lane.b32.xlu0 %v5991, 57
        %v5997 = vpop.permute.xlu0 %5996
        %5998 = vrot.lane.b32.xlu0 %v5992, 57
        %v5999 = vpop.permute.xlu0 %5998
        %6000 = vrot.lane.b32.xlu0 %v5993, 57
        %v6001 = vpop.permute.xlu0 %6000
        %6002 = vrot.lane.b32.xlu0 %v5994, 57
        %v6003 = vpop.permute.xlu0 %6002
        %6004 = vrot.lane.b32.xlu0 %v5995, 57
        %v6005 = vpop.permute.xlu0 %6004
        %v6006 = vsel %vm579, %v5997, %v5999
        %v6007 = vsel %vm579, %v5999, %v6001
        %v6008 = vsel %vm579, %v6001, %v6003
        %v6009 = vsel %vm579, %v6003, %v6005
        %v6011 = vsel %vm321, %v5982, 0
        %v6014 = vsel %vm325, %v6006, 0
        %v6017 = vsel %vm325, %v6007, 0
        %v6020 = vsel %vm325, %v6008, 0
        %v6023 = vsel %vm325, %v6009, 0
        %6025 = vmatprep.subr.bf16.mxu0 %v6017
        %6026 = vmatpush1.bf16.msra.mxu0 %v6014
        %6027 = vmatprep.subr.bf16.mxu0 0
        %6028 = vmatpush1.bf16.msra.mxu0 0
        %6029 = vmatprep.subr.bf16.mxu0 0
        %6030 = vmatpush1.bf16.msra.mxu0 0
        %6031 = vmatprep.subr.bf16.mxu0 0
        %6032 = vmatpush1.bf16.msra.mxu0 0
        %6033 = vmatprep.subr.bf16.mxu0 0
        %6034 = vmatpush1.bf16.msra.mxu0 0
        %6035 = vmatprep.subr.bf16.mxu0 0
        %6036 = vmatpush1.bf16.msra.mxu0 0
        %6037 = vmatprep.subr.bf16.mxu0 0
        %6038 = vmatpush1.bf16.msra.mxu0 0
        %6039 = vmatprep.subr.bf16.mxu0 0
        %6040 = vmatpush1.bf16.msra.mxu0 0
        %6041 = vmatprep.subr.bf16.mxu0 0
        %6042 = vmatpush1.bf16.msra.mxu0 0
        %6043 = vmatprep.subr.bf16.mxu0 0
        %6044 = vmatpush1.bf16.msra.mxu0 0
        %6045 = vmatprep.subr.bf16.mxu0 0
        %6046 = vmatpush1.bf16.msra.mxu0 0
        %6047 = vmatprep.subr.bf16.mxu0 0
        %6048 = vmatpush1.bf16.msra.mxu0 0
        %6049 = vmatprep.subr.bf16.mxu0 0
        %6050 = vmatpush1.bf16.msra.mxu0 0
        %6051 = vmatprep.subr.bf16.mxu0 0
        %6052 = vmatpush1.bf16.msra.mxu0 0
        %6053 = vmatprep.subr.bf16.mxu0 0
        %6054 = vmatpush1.bf16.msra.mxu0 0
        %6055 = vmatprep.subr.bf16.mxu0 0
        %6056 = vmatpush1.bf16.msra.mxu0 0
        %6057 = vmatprep.mubr.bf16.mxu0 0
        %6058 = vmatmul.mubr.bf16.gmra.mrb[0].mxu0 %v6011
        %v6059 = vpop.f32.mrb[0].mxu0
        %v6060 = vadd.f32 0.0, %v6059
        %v6061 = vpop.f32.mrb[0].mxu0
        %v6062 = vadd.f32 0.0, %v6061
        %v6063 = vpop.f32.mrb[0].mxu0
        %v6064 = vpop.f32.mrb[0].mxu0
        %6065 = vdwg.mxu0
        %6066 = vmatprep.subr.bf16.mxu0 %v6023
        %6067 = vmatpush1.bf16.msra.mxu0 %v6020
        %6068 = vmatprep.subr.bf16.mxu0 0
        %6069 = vmatpush1.bf16.msra.mxu0 0
        %6070 = vmatprep.subr.bf16.mxu0 0
        %6071 = vmatpush1.bf16.msra.mxu0 0
        %6072 = vmatprep.subr.bf16.mxu0 0
        %6073 = vmatpush1.bf16.msra.mxu0 0
        %6074 = vmatprep.subr.bf16.mxu0 0
        %6075 = vmatpush1.bf16.msra.mxu0 0
        %6076 = vmatprep.subr.bf16.mxu0 0
        %6077 = vmatpush1.bf16.msra.mxu0 0
        %6078 = vmatprep.subr.bf16.mxu0 0
        %6079 = vmatpush1.bf16.msra.mxu0 0
        %6080 = vmatprep.subr.bf16.mxu0 0
        %6081 = vmatpush1.bf16.msra.mxu0 0
        %6082 = vmatprep.subr.bf16.mxu0 0
        %6083 = vmatpush1.bf16.msra.mxu0 0
        %6084 = vmatprep.subr.bf16.mxu0 0
        %6085 = vmatpush1.bf16.msra.mxu0 0
        %6086 = vmatprep.subr.bf16.mxu0 0
        %6087 = vmatpush1.bf16.msra.mxu0 0
        %6088 = vmatprep.subr.bf16.mxu0 0
        %6089 = vmatpush1.bf16.msra.mxu0 0
        %6090 = vmatprep.subr.bf16.mxu0 0
        %6091 = vmatpush1.bf16.msra.mxu0 0
        %6092 = vmatprep.subr.bf16.mxu0 0
        %6093 = vmatpush1.bf16.msra.mxu0 0
        %6094 = vmatprep.subr.bf16.mxu0 0
        %6095 = vmatpush1.bf16.msra.mxu0 0
        %6096 = vmatprep.subr.bf16.mxu0 0
        %6097 = vmatpush1.bf16.msra.mxu0 0
        %6098 = vmatprep.mubr.bf16.mxu0 0
        %6099 = vmatmul.mubr.bf16.gmra.mrb[0].mxu0 %v6011
        %v6100 = vpop.f32.mrb[0].mxu0
        %v6101 = vadd.f32 0.0, %v6100
        %v6102 = vpop.f32.mrb[0].mxu0
        %v6103 = vadd.f32 0.0, %v6102
        %v6104 = vpop.f32.mrb[0].mxu0
        %v6105 = vpop.f32.mrb[0].mxu0
        %6106 = vdwg.mxu0
        %v6107 = vadd.f32 %v5935, %v6060
        %v6108 = vadd.f32 %v5936, %v6062
        %v6109 = vadd.f32 %v5937, %v6101
        %v6110 = vadd.f32 %v5938, %v6103
        %v6111 = vld [vmem:[%s1415] sm:$0xf]
        %vm6112 = vcmp.gt.f32.partialorder %v6111, 0.5
        %v6113 = vsel %vm6112, 1, 0
        %v6114 = vlaneseq
        %v6115 = vshrl.u32 %v6114, 7
        %v6116 = vsub.s32 0, %v6115
        %v6117 = vrot.slane %v6113, %v6116
        %v6118 = vlaneseq
        %v6119 = vshrl.u32 %v6118, 7
        %v6120 = vsub.s32 1, %v6119
        %v6121 = vrot.slane %v6113, %v6120
        %v6122 = vlaneseq
        %v6123 = vshrl.u32 %v6122, 7
        %v6124 = vsub.s32 2, %v6123
        %v6125 = vrot.slane %v6113, %v6124
        %v6126 = vlaneseq
        %v6127 = vshrl.u32 %v6126, 7
        %v6128 = vsub.s32 3, %v6127
        %v6129 = vrot.slane %v6113, %v6128
        %vm6130 = vcmp.eq.s32.totalorder %v6117, 1
        %vm6131 = vcmp.eq.s32.totalorder %v6121, 1
        %vm6132 = vcmp.eq.s32.totalorder %v6125, 1
        %vm6133 = vcmp.eq.s32.totalorder %v6129, 1
        %vm6134 = vmpackc.low %vm6131, %vm6130
        %vm6135 = vmpackc.low %vm6133, %vm6132
        %v6136 = vsel %vm6134, 65537, 0
        %v6137 = vsel %vm6135, 65537, 0
        %6138 = vrot.lane.b32.xlu0 %v6136, 72
        %v6139 = vpop.permute.xlu0 %6138
        %6140 = vrot.lane.b32.xlu0 %v6137, 72
        %v6141 = vpop.permute.xlu0 %6140
        %v6142 = vrot.slane %v6139, 4
        %v6143 = vrot.slane %v6141, 4
        %v6144 = vsel %vm316, %v6142, %v6139
        %v6145 = vsel %vm237, %v6142, %v6143
        %v6146 = vsel %vm316, %v6145, %v6141
        %vm6147 = vcmp.ne.s16.totalorder %v6144, 0
        %vm6148 = vcmp.ne.s16.totalorder %v6146, 0
        %vm6149 = vcmp.ne.s16.totalorder %v6143, 0
        %v6150 = vsel %vm6147, %v4913, 0
        %v6151 = vsel %vm6148, %v4914, 0
        %v6152 = vsel %vm6149, %v4915, 0
        %s6153 = scalar_lea.vmem %s3, 28
        %v6154 = vld [vmem:[%s6153] sm:$0xf]
        %v6158 = vunpack.c.l.b16 %v6150
        %v6159 = vunpack.c.h.b16 %v6150
        %v6160 = vunpack.c.l.b16 %v6151
        %v6161 = vunpack.c.h.b16 %v6151
        %v6162 = vunpack.c.l.b16 %v6152
        %v6163 = vpack.c.b16 %v6158, %v6158
        %v6164 = vpack.c.b16 %v6159, %v6159
        %v6165 = vpack.c.b16 %v6160, %v6160
        %v6166 = vpack.c.b16 %v6161, %v6161
        %v6167 = vpack.c.b16 %v6162, %v6162
        %6168 = vrot.lane.b32.xlu0 %v6163, 56
        %v6169 = vpop.permute.xlu0 %6168
        %6170 = vrot.lane.b32.xlu0 %v6164, 56
        %v6171 = vpop.permute.xlu0 %6170
        %6172 = vrot.lane.b32.xlu0 %v6165, 56
        %v6173 = vpop.permute.xlu0 %6172
        %6174 = vrot.lane.b32.xlu0 %v6166, 56
        %v6175 = vpop.permute.xlu0 %6174
        %6176 = vrot.lane.b32.xlu0 %v6167, 56
        %v6177 = vpop.permute.xlu0 %6176
        %v6178 = vsel %vm281, %v6169, %v6171
        %v6179 = vsel %vm281, %v6171, %v6173
        %v6180 = vsel %vm281, %v6173, %v6175
        %v6181 = vsel %vm281, %v6175, %v6177
        %v6183 = vsel %vm321, %v6154, 0
        %v6186 = vsel %vm325, %v6178, 0
        %v6189 = vsel %vm325, %v6179, 0
        %v6192 = vsel %vm325, %v6180, 0
        %v6195 = vsel %vm325, %v6181, 0
        %6197 = vmatprep.subr.bf16.mxu0 %v6189
        %6198 = vmatpush1.bf16.msra.mxu0 %v6186
        %6199 = vmatprep.subr.bf16.mxu0 0
        %6200 = vmatpush1.bf16.msra.mxu0 0
        %6201 = vmatprep.subr.bf16.mxu0 0
        %6202 = vmatpush1.bf16.msra.mxu0 0
        %6203 = vmatprep.subr.bf16.mxu0 0
        %6204 = vmatpush1.bf16.msra.mxu0 0
        %6205 = vmatprep.subr.bf16.mxu0 0
        %6206 = vmatpush1.bf16.msra.mxu0 0
        %6207 = vmatprep.subr.bf16.mxu0 0
        %6208 = vmatpush1.bf16.msra.mxu0 0
        %6209 = vmatprep.subr.bf16.mxu0 0
        %6210 = vmatpush1.bf16.msra.mxu0 0
        %6211 = vmatprep.subr.bf16.mxu0 0
        %6212 = vmatpush1.bf16.msra.mxu0 0
        %6213 = vmatprep.subr.bf16.mxu0 0
        %6214 = vmatpush1.bf16.msra.mxu0 0
        %6215 = vmatprep.subr.bf16.mxu0 0
        %6216 = vmatpush1.bf16.msra.mxu0 0
        %6217 = vmatprep.subr.bf16.mxu0 0
        %6218 = vmatpush1.bf16.msra.mxu0 0
        %6219 = vmatprep.subr.bf16.mxu0 0
        %6220 = vmatpush1.bf16.msra.mxu0 0
        %6221 = vmatprep.subr.bf16.mxu0 0
        %6222 = vmatpush1.bf16.msra.mxu0 0
        %6223 = vmatprep.subr.bf16.mxu0 0
        %6224 = vmatpush1.bf16.msra.mxu0 0
        %6225 = vmatprep.subr.bf16.mxu0 0
        %6226 = vmatpush1.bf16.msra.mxu0 0
        %6227 = vmatprep.subr.bf16.mxu0 0
        %6228 = vmatpush1.bf16.msra.mxu0 0
        %6229 = vmatprep.mubr.bf16.mxu0 0
        %6230 = vmatmul.mubr.bf16.gmra.mrb[0].mxu0 %v6183
        %v6231 = vpop.f32.mrb[0].mxu0
        %v6232 = vadd.f32 0.0, %v6231
        %v6233 = vpop.f32.mrb[0].mxu0
        %v6234 = vadd.f32 0.0, %v6233
        %v6235 = vpop.f32.mrb[0].mxu0
        %v6236 = vpop.f32.mrb[0].mxu0
        %6237 = vdwg.mxu0
        %6238 = vmatprep.subr.bf16.mxu0 %v6195
        %6239 = vmatpush1.bf16.msra.mxu0 %v6192
        %6240 = vmatprep.subr.bf16.mxu0 0
        %6241 = vmatpush1.bf16.msra.mxu0 0
        %6242 = vmatprep.subr.bf16.mxu0 0
        %6243 = vmatpush1.bf16.msra.mxu0 0
        %6244 = vmatprep.subr.bf16.mxu0 0
        %6245 = vmatpush1.bf16.msra.mxu0 0
        %6246 = vmatprep.subr.bf16.mxu0 0
        %6247 = vmatpush1.bf16.msra.mxu0 0
        %6248 = vmatprep.subr.bf16.mxu0 0
        %6249 = vmatpush1.bf16.msra.mxu0 0
        %6250 = vmatprep.subr.bf16.mxu0 0
        %6251 = vmatpush1.bf16.msra.mxu0 0
        %6252 = vmatprep.subr.bf16.mxu0 0
        %6253 = vmatpush1.bf16.msra.mxu0 0
        %6254 = vmatprep.subr.bf16.mxu0 0
        %6255 = vmatpush1.bf16.msra.mxu0 0
        %6256 = vmatprep.subr.bf16.mxu0 0
        %6257 = vmatpush1.bf16.msra.mxu0 0
        %6258 = vmatprep.subr.bf16.mxu0 0
        %6259 = vmatpush1.bf16.msra.mxu0 0
        %6260 = vmatprep.subr.bf16.mxu0 0
        %6261 = vmatpush1.bf16.msra.mxu0 0
        %6262 = vmatprep.subr.bf16.mxu0 0
        %6263 = vmatpush1.bf16.msra.mxu0 0
        %6264 = vmatprep.subr.bf16.mxu0 0
        %6265 = vmatpush1.bf16.msra.mxu0 0
        %6266 = vmatprep.subr.bf16.mxu0 0
        %6267 = vmatpush1.bf16.msra.mxu0 0
        %6268 = vmatprep.subr.bf16.mxu0 0
        %6269 = vmatpush1.bf16.msra.mxu0 0
        %6270 = vmatprep.mubr.bf16.mxu0 0
        %6271 = vmatmul.mubr.bf16.gmra.mrb[0].mxu0 %v6183
        %v6272 = vpop.f32.mrb[0].mxu0
        %v6273 = vadd.f32 0.0, %v6272
        %v6274 = vpop.f32.mrb[0].mxu0
        %v6275 = vadd.f32 0.0, %v6274
        %v6276 = vpop.f32.mrb[0].mxu0
        %v6277 = vpop.f32.mrb[0].mxu0
        %6278 = vdwg.mxu0
        %v6279 = vadd.f32 %v6107, %v6232
        %v6280 = vadd.f32 %v6108, %v6234
        %v6281 = vadd.f32 %v6109, %v6273
        %v6282 = vadd.f32 %v6110, %v6275
        %v6283 = vld [vmem:[%s1588] sm:$0xf]
        %vm6284 = vcmp.gt.f32.partialorder %v6283, 0.5
        %v6285 = vsel %vm6284, 1, 0
        %v6286 = vlaneseq
        %v6287 = vshrl.u32 %v6286, 7
        %v6288 = vsub.s32 0, %v6287
        %v6289 = vrot.slane %v6285, %v6288
        %v6290 = vlaneseq
        %v6291 = vshrl.u32 %v6290, 7
        %v6292 = vsub.s32 1, %v6291
        %v6293 = vrot.slane %v6285, %v6292
        %v6294 = vlaneseq
        %v6295 = vshrl.u32 %v6294, 7
        %v6296 = vsub.s32 2, %v6295
        %v6297 = vrot.slane %v6285, %v6296
        %v6298 = vlaneseq
        %v6299 = vshrl.u32 %v6298, 7
        %v6300 = vsub.s32 3, %v6299
        %v6301 = vrot.slane %v6285, %v6300
        %vm6302 = vcmp.eq.s32.totalorder %v6289, 1
        %vm6303 = vcmp.eq.s32.totalorder %v6293, 1
        %vm6304 = vcmp.eq.s32.totalorder %v6297, 1
        %vm6305 = vcmp.eq.s32.totalorder %v6301, 1
        %vm6306 = vmpackc.low %vm6303, %vm6302
        %vm6307 = vmpackc.low %vm6305, %vm6304
        %v6308 = vsel %vm6306, 65537, 0
        %v6309 = vsel %vm6307, 65537, 0
        %6310 = vrot.lane.b32.xlu0 %v6308, 73
        %v6311 = vpop.permute.xlu0 %6310
        %6312 = vrot.lane.b32.xlu0 %v6309, 73
        %v6313 = vpop.permute.xlu0 %6312
        %v6314 = vrot.slane %v6311, 4
        %v6315 = vrot.slane %v6313, 4
        %v6316 = vsel %vm443, %v6314, %v6311
        %v6317 = vsel %vm237, %v6314, %v6315
        %v6318 = vsel %vm443, %v6317, %v6313
        %vm6319 = vcmp.ne.s16.totalorder %v6316, 0
        %vm6320 = vcmp.ne.s16.totalorder %v6318, 0
        %vm6321 = vcmp.ne.s16.totalorder %v6315, 0
        %v6322 = vsel %vm6319, %v4913, 0
        %v6323 = vsel %vm6320, %v4914, 0
        %v6324 = vsel %vm6321, %v4915, 0
        %s6325 = scalar_lea.vmem %s3, 32
        %v6326 = vld [vmem:[%s6325] sm:$0xf]
        %v6330 = vunpack.c.l.b16 %v6322
        %v6331 = vunpack.c.h.b16 %v6322
        %v6332 = vunpack.c.l.b16 %v6323
        %v6333 = vunpack.c.h.b16 %v6323
        %v6334 = vunpack.c.l.b16 %v6324
        %v6335 = vpack.c.b16 %v6330, %v6330
        %v6336 = vpack.c.b16 %v6331, %v6331
        %v6337 = vpack.c.b16 %v6332, %v6332
        %v6338 = vpack.c.b16 %v6333, %v6333
        %v6339 = vpack.c.b16 %v6334, %v6334
        %6340 = vrot.lane.b32.xlu0 %v6335, 55
        %v6341 = vpop.permute.xlu0 %6340
        %6342 = vrot.lane.b32.xlu0 %v6336, 55
        %v6343 = vpop.permute.xlu0 %6342
        %6344 = vrot.lane.b32.xlu0 %v6337, 55
        %v6345 = vpop.permute.xlu0 %6344
        %6346 = vrot.lane.b32.xlu0 %v6338, 55
        %v6347 = vpop.permute.xlu0 %6346
        %6348 = vrot.lane.b32.xlu0 %v6339, 55
        %v6349 = vpop.permute.xlu0 %6348
        %v6350 = vsel %vm235, %v6341, %v6343
        %v6351 = vsel %vm235, %v6343, %v6345
        %v6352 = vsel %vm235, %v6345, %v6347
        %v6353 = vsel %vm235, %v6347, %v6349
        %v6355 = vsel %vm321, %v6326, 0
        %v6358 = vsel %vm325, %v6350, 0
        %v6361 = vsel %vm325, %v6351, 0
        %v6364 = vsel %vm325, %v6352, 0
        %v6367 = vsel %vm325, %v6353, 0
        %6369 = vmatprep.subr.bf16.mxu0 %v6361
        %6370 = vmatpush1.bf16.msra.mxu0 %v6358
        %6371 = vmatprep.subr.bf16.mxu0 0
        %6372 = vmatpush1.bf16.msra.mxu0 0
        %6373 = vmatprep.subr.bf16.mxu0 0
        %6374 = vmatpush1.bf16.msra.mxu0 0
        %6375 = vmatprep.subr.bf16.mxu0 0
        %6376 = vmatpush1.bf16.msra.mxu0 0
        %6377 = vmatprep.subr.bf16.mxu0 0
        %6378 = vmatpush1.bf16.msra.mxu0 0
        %6379 = vmatprep.subr.bf16.mxu0 0
        %6380 = vmatpush1.bf16.msra.mxu0 0
        %6381 = vmatprep.subr.bf16.mxu0 0
        %6382 = vmatpush1.bf16.msra.mxu0 0
        %6383 = vmatprep.subr.bf16.mxu0 0
        %6384 = vmatpush1.bf16.msra.mxu0 0
        %6385 = vmatprep.subr.bf16.mxu0 0
        %6386 = vmatpush1.bf16.msra.mxu0 0
        %6387 = vmatprep.subr.bf16.mxu0 0
        %6388 = vmatpush1.bf16.msra.mxu0 0
        %6389 = vmatprep.subr.bf16.mxu0 0
        %6390 = vmatpush1.bf16.msra.mxu0 0
        %6391 = vmatprep.subr.bf16.mxu0 0
        %6392 = vmatpush1.bf16.msra.mxu0 0
        %6393 = vmatprep.subr.bf16.mxu0 0
        %6394 = vmatpush1.bf16.msra.mxu0 0
        %6395 = vmatprep.subr.bf16.mxu0 0
        %6396 = vmatpush1.bf16.msra.mxu0 0
        %6397 = vmatprep.subr.bf16.mxu0 0
        %6398 = vmatpush1.bf16.msra.mxu0 0
        %6399 = vmatprep.subr.bf16.mxu0 0
        %6400 = vmatpush1.bf16.msra.mxu0 0
        %6401 = vmatprep.mubr.bf16.mxu0 0
        %6402 = vmatmul.mubr.bf16.gmra.mrb[0].mxu0 %v6355
        %v6403 = vpop.f32.mrb[0].mxu0
        %v6404 = vadd.f32 0.0, %v6403
        %v6405 = vpop.f32.mrb[0].mxu0
        %v6406 = vadd.f32 0.0, %v6405
        %v6407 = vpop.f32.mrb[0].mxu0
        %v6408 = vpop.f32.mrb[0].mxu0
        %6409 = vdwg.mxu0
        %6410 = vmatprep.subr.bf16.mxu0 %v6367
        %6411 = vmatpush1.bf16.msra.mxu0 %v6364
        %6412 = vmatprep.subr.bf16.mxu0 0
        %6413 = vmatpush1.bf16.msra.mxu0 0
        %6414 = vmatprep.subr.bf16.mxu0 0
        %6415 = vmatpush1.bf16.msra.mxu0 0
        %6416 = vmatprep.subr.bf16.mxu0 0
        %6417 = vmatpush1.bf16.msra.mxu0 0
        %6418 = vmatprep.subr.bf16.mxu0 0
        %6419 = vmatpush1.bf16.msra.mxu0 0
        %6420 = vmatprep.subr.bf16.mxu0 0
        %6421 = vmatpush1.bf16.msra.mxu0 0
        %6422 = vmatprep.subr.bf16.mxu0 0
        %6423 = vmatpush1.bf16.msra.mxu0 0
        %6424 = vmatprep.subr.bf16.mxu0 0
        %6425 = vmatpush1.bf16.msra.mxu0 0
        %6426 = vmatprep.subr.bf16.mxu0 0
        %6427 = vmatpush1.bf16.msra.mxu0 0
        %6428 = vmatprep.subr.bf16.mxu0 0
        %6429 = vmatpush1.bf16.msra.mxu0 0
        %6430 = vmatprep.subr.bf16.mxu0 0
        %6431 = vmatpush1.bf16.msra.mxu0 0
        %6432 = vmatprep.subr.bf16.mxu0 0
        %6433 = vmatpush1.bf16.msra.mxu0 0
        %6434 = vmatprep.subr.bf16.mxu0 0
        %6435 = vmatpush1.bf16.msra.mxu0 0
        %6436 = vmatprep.subr.bf16.mxu0 0
        %6437 = vmatpush1.bf16.msra.mxu0 0
        %6438 = vmatprep.subr.bf16.mxu0 0
        %6439 = vmatpush1.bf16.msra.mxu0 0
        %6440 = vmatprep.subr.bf16.mxu0 0
        %6441 = vmatpush1.bf16.msra.mxu0 0
        %6442 = vmatprep.mubr.bf16.mxu0 0
        %6443 = vmatmul.mubr.bf16.gmra.mrb[0].mxu0 %v6355
        %v6444 = vpop.f32.mrb[0].mxu0
        %v6445 = vadd.f32 0.0, %v6444
        %v6446 = vpop.f32.mrb[0].mxu0
        %v6447 = vadd.f32 0.0, %v6446
        %v6448 = vpop.f32.mrb[0].mxu0
        %v6449 = vpop.f32.mrb[0].mxu0
        %6450 = vdwg.mxu0
        %v6451 = vadd.f32 %v6279, %v6404
        %v6452 = vadd.f32 %v6280, %v6406
        %v6453 = vadd.f32 %v6281, %v6445
        %v6454 = vadd.f32 %v6282, %v6447
        %v6455 = vld [vmem:[%s1761] sm:$0xf]
        %vm6456 = vcmp.gt.f32.partialorder %v6455, 0.5
        %v6457 = vsel %vm6456, 1, 0
        %v6458 = vlaneseq
        %v6459 = vshrl.u32 %v6458, 7
        %v6460 = vsub.s32 0, %v6459
        %v6461 = vrot.slane %v6457, %v6460
        %v6462 = vlaneseq
        %v6463 = vshrl.u32 %v6462, 7
        %v6464 = vsub.s32 1, %v6463
        %v6465 = vrot.slane %v6457, %v6464
        %v6466 = vlaneseq
        %v6467 = vshrl.u32 %v6466, 7
        %v6468 = vsub.s32 2, %v6467
        %v6469 = vrot.slane %v6457, %v6468
        %v6470 = vlaneseq
        %v6471 = vshrl.u32 %v6470, 7
        %v6472 = vsub.s32 3, %v6471
        %v6473 = vrot.slane %v6457, %v6472
        %vm6474 = vcmp.eq.s32.totalorder %v6461, 1
        %vm6475 = vcmp.eq.s32.totalorder %v6465, 1
        %vm6476 = vcmp.eq.s32.totalorder %v6469, 1
        %vm6477 = vcmp.eq.s32.totalorder %v6473, 1
        %vm6478 = vmpackc.low %vm6475, %vm6474
        %vm6479 = vmpackc.low %vm6477, %vm6476
        %v6480 = vsel %vm6478, 65537, 0
        %v6481 = vsel %vm6479, 65537, 0
        %6482 = vrot.lane.b32.xlu0 %v6480, 119
        %v6483 = vpop.permute.xlu0 %6482
        %6484 = vrot.lane.b32.xlu0 %v6481, 119
        %v6485 = vpop.permute.xlu0 %6484
        %v6486 = vrot.slane %v6483, 4
        %v6487 = vrot.slane %v6485, 4
        %v6488 = vsel %vm1795, %v6486, %v6483
        %v6489 = vsel %vm237, %v6486, %v6487
        %v6490 = vsel %vm1795, %v6489, %v6485
        %vm6491 = vcmp.ne.s16.totalorder %v6488, 0
        %vm6492 = vcmp.ne.s16.totalorder %v6490, 0
        %vm6493 = vcmp.ne.s16.totalorder %v6487, 0
        %v6494 = vsel %vm6491, %v4913, 0
        %v6495 = vsel %vm6492, %v4914, 0
        %v6496 = vsel %vm6493, %v4915, 0
        %s6497 = scalar_lea.vmem %s3, 36
        %v6498 = vld [vmem:[%s6497] sm:$0xf]
        %v6502 = vunpack.c.l.b16 %v6494
        %v6503 = vunpack.c.h.b16 %v6494
        %v6504 = vunpack.c.l.b16 %v6495
        %v6505 = vunpack.c.h.b16 %v6495
        %v6506 = vunpack.c.l.b16 %v6496
        %v6507 = vpack.c.b16 %v6502, %v6502
        %v6508 = vpack.c.b16 %v6503, %v6503
        %v6509 = vpack.c.b16 %v6504, %v6504
        %v6510 = vpack.c.b16 %v6505, %v6505
        %v6511 = vpack.c.b16 %v6506, %v6506
        %6512 = vrot.lane.b32.xlu0 %v6507, 9
        %v6513 = vpop.permute.xlu0 %6512
        %6514 = vrot.lane.b32.xlu0 %v6508, 9
        %v6515 = vpop.permute.xlu0 %6514
        %6516 = vrot.lane.b32.xlu0 %v6509, 9
        %v6517 = vpop.permute.xlu0 %6516
        %6518 = vrot.lane.b32.xlu0 %v6510, 9
        %v6519 = vpop.permute.xlu0 %6518
        %6520 = vrot.lane.b32.xlu0 %v6511, 9
        %v6521 = vpop.permute.xlu0 %6520
        %v6522 = vsel %vm1830, %v6513, %v6515
        %v6523 = vsel %vm1830, %v6515, %v6517
        %v6524 = vsel %vm1830, %v6517, %v6519
        %v6525 = vsel %vm1830, %v6519, %v6521
        %v6527 = vsel %vm321, %v6498, 0
        %v6530 = vsel %vm325, %v6522, 0
        %v6533 = vsel %vm325, %v6523, 0
        %v6536 = vsel %vm325, %v6524, 0
        %v6539 = vsel %vm325, %v6525, 0
        %6541 = vmatprep.subr.bf16.mxu0 %v6533
        %6542 = vmatpush1.bf16.msra.mxu0 %v6530
        %6543 = vmatprep.subr.bf16.mxu0 0
        %6544 = vmatpush1.bf16.msra.mxu0 0
        %6545 = vmatprep.subr.bf16.mxu0 0
        %6546 = vmatpush1.bf16.msra.mxu0 0
        %6547 = vmatprep.subr.bf16.mxu0 0
        %6548 = vmatpush1.bf16.msra.mxu0 0
        %6549 = vmatprep.subr.bf16.mxu0 0
        %6550 = vmatpush1.bf16.msra.mxu0 0
        %6551 = vmatprep.subr.bf16.mxu0 0
        %6552 = vmatpush1.bf16.msra.mxu0 0
        %6553 = vmatprep.subr.bf16.mxu0 0
        %6554 = vmatpush1.bf16.msra.mxu0 0
        %6555 = vmatprep.subr.bf16.mxu0 0
        %6556 = vmatpush1.bf16.msra.mxu0 0
        %6557 = vmatprep.subr.bf16.mxu0 0
        %6558 = vmatpush1.bf16.msra.mxu0 0
        %6559 = vmatprep.subr.bf16.mxu0 0
        %6560 = vmatpush1.bf16.msra.mxu0 0
        %6561 = vmatprep.subr.bf16.mxu0 0
        %6562 = vmatpush1.bf16.msra.mxu0 0
        %6563 = vmatprep.subr.bf16.mxu0 0
        %6564 = vmatpush1.bf16.msra.mxu0 0
        %6565 = vmatprep.subr.bf16.mxu0 0
        %6566 = vmatpush1.bf16.msra.mxu0 0
        %6567 = vmatprep.subr.bf16.mxu0 0
        %6568 = vmatpush1.bf16.msra.mxu0 0
        %6569 = vmatprep.subr.bf16.mxu0 0
        %6570 = vmatpush1.bf16.msra.mxu0 0
        %6571 = vmatprep.subr.bf16.mxu0 0
        %6572 = vmatpush1.bf16.msra.mxu0 0
        %6573 = vmatprep.mubr.bf16.mxu0 0
        %6574 = vmatmul.mubr.bf16.gmra.mrb[0].mxu0 %v6527
        %v6575 = vpop.f32.mrb[0].mxu0
        %v6576 = vadd.f32 0.0, %v6575
        %v6577 = vpop.f32.mrb[0].mxu0
        %v6578 = vadd.f32 0.0, %v6577
        %v6579 = vpop.f32.mrb[0].mxu0
        %v6580 = vpop.f32.mrb[0].mxu0
        %6581 = vdwg.mxu0
        %6582 = vmatprep.subr.bf16.mxu0 %v6539
        %6583 = vmatpush1.bf16.msra.mxu0 %v6536
        %6584 = vmatprep.subr.bf16.mxu0 0
        %6585 = vmatpush1.bf16.msra.mxu0 0
        %6586 = vmatprep.subr.bf16.mxu0 0
        %6587 = vmatpush1.bf16.msra.mxu0 0
        %6588 = vmatprep.subr.bf16.mxu0 0
        %6589 = vmatpush1.bf16.msra.mxu0 0
        %6590 = vmatprep.subr.bf16.mxu0 0
        %6591 = vmatpush1.bf16.msra.mxu0 0
        %6592 = vmatprep.subr.bf16.mxu0 0
        %6593 = vmatpush1.bf16.msra.mxu0 0
        %6594 = vmatprep.subr.bf16.mxu0 0
        %6595 = vmatpush1.bf16.msra.mxu0 0
        %6596 = vmatprep.subr.bf16.mxu0 0
        %6597 = vmatpush1.bf16.msra.mxu0 0
        %6598 = vmatprep.subr.bf16.mxu0 0
        %6599 = vmatpush1.bf16.msra.mxu0 0
        %6600 = vmatprep.subr.bf16.mxu0 0
        %6601 = vmatpush1.bf16.msra.mxu0 0
        %6602 = vmatprep.subr.bf16.mxu0 0
        %6603 = vmatpush1.bf16.msra.mxu0 0
        %6604 = vmatprep.subr.bf16.mxu0 0
        %6605 = vmatpush1.bf16.msra.mxu0 0
        %6606 = vmatprep.subr.bf16.mxu0 0
        %6607 = vmatpush1.bf16.msra.mxu0 0
        %6608 = vmatprep.subr.bf16.mxu0 0
        %6609 = vmatpush1.bf16.msra.mxu0 0
        %6610 = vmatprep.subr.bf16.mxu0 0
        %6611 = vmatpush1.bf16.msra.mxu0 0
        %6612 = vmatprep.subr.bf16.mxu0 0
        %6613 = vmatpush1.bf16.msra.mxu0 0
        %6614 = vmatprep.mubr.bf16.mxu0 0
        %6615 = vmatmul.mubr.bf16.gmra.mrb[0].mxu0 %v6527
        %v6616 = vpop.f32.mrb[0].mxu0
        %v6617 = vadd.f32 0.0, %v6616
        %v6618 = vpop.f32.mrb[0].mxu0
        %v6619 = vadd.f32 0.0, %v6618
        %v6620 = vpop.f32.mrb[0].mxu0
        %v6621 = vpop.f32.mrb[0].mxu0
        %6622 = vdwg.mxu0
        %v6623 = vadd.f32 %v6451, %v6576
        %v6624 = vadd.f32 %v6452, %v6578
        %v6625 = vadd.f32 %v6453, %v6617
        %v6626 = vadd.f32 %v6454, %v6619
        %v6627 = vld [vmem:[%s1936] sm:$0xf]
        %vm6628 = vcmp.gt.f32.partialorder %v6627, 0.5
        %v6629 = vsel %vm6628, 1, 0
        %v6630 = vlaneseq
        %v6631 = vshrl.u32 %v6630, 7
        %v6632 = vsub.s32 0, %v6631
        %v6633 = vrot.slane %v6629, %v6632
        %v6634 = vlaneseq
        %v6635 = vshrl.u32 %v6634, 7
        %v6636 = vsub.s32 1, %v6635
        %v6637 = vrot.slane %v6629, %v6636
        %v6638 = vlaneseq
        %v6639 = vshrl.u32 %v6638, 7
        %v6640 = vsub.s32 2, %v6639
        %v6641 = vrot.slane %v6629, %v6640
        %v6642 = vlaneseq
        %v6643 = vshrl.u32 %v6642, 7
        %v6644 = vsub.s32 3, %v6643
        %v6645 = vrot.slane %v6629, %v6644
        %vm6646 = vcmp.eq.s32.totalorder %v6633, 1
        %vm6647 = vcmp.eq.s32.totalorder %v6637, 1
        %vm6648 = vcmp.eq.s32.totalorder %v6641, 1
        %vm6649 = vcmp.eq.s32.totalorder %v6645, 1
        %vm6650 = vmpackc.low %vm6647, %vm6646
        %vm6651 = vmpackc.low %vm6649, %vm6648
        %v6652 = vsel %vm6650, 65537, 0
        %v6653 = vsel %vm6651, 65537, 0
        %6654 = vrot.lane.b32.xlu0 %v6652, 120
        %v6655 = vpop.permute.xlu0 %6654
        %6656 = vrot.lane.b32.xlu0 %v6653, 120
        %v6657 = vpop.permute.xlu0 %6656
        %v6658 = vrot.slane %v6655, 4
        %v6659 = vrot.slane %v6657, 4
        %v6660 = vsel %vm1970, %v6658, %v6655
        %v6661 = vsel %vm237, %v6658, %v6659
        %v6662 = vsel %vm1970, %v6661, %v6657
        %vm6663 = vcmp.ne.s16.totalorder %v6660, 0
        %vm6664 = vcmp.ne.s16.totalorder %v6662, 0
        %vm6665 = vcmp.ne.s16.totalorder %v6659, 0
        %v6666 = vsel %vm6663, %v4913, 0
        %v6667 = vsel %vm6664, %v4914, 0
        %v6668 = vsel %vm6665, %v4915, 0
        %s6669 = scalar_lea.vmem %s3, 40
        %v6670 = vld [vmem:[%s6669] sm:$0xf]
        %v6674 = vunpack.c.l.b16 %v6666
        %v6675 = vunpack.c.h.b16 %v6666
        %v6676 = vunpack.c.l.b16 %v6667
        %v6677 = vunpack.c.h.b16 %v6667
        %v6678 = vunpack.c.l.b16 %v6668
        %v6679 = vpack.c.b16 %v6674, %v6674
        %v6680 = vpack.c.b16 %v6675, %v6675
        %v6681 = vpack.c.b16 %v6676, %v6676
        %v6682 = vpack.c.b16 %v6677, %v6677
        %v6683 = vpack.c.b16 %v6678, %v6678
        %6684 = vrot.lane.b32.xlu0 %v6679, 8
        %v6685 = vpop.permute.xlu0 %6684
        %6686 = vrot.lane.b32.xlu0 %v6680, 8
        %v6687 = vpop.permute.xlu0 %6686
        %6688 = vrot.lane.b32.xlu0 %v6681, 8
        %v6689 = vpop.permute.xlu0 %6688
        %6690 = vrot.lane.b32.xlu0 %v6682, 8
        %v6691 = vpop.permute.xlu0 %6690
        %6692 = vrot.lane.b32.xlu0 %v6683, 8
        %v6693 = vpop.permute.xlu0 %6692
        %v6694 = vsel %vm2005, %v6685, %v6687
        %v6695 = vsel %vm2005, %v6687, %v6689
        %v6696 = vsel %vm2005, %v6689, %v6691
        %v6697 = vsel %vm2005, %v6691, %v6693
        %v6699 = vsel %vm321, %v6670, 0
        %v6702 = vsel %vm325, %v6694, 0
        %v6705 = vsel %vm325, %v6695, 0
        %v6708 = vsel %vm325, %v6696, 0
        %v6711 = vsel %vm325, %v6697, 0
        %6713 = vmatprep.subr.bf16.mxu0 %v6705
        %6714 = vmatpush1.bf16.msra.mxu0 %v6702
        %6715 = vmatprep.subr.bf16.mxu0 0
        %6716 = vmatpush1.bf16.msra.mxu0 0
        %6717 = vmatprep.subr.bf16.mxu0 0
        %6718 = vmatpush1.bf16.msra.mxu0 0
        %6719 = vmatprep.subr.bf16.mxu0 0
        %6720 = vmatpush1.bf16.msra.mxu0 0
        %6721 = vmatprep.subr.bf16.mxu0 0
        %6722 = vmatpush1.bf16.msra.mxu0 0
        %6723 = vmatprep.subr.bf16.mxu0 0
        %6724 = vmatpush1.bf16.msra.mxu0 0
        %6725 = vmatprep.subr.bf16.mxu0 0
        %6726 = vmatpush1.bf16.msra.mxu0 0
        %6727 = vmatprep.subr.bf16.mxu0 0
        %6728 = vmatpush1.bf16.msra.mxu0 0
        %6729 = vmatprep.subr.bf16.mxu0 0
        %6730 = vmatpush1.bf16.msra.mxu0 0
        %6731 = vmatprep.subr.bf16.mxu0 0
        %6732 = vmatpush1.bf16.msra.mxu0 0
        %6733 = vmatprep.subr.bf16.mxu0 0
        %6734 = vmatpush1.bf16.msra.mxu0 0
        %6735 = vmatprep.subr.bf16.mxu0 0
        %6736 = vmatpush1.bf16.msra.mxu0 0
        %6737 = vmatprep.subr.bf16.mxu0 0
        %6738 = vmatpush1.bf16.msra.mxu0 0
        %6739 = vmatprep.subr.bf16.mxu0 0
        %6740 = vmatpush1.bf16.msra.mxu0 0
        %6741 = vmatprep.subr.bf16.mxu0 0
        %6742 = vmatpush1.bf16.msra.mxu0 0
        %6743 = vmatprep.subr.bf16.mxu0 0
        %6744 = vmatpush1.bf16.msra.mxu0 0
        %6745 = vmatprep.mubr.bf16.mxu0 0
        %6746 = vmatmul.mubr.bf16.gmra.mrb[0].mxu0 %v6699
        %v6747 = vpop.f32.mrb[0].mxu0
        %v6748 = vadd.f32 0.0, %v6747
        %v6749 = vpop.f32.mrb[0].mxu0
        %v6750 = vadd.f32 0.0, %v6749
        %v6751 = vpop.f32.mrb[0].mxu0
        %v6752 = vpop.f32.mrb[0].mxu0
        %6753 = vdwg.mxu0
        %6754 = vmatprep.subr.bf16.mxu0 %v6711
        %6755 = vmatpush1.bf16.msra.mxu0 %v6708
        %6756 = vmatprep.subr.bf16.mxu0 0
        %6757 = vmatpush1.bf16.msra.mxu0 0
        %6758 = vmatprep.subr.bf16.mxu0 0
        %6759 = vmatpush1.bf16.msra.mxu0 0
        %6760 = vmatprep.subr.bf16.mxu0 0
        %6761 = vmatpush1.bf16.msra.mxu0 0
        %6762 = vmatprep.subr.bf16.mxu0 0
        %6763 = vmatpush1.bf16.msra.mxu0 0
        %6764 = vmatprep.subr.bf16.mxu0 0
        %6765 = vmatpush1.bf16.msra.mxu0 0
        %6766 = vmatprep.subr.bf16.mxu0 0
        %6767 = vmatpush1.bf16.msra.mxu0 0
        %6768 = vmatprep.subr.bf16.mxu0 0
        %6769 = vmatpush1.bf16.msra.mxu0 0
        %6770 = vmatprep.subr.bf16.mxu0 0
        %6771 = vmatpush1.bf16.msra.mxu0 0
        %6772 = vmatprep.subr.bf16.mxu0 0
        %6773 = vmatpush1.bf16.msra.mxu0 0
        %6774 = vmatprep.subr.bf16.mxu0 0
        %6775 = vmatpush1.bf16.msra.mxu0 0
        %6776 = vmatprep.subr.bf16.mxu0 0
        %6777 = vmatpush1.bf16.msra.mxu0 0
        %6778 = vmatprep.subr.bf16.mxu0 0
        %6779 = vmatpush1.bf16.msra.mxu0 0
        %6780 = vmatprep.subr.bf16.mxu0 0
        %6781 = vmatpush1.bf16.msra.mxu0 0
        %6782 = vmatprep.subr.bf16.mxu0 0
        %6783 = vmatpush1.bf16.msra.mxu0 0
        %6784 = vmatprep.subr.bf16.mxu0 0
        %6785 = vmatpush1.bf16.msra.mxu0 0
        %6786 = vmatprep.mubr.bf16.mxu0 0
        %6787 = vmatmul.mubr.bf16.gmra.mrb[0].mxu0 %v6699
        %v6788 = vpop.f32.mrb[0].mxu0
        %v6789 = vadd.f32 0.0, %v6788
        %v6790 = vpop.f32.mrb[0].mxu0
        %v6791 = vadd.f32 0.0, %v6790
        %v6792 = vpop.f32.mrb[0].mxu0
        %v6793 = vpop.f32.mrb[0].mxu0
        %6794 = vdwg.mxu0
        %v6795 = vadd.f32 %v6623, %v6748
        %v6796 = vadd.f32 %v6624, %v6750
        %v6797 = vadd.f32 %v6625, %v6789
        %v6798 = vadd.f32 %v6626, %v6791
        %v6799 = vld [vmem:[%s2111] sm:$0xf]
        %vm6800 = vcmp.gt.f32.partialorder %v6799, 0.5
        %v6801 = vsel %vm6800, 1, 0
        %v6802 = vlaneseq
        %v6803 = vshrl.u32 %v6802, 7
        %v6804 = vsub.s32 0, %v6803
        %v6805 = vrot.slane %v6801, %v6804
        %v6806 = vlaneseq
        %v6807 = vshrl.u32 %v6806, 7
        %v6808 = vsub.s32 1, %v6807
        %v6809 = vrot.slane %v6801, %v6808
        %v6810 = vlaneseq
        %v6811 = vshrl.u32 %v6810, 7
        %v6812 = vsub.s32 2, %v6811
        %v6813 = vrot.slane %v6801, %v6812
        %v6814 = vlaneseq
        %v6815 = vshrl.u32 %v6814, 7
        %v6816 = vsub.s32 3, %v6815
        %v6817 = vrot.slane %v6801, %v6816
        %vm6818 = vcmp.eq.s32.totalorder %v6805, 1
        %vm6819 = vcmp.eq.s32.totalorder %v6809, 1
        %vm6820 = vcmp.eq.s32.totalorder %v6813, 1
        %vm6821 = vcmp.eq.s32.totalorder %v6817, 1
        %vm6822 = vmpackc.low %vm6819, %vm6818
        %vm6823 = vmpackc.low %vm6821, %vm6820
        %v6824 = vsel %vm6822, 65537, 0
        %v6825 = vsel %vm6823, 65537, 0
        %6826 = vrot.lane.b32.xlu0 %v6824, 121
        %v6827 = vpop.permute.xlu0 %6826
        %6828 = vrot.lane.b32.xlu0 %v6825, 121
        %v6829 = vpop.permute.xlu0 %6828
        %v6830 = vrot.slane %v6827, 4
        %v6831 = vrot.slane %v6829, 4
        %v6832 = vsel %vm2145, %v6830, %v6827
        %v6833 = vsel %vm237, %v6830, %v6831
        %v6834 = vsel %vm2145, %v6833, %v6829
        %vm6835 = vcmp.ne.s16.totalorder %v6832, 0
        %vm6836 = vcmp.ne.s16.totalorder %v6834, 0
        %vm6837 = vcmp.ne.s16.totalorder %v6831, 0
        %v6838 = vsel %vm6835, %v4913, 0
        %v6839 = vsel %vm6836, %v4914, 0
        %v6840 = vsel %vm6837, %v4915, 0
        %s6841 = scalar_lea.vmem %s3, 44
        %v6842 = vld [vmem:[%s6841] sm:$0xf]
        %v6846 = vunpack.c.l.b16 %v6838
        %v6847 = vunpack.c.h.b16 %v6838
        %v6848 = vunpack.c.l.b16 %v6839
        %v6849 = vunpack.c.h.b16 %v6839
        %v6850 = vunpack.c.l.b16 %v6840
        %v6851 = vpack.c.b16 %v6846, %v6846
        %v6852 = vpack.c.b16 %v6847, %v6847
        %v6853 = vpack.c.b16 %v6848, %v6848
        %v6854 = vpack.c.b16 %v6849, %v6849
        %v6855 = vpack.c.b16 %v6850, %v6850
        %6856 = vrot.lane.b32.xlu0 %v6851, 7
        %v6857 = vpop.permute.xlu0 %6856
        %6858 = vrot.lane.b32.xlu0 %v6852, 7
        %v6859 = vpop.permute.xlu0 %6858
        %6860 = vrot.lane.b32.xlu0 %v6853, 7
        %v6861 = vpop.permute.xlu0 %6860
        %6862 = vrot.lane.b32.xlu0 %v6854, 7
        %v6863 = vpop.permute.xlu0 %6862
        %6864 = vrot.lane.b32.xlu0 %v6855, 7
        %v6865 = vpop.permute.xlu0 %6864
        %v6866 = vsel %vm2180, %v6857, %v6859
        %v6867 = vsel %vm2180, %v6859, %v6861
        %v6868 = vsel %vm2180, %v6861, %v6863
        %v6869 = vsel %vm2180, %v6863, %v6865
        %v6871 = vsel %vm321, %v6842, 0
        %v6874 = vsel %vm325, %v6866, 0
        %v6877 = vsel %vm325, %v6867, 0
        %v6880 = vsel %vm325, %v6868, 0
        %v6883 = vsel %vm325, %v6869, 0
        %6885 = vmatprep.subr.bf16.mxu0 %v6877
        %6886 = vmatpush1.bf16.msra.mxu0 %v6874
        %6887 = vmatprep.subr.bf16.mxu0 0
        %6888 = vmatpush1.bf16.msra.mxu0 0
        %6889 = vmatprep.subr.bf16.mxu0 0
        %6890 = vmatpush1.bf16.msra.mxu0 0
        %6891 = vmatprep.subr.bf16.mxu0 0
        %6892 = vmatpush1.bf16.msra.mxu0 0
        %6893 = vmatprep.subr.bf16.mxu0 0
        %6894 = vmatpush1.bf16.msra.mxu0 0
        %6895 = vmatprep.subr.bf16.mxu0 0
        %6896 = vmatpush1.bf16.msra.mxu0 0
        %6897 = vmatprep.subr.bf16.mxu0 0
        %6898 = vmatpush1.bf16.msra.mxu0 0
        %6899 = vmatprep.subr.bf16.mxu0 0
        %6900 = vmatpush1.bf16.msra.mxu0 0
        %6901 = vmatprep.subr.bf16.mxu0 0
        %6902 = vmatpush1.bf16.msra.mxu0 0
        %6903 = vmatprep.subr.bf16.mxu0 0
        %6904 = vmatpush1.bf16.msra.mxu0 0
        %6905 = vmatprep.subr.bf16.mxu0 0
        %6906 = vmatpush1.bf16.msra.mxu0 0
        %6907 = vmatprep.subr.bf16.mxu0 0
        %6908 = vmatpush1.bf16.msra.mxu0 0
        %6909 = vmatprep.subr.bf16.mxu0 0
        %6910 = vmatpush1.bf16.msra.mxu0 0
        %6911 = vmatprep.subr.bf16.mxu0 0
        %6912 = vmatpush1.bf16.msra.mxu0 0
        %6913 = vmatprep.subr.bf16.mxu0 0
        %6914 = vmatpush1.bf16.msra.mxu0 0
        %6915 = vmatprep.subr.bf16.mxu0 0
        %6916 = vmatpush1.bf16.msra.mxu0 0
        %6917 = vmatprep.mubr.bf16.mxu0 0
        %6918 = vmatmul.mubr.bf16.gmra.mrb[0].mxu0 %v6871
        %v6919 = vpop.f32.mrb[0].mxu0
        %v6920 = vadd.f32 0.0, %v6919
        %v6921 = vpop.f32.mrb[0].mxu0
        %v6922 = vadd.f32 0.0, %v6921
        %v6923 = vpop.f32.mrb[0].mxu0
        %v6924 = vpop.f32.mrb[0].mxu0
        %6925 = vdwg.mxu0
        %6926 = vmatprep.subr.bf16.mxu0 %v6883
        %6927 = vmatpush1.bf16.msra.mxu0 %v6880
        %6928 = vmatprep.subr.bf16.mxu0 0
        %6929 = vmatpush1.bf16.msra.mxu0 0
        %6930 = vmatprep.subr.bf16.mxu0 0
        %6931 = vmatpush1.bf16.msra.mxu0 0
        %6932 = vmatprep.subr.bf16.mxu0 0
        %6933 = vmatpush1.bf16.msra.mxu0 0
        %6934 = vmatprep.subr.bf16.mxu0 0
        %6935 = vmatpush1.bf16.msra.mxu0 0
        %6936 = vmatprep.subr.bf16.mxu0 0
        %6937 = vmatpush1.bf16.msra.mxu0 0
        %6938 = vmatprep.subr.bf16.mxu0 0
        %6939 = vmatpush1.bf16.msra.mxu0 0
        %6940 = vmatprep.subr.bf16.mxu0 0
        %6941 = vmatpush1.bf16.msra.mxu0 0
        %6942 = vmatprep.subr.bf16.mxu0 0
        %6943 = vmatpush1.bf16.msra.mxu0 0
        %6944 = vmatprep.subr.bf16.mxu0 0
        %6945 = vmatpush1.bf16.msra.mxu0 0
        %6946 = vmatprep.subr.bf16.mxu0 0
        %6947 = vmatpush1.bf16.msra.mxu0 0
        %6948 = vmatprep.subr.bf16.mxu0 0
        %6949 = vmatpush1.bf16.msra.mxu0 0
        %6950 = vmatprep.subr.bf16.mxu0 0
        %6951 = vmatpush1.bf16.msra.mxu0 0
        %6952 = vmatprep.subr.bf16.mxu0 0
        %6953 = vmatpush1.bf16.msra.mxu0 0
        %6954 = vmatprep.subr.bf16.mxu0 0
        %6955 = vmatpush1.bf16.msra.mxu0 0
        %6956 = vmatprep.subr.bf16.mxu0 0
        %6957 = vmatpush1.bf16.msra.mxu0 0
        %6958 = vmatprep.mubr.bf16.mxu0 0
        %6959 = vmatmul.mubr.bf16.gmra.mrb[0].mxu0 %v6871
        %v6960 = vpop.f32.mrb[0].mxu0
        %v6961 = vadd.f32 0.0, %v6960
        %v6962 = vpop.f32.mrb[0].mxu0
        %v6963 = vadd.f32 0.0, %v6962
        %v6964 = vpop.f32.mrb[0].mxu0
        %v6965 = vpop.f32.mrb[0].mxu0
        %6966 = vdwg.mxu0
        %v6967 = vadd.f32 %v6795, %v6920
        %v6968 = vadd.f32 %v6796, %v6922
        %v6969 = vadd.f32 %v6797, %v6961
        %v6970 = vadd.f32 %v6798, %v6963
        %v6971 = vld [vmem:[%s2286] sm:$0xf]
        %vm6972 = vcmp.gt.f32.partialorder %v6971, 0.5
        %v6973 = vsel %vm6972, 1, 0
        %v6974 = vlaneseq
        %v6975 = vshrl.u32 %v6974, 7
        %v6976 = vsub.s32 0, %v6975
        %v6977 = vrot.slane %v6973, %v6976
        %v6978 = vlaneseq
        %v6979 = vshrl.u32 %v6978, 7
        %v6980 = vsub.s32 1, %v6979
        %v6981 = vrot.slane %v6973, %v6980
        %v6982 = vlaneseq
        %v6983 = vshrl.u32 %v6982, 7
        %v6984 = vsub.s32 2, %v6983
        %v6985 = vrot.slane %v6973, %v6984
        %v6986 = vlaneseq
        %v6987 = vshrl.u32 %v6986, 7
        %v6988 = vsub.s32 3, %v6987
        %v6989 = vrot.slane %v6973, %v6988
        %vm6990 = vcmp.eq.s32.totalorder %v6977, 1
        %vm6991 = vcmp.eq.s32.totalorder %v6981, 1
        %vm6992 = vcmp.eq.s32.totalorder %v6985, 1
        %vm6993 = vcmp.eq.s32.totalorder %v6989, 1
        %vm6994 = vmpackc.low %vm6991, %vm6990
        %vm6995 = vmpackc.low %vm6993, %vm6992
        %v6996 = vsel %vm6994, 65537, 0
        %v6997 = vsel %vm6995, 65537, 0
        %6998 = vrot.lane.b32.xlu0 %v6996, 127
        %v6999 = vpop.permute.xlu0 %6998
        %7000 = vrot.lane.b32.xlu0 %v6997, 127
        %v7001 = vpop.permute.xlu0 %7000
        %v7002 = vrot.slane %v6999, 4
        %v7003 = vrot.slane %v7001, 4
        %v7004 = vsel %vm2320, %v7002, %v6999
        %v7005 = vsel %vm237, %v7002, %v7003
        %v7006 = vsel %vm2320, %v7005, %v7001
        %vm7007 = vcmp.ne.s16.totalorder %v7004, 0
        %vm7008 = vcmp.ne.s16.totalorder %v7006, 0
        %vm7009 = vcmp.ne.s16.totalorder %v7003, 0
        %v7010 = vsel %vm7007, %v4913, 0
        %v7011 = vsel %vm7008, %v4914, 0
        %v7012 = vsel %vm7009, %v4915, 0
        %s7013 = scalar_lea.vmem %s3, 48
        %v7014 = vld [vmem:[%s7013] sm:$0xf]
        %v7018 = vunpack.c.l.b16 %v7010
        %v7019 = vunpack.c.h.b16 %v7010
        %v7020 = vunpack.c.l.b16 %v7011
        %v7021 = vunpack.c.h.b16 %v7011
        %v7022 = vunpack.c.l.b16 %v7012
        %v7023 = vpack.c.b16 %v7018, %v7018
        %v7024 = vpack.c.b16 %v7019, %v7019
        %v7025 = vpack.c.b16 %v7020, %v7020
        %v7026 = vpack.c.b16 %v7021, %v7021
        %v7027 = vpack.c.b16 %v7022, %v7022
        %7028 = vrot.lane.b32.xlu0 %v7023, 1
        %v7029 = vpop.permute.xlu0 %7028
        %7030 = vrot.lane.b32.xlu0 %v7024, 1
        %v7031 = vpop.permute.xlu0 %7030
        %7032 = vrot.lane.b32.xlu0 %v7025, 1
        %v7033 = vpop.permute.xlu0 %7032
        %7034 = vrot.lane.b32.xlu0 %v7026, 1
        %v7035 = vpop.permute.xlu0 %7034
        %7036 = vrot.lane.b32.xlu0 %v7027, 1
        %v7037 = vpop.permute.xlu0 %7036
        %v7038 = vsel %vm2355, %v7029, %v7031
        %v7039 = vsel %vm2355, %v7031, %v7033
        %v7040 = vsel %vm2355, %v7033, %v7035
        %v7041 = vsel %vm2355, %v7035, %v7037
        %v7043 = vsel %vm321, %v7014, 0
        %v7046 = vsel %vm325, %v7038, 0
        %v7049 = vsel %vm325, %v7039, 0
        %v7052 = vsel %vm325, %v7040, 0
        %v7055 = vsel %vm325, %v7041, 0
        %7057 = vmatprep.subr.bf16.mxu0 %v7049
        %7058 = vmatpush1.bf16.msra.mxu0 %v7046
        %7059 = vmatprep.subr.bf16.mxu0 0
        %7060 = vmatpush1.bf16.msra.mxu0 0
        %7061 = vmatprep.subr.bf16.mxu0 0
        %7062 = vmatpush1.bf16.msra.mxu0 0
        %7063 = vmatprep.subr.bf16.mxu0 0
        %7064 = vmatpush1.bf16.msra.mxu0 0
        %7065 = vmatprep.subr.bf16.mxu0 0
        %7066 = vmatpush1.bf16.msra.mxu0 0
        %7067 = vmatprep.subr.bf16.mxu0 0
        %7068 = vmatpush1.bf16.msra.mxu0 0
        %7069 = vmatprep.subr.bf16.mxu0 0
        %7070 = vmatpush1.bf16.msra.mxu0 0
        %7071 = vmatprep.subr.bf16.mxu0 0
        %7072 = vmatpush1.bf16.msra.mxu0 0
        %7073 = vmatprep.subr.bf16.mxu0 0
        %7074 = vmatpush1.bf16.msra.mxu0 0
        %7075 = vmatprep.subr.bf16.mxu0 0
        %7076 = vmatpush1.bf16.msra.mxu0 0
        %7077 = vmatprep.subr.bf16.mxu0 0
        %7078 = vmatpush1.bf16.msra.mxu0 0
        %7079 = vmatprep.subr.bf16.mxu0 0
        %7080 = vmatpush1.bf16.msra.mxu0 0
        %7081 = vmatprep.subr.bf16.mxu0 0
        %7082 = vmatpush1.bf16.msra.mxu0 0
        %7083 = vmatprep.subr.bf16.mxu0 0
        %7084 = vmatpush1.bf16.msra.mxu0 0
        %7085 = vmatprep.subr.bf16.mxu0 0
        %7086 = vmatpush1.bf16.msra.mxu0 0
        %7087 = vmatprep.subr.bf16.mxu0 0
        %7088 = vmatpush1.bf16.msra.mxu0 0
        %7089 = vmatprep.mubr.bf16.mxu0 0
        %7090 = vmatmul.mubr.bf16.gmra.mrb[0].mxu0 %v7043
        %v7091 = vpop.f32.mrb[0].mxu0
        %v7092 = vadd.f32 0.0, %v7091
        %v7093 = vpop.f32.mrb[0].mxu0
        %v7094 = vadd.f32 0.0, %v7093
        %v7095 = vpop.f32.mrb[0].mxu0
        %v7096 = vpop.f32.mrb[0].mxu0
        %7097 = vdwg.mxu0
        %7098 = vmatprep.subr.bf16.mxu0 %v7055
        %7099 = vmatpush1.bf16.msra.mxu0 %v7052
        %7100 = vmatprep.subr.bf16.mxu0 0
        %7101 = vmatpush1.bf16.msra.mxu0 0
        %7102 = vmatprep.subr.bf16.mxu0 0
        %7103 = vmatpush1.bf16.msra.mxu0 0
        %7104 = vmatprep.subr.bf16.mxu0 0
        %7105 = vmatpush1.bf16.msra.mxu0 0
        %7106 = vmatprep.subr.bf16.mxu0 0
        %7107 = vmatpush1.bf16.msra.mxu0 0
        %7108 = vmatprep.subr.bf16.mxu0 0
        %7109 = vmatpush1.bf16.msra.mxu0 0
        %7110 = vmatprep.subr.bf16.mxu0 0
        %7111 = vmatpush1.bf16.msra.mxu0 0
        %7112 = vmatprep.subr.bf16.mxu0 0
        %7113 = vmatpush1.bf16.msra.mxu0 0
        %7114 = vmatprep.subr.bf16.mxu0 0
        %7115 = vmatpush1.bf16.msra.mxu0 0
        %7116 = vmatprep.subr.bf16.mxu0 0
        %7117 = vmatpush1.bf16.msra.mxu0 0
        %7118 = vmatprep.subr.bf16.mxu0 0
        %7119 = vmatpush1.bf16.msra.mxu0 0
        %7120 = vmatprep.subr.bf16.mxu0 0
        %7121 = vmatpush1.bf16.msra.mxu0 0
        %7122 = vmatprep.subr.bf16.mxu0 0
        %7123 = vmatpush1.bf16.msra.mxu0 0
        %7124 = vmatprep.subr.bf16.mxu0 0
        %7125 = vmatpush1.bf16.msra.mxu0 0
        %7126 = vmatprep.subr.bf16.mxu0 0
        %7127 = vmatpush1.bf16.msra.mxu0 0
        %7128 = vmatprep.subr.bf16.mxu0 0
        %7129 = vmatpush1.bf16.msra.mxu0 0
        %7130 = vmatprep.mubr.bf16.mxu0 0
        %7131 = vmatmul.mubr.bf16.gmra.mrb[0].mxu0 %v7043
        %v7132 = vpop.f32.mrb[0].mxu0
        %v7133 = vadd.f32 0.0, %v7132
        %v7134 = vpop.f32.mrb[0].mxu0
        %v7135 = vadd.f32 0.0, %v7134
        %v7136 = vpop.f32.mrb[0].mxu0
        %v7137 = vpop.f32.mrb[0].mxu0
        %7138 = vdwg.mxu0
        %v7139 = vadd.f32 %v6967, %v7092
        %v7140 = vadd.f32 %v6968, %v7094
        %v7141 = vadd.f32 %v6969, %v7133
        %v7142 = vadd.f32 %v6970, %v7135
        %v7143 = vld [vmem:[#allocation2 + $0x4] sm:$0xff]
        %v7144 = vld [vmem:[#allocation2 + $0xc] sm:$0xff]
        %v7145 = vld [vmem:[%s2463] sm:$0xf]
        %vm7146 = vcmp.gt.f32.partialorder %v7145, 0.5
        %v7147 = vsel %vm7146, 1, 0
        %v7148 = vlaneseq
        %v7149 = vshrl.u32 %v7148, 7
        %v7150 = vsub.s32 0, %v7149
        %v7151 = vrot.slane %v7147, %v7150
        %v7152 = vlaneseq
        %v7153 = vshrl.u32 %v7152, 7
        %v7154 = vsub.s32 1, %v7153
        %v7155 = vrot.slane %v7147, %v7154
        %v7156 = vlaneseq
        %v7157 = vshrl.u32 %v7156, 7
        %v7158 = vsub.s32 2, %v7157
        %v7159 = vrot.slane %v7147, %v7158
        %v7160 = vlaneseq
        %v7161 = vshrl.u32 %v7160, 7
        %v7162 = vsub.s32 3, %v7161
        %v7163 = vrot.slane %v7147, %v7162
        %vm7164 = vcmp.eq.s32.totalorder %v7151, 1
        %vm7165 = vcmp.eq.s32.totalorder %v7155, 1
        %vm7166 = vcmp.eq.s32.totalorder %v7159, 1
        %vm7167 = vcmp.eq.s32.totalorder %v7163, 1
        %vm7168 = vmpackc.low %vm7165, %vm7164
        %vm7169 = vmpackc.low %vm7167, %vm7166
        %v7170 = vsel %vm7168, %v7143, 0
        %v7171 = vsel %vm7169, %v7144, 0
        %s7172 = scalar_lea.vmem %s3, 52
        %v7173 = vld [vmem:[%s7172] sm:$0xf]
        %v7176 = vunpack.c.l.b16 %v7170
        %v7177 = vunpack.c.h.b16 %v7170
        %v7178 = vunpack.c.l.b16 %v7171
        %v7179 = vunpack.c.h.b16 %v7171
        %v7180 = vpack.c.b16 %v7176, %v7176
        %v7181 = vpack.c.b16 %v7177, %v7177
        %v7182 = vpack.c.b16 %v7178, %v7178
        %v7183 = vpack.c.b16 %v7179, %v7179
        %v7185 = vsel %vm321, %v7173, 0
        %v7188 = vsel %vm325, %v7180, 0
        %v7191 = vsel %vm325, %v7181, 0
        %v7194 = vsel %vm325, %v7182, 0
        %v7197 = vsel %vm325, %v7183, 0
        %7199 = vmatprep.subr.bf16.mxu0 %v7191
        %7200 = vmatpush1.bf16.msra.mxu0 %v7188
        %7201 = vmatprep.subr.bf16.mxu0 0
        %7202 = vmatpush1.bf16.msra.mxu0 0
        %7203 = vmatprep.subr.bf16.mxu0 0
        %7204 = vmatpush1.bf16.msra.mxu0 0
        %7205 = vmatprep.subr.bf16.mxu0 0
        %7206 = vmatpush1.bf16.msra.mxu0 0
        %7207 = vmatprep.subr.bf16.mxu0 0
        %7208 = vmatpush1.bf16.msra.mxu0 0
        %7209 = vmatprep.subr.bf16.mxu0 0
        %7210 = vmatpush1.bf16.msra.mxu0 0
        %7211 = vmatprep.subr.bf16.mxu0 0
        %7212 = vmatpush1.bf16.msra.mxu0 0
        %7213 = vmatprep.subr.bf16.mxu0 0
        %7214 = vmatpush1.bf16.msra.mxu0 0
        %7215 = vmatprep.subr.bf16.mxu0 0
        %7216 = vmatpush1.bf16.msra.mxu0 0
        %7217 = vmatprep.subr.bf16.mxu0 0
        %7218 = vmatpush1.bf16.msra.mxu0 0
        %7219 = vmatprep.subr.bf16.mxu0 0
        %7220 = vmatpush1.bf16.msra.mxu0 0
        %7221 = vmatprep.subr.bf16.mxu0 0
        %7222 = vmatpush1.bf16.msra.mxu0 0
        %7223 = vmatprep.subr.bf16.mxu0 0
        %7224 = vmatpush1.bf16.msra.mxu0 0
        %7225 = vmatprep.subr.bf16.mxu0 0
        %7226 = vmatpush1.bf16.msra.mxu0 0
        %7227 = vmatprep.subr.bf16.mxu0 0
        %7228 = vmatpush1.bf16.msra.mxu0 0
        %7229 = vmatprep.subr.bf16.mxu0 0
        %7230 = vmatpush1.bf16.msra.mxu0 0
        %7231 = vmatprep.mubr.bf16.mxu0 0
        %7232 = vmatmul.mubr.bf16.gmra.mrb[0].mxu0 %v7185
        %v7233 = vpop.f32.mrb[0].mxu0
        %v7234 = vadd.f32 0.0, %v7233
        %v7235 = vpop.f32.mrb[0].mxu0
        %v7236 = vadd.f32 0.0, %v7235
        %v7237 = vpop.f32.mrb[0].mxu0
        %v7238 = vpop.f32.mrb[0].mxu0
        %7239 = vdwg.mxu0
        %7240 = vmatprep.subr.bf16.mxu0 %v7197
        %7241 = vmatpush1.bf16.msra.mxu0 %v7194
        %7242 = vmatprep.subr.bf16.mxu0 0
        %7243 = vmatpush1.bf16.msra.mxu0 0
        %7244 = vmatprep.subr.bf16.mxu0 0
        %7245 = vmatpush1.bf16.msra.mxu0 0
        %7246 = vmatprep.subr.bf16.mxu0 0
        %7247 = vmatpush1.bf16.msra.mxu0 0
        %7248 = vmatprep.subr.bf16.mxu0 0
        %7249 = vmatpush1.bf16.msra.mxu0 0
        %7250 = vmatprep.subr.bf16.mxu0 0
        %7251 = vmatpush1.bf16.msra.mxu0 0
        %7252 = vmatprep.subr.bf16.mxu0 0
        %7253 = vmatpush1.bf16.msra.mxu0 0
        %7254 = vmatprep.subr.bf16.mxu0 0
        %7255 = vmatpush1.bf16.msra.mxu0 0
        %7256 = vmatprep.subr.bf16.mxu0 0
        %7257 = vmatpush1.bf16.msra.mxu0 0
        %7258 = vmatprep.subr.bf16.mxu0 0
        %7259 = vmatpush1.bf16.msra.mxu0 0
        %7260 = vmatprep.subr.bf16.mxu0 0
        %7261 = vmatpush1.bf16.msra.mxu0 0
        %7262 = vmatprep.subr.bf16.mxu0 0
        %7263 = vmatpush1.bf16.msra.mxu0 0
        %7264 = vmatprep.subr.bf16.mxu0 0
        %7265 = vmatpush1.bf16.msra.mxu0 0
        %7266 = vmatprep.subr.bf16.mxu0 0
        %7267 = vmatpush1.bf16.msra.mxu0 0
        %7268 = vmatprep.subr.bf16.mxu0 0
        %7269 = vmatpush1.bf16.msra.mxu0 0
        %7270 = vmatprep.subr.bf16.mxu0 0
        %7271 = vmatpush1.bf16.msra.mxu0 0
        %7272 = vmatprep.mubr.bf16.mxu0 0
        %7273 = vmatmul.mubr.bf16.gmra.mrb[0].mxu0 %v7185
        %v7274 = vpop.f32.mrb[0].mxu0
        %v7275 = vadd.f32 0.0, %v7274
        %v7276 = vpop.f32.mrb[0].mxu0
        %v7277 = vadd.f32 0.0, %v7276
        %v7278 = vpop.f32.mrb[0].mxu0
        %v7279 = vpop.f32.mrb[0].mxu0
        %7280 = vdwg.mxu0
        %v7281 = vadd.f32 %v7139, %v7234
        %v7282 = vadd.f32 %v7140, %v7236
        %v7283 = vadd.f32 %v7141, %v7275
        %v7284 = vadd.f32 %v7142, %v7277
        %v7285 = vld [vmem:[#allocation2 + $0x4] sm:$0xff]
        %v7286 = vld [vmem:[#allocation2 + $0xc] sm:$0xff]
        %v7287 = vld [vmem:[#allocation2 + $0x14] sm:$0xf]
        %v7288 = vld [vmem:[%s2607] sm:$0xf]
        %vm7289 = vcmp.gt.f32.partialorder %v7288, 0.5
        %v7290 = vsel %vm7289, 1, 0
        %v7291 = vlaneseq
        %v7292 = vshrl.u32 %v7291, 7
        %v7293 = vsub.s32 0, %v7292
        %v7294 = vrot.slane %v7290, %v7293
        %v7295 = vlaneseq
        %v7296 = vshrl.u32 %v7295, 7
        %v7297 = vsub.s32 1, %v7296
        %v7298 = vrot.slane %v7290, %v7297
        %v7299 = vlaneseq
        %v7300 = vshrl.u32 %v7299, 7
        %v7301 = vsub.s32 2, %v7300
        %v7302 = vrot.slane %v7290, %v7301
        %v7303 = vlaneseq
        %v7304 = vshrl.u32 %v7303, 7
        %v7305 = vsub.s32 3, %v7304
        %v7306 = vrot.slane %v7290, %v7305
        %vm7307 = vcmp.eq.s32.totalorder %v7294, 1
        %vm7308 = vcmp.eq.s32.totalorder %v7298, 1
        %vm7309 = vcmp.eq.s32.totalorder %v7302, 1
        %vm7310 = vcmp.eq.s32.totalorder %v7306, 1
        %vm7311 = vmpackc.low %vm7308, %vm7307
        %vm7312 = vmpackc.low %vm7310, %vm7309
        %v7313 = vsel %vm7311, 65537, 0
        %v7314 = vsel %vm7312, 65537, 0
        %7315 = vrot.lane.b32.xlu0 %v7313, 1
        %v7316 = vpop.permute.xlu0 %7315
        %7317 = vrot.lane.b32.xlu0 %v7314, 1
        %v7318 = vpop.permute.xlu0 %7317
        %v7319 = vrot.slane %v7316, 4
        %v7320 = vrot.slane %v7318, 4
        %v7321 = vsel %vm2355, %v7319, %v7316
        %v7322 = vsel %vm237, %v7319, %v7320
        %v7323 = vsel %vm2355, %v7322, %v7318
        %vm7324 = vcmp.ne.s16.totalorder %v7321, 0
        %vm7325 = vcmp.ne.s16.totalorder %v7323, 0
        %vm7326 = vcmp.ne.s16.totalorder %v7320, 0
        %v7327 = vsel %vm7324, %v7285, 0
        %v7328 = vsel %vm7325, %v7286, 0
        %v7329 = vsel %vm7326, %v7287, 0
        %s7330 = scalar_lea.vmem %s3, 56
        %v7331 = vld [vmem:[%s7330] sm:$0xf]
        %v7335 = vunpack.c.l.b16 %v7327
        %v7336 = vunpack.c.h.b16 %v7327
        %v7337 = vunpack.c.l.b16 %v7328
        %v7338 = vunpack.c.h.b16 %v7328
        %v7339 = vunpack.c.l.b16 %v7329
        %v7340 = vpack.c.b16 %v7335, %v7335
        %v7341 = vpack.c.b16 %v7336, %v7336
        %v7342 = vpack.c.b16 %v7337, %v7337
        %v7343 = vpack.c.b16 %v7338, %v7338
        %v7344 = vpack.c.b16 %v7339, %v7339
        %7345 = vrot.lane.b32.xlu0 %v7340, 127
        %v7346 = vpop.permute.xlu0 %7345
        %7347 = vrot.lane.b32.xlu0 %v7341, 127
        %v7348 = vpop.permute.xlu0 %7347
        %7349 = vrot.lane.b32.xlu0 %v7342, 127
        %v7350 = vpop.permute.xlu0 %7349
        %7351 = vrot.lane.b32.xlu0 %v7343, 127
        %v7352 = vpop.permute.xlu0 %7351
        %7353 = vrot.lane.b32.xlu0 %v7344, 127
        %v7354 = vpop.permute.xlu0 %7353
        %v7355 = vsel %vm2320, %v7346, %v7348
        %v7356 = vsel %vm2320, %v7348, %v7350
        %v7357 = vsel %vm2320, %v7350, %v7352
        %v7358 = vsel %vm2320, %v7352, %v7354
        %v7360 = vsel %vm321, %v7331, 0
        %v7363 = vsel %vm325, %v7355, 0
        %v7366 = vsel %vm325, %v7356, 0
        %v7369 = vsel %vm325, %v7357, 0
        %v7372 = vsel %vm325, %v7358, 0
        %7374 = vmatprep.subr.bf16.mxu0 %v7366
        %7375 = vmatpush1.bf16.msra.mxu0 %v7363
        %7376 = vmatprep.subr.bf16.mxu0 0
        %7377 = vmatpush1.bf16.msra.mxu0 0
        %7378 = vmatprep.subr.bf16.mxu0 0
        %7379 = vmatpush1.bf16.msra.mxu0 0
        %7380 = vmatprep.subr.bf16.mxu0 0
        %7381 = vmatpush1.bf16.msra.mxu0 0
        %7382 = vmatprep.subr.bf16.mxu0 0
        %7383 = vmatpush1.bf16.msra.mxu0 0
        %7384 = vmatprep.subr.bf16.mxu0 0
        %7385 = vmatpush1.bf16.msra.mxu0 0
        %7386 = vmatprep.subr.bf16.mxu0 0
        %7387 = vmatpush1.bf16.msra.mxu0 0
        %7388 = vmatprep.subr.bf16.mxu0 0
        %7389 = vmatpush1.bf16.msra.mxu0 0
        %7390 = vmatprep.subr.bf16.mxu0 0
        %7391 = vmatpush1.bf16.msra.mxu0 0
        %7392 = vmatprep.subr.bf16.mxu0 0
        %7393 = vmatpush1.bf16.msra.mxu0 0
        %7394 = vmatprep.subr.bf16.mxu0 0
        %7395 = vmatpush1.bf16.msra.mxu0 0
        %7396 = vmatprep.subr.bf16.mxu0 0
        %7397 = vmatpush1.bf16.msra.mxu0 0
        %7398 = vmatprep.subr.bf16.mxu0 0
        %7399 = vmatpush1.bf16.msra.mxu0 0
        %7400 = vmatprep.subr.bf16.mxu0 0
        %7401 = vmatpush1.bf16.msra.mxu0 0
        %7402 = vmatprep.subr.bf16.mxu0 0
        %7403 = vmatpush1.bf16.msra.mxu0 0
        %7404 = vmatprep.subr.bf16.mxu0 0
        %7405 = vmatpush1.bf16.msra.mxu0 0
        %7406 = vmatprep.mubr.bf16.mxu0 0
        %7407 = vmatmul.mubr.bf16.gmra.mrb[0].mxu0 %v7360
        %v7408 = vpop.f32.mrb[0].mxu0
        %v7409 = vadd.f32 0.0, %v7408
        %v7410 = vpop.f32.mrb[0].mxu0
        %v7411 = vadd.f32 0.0, %v7410
        %v7412 = vpop.f32.mrb[0].mxu0
        %v7413 = vpop.f32.mrb[0].mxu0
        %7414 = vdwg.mxu0
        %7415 = vmatprep.subr.bf16.mxu0 %v7372
        %7416 = vmatpush1.bf16.msra.mxu0 %v7369
        %7417 = vmatprep.subr.bf16.mxu0 0
        %7418 = vmatpush1.bf16.msra.mxu0 0
        %7419 = vmatprep.subr.bf16.mxu0 0
        %7420 = vmatpush1.bf16.msra.mxu0 0
        %7421 = vmatprep.subr.bf16.mxu0 0
        %7422 = vmatpush1.bf16.msra.mxu0 0
        %7423 = vmatprep.subr.bf16.mxu0 0
        %7424 = vmatpush1.bf16.msra.mxu0 0
        %7425 = vmatprep.subr.bf16.mxu0 0
        %7426 = vmatpush1.bf16.msra.mxu0 0
        %7427 = vmatprep.subr.bf16.mxu0 0
        %7428 = vmatpush1.bf16.msra.mxu0 0
        %7429 = vmatprep.subr.bf16.mxu0 0
        %7430 = vmatpush1.bf16.msra.mxu0 0
        %7431 = vmatprep.subr.bf16.mxu0 0
        %7432 = vmatpush1.bf16.msra.mxu0 0
        %7433 = vmatprep.subr.bf16.mxu0 0
        %7434 = vmatpush1.bf16.msra.mxu0 0
        %7435 = vmatprep.subr.bf16.mxu0 0
        %7436 = vmatpush1.bf16.msra.mxu0 0
        %7437 = vmatprep.subr.bf16.mxu0 0
        %7438 = vmatpush1.bf16.msra.mxu0 0
        %7439 = vmatprep.subr.bf16.mxu0 0
        %7440 = vmatpush1.bf16.msra.mxu0 0
        %7441 = vmatprep.subr.bf16.mxu0 0
        %7442 = vmatpush1.bf16.msra.mxu0 0
        %7443 = vmatprep.subr.bf16.mxu0 0
        %7444 = vmatpush1.bf16.msra.mxu0 0
        %7445 = vmatprep.subr.bf16.mxu0 0
        %7446 = vmatpush1.bf16.msra.mxu0 0
        %7447 = vmatprep.mubr.bf16.mxu0 0
        %7448 = vmatmul.mubr.bf16.gmra.mrb[0].mxu0 %v7360
        %v7449 = vpop.f32.mrb[0].mxu0
        %v7450 = vadd.f32 0.0, %v7449
        %v7451 = vpop.f32.mrb[0].mxu0
        %v7452 = vadd.f32 0.0, %v7451
        %v7453 = vpop.f32.mrb[0].mxu0
        %v7454 = vpop.f32.mrb[0].mxu0
        %7455 = vdwg.mxu0
        %v7456 = vadd.f32 %v7281, %v7409
        %v7457 = vadd.f32 %v7282, %v7411
        %v7458 = vadd.f32 %v7283, %v7450
        %v7459 = vadd.f32 %v7284, %v7452
        %v7460 = vld [vmem:[%s2780] sm:$0xf]
        %vm7461 = vcmp.gt.f32.partialorder %v7460, 0.5
        %v7462 = vsel %vm7461, 1, 0
        %v7463 = vlaneseq
        %v7464 = vshrl.u32 %v7463, 7
        %v7465 = vsub.s32 0, %v7464
        %v7466 = vrot.slane %v7462, %v7465
        %v7467 = vlaneseq
        %v7468 = vshrl.u32 %v7467, 7
        %v7469 = vsub.s32 1, %v7468
        %v7470 = vrot.slane %v7462, %v7469
        %v7471 = vlaneseq
        %v7472 = vshrl.u32 %v7471, 7
        %v7473 = vsub.s32 2, %v7472
        %v7474 = vrot.slane %v7462, %v7473
        %v7475 = vlaneseq
        %v7476 = vshrl.u32 %v7475, 7
        %v7477 = vsub.s32 3, %v7476
        %v7478 = vrot.slane %v7462, %v7477
        %vm7479 = vcmp.eq.s32.totalorder %v7466, 1
        %vm7480 = vcmp.eq.s32.totalorder %v7470, 1
        %vm7481 = vcmp.eq.s32.totalorder %v7474, 1
        %vm7482 = vcmp.eq.s32.totalorder %v7478, 1
        %vm7483 = vmpackc.low %vm7480, %vm7479
        %vm7484 = vmpackc.low %vm7482, %vm7481
        %v7485 = vsel %vm7483, 65537, 0
        %v7486 = vsel %vm7484, 65537, 0
        %7487 = vrot.lane.b32.xlu0 %v7485, 7
        %v7488 = vpop.permute.xlu0 %7487
        %7489 = vrot.lane.b32.xlu0 %v7486, 7
        %v7490 = vpop.permute.xlu0 %7489
        %v7491 = vrot.slane %v7488, 4
        %v7492 = vrot.slane %v7490, 4
        %v7493 = vsel %vm2180, %v7491, %v7488
        %v7494 = vsel %vm237, %v7491, %v7492
        %v7495 = vsel %vm2180, %v7494, %v7490
        %vm7496 = vcmp.ne.s16.totalorder %v7493, 0
        %vm7497 = vcmp.ne.s16.totalorder %v7495, 0
        %vm7498 = vcmp.ne.s16.totalorder %v7492, 0
        %v7499 = vsel %vm7496, %v7285, 0
        %v7500 = vsel %vm7497, %v7286, 0
        %v7501 = vsel %vm7498, %v7287, 0
        %s7502 = scalar_lea.vmem %s3, 60
        %v7503 = vld [vmem:[%s7502] sm:$0xf]
        %v7507 = vunpack.c.l.b16 %v7499
        %v7508 = vunpack.c.h.b16 %v7499
        %v7509 = vunpack.c.l.b16 %v7500
        %v7510 = vunpack.c.h.b16 %v7500
        %v7511 = vunpack.c.l.b16 %v7501
        %v7512 = vpack.c.b16 %v7507, %v7507
        %v7513 = vpack.c.b16 %v7508, %v7508
        %v7514 = vpack.c.b16 %v7509, %v7509
        %v7515 = vpack.c.b16 %v7510, %v7510
        %v7516 = vpack.c.b16 %v7511, %v7511
        %7517 = vrot.lane.b32.xlu0 %v7512, 121
        %v7518 = vpop.permute.xlu0 %7517
        %7519 = vrot.lane.b32.xlu0 %v7513, 121
        %v7520 = vpop.permute.xlu0 %7519
        %7521 = vrot.lane.b32.xlu0 %v7514, 121
        %v7522 = vpop.permute.xlu0 %7521
        %7523 = vrot.lane.b32.xlu0 %v7515, 121
        %v7524 = vpop.permute.xlu0 %7523
        %7525 = vrot.lane.b32.xlu0 %v7516, 121
        %v7526 = vpop.permute.xlu0 %7525
        %v7527 = vsel %vm2145, %v7518, %v7520
        %v7528 = vsel %vm2145, %v7520, %v7522
        %v7529 = vsel %vm2145, %v7522, %v7524
        %v7530 = vsel %vm2145, %v7524, %v7526
        %v7532 = vsel %vm321, %v7503, 0
        %v7535 = vsel %vm325, %v7527, 0
        %v7538 = vsel %vm325, %v7528, 0
        %v7541 = vsel %vm325, %v7529, 0
        %v7544 = vsel %vm325, %v7530, 0
        %7546 = vmatprep.subr.bf16.mxu0 %v7538
        %7547 = vmatpush1.bf16.msra.mxu0 %v7535
        %7548 = vmatprep.subr.bf16.mxu0 0
        %7549 = vmatpush1.bf16.msra.mxu0 0
        %7550 = vmatprep.subr.bf16.mxu0 0
        %7551 = vmatpush1.bf16.msra.mxu0 0
        %7552 = vmatprep.subr.bf16.mxu0 0
        %7553 = vmatpush1.bf16.msra.mxu0 0
        %7554 = vmatprep.subr.bf16.mxu0 0
        %7555 = vmatpush1.bf16.msra.mxu0 0
        %7556 = vmatprep.subr.bf16.mxu0 0
        %7557 = vmatpush1.bf16.msra.mxu0 0
        %7558 = vmatprep.subr.bf16.mxu0 0
        %7559 = vmatpush1.bf16.msra.mxu0 0
        %7560 = vmatprep.subr.bf16.mxu0 0
        %7561 = vmatpush1.bf16.msra.mxu0 0
        %7562 = vmatprep.subr.bf16.mxu0 0
        %7563 = vmatpush1.bf16.msra.mxu0 0
        %7564 = vmatprep.subr.bf16.mxu0 0
        %7565 = vmatpush1.bf16.msra.mxu0 0
        %7566 = vmatprep.subr.bf16.mxu0 0
        %7567 = vmatpush1.bf16.msra.mxu0 0
        %7568 = vmatprep.subr.bf16.mxu0 0
        %7569 = vmatpush1.bf16.msra.mxu0 0
        %7570 = vmatprep.subr.bf16.mxu0 0
        %7571 = vmatpush1.bf16.msra.mxu0 0
        %7572 = vmatprep.subr.bf16.mxu0 0
        %7573 = vmatpush1.bf16.msra.mxu0 0
        %7574 = vmatprep.subr.bf16.mxu0 0
        %7575 = vmatpush1.bf16.msra.mxu0 0
        %7576 = vmatprep.subr.bf16.mxu0 0
        %7577 = vmatpush1.bf16.msra.mxu0 0
        %7578 = vmatprep.mubr.bf16.mxu0 0
        %7579 = vmatmul.mubr.bf16.gmra.mrb[0].mxu0 %v7532
        %v7580 = vpop.f32.mrb[0].mxu0
        %v7581 = vadd.f32 0.0, %v7580
        %v7582 = vpop.f32.mrb[0].mxu0
        %v7583 = vadd.f32 0.0, %v7582
        %v7584 = vpop.f32.mrb[0].mxu0
        %v7585 = vpop.f32.mrb[0].mxu0
        %7586 = vdwg.mxu0
        %7587 = vmatprep.subr.bf16.mxu0 %v7544
        %7588 = vmatpush1.bf16.msra.mxu0 %v7541
        %7589 = vmatprep.subr.bf16.mxu0 0
        %7590 = vmatpush1.bf16.msra.mxu0 0
        %7591 = vmatprep.subr.bf16.mxu0 0
        %7592 = vmatpush1.bf16.msra.mxu0 0
        %7593 = vmatprep.subr.bf16.mxu0 0
        %7594 = vmatpush1.bf16.msra.mxu0 0
        %7595 = vmatprep.subr.bf16.mxu0 0
        %7596 = vmatpush1.bf16.msra.mxu0 0
        %7597 = vmatprep.subr.bf16.mxu0 0
        %7598 = vmatpush1.bf16.msra.mxu0 0
        %7599 = vmatprep.subr.bf16.mxu0 0
        %7600 = vmatpush1.bf16.msra.mxu0 0
        %7601 = vmatprep.subr.bf16.mxu0 0
        %7602 = vmatpush1.bf16.msra.mxu0 0
        %7603 = vmatprep.subr.bf16.mxu0 0
        %7604 = vmatpush1.bf16.msra.mxu0 0
        %7605 = vmatprep.subr.bf16.mxu0 0
        %7606 = vmatpush1.bf16.msra.mxu0 0
        %7607 = vmatprep.subr.bf16.mxu0 0
        %7608 = vmatpush1.bf16.msra.mxu0 0
        %7609 = vmatprep.subr.bf16.mxu0 0
        %7610 = vmatpush1.bf16.msra.mxu0 0
        %7611 = vmatprep.subr.bf16.mxu0 0
        %7612 = vmatpush1.bf16.msra.mxu0 0
        %7613 = vmatprep.subr.bf16.mxu0 0
        %7614 = vmatpush1.bf16.msra.mxu0 0
        %7615 = vmatprep.subr.bf16.mxu0 0
        %7616 = vmatpush1.bf16.msra.mxu0 0
        %7617 = vmatprep.subr.bf16.mxu0 0
        %7618 = vmatpush1.bf16.msra.mxu0 0
        %7619 = vmatprep.mubr.bf16.mxu0 0
        %7620 = vmatmul.mubr.bf16.gmra.mrb[0].mxu0 %v7532
        %v7621 = vpop.f32.mrb[0].mxu0
        %v7622 = vadd.f32 0.0, %v7621
        %v7623 = vpop.f32.mrb[0].mxu0
        %v7624 = vadd.f32 0.0, %v7623
        %v7625 = vpop.f32.mrb[0].mxu0
        %v7626 = vpop.f32.mrb[0].mxu0
        %7627 = vdwg.mxu0
        %v7628 = vadd.f32 %v7456, %v7581
        %v7629 = vadd.f32 %v7457, %v7583
        %v7630 = vadd.f32 %v7458, %v7622
        %v7631 = vadd.f32 %v7459, %v7624
        %v7632 = vld [vmem:[%s2953] sm:$0xf]
        %vm7633 = vcmp.gt.f32.partialorder %v7632, 0.5
        %v7634 = vsel %vm7633, 1, 0
        %v7635 = vlaneseq
        %v7636 = vshrl.u32 %v7635, 7
        %v7637 = vsub.s32 0, %v7636
        %v7638 = vrot.slane %v7634, %v7637
        %v7639 = vlaneseq
        %v7640 = vshrl.u32 %v7639, 7
        %v7641 = vsub.s32 1, %v7640
        %v7642 = vrot.slane %v7634, %v7641
        %v7643 = vlaneseq
        %v7644 = vshrl.u32 %v7643, 7
        %v7645 = vsub.s32 2, %v7644
        %v7646 = vrot.slane %v7634, %v7645
        %v7647 = vlaneseq
        %v7648 = vshrl.u32 %v7647, 7
        %v7649 = vsub.s32 3, %v7648
        %v7650 = vrot.slane %v7634, %v7649
        %vm7651 = vcmp.eq.s32.totalorder %v7638, 1
        %vm7652 = vcmp.eq.s32.totalorder %v7642, 1
        %vm7653 = vcmp.eq.s32.totalorder %v7646, 1
        %vm7654 = vcmp.eq.s32.totalorder %v7650, 1
        %vm7655 = vmpackc.low %vm7652, %vm7651
        %vm7656 = vmpackc.low %vm7654, %vm7653
        %v7657 = vsel %vm7655, 65537, 0
        %v7658 = vsel %vm7656, 65537, 0
        %7659 = vrot.lane.b32.xlu0 %v7657, 8
        %v7660 = vpop.permute.xlu0 %7659
        %7661 = vrot.lane.b32.xlu0 %v7658, 8
        %v7662 = vpop.permute.xlu0 %7661
        %v7663 = vrot.slane %v7660, 4
        %v7664 = vrot.slane %v7662, 4
        %v7665 = vsel %vm2005, %v7663, %v7660
        %v7666 = vsel %vm237, %v7663, %v7664
        %v7667 = vsel %vm2005, %v7666, %v7662
        %vm7668 = vcmp.ne.s16.totalorder %v7665, 0
        %vm7669 = vcmp.ne.s16.totalorder %v7667, 0
        %vm7670 = vcmp.ne.s16.totalorder %v7664, 0
        %v7671 = vsel %vm7668, %v7285, 0
        %v7672 = vsel %vm7669, %v7286, 0
        %v7673 = vsel %vm7670, %v7287, 0
        %s7674 = scalar_lea.vmem %s3, 64
        %v7675 = vld [vmem:[%s7674] sm:$0xf]
        %v7679 = vunpack.c.l.b16 %v7671
        %v7680 = vunpack.c.h.b16 %v7671
        %v7681 = vunpack.c.l.b16 %v7672
        %v7682 = vunpack.c.h.b16 %v7672
        %v7683 = vunpack.c.l.b16 %v7673
        %v7684 = vpack.c.b16 %v7679, %v7679
        %v7685 = vpack.c.b16 %v7680, %v7680
        %v7686 = vpack.c.b16 %v7681, %v7681
        %v7687 = vpack.c.b16 %v7682, %v7682
        %v7688 = vpack.c.b16 %v7683, %v7683
        %7689 = vrot.lane.b32.xlu0 %v7684, 120
        %v7690 = vpop.permute.xlu0 %7689
        %7691 = vrot.lane.b32.xlu0 %v7685, 120
        %v7692 = vpop.permute.xlu0 %7691
        %7693 = vrot.lane.b32.xlu0 %v7686, 120
        %v7694 = vpop.permute.xlu0 %7693
        %7695 = vrot.lane.b32.xlu0 %v7687, 120
        %v7696 = vpop.permute.xlu0 %7695
        %7697 = vrot.lane.b32.xlu0 %v7688, 120
        %v7698 = vpop.permute.xlu0 %7697
        %v7699 = vsel %vm1970, %v7690, %v7692
        %v7700 = vsel %vm1970, %v7692, %v7694
        %v7701 = vsel %vm1970, %v7694, %v7696
        %v7702 = vsel %vm1970, %v7696, %v7698
        %v7704 = vsel %vm321, %v7675, 0
        %v7707 = vsel %vm325, %v7699, 0
        %v7710 = vsel %vm325, %v7700, 0
        %v7713 = vsel %vm325, %v7701, 0
        %v7716 = vsel %vm325, %v7702, 0
        %7718 = vmatprep.subr.bf16.mxu0 %v7710
        %7719 = vmatpush1.bf16.msra.mxu0 %v7707
        %7720 = vmatprep.subr.bf16.mxu0 0
        %7721 = vmatpush1.bf16.msra.mxu0 0
        %7722 = vmatprep.subr.bf16.mxu0 0
        %7723 = vmatpush1.bf16.msra.mxu0 0
        %7724 = vmatprep.subr.bf16.mxu0 0
        %7725 = vmatpush1.bf16.msra.mxu0 0
        %7726 = vmatprep.subr.bf16.mxu0 0
        %7727 = vmatpush1.bf16.msra.mxu0 0
        %7728 = vmatprep.subr.bf16.mxu0 0
        %7729 = vmatpush1.bf16.msra.mxu0 0
        %7730 = vmatprep.subr.bf16.mxu0 0
        %7731 = vmatpush1.bf16.msra.mxu0 0
        %7732 = vmatprep.subr.bf16.mxu0 0
        %7733 = vmatpush1.bf16.msra.mxu0 0
        %7734 = vmatprep.subr.bf16.mxu0 0
        %7735 = vmatpush1.bf16.msra.mxu0 0
        %7736 = vmatprep.subr.bf16.mxu0 0
        %7737 = vmatpush1.bf16.msra.mxu0 0
        %7738 = vmatprep.subr.bf16.mxu0 0
        %7739 = vmatpush1.bf16.msra.mxu0 0
        %7740 = vmatprep.subr.bf16.mxu0 0
        %7741 = vmatpush1.bf16.msra.mxu0 0
        %7742 = vmatprep.subr.bf16.mxu0 0
        %7743 = vmatpush1.bf16.msra.mxu0 0
        %7744 = vmatprep.subr.bf16.mxu0 0
        %7745 = vmatpush1.bf16.msra.mxu0 0
        %7746 = vmatprep.subr.bf16.mxu0 0
        %7747 = vmatpush1.bf16.msra.mxu0 0
        %7748 = vmatprep.subr.bf16.mxu0 0
        %7749 = vmatpush1.bf16.msra.mxu0 0
        %7750 = vmatprep.mubr.bf16.mxu0 0
        %7751 = vmatmul.mubr.bf16.gmra.mrb[0].mxu0 %v7704
        %v7752 = vpop.f32.mrb[0].mxu0
        %v7753 = vadd.f32 0.0, %v7752
        %v7754 = vpop.f32.mrb[0].mxu0
        %v7755 = vadd.f32 0.0, %v7754
        %v7756 = vpop.f32.mrb[0].mxu0
        %v7757 = vpop.f32.mrb[0].mxu0
        %7758 = vdwg.mxu0
        %7759 = vmatprep.subr.bf16.mxu0 %v7716
        %7760 = vmatpush1.bf16.msra.mxu0 %v7713
        %7761 = vmatprep.subr.bf16.mxu0 0
        %7762 = vmatpush1.bf16.msra.mxu0 0
        %7763 = vmatprep.subr.bf16.mxu0 0
        %7764 = vmatpush1.bf16.msra.mxu0 0
        %7765 = vmatprep.subr.bf16.mxu0 0
        %7766 = vmatpush1.bf16.msra.mxu0 0
        %7767 = vmatprep.subr.bf16.mxu0 0
        %7768 = vmatpush1.bf16.msra.mxu0 0
        %7769 = vmatprep.subr.bf16.mxu0 0
        %7770 = vmatpush1.bf16.msra.mxu0 0
        %7771 = vmatprep.subr.bf16.mxu0 0
        %7772 = vmatpush1.bf16.msra.mxu0 0
        %7773 = vmatprep.subr.bf16.mxu0 0
        %7774 = vmatpush1.bf16.msra.mxu0 0
        %7775 = vmatprep.subr.bf16.mxu0 0
        %7776 = vmatpush1.bf16.msra.mxu0 0
        %7777 = vmatprep.subr.bf16.mxu0 0
        %7778 = vmatpush1.bf16.msra.mxu0 0
        %7779 = vmatprep.subr.bf16.mxu0 0
        %7780 = vmatpush1.bf16.msra.mxu0 0
        %7781 = vmatprep.subr.bf16.mxu0 0
        %7782 = vmatpush1.bf16.msra.mxu0 0
        %7783 = vmatprep.subr.bf16.mxu0 0
        %7784 = vmatpush1.bf16.msra.mxu0 0
        %7785 = vmatprep.subr.bf16.mxu0 0
        %7786 = vmatpush1.bf16.msra.mxu0 0
        %7787 = vmatprep.subr.bf16.mxu0 0
        %7788 = vmatpush1.bf16.msra.mxu0 0
        %7789 = vmatprep.subr.bf16.mxu0 0
        %7790 = vmatpush1.bf16.msra.mxu0 0
        %7791 = vmatprep.mubr.bf16.mxu0 0
        %7792 = vmatmul.mubr.bf16.gmra.mrb[0].mxu0 %v7704
        %v7793 = vpop.f32.mrb[0].mxu0
        %v7794 = vadd.f32 0.0, %v7793
        %v7795 = vpop.f32.mrb[0].mxu0
        %v7796 = vadd.f32 0.0, %v7795
        %v7797 = vpop.f32.mrb[0].mxu0
        %v7798 = vpop.f32.mrb[0].mxu0
        %7799 = vdwg.mxu0
        %v7800 = vadd.f32 %v7628, %v7753
        %v7801 = vadd.f32 %v7629, %v7755
        %v7802 = vadd.f32 %v7630, %v7794
        %v7803 = vadd.f32 %v7631, %v7796
        %v7804 = vld [vmem:[%s3126] sm:$0xf]
        %vm7805 = vcmp.gt.f32.partialorder %v7804, 0.5
        %v7806 = vsel %vm7805, 1, 0
        %v7807 = vlaneseq
        %v7808 = vshrl.u32 %v7807, 7
        %v7809 = vsub.s32 0, %v7808
        %v7810 = vrot.slane %v7806, %v7809
        %v7811 = vlaneseq
        %v7812 = vshrl.u32 %v7811, 7
        %v7813 = vsub.s32 1, %v7812
        %v7814 = vrot.slane %v7806, %v7813
        %v7815 = vlaneseq
        %v7816 = vshrl.u32 %v7815, 7
        %v7817 = vsub.s32 2, %v7816
        %v7818 = vrot.slane %v7806, %v7817
        %v7819 = vlaneseq
        %v7820 = vshrl.u32 %v7819, 7
        %v7821 = vsub.s32 3, %v7820
        %v7822 = vrot.slane %v7806, %v7821
        %vm7823 = vcmp.eq.s32.totalorder %v7810, 1
        %vm7824 = vcmp.eq.s32.totalorder %v7814, 1
        %vm7825 = vcmp.eq.s32.totalorder %v7818, 1
        %vm7826 = vcmp.eq.s32.totalorder %v7822, 1
        %vm7827 = vmpackc.low %vm7824, %vm7823
        %vm7828 = vmpackc.low %vm7826, %vm7825
        %v7829 = vsel %vm7827, 65537, 0
        %v7830 = vsel %vm7828, 65537, 0
        %7831 = vrot.lane.b32.xlu0 %v7829, 9
        %v7832 = vpop.permute.xlu0 %7831
        %7833 = vrot.lane.b32.xlu0 %v7830, 9
        %v7834 = vpop.permute.xlu0 %7833
        %v7835 = vrot.slane %v7832, 4
        %v7836 = vrot.slane %v7834, 4
        %v7837 = vsel %vm1830, %v7835, %v7832
        %v7838 = vsel %vm237, %v7835, %v7836
        %v7839 = vsel %vm1830, %v7838, %v7834
        %vm7840 = vcmp.ne.s16.totalorder %v7837, 0
        %vm7841 = vcmp.ne.s16.totalorder %v7839, 0
        %vm7842 = vcmp.ne.s16.totalorder %v7836, 0
        %v7843 = vsel %vm7840, %v7285, 0
        %v7844 = vsel %vm7841, %v7286, 0
        %v7845 = vsel %vm7842, %v7287, 0
        %s7846 = scalar_lea.vmem %s3, 68
        %v7847 = vld [vmem:[%s7846] sm:$0xf]
        %v7851 = vunpack.c.l.b16 %v7843
        %v7852 = vunpack.c.h.b16 %v7843
        %v7853 = vunpack.c.l.b16 %v7844
        %v7854 = vunpack.c.h.b16 %v7844
        %v7855 = vunpack.c.l.b16 %v7845
        %v7856 = vpack.c.b16 %v7851, %v7851
        %v7857 = vpack.c.b16 %v7852, %v7852
        %v7858 = vpack.c.b16 %v7853, %v7853
        %v7859 = vpack.c.b16 %v7854, %v7854
        %v7860 = vpack.c.b16 %v7855, %v7855
        %7861 = vrot.lane.b32.xlu0 %v7856, 119
        %v7862 = vpop.permute.xlu0 %7861
        %7863 = vrot.lane.b32.xlu0 %v7857, 119
        %v7864 = vpop.permute.xlu0 %7863
        %7865 = vrot.lane.b32.xlu0 %v7858, 119
        %v7866 = vpop.permute.xlu0 %7865
        %7867 = vrot.lane.b32.xlu0 %v7859, 119
        %v7868 = vpop.permute.xlu0 %7867
        %7869 = vrot.lane.b32.xlu0 %v7860, 119
        %v7870 = vpop.permute.xlu0 %7869
        %v7871 = vsel %vm1795, %v7862, %v7864
        %v7872 = vsel %vm1795, %v7864, %v7866
        %v7873 = vsel %vm1795, %v7866, %v7868
        %v7874 = vsel %vm1795, %v7868, %v7870
        %v7876 = vsel %vm321, %v7847, 0
        %v7879 = vsel %vm325, %v7871, 0
        %v7882 = vsel %vm325, %v7872, 0
        %v7885 = vsel %vm325, %v7873, 0
        %v7888 = vsel %vm325, %v7874, 0
        %7890 = vmatprep.subr.bf16.mxu0 %v7882
        %7891 = vmatpush1.bf16.msra.mxu0 %v7879
        %7892 = vmatprep.subr.bf16.mxu0 0
        %7893 = vmatpush1.bf16.msra.mxu0 0
        %7894 = vmatprep.subr.bf16.mxu0 0
        %7895 = vmatpush1.bf16.msra.mxu0 0
        %7896 = vmatprep.subr.bf16.mxu0 0
        %7897 = vmatpush1.bf16.msra.mxu0 0
        %7898 = vmatprep.subr.bf16.mxu0 0
        %7899 = vmatpush1.bf16.msra.mxu0 0
        %7900 = vmatprep.subr.bf16.mxu0 0
        %7901 = vmatpush1.bf16.msra.mxu0 0
        %7902 = vmatprep.subr.bf16.mxu0 0
        %7903 = vmatpush1.bf16.msra.mxu0 0
        %7904 = vmatprep.subr.bf16.mxu0 0
        %7905 = vmatpush1.bf16.msra.mxu0 0
        %7906 = vmatprep.subr.bf16.mxu0 0
        %7907 = vmatpush1.bf16.msra.mxu0 0
        %7908 = vmatprep.subr.bf16.mxu0 0
        %7909 = vmatpush1.bf16.msra.mxu0 0
        %7910 = vmatprep.subr.bf16.mxu0 0
        %7911 = vmatpush1.bf16.msra.mxu0 0
        %7912 = vmatprep.subr.bf16.mxu0 0
        %7913 = vmatpush1.bf16.msra.mxu0 0
        %7914 = vmatprep.subr.bf16.mxu0 0
        %7915 = vmatpush1.bf16.msra.mxu0 0
        %7916 = vmatprep.subr.bf16.mxu0 0
        %7917 = vmatpush1.bf16.msra.mxu0 0
        %7918 = vmatprep.subr.bf16.mxu0 0
        %7919 = vmatpush1.bf16.msra.mxu0 0
        %7920 = vmatprep.subr.bf16.mxu0 0
        %7921 = vmatpush1.bf16.msra.mxu0 0
        %7922 = vmatprep.mubr.bf16.mxu0 0
        %7923 = vmatmul.mubr.bf16.gmra.mrb[0].mxu0 %v7876
        %v7924 = vpop.f32.mrb[0].mxu0
        %v7925 = vadd.f32 0.0, %v7924
        %v7926 = vpop.f32.mrb[0].mxu0
        %v7927 = vadd.f32 0.0, %v7926
        %v7928 = vpop.f32.mrb[0].mxu0
        %v7929 = vpop.f32.mrb[0].mxu0
        %7930 = vdwg.mxu0
        %7931 = vmatprep.subr.bf16.mxu0 %v7888
        %7932 = vmatpush1.bf16.msra.mxu0 %v7885
        %7933 = vmatprep.subr.bf16.mxu0 0
        %7934 = vmatpush1.bf16.msra.mxu0 0
        %7935 = vmatprep.subr.bf16.mxu0 0
        %7936 = vmatpush1.bf16.msra.mxu0 0
        %7937 = vmatprep.subr.bf16.mxu0 0
        %7938 = vmatpush1.bf16.msra.mxu0 0
        %7939 = vmatprep.subr.bf16.mxu0 0
        %7940 = vmatpush1.bf16.msra.mxu0 0
        %7941 = vmatprep.subr.bf16.mxu0 0
        %7942 = vmatpush1.bf16.msra.mxu0 0
        %7943 = vmatprep.subr.bf16.mxu0 0
        %7944 = vmatpush1.bf16.msra.mxu0 0
        %7945 = vmatprep.subr.bf16.mxu0 0
        %7946 = vmatpush1.bf16.msra.mxu0 0
        %7947 = vmatprep.subr.bf16.mxu0 0
        %7948 = vmatpush1.bf16.msra.mxu0 0
        %7949 = vmatprep.subr.bf16.mxu0 0
        %7950 = vmatpush1.bf16.msra.mxu0 0
        %7951 = vmatprep.subr.bf16.mxu0 0
        %7952 = vmatpush1.bf16.msra.mxu0 0
        %7953 = vmatprep.subr.bf16.mxu0 0
        %7954 = vmatpush1.bf16.msra.mxu0 0
        %7955 = vmatprep.subr.bf16.mxu0 0
        %7956 = vmatpush1.bf16.msra.mxu0 0
        %7957 = vmatprep.subr.bf16.mxu0 0
        %7958 = vmatpush1.bf16.msra.mxu0 0
        %7959 = vmatprep.subr.bf16.mxu0 0
        %7960 = vmatpush1.bf16.msra.mxu0 0
        %7961 = vmatprep.subr.bf16.mxu0 0
        %7962 = vmatpush1.bf16.msra.mxu0 0
        %7963 = vmatprep.mubr.bf16.mxu0 0
        %7964 = vmatmul.mubr.bf16.gmra.mrb[0].mxu0 %v7876
        %v7965 = vpop.f32.mrb[0].mxu0
        %v7966 = vadd.f32 0.0, %v7965
        %v7967 = vpop.f32.mrb[0].mxu0
        %v7968 = vadd.f32 0.0, %v7967
        %v7969 = vpop.f32.mrb[0].mxu0
        %v7970 = vpop.f32.mrb[0].mxu0
        %7971 = vdwg.mxu0
        %v7972 = vadd.f32 %v7800, %v7925
        %v7973 = vadd.f32 %v7801, %v7927
        %v7974 = vadd.f32 %v7802, %v7966
        %v7975 = vadd.f32 %v7803, %v7968
        %v7976 = vld [vmem:[%s3299] sm:$0xf]
        %vm7977 = vcmp.gt.f32.partialorder %v7976, 0.5
        %v7978 = vsel %vm7977, 1, 0
        %v7979 = vlaneseq
        %v7980 = vshrl.u32 %v7979, 7
        %v7981 = vsub.s32 0, %v7980
        %v7982 = vrot.slane %v7978, %v7981
        %v7983 = vlaneseq
        %v7984 = vshrl.u32 %v7983, 7
        %v7985 = vsub.s32 1, %v7984
        %v7986 = vrot.slane %v7978, %v7985
        %v7987 = vlaneseq
        %v7988 = vshrl.u32 %v7987, 7
        %v7989 = vsub.s32 2, %v7988
        %v7990 = vrot.slane %v7978, %v7989
        %v7991 = vlaneseq
        %v7992 = vshrl.u32 %v7991, 7
        %v7993 = vsub.s32 3, %v7992
        %v7994 = vrot.slane %v7978, %v7993
        %vm7995 = vcmp.eq.s32.totalorder %v7982, 1
        %vm7996 = vcmp.eq.s32.totalorder %v7986, 1
        %vm7997 = vcmp.eq.s32.totalorder %v7990, 1
        %vm7998 = vcmp.eq.s32.totalorder %v7994, 1
        %vm7999 = vmpackc.low %vm7996, %vm7995
        %vm8000 = vmpackc.low %vm7998, %vm7997
        %v8001 = vsel %vm7999, 65537, 0
        %v8002 = vsel %vm8000, 65537, 0
        %8003 = vrot.lane.b32.xlu0 %v8001, 55
        %v8004 = vpop.permute.xlu0 %8003
        %8005 = vrot.lane.b32.xlu0 %v8002, 55
        %v8006 = vpop.permute.xlu0 %8005
        %v8007 = vrot.slane %v8004, 4
        %v8008 = vrot.slane %v8006, 4
        %v8009 = vsel %vm235, %v8007, %v8004
        %v8010 = vsel %vm237, %v8007, %v8008
        %v8011 = vsel %vm235, %v8010, %v8006
        %vm8012 = vcmp.ne.s16.totalorder %v8009, 0
        %vm8013 = vcmp.ne.s16.totalorder %v8011, 0
        %vm8014 = vcmp.ne.s16.totalorder %v8008, 0
        %v8015 = vsel %vm8012, %v7285, 0
        %v8016 = vsel %vm8013, %v7286, 0
        %v8017 = vsel %vm8014, %v7287, 0
        %s8018 = scalar_lea.vmem %s3, 72
        %v8019 = vld [vmem:[%s8018] sm:$0xf]
        %v8023 = vunpack.c.l.b16 %v8015
        %v8024 = vunpack.c.h.b16 %v8015
        %v8025 = vunpack.c.l.b16 %v8016
        %v8026 = vunpack.c.h.b16 %v8016
        %v8027 = vunpack.c.l.b16 %v8017
        %v8028 = vpack.c.b16 %v8023, %v8023
        %v8029 = vpack.c.b16 %v8024, %v8024
        %v8030 = vpack.c.b16 %v8025, %v8025
        %v8031 = vpack.c.b16 %v8026, %v8026
        %v8032 = vpack.c.b16 %v8027, %v8027
        %8033 = vrot.lane.b32.xlu0 %v8028, 73
        %v8034 = vpop.permute.xlu0 %8033
        %8035 = vrot.lane.b32.xlu0 %v8029, 73
        %v8036 = vpop.permute.xlu0 %8035
        %8037 = vrot.lane.b32.xlu0 %v8030, 73
        %v8038 = vpop.permute.xlu0 %8037
        %8039 = vrot.lane.b32.xlu0 %v8031, 73
        %v8040 = vpop.permute.xlu0 %8039
        %8041 = vrot.lane.b32.xlu0 %v8032, 73
        %v8042 = vpop.permute.xlu0 %8041
        %v8043 = vsel %vm443, %v8034, %v8036
        %v8044 = vsel %vm443, %v8036, %v8038
        %v8045 = vsel %vm443, %v8038, %v8040
        %v8046 = vsel %vm443, %v8040, %v8042
        %v8048 = vsel %vm321, %v8019, 0
        %v8051 = vsel %vm325, %v8043, 0
        %v8054 = vsel %vm325, %v8044, 0
        %v8057 = vsel %vm325, %v8045, 0
        %v8060 = vsel %vm325, %v8046, 0
        %8062 = vmatprep.subr.bf16.mxu0 %v8054
        %8063 = vmatpush1.bf16.msra.mxu0 %v8051
        %8064 = vmatprep.subr.bf16.mxu0 0
        %8065 = vmatpush1.bf16.msra.mxu0 0
        %8066 = vmatprep.subr.bf16.mxu0 0
        %8067 = vmatpush1.bf16.msra.mxu0 0
        %8068 = vmatprep.subr.bf16.mxu0 0
        %8069 = vmatpush1.bf16.msra.mxu0 0
        %8070 = vmatprep.subr.bf16.mxu0 0
        %8071 = vmatpush1.bf16.msra.mxu0 0
        %8072 = vmatprep.subr.bf16.mxu0 0
        %8073 = vmatpush1.bf16.msra.mxu0 0
        %8074 = vmatprep.subr.bf16.mxu0 0
        %8075 = vmatpush1.bf16.msra.mxu0 0
        %8076 = vmatprep.subr.bf16.mxu0 0
        %8077 = vmatpush1.bf16.msra.mxu0 0
        %8078 = vmatprep.subr.bf16.mxu0 0
        %8079 = vmatpush1.bf16.msra.mxu0 0
        %8080 = vmatprep.subr.bf16.mxu0 0
        %8081 = vmatpush1.bf16.msra.mxu0 0
        %8082 = vmatprep.subr.bf16.mxu0 0
        %8083 = vmatpush1.bf16.msra.mxu0 0
        %8084 = vmatprep.subr.bf16.mxu0 0
        %8085 = vmatpush1.bf16.msra.mxu0 0
        %8086 = vmatprep.subr.bf16.mxu0 0
        %8087 = vmatpush1.bf16.msra.mxu0 0
        %8088 = vmatprep.subr.bf16.mxu0 0
        %8089 = vmatpush1.bf16.msra.mxu0 0
        %8090 = vmatprep.subr.bf16.mxu0 0
        %8091 = vmatpush1.bf16.msra.mxu0 0
        %8092 = vmatprep.subr.bf16.mxu0 0
        %8093 = vmatpush1.bf16.msra.mxu0 0
        %8094 = vmatprep.mubr.bf16.mxu0 0
        %8095 = vmatmul.mubr.bf16.gmra.mrb[0].mxu0 %v8048
        %v8096 = vpop.f32.mrb[0].mxu0
        %v8097 = vadd.f32 0.0, %v8096
        %v8098 = vpop.f32.mrb[0].mxu0
        %v8099 = vadd.f32 0.0, %v8098
        %v8100 = vpop.f32.mrb[0].mxu0
        %v8101 = vpop.f32.mrb[0].mxu0
        %8102 = vdwg.mxu0
        %8103 = vmatprep.subr.bf16.mxu0 %v8060
        %8104 = vmatpush1.bf16.msra.mxu0 %v8057
        %8105 = vmatprep.subr.bf16.mxu0 0
        %8106 = vmatpush1.bf16.msra.mxu0 0
        %8107 = vmatprep.subr.bf16.mxu0 0
        %8108 = vmatpush1.bf16.msra.mxu0 0
        %8109 = vmatprep.subr.bf16.mxu0 0
        %8110 = vmatpush1.bf16.msra.mxu0 0
        %8111 = vmatprep.subr.bf16.mxu0 0
        %8112 = vmatpush1.bf16.msra.mxu0 0
        %8113 = vmatprep.subr.bf16.mxu0 0
        %8114 = vmatpush1.bf16.msra.mxu0 0
        %8115 = vmatprep.subr.bf16.mxu0 0
        %8116 = vmatpush1.bf16.msra.mxu0 0
        %8117 = vmatprep.subr.bf16.mxu0 0
        %8118 = vmatpush1.bf16.msra.mxu0 0
        %8119 = vmatprep.subr.bf16.mxu0 0
        %8120 = vmatpush1.bf16.msra.mxu0 0
        %8121 = vmatprep.subr.bf16.mxu0 0
        %8122 = vmatpush1.bf16.msra.mxu0 0
        %8123 = vmatprep.subr.bf16.mxu0 0
        %8124 = vmatpush1.bf16.msra.mxu0 0
        %8125 = vmatprep.subr.bf16.mxu0 0
        %8126 = vmatpush1.bf16.msra.mxu0 0
        %8127 = vmatprep.subr.bf16.mxu0 0
        %8128 = vmatpush1.bf16.msra.mxu0 0
        %8129 = vmatprep.subr.bf16.mxu0 0
        %8130 = vmatpush1.bf16.msra.mxu0 0
        %8131 = vmatprep.subr.bf16.mxu0 0
        %8132 = vmatpush1.bf16.msra.mxu0 0
        %8133 = vmatprep.subr.bf16.mxu0 0
        %8134 = vmatpush1.bf16.msra.mxu0 0
        %8135 = vmatprep.mubr.bf16.mxu0 0
        %8136 = vmatmul.mubr.bf16.gmra.mrb[0].mxu0 %v8048
        %v8137 = vpop.f32.mrb[0].mxu0
        %v8138 = vadd.f32 0.0, %v8137
        %v8139 = vpop.f32.mrb[0].mxu0
        %v8140 = vadd.f32 0.0, %v8139
        %v8141 = vpop.f32.mrb[0].mxu0
        %v8142 = vpop.f32.mrb[0].mxu0
        %8143 = vdwg.mxu0
        %v8144 = vadd.f32 %v7972, %v8097
        %v8145 = vadd.f32 %v7973, %v8099
        %v8146 = vadd.f32 %v7974, %v8138
        %v8147 = vadd.f32 %v7975, %v8140
        %v8148 = vld [vmem:[%s3472] sm:$0xf]
        %vm8149 = vcmp.gt.f32.partialorder %v8148, 0.5
        %v8150 = vsel %vm8149, 1, 0
        %v8151 = vlaneseq
        %v8152 = vshrl.u32 %v8151, 7
        %v8153 = vsub.s32 0, %v8152
        %v8154 = vrot.slane %v8150, %v8153
        %v8155 = vlaneseq
        %v8156 = vshrl.u32 %v8155, 7
        %v8157 = vsub.s32 1, %v8156
        %v8158 = vrot.slane %v8150, %v8157
        %v8159 = vlaneseq
        %v8160 = vshrl.u32 %v8159, 7
        %v8161 = vsub.s32 2, %v8160
        %v8162 = vrot.slane %v8150, %v8161
        %v8163 = vlaneseq
        %v8164 = vshrl.u32 %v8163, 7
        %v8165 = vsub.s32 3, %v8164
        %v8166 = vrot.slane %v8150, %v8165
        %vm8167 = vcmp.eq.s32.totalorder %v8154, 1
        %vm8168 = vcmp.eq.s32.totalorder %v8158, 1
        %vm8169 = vcmp.eq.s32.totalorder %v8162, 1
        %vm8170 = vcmp.eq.s32.totalorder %v8166, 1
        %vm8171 = vmpackc.low %vm8168, %vm8167
        %vm8172 = vmpackc.low %vm8170, %vm8169
        %v8173 = vsel %vm8171, 65537, 0
        %v8174 = vsel %vm8172, 65537, 0
        %8175 = vrot.lane.b32.xlu0 %v8173, 56
        %v8176 = vpop.permute.xlu0 %8175
        %8177 = vrot.lane.b32.xlu0 %v8174, 56
        %v8178 = vpop.permute.xlu0 %8177
        %v8179 = vrot.slane %v8176, 4
        %v8180 = vrot.slane %v8178, 4
        %v8181 = vsel %vm281, %v8179, %v8176
        %v8182 = vsel %vm237, %v8179, %v8180
        %v8183 = vsel %vm281, %v8182, %v8178
        %vm8184 = vcmp.ne.s16.totalorder %v8181, 0
        %vm8185 = vcmp.ne.s16.totalorder %v8183, 0
        %vm8186 = vcmp.ne.s16.totalorder %v8180, 0
        %v8187 = vsel %vm8184, %v7285, 0
        %v8188 = vsel %vm8185, %v7286, 0
        %v8189 = vsel %vm8186, %v7287, 0
        %s8190 = scalar_lea.vmem %s3, 76
        %v8191 = vld [vmem:[%s8190] sm:$0xf]
        %v8195 = vunpack.c.l.b16 %v8187
        %v8196 = vunpack.c.h.b16 %v8187
        %v8197 = vunpack.c.l.b16 %v8188
        %v8198 = vunpack.c.h.b16 %v8188
        %v8199 = vunpack.c.l.b16 %v8189
        %v8200 = vpack.c.b16 %v8195, %v8195
        %v8201 = vpack.c.b16 %v8196, %v8196
        %v8202 = vpack.c.b16 %v8197, %v8197
        %v8203 = vpack.c.b16 %v8198, %v8198
        %v8204 = vpack.c.b16 %v8199, %v8199
        %8205 = vrot.lane.b32.xlu0 %v8200, 72
        %v8206 = vpop.permute.xlu0 %8205
        %8207 = vrot.lane.b32.xlu0 %v8201, 72
        %v8208 = vpop.permute.xlu0 %8207
        %8209 = vrot.lane.b32.xlu0 %v8202, 72
        %v8210 = vpop.permute.xlu0 %8209
        %8211 = vrot.lane.b32.xlu0 %v8203, 72
        %v8212 = vpop.permute.xlu0 %8211
        %8213 = vrot.lane.b32.xlu0 %v8204, 72
        %v8214 = vpop.permute.xlu0 %8213
        %v8215 = vsel %vm316, %v8206, %v8208
        %v8216 = vsel %vm316, %v8208, %v8210
        %v8217 = vsel %vm316, %v8210, %v8212
        %v8218 = vsel %vm316, %v8212, %v8214
        %v8220 = vsel %vm321, %v8191, 0
        %v8223 = vsel %vm325, %v8215, 0
        %v8226 = vsel %vm325, %v8216, 0
        %v8229 = vsel %vm325, %v8217, 0
        %v8232 = vsel %vm325, %v8218, 0
        %8234 = vmatprep.subr.bf16.mxu0 %v8226
        %8235 = vmatpush1.bf16.msra.mxu0 %v8223
        %8236 = vmatprep.subr.bf16.mxu0 0
        %8237 = vmatpush1.bf16.msra.mxu0 0
        %8238 = vmatprep.subr.bf16.mxu0 0
        %8239 = vmatpush1.bf16.msra.mxu0 0
        %8240 = vmatprep.subr.bf16.mxu0 0
        %8241 = vmatpush1.bf16.msra.mxu0 0
        %8242 = vmatprep.subr.bf16.mxu0 0
        %8243 = vmatpush1.bf16.msra.mxu0 0
        %8244 = vmatprep.subr.bf16.mxu0 0
        %8245 = vmatpush1.bf16.msra.mxu0 0
        %8246 = vmatprep.subr.bf16.mxu0 0
        %8247 = vmatpush1.bf16.msra.mxu0 0
        %8248 = vmatprep.subr.bf16.mxu0 0
        %8249 = vmatpush1.bf16.msra.mxu0 0
        %8250 = vmatprep.subr.bf16.mxu0 0
        %8251 = vmatpush1.bf16.msra.mxu0 0
        %8252 = vmatprep.subr.bf16.mxu0 0
        %8253 = vmatpush1.bf16.msra.mxu0 0
        %8254 = vmatprep.subr.bf16.mxu0 0
        %8255 = vmatpush1.bf16.msra.mxu0 0
        %8256 = vmatprep.subr.bf16.mxu0 0
        %8257 = vmatpush1.bf16.msra.mxu0 0
        %8258 = vmatprep.subr.bf16.mxu0 0
        %8259 = vmatpush1.bf16.msra.mxu0 0
        %8260 = vmatprep.subr.bf16.mxu0 0
        %8261 = vmatpush1.bf16.msra.mxu0 0
        %8262 = vmatprep.subr.bf16.mxu0 0
        %8263 = vmatpush1.bf16.msra.mxu0 0
        %8264 = vmatprep.subr.bf16.mxu0 0
        %8265 = vmatpush1.bf16.msra.mxu0 0
        %8266 = vmatprep.mubr.bf16.mxu0 0
        %8267 = vmatmul.mubr.bf16.gmra.mrb[0].mxu0 %v8220
        %v8268 = vpop.f32.mrb[0].mxu0
        %v8269 = vadd.f32 0.0, %v8268
        %v8270 = vpop.f32.mrb[0].mxu0
        %v8271 = vadd.f32 0.0, %v8270
        %v8272 = vpop.f32.mrb[0].mxu0
        %v8273 = vpop.f32.mrb[0].mxu0
        %8274 = vdwg.mxu0
        %8275 = vmatprep.subr.bf16.mxu0 %v8232
        %8276 = vmatpush1.bf16.msra.mxu0 %v8229
        %8277 = vmatprep.subr.bf16.mxu0 0
        %8278 = vmatpush1.bf16.msra.mxu0 0
        %8279 = vmatprep.subr.bf16.mxu0 0
        %8280 = vmatpush1.bf16.msra.mxu0 0
        %8281 = vmatprep.subr.bf16.mxu0 0
        %8282 = vmatpush1.bf16.msra.mxu0 0
        %8283 = vmatprep.subr.bf16.mxu0 0
        %8284 = vmatpush1.bf16.msra.mxu0 0
        %8285 = vmatprep.subr.bf16.mxu0 0
        %8286 = vmatpush1.bf16.msra.mxu0 0
        %8287 = vmatprep.subr.bf16.mxu0 0
        %8288 = vmatpush1.bf16.msra.mxu0 0
        %8289 = vmatprep.subr.bf16.mxu0 0
        %8290 = vmatpush1.bf16.msra.mxu0 0
        %8291 = vmatprep.subr.bf16.mxu0 0
        %8292 = vmatpush1.bf16.msra.mxu0 0
        %8293 = vmatprep.subr.bf16.mxu0 0
        %8294 = vmatpush1.bf16.msra.mxu0 0
        %8295 = vmatprep.subr.bf16.mxu0 0
        %8296 = vmatpush1.bf16.msra.mxu0 0
        %8297 = vmatprep.subr.bf16.mxu0 0
        %8298 = vmatpush1.bf16.msra.mxu0 0
        %8299 = vmatprep.subr.bf16.mxu0 0
        %8300 = vmatpush1.bf16.msra.mxu0 0
        %8301 = vmatprep.subr.bf16.mxu0 0
        %8302 = vmatpush1.bf16.msra.mxu0 0
        %8303 = vmatprep.subr.bf16.mxu0 0
        %8304 = vmatpush1.bf16.msra.mxu0 0
        %8305 = vmatprep.subr.bf16.mxu0 0
        %8306 = vmatpush1.bf16.msra.mxu0 0
        %8307 = vmatprep.mubr.bf16.mxu0 0
        %8308 = vmatmul.mubr.bf16.gmra.mrb[0].mxu0 %v8220
        %v8309 = vpop.f32.mrb[0].mxu0
        %v8310 = vadd.f32 0.0, %v8309
        %v8311 = vpop.f32.mrb[0].mxu0
        %v8312 = vadd.f32 0.0, %v8311
        %v8313 = vpop.f32.mrb[0].mxu0
        %v8314 = vpop.f32.mrb[0].mxu0
        %8315 = vdwg.mxu0
        %v8316 = vadd.f32 %v8144, %v8269
        %v8317 = vadd.f32 %v8145, %v8271
        %v8318 = vadd.f32 %v8146, %v8310
        %v8319 = vadd.f32 %v8147, %v8312
        %v8320 = vld [vmem:[%s3645] sm:$0xf]
        %vm8321 = vcmp.gt.f32.partialorder %v8320, 0.5
        %v8322 = vsel %vm8321, 1, 0
        %v8323 = vlaneseq
        %v8324 = vshrl.u32 %v8323, 7
        %v8325 = vsub.s32 0, %v8324
        %v8326 = vrot.slane %v8322, %v8325
        %v8327 = vlaneseq
        %v8328 = vshrl.u32 %v8327, 7
        %v8329 = vsub.s32 1, %v8328
        %v8330 = vrot.slane %v8322, %v8329
        %v8331 = vlaneseq
        %v8332 = vshrl.u32 %v8331, 7
        %v8333 = vsub.s32 2, %v8332
        %v8334 = vrot.slane %v8322, %v8333
        %v8335 = vlaneseq
        %v8336 = vshrl.u32 %v8335, 7
        %v8337 = vsub.s32 3, %v8336
        %v8338 = vrot.slane %v8322, %v8337
        %vm8339 = vcmp.eq.s32.totalorder %v8326, 1
        %vm8340 = vcmp.eq.s32.totalorder %v8330, 1
        %vm8341 = vcmp.eq.s32.totalorder %v8334, 1
        %vm8342 = vcmp.eq.s32.totalorder %v8338, 1
        %vm8343 = vmpackc.low %vm8340, %vm8339
        %vm8344 = vmpackc.low %vm8342, %vm8341
        %v8345 = vsel %vm8343, 65537, 0
        %v8346 = vsel %vm8344, 65537, 0
        %8347 = vrot.lane.b32.xlu0 %v8345, 57
        %v8348 = vpop.permute.xlu0 %8347
        %8349 = vrot.lane.b32.xlu0 %v8346, 57
        %v8350 = vpop.permute.xlu0 %8349
        %v8351 = vrot.slane %v8348, 4
        %v8352 = vrot.slane %v8350, 4
        %v8353 = vsel %vm579, %v8351, %v8348
        %v8354 = vsel %vm237, %v8351, %v8352
        %v8355 = vsel %vm579, %v8354, %v8350
        %vm8356 = vcmp.ne.s16.totalorder %v8353, 0
        %vm8357 = vcmp.ne.s16.totalorder %v8355, 0
        %vm8358 = vcmp.ne.s16.totalorder %v8352, 0
        %v8359 = vsel %vm8356, %v7285, 0
        %v8360 = vsel %vm8357, %v7286, 0
        %v8361 = vsel %vm8358, %v7287, 0
        %s8362 = scalar_lea.vmem %s3, 80
        %v8363 = vld [vmem:[%s8362] sm:$0xf]
        %v8367 = vunpack.c.l.b16 %v8359
        %v8368 = vunpack.c.h.b16 %v8359
        %v8369 = vunpack.c.l.b16 %v8360
        %v8370 = vunpack.c.h.b16 %v8360
        %v8371 = vunpack.c.l.b16 %v8361
        %v8372 = vpack.c.b16 %v8367, %v8367
        %v8373 = vpack.c.b16 %v8368, %v8368
        %v8374 = vpack.c.b16 %v8369, %v8369
        %v8375 = vpack.c.b16 %v8370, %v8370
        %v8376 = vpack.c.b16 %v8371, %v8371
        %8377 = vrot.lane.b32.xlu0 %v8372, 71
        %v8378 = vpop.permute.xlu0 %8377
        %8379 = vrot.lane.b32.xlu0 %v8373, 71
        %v8380 = vpop.permute.xlu0 %8379
        %8381 = vrot.lane.b32.xlu0 %v8374, 71
        %v8382 = vpop.permute.xlu0 %8381
        %8383 = vrot.lane.b32.xlu0 %v8375, 71
        %v8384 = vpop.permute.xlu0 %8383
        %8385 = vrot.lane.b32.xlu0 %v8376, 71
        %v8386 = vpop.permute.xlu0 %8385
        %v8387 = vsel %vm614, %v8378, %v8380
        %v8388 = vsel %vm614, %v8380, %v8382
        %v8389 = vsel %vm614, %v8382, %v8384
        %v8390 = vsel %vm614, %v8384, %v8386
        %v8392 = vsel %vm321, %v8363, 0
        %v8395 = vsel %vm325, %v8387, 0
        %v8398 = vsel %vm325, %v8388, 0
        %v8401 = vsel %vm325, %v8389, 0
        %v8404 = vsel %vm325, %v8390, 0
        %8406 = vmatprep.subr.bf16.mxu0 %v8398
        %8407 = vmatpush1.bf16.msra.mxu0 %v8395
        %8408 = vmatprep.subr.bf16.mxu0 0
        %8409 = vmatpush1.bf16.msra.mxu0 0
        %8410 = vmatprep.subr.bf16.mxu0 0
        %8411 = vmatpush1.bf16.msra.mxu0 0
        %8412 = vmatprep.subr.bf16.mxu0 0
        %8413 = vmatpush1.bf16.msra.mxu0 0
        %8414 = vmatprep.subr.bf16.mxu0 0
        %8415 = vmatpush1.bf16.msra.mxu0 0
        %8416 = vmatprep.subr.bf16.mxu0 0
        %8417 = vmatpush1.bf16.msra.mxu0 0
        %8418 = vmatprep.subr.bf16.mxu0 0
        %8419 = vmatpush1.bf16.msra.mxu0 0
        %8420 = vmatprep.subr.bf16.mxu0 0
        %8421 = vmatpush1.bf16.msra.mxu0 0
        %8422 = vmatprep.subr.bf16.mxu0 0
        %8423 = vmatpush1.bf16.msra.mxu0 0
        %8424 = vmatprep.subr.bf16.mxu0 0
        %8425 = vmatpush1.bf16.msra.mxu0 0
        %8426 = vmatprep.subr.bf16.mxu0 0
        %8427 = vmatpush1.bf16.msra.mxu0 0
        %8428 = vmatprep.subr.bf16.mxu0 0
        %8429 = vmatpush1.bf16.msra.mxu0 0
        %8430 = vmatprep.subr.bf16.mxu0 0
        %8431 = vmatpush1.bf16.msra.mxu0 0
        %8432 = vmatprep.subr.bf16.mxu0 0
        %8433 = vmatpush1.bf16.msra.mxu0 0
        %8434 = vmatprep.subr.bf16.mxu0 0
        %8435 = vmatpush1.bf16.msra.mxu0 0
        %8436 = vmatprep.subr.bf16.mxu0 0
        %8437 = vmatpush1.bf16.msra.mxu0 0
        %8438 = vmatprep.mubr.bf16.mxu0 0
        %8439 = vmatmul.mubr.bf16.gmra.mrb[0].mxu0 %v8392
        %v8440 = vpop.f32.mrb[0].mxu0
        %v8441 = vadd.f32 0.0, %v8440
        %v8442 = vpop.f32.mrb[0].mxu0
        %v8443 = vadd.f32 0.0, %v8442
        %v8444 = vpop.f32.mrb[0].mxu0
        %v8445 = vpop.f32.mrb[0].mxu0
        %8446 = vdwg.mxu0
        %8447 = vmatprep.subr.bf16.mxu0 %v8404
        %8448 = vmatpush1.bf16.msra.mxu0 %v8401
        %8449 = vmatprep.subr.bf16.mxu0 0
        %8450 = vmatpush1.bf16.msra.mxu0 0
        %8451 = vmatprep.subr.bf16.mxu0 0
        %8452 = vmatpush1.bf16.msra.mxu0 0
        %8453 = vmatprep.subr.bf16.mxu0 0
        %8454 = vmatpush1.bf16.msra.mxu0 0
        %8455 = vmatprep.subr.bf16.mxu0 0
        %8456 = vmatpush1.bf16.msra.mxu0 0
        %8457 = vmatprep.subr.bf16.mxu0 0
        %8458 = vmatpush1.bf16.msra.mxu0 0
        %8459 = vmatprep.subr.bf16.mxu0 0
        %8460 = vmatpush1.bf16.msra.mxu0 0
        %8461 = vmatprep.subr.bf16.mxu0 0
        %8462 = vmatpush1.bf16.msra.mxu0 0
        %8463 = vmatprep.subr.bf16.mxu0 0
        %8464 = vmatpush1.bf16.msra.mxu0 0
        %8465 = vmatprep.subr.bf16.mxu0 0
        %8466 = vmatpush1.bf16.msra.mxu0 0
        %8467 = vmatprep.subr.bf16.mxu0 0
        %8468 = vmatpush1.bf16.msra.mxu0 0
        %8469 = vmatprep.subr.bf16.mxu0 0
        %8470 = vmatpush1.bf16.msra.mxu0 0
        %8471 = vmatprep.subr.bf16.mxu0 0
        %8472 = vmatpush1.bf16.msra.mxu0 0
        %8473 = vmatprep.subr.bf16.mxu0 0
        %8474 = vmatpush1.bf16.msra.mxu0 0
        %8475 = vmatprep.subr.bf16.mxu0 0
        %8476 = vmatpush1.bf16.msra.mxu0 0
        %8477 = vmatprep.subr.bf16.mxu0 0
        %8478 = vmatpush1.bf16.msra.mxu0 0
        %8479 = vmatprep.mubr.bf16.mxu0 0
        %8480 = vmatmul.mubr.bf16.gmra.mrb[0].mxu0 %v8392
        %v8481 = vpop.f32.mrb[0].mxu0
        %v8482 = vadd.f32 0.0, %v8481
        %v8483 = vpop.f32.mrb[0].mxu0
        %v8484 = vadd.f32 0.0, %v8483
        %v8485 = vpop.f32.mrb[0].mxu0
        %v8486 = vpop.f32.mrb[0].mxu0
        %8487 = vdwg.mxu0
        %v8488 = vadd.f32 %v8316, %v8441
        %v8489 = vadd.f32 %v8317, %v8443
        %v8490 = vadd.f32 %v8318, %v8482
        %v8491 = vadd.f32 %v8319, %v8484
        %v8492 = vld [vmem:[%s3818] sm:$0xf]
        %vm8493 = vcmp.gt.f32.partialorder %v8492, 0.5
        %v8494 = vsel %vm8493, 1, 0
        %v8495 = vlaneseq
        %v8496 = vshrl.u32 %v8495, 7
        %v8497 = vsub.s32 0, %v8496
        %v8498 = vrot.slane %v8494, %v8497
        %v8499 = vlaneseq
        %v8500 = vshrl.u32 %v8499, 7
        %v8501 = vsub.s32 1, %v8500
        %v8502 = vrot.slane %v8494, %v8501
        %v8503 = vlaneseq
        %v8504 = vshrl.u32 %v8503, 7
        %v8505 = vsub.s32 2, %v8504
        %v8506 = vrot.slane %v8494, %v8505
        %v8507 = vlaneseq
        %v8508 = vshrl.u32 %v8507, 7
        %v8509 = vsub.s32 3, %v8508
        %v8510 = vrot.slane %v8494, %v8509
        %vm8511 = vcmp.eq.s32.totalorder %v8498, 1
        %vm8512 = vcmp.eq.s32.totalorder %v8502, 1
        %vm8513 = vcmp.eq.s32.totalorder %v8506, 1
        %vm8514 = vcmp.eq.s32.totalorder %v8510, 1
        %vm8515 = vmpackc.low %vm8512, %vm8511
        %vm8516 = vmpackc.low %vm8514, %vm8513
        %v8517 = vsel %vm8515, 65537, 0
        %v8518 = vsel %vm8516, 65537, 0
        %8519 = vrot.lane.b32.xlu0 %v8517, 63
        %v8520 = vpop.permute.xlu0 %8519
        %8521 = vrot.lane.b32.xlu0 %v8518, 63
        %v8522 = vpop.permute.xlu0 %8521
        %v8523 = vrot.slane %v8520, 4
        %v8524 = vrot.slane %v8522, 4
        %v8525 = vsel %vm754, %v8523, %v8520
        %v8526 = vsel %vm237, %v8523, %v8524
        %v8527 = vsel %vm754, %v8526, %v8522
        %vm8528 = vcmp.ne.s16.totalorder %v8525, 0
        %vm8529 = vcmp.ne.s16.totalorder %v8527, 0
        %vm8530 = vcmp.ne.s16.totalorder %v8524, 0
        %v8531 = vsel %vm8528, %v7285, 0
        %v8532 = vsel %vm8529, %v7286, 0
        %v8533 = vsel %vm8530, %v7287, 0
        %s8534 = scalar_lea.vmem %s3, 84
        %v8535 = vld [vmem:[%s8534] sm:$0xf]
        %v8539 = vunpack.c.l.b16 %v8531
        %v8540 = vunpack.c.h.b16 %v8531
        %v8541 = vunpack.c.l.b16 %v8532
        %v8542 = vunpack.c.h.b16 %v8532
        %v8543 = vunpack.c.l.b16 %v8533
        %v8544 = vpack.c.b16 %v8539, %v8539
        %v8545 = vpack.c.b16 %v8540, %v8540
        %v8546 = vpack.c.b16 %v8541, %v8541
        %v8547 = vpack.c.b16 %v8542, %v8542
        %v8548 = vpack.c.b16 %v8543, %v8543
        %8549 = vrot.lane.b32.xlu0 %v8544, 65
        %v8550 = vpop.permute.xlu0 %8549
        %8551 = vrot.lane.b32.xlu0 %v8545, 65
        %v8552 = vpop.permute.xlu0 %8551
        %8553 = vrot.lane.b32.xlu0 %v8546, 65
        %v8554 = vpop.permute.xlu0 %8553
        %8555 = vrot.lane.b32.xlu0 %v8547, 65
        %v8556 = vpop.permute.xlu0 %8555
        %8557 = vrot.lane.b32.xlu0 %v8548, 65
        %v8558 = vpop.permute.xlu0 %8557
        %v8559 = vsel %vm789, %v8550, %v8552
        %v8560 = vsel %vm789, %v8552, %v8554
        %v8561 = vsel %vm789, %v8554, %v8556
        %v8562 = vsel %vm789, %v8556, %v8558
        %v8564 = vsel %vm321, %v8535, 0
        %v8567 = vsel %vm325, %v8559, 0
        %v8570 = vsel %vm325, %v8560, 0
        %v8573 = vsel %vm325, %v8561, 0
        %v8576 = vsel %vm325, %v8562, 0
        %8578 = vmatprep.subr.bf16.mxu0 %v8570
        %8579 = vmatpush1.bf16.msra.mxu0 %v8567
        %8580 = vmatprep.subr.bf16.mxu0 0
        %8581 = vmatpush1.bf16.msra.mxu0 0
        %8582 = vmatprep.subr.bf16.mxu0 0
        %8583 = vmatpush1.bf16.msra.mxu0 0
        %8584 = vmatprep.subr.bf16.mxu0 0
        %8585 = vmatpush1.bf16.msra.mxu0 0
        %8586 = vmatprep.subr.bf16.mxu0 0
        %8587 = vmatpush1.bf16.msra.mxu0 0
        %8588 = vmatprep.subr.bf16.mxu0 0
        %8589 = vmatpush1.bf16.msra.mxu0 0
        %8590 = vmatprep.subr.bf16.mxu0 0
        %8591 = vmatpush1.bf16.msra.mxu0 0
        %8592 = vmatprep.subr.bf16.mxu0 0
        %8593 = vmatpush1.bf16.msra.mxu0 0
        %8594 = vmatprep.subr.bf16.mxu0 0
        %8595 = vmatpush1.bf16.msra.mxu0 0
        %8596 = vmatprep.subr.bf16.mxu0 0
        %8597 = vmatpush1.bf16.msra.mxu0 0
        %8598 = vmatprep.subr.bf16.mxu0 0
        %8599 = vmatpush1.bf16.msra.mxu0 0
        %8600 = vmatprep.subr.bf16.mxu0 0
        %8601 = vmatpush1.bf16.msra.mxu0 0
        %8602 = vmatprep.subr.bf16.mxu0 0
        %8603 = vmatpush1.bf16.msra.mxu0 0
        %8604 = vmatprep.subr.bf16.mxu0 0
        %8605 = vmatpush1.bf16.msra.mxu0 0
        %8606 = vmatprep.subr.bf16.mxu0 0
        %8607 = vmatpush1.bf16.msra.mxu0 0
        %8608 = vmatprep.subr.bf16.mxu0 0
        %8609 = vmatpush1.bf16.msra.mxu0 0
        %8610 = vmatprep.mubr.bf16.mxu0 0
        %8611 = vmatmul.mubr.bf16.gmra.mrb[0].mxu0 %v8564
        %v8612 = vpop.f32.mrb[0].mxu0
        %v8613 = vadd.f32 0.0, %v8612
        %v8614 = vpop.f32.mrb[0].mxu0
        %v8615 = vadd.f32 0.0, %v8614
        %v8616 = vpop.f32.mrb[0].mxu0
        %v8617 = vpop.f32.mrb[0].mxu0
        %8618 = vdwg.mxu0
        %8619 = vmatprep.subr.bf16.mxu0 %v8576
        %8620 = vmatpush1.bf16.msra.mxu0 %v8573
        %8621 = vmatprep.subr.bf16.mxu0 0
        %8622 = vmatpush1.bf16.msra.mxu0 0
        %8623 = vmatprep.subr.bf16.mxu0 0
        %8624 = vmatpush1.bf16.msra.mxu0 0
        %8625 = vmatprep.subr.bf16.mxu0 0
        %8626 = vmatpush1.bf16.msra.mxu0 0
        %8627 = vmatprep.subr.bf16.mxu0 0
        %8628 = vmatpush1.bf16.msra.mxu0 0
        %8629 = vmatprep.subr.bf16.mxu0 0
        %8630 = vmatpush1.bf16.msra.mxu0 0
        %8631 = vmatprep.subr.bf16.mxu0 0
        %8632 = vmatpush1.bf16.msra.mxu0 0
        %8633 = vmatprep.subr.bf16.mxu0 0
        %8634 = vmatpush1.bf16.msra.mxu0 0
        %8635 = vmatprep.subr.bf16.mxu0 0
        %8636 = vmatpush1.bf16.msra.mxu0 0
        %8637 = vmatprep.subr.bf16.mxu0 0
        %8638 = vmatpush1.bf16.msra.mxu0 0
        %8639 = vmatprep.subr.bf16.mxu0 0
        %8640 = vmatpush1.bf16.msra.mxu0 0
        %8641 = vmatprep.subr.bf16.mxu0 0
        %8642 = vmatpush1.bf16.msra.mxu0 0
        %8643 = vmatprep.subr.bf16.mxu0 0
        %8644 = vmatpush1.bf16.msra.mxu0 0
        %8645 = vmatprep.subr.bf16.mxu0 0
        %8646 = vmatpush1.bf16.msra.mxu0 0
        %8647 = vmatprep.subr.bf16.mxu0 0
        %8648 = vmatpush1.bf16.msra.mxu0 0
        %8649 = vmatprep.subr.bf16.mxu0 0
        %8650 = vmatpush1.bf16.msra.mxu0 0
        %8651 = vmatprep.mubr.bf16.mxu0 0
        %8652 = vmatmul.mubr.bf16.gmra.mrb[0].mxu0 %v8564
        %v8653 = vpop.f32.mrb[0].mxu0
        %v8654 = vadd.f32 0.0, %v8653
        %v8655 = vpop.f32.mrb[0].mxu0
        %v8656 = vadd.f32 0.0, %v8655
        %v8657 = vpop.f32.mrb[0].mxu0
        %v8658 = vpop.f32.mrb[0].mxu0
        %8659 = vdwg.mxu0
        %v8660 = vadd.f32 %v8488, %v8613
        %v8661 = vadd.f32 %v8489, %v8615
        %v8662 = vadd.f32 %v8490, %v8654
        %v8663 = vadd.f32 %v8491, %v8656
        %v8664 = vld [vmem:[%s3991] sm:$0xf]
        %vm8665 = vcmp.gt.f32.partialorder %v8664, 0.5
        %v8666 = vsel %vm8665, 1, 0
        %v8667 = vlaneseq
        %v8668 = vshrl.u32 %v8667, 7
        %v8669 = vsub.s32 0, %v8668
        %v8670 = vrot.slane %v8666, %v8669
        %v8671 = vlaneseq
        %v8672 = vshrl.u32 %v8671, 7
        %v8673 = vsub.s32 1, %v8672
        %v8674 = vrot.slane %v8666, %v8673
        %v8675 = vlaneseq
        %v8676 = vshrl.u32 %v8675, 7
        %v8677 = vsub.s32 2, %v8676
        %v8678 = vrot.slane %v8666, %v8677
        %v8679 = vlaneseq
        %v8680 = vshrl.u32 %v8679, 7
        %v8681 = vsub.s32 3, %v8680
        %v8682 = vrot.slane %v8666, %v8681
        %vm8683 = vcmp.eq.s32.totalorder %v8670, 1
        %vm8684 = vcmp.eq.s32.totalorder %v8674, 1
        %vm8685 = vcmp.eq.s32.totalorder %v8678, 1
        %vm8686 = vcmp.eq.s32.totalorder %v8682, 1
        %vm8687 = vmpackc.low %vm8684, %vm8683
        %vm8688 = vmpackc.low %vm8686, %vm8685
        %v8689 = vsel %vm8687, 65537, 0
        %v8690 = vsel %vm8688, 65537, 0
        %8691 = vrot.lane.b32.xlu0 %v8689, 64
        %v8692 = vpop.permute.xlu0 %8691
        %8693 = vrot.lane.b32.xlu0 %v8690, 64
        %v8694 = vpop.permute.xlu0 %8693
        %v8695 = vrot.slane %v8692, 4
        %v8696 = vrot.slane %v8694, 4
        %v8697 = vsel %vm929, %v8695, %v8692
        %v8698 = vsel %vm237, %v8695, %v8696
        %v8699 = vsel %vm929, %v8698, %v8694
        %vm8700 = vcmp.ne.s16.totalorder %v8697, 0
        %vm8701 = vcmp.ne.s16.totalorder %v8699, 0
        %vm8702 = vcmp.ne.s16.totalorder %v8696, 0
        %v8703 = vsel %vm8700, %v7285, 0
        %v8704 = vsel %vm8701, %v7286, 0
        %v8705 = vsel %vm8702, %v7287, 0
        %s8706 = scalar_lea.vmem %s3, 88
        %v8707 = vld [vmem:[%s8706] sm:$0xf]
        %v8711 = vunpack.c.l.b16 %v8703
        %v8712 = vunpack.c.h.b16 %v8703
        %v8713 = vunpack.c.l.b16 %v8704
        %v8714 = vunpack.c.h.b16 %v8704
        %v8715 = vunpack.c.l.b16 %v8705
        %v8716 = vpack.c.b16 %v8711, %v8711
        %v8717 = vpack.c.b16 %v8712, %v8712
        %v8718 = vpack.c.b16 %v8713, %v8713
        %v8719 = vpack.c.b16 %v8714, %v8714
        %v8720 = vpack.c.b16 %v8715, %v8715
        %8721 = vrot.lane.b32.xlu0 %v8716, 64
        %v8722 = vpop.permute.xlu0 %8721
        %8723 = vrot.lane.b32.xlu0 %v8717, 64
        %v8724 = vpop.permute.xlu0 %8723
        %8725 = vrot.lane.b32.xlu0 %v8718, 64
        %v8726 = vpop.permute.xlu0 %8725
        %8727 = vrot.lane.b32.xlu0 %v8719, 64
        %v8728 = vpop.permute.xlu0 %8727
        %8729 = vrot.lane.b32.xlu0 %v8720, 64
        %v8730 = vpop.permute.xlu0 %8729
        %v8731 = vsel %vm929, %v8722, %v8724
        %v8732 = vsel %vm929, %v8724, %v8726
        %v8733 = vsel %vm929, %v8726, %v8728
        %v8734 = vsel %vm929, %v8728, %v8730
        %v8736 = vsel %vm321, %v8707, 0
        %v8739 = vsel %vm325, %v8731, 0
        %v8742 = vsel %vm325, %v8732, 0
        %v8745 = vsel %vm325, %v8733, 0
        %v8748 = vsel %vm325, %v8734, 0
        %8750 = vmatprep.subr.bf16.mxu0 %v8742
        %8751 = vmatpush1.bf16.msra.mxu0 %v8739
        %8752 = vmatprep.subr.bf16.mxu0 0
        %8753 = vmatpush1.bf16.msra.mxu0 0
        %8754 = vmatprep.subr.bf16.mxu0 0
        %8755 = vmatpush1.bf16.msra.mxu0 0
        %8756 = vmatprep.subr.bf16.mxu0 0
        %8757 = vmatpush1.bf16.msra.mxu0 0
        %8758 = vmatprep.subr.bf16.mxu0 0
        %8759 = vmatpush1.bf16.msra.mxu0 0
        %8760 = vmatprep.subr.bf16.mxu0 0
        %8761 = vmatpush1.bf16.msra.mxu0 0
        %8762 = vmatprep.subr.bf16.mxu0 0
        %8763 = vmatpush1.bf16.msra.mxu0 0
        %8764 = vmatprep.subr.bf16.mxu0 0
        %8765 = vmatpush1.bf16.msra.mxu0 0
        %8766 = vmatprep.subr.bf16.mxu0 0
        %8767 = vmatpush1.bf16.msra.mxu0 0
        %8768 = vmatprep.subr.bf16.mxu0 0
        %8769 = vmatpush1.bf16.msra.mxu0 0
        %8770 = vmatprep.subr.bf16.mxu0 0
        %8771 = vmatpush1.bf16.msra.mxu0 0
        %8772 = vmatprep.subr.bf16.mxu0 0
        %8773 = vmatpush1.bf16.msra.mxu0 0
        %8774 = vmatprep.subr.bf16.mxu0 0
        %8775 = vmatpush1.bf16.msra.mxu0 0
        %8776 = vmatprep.subr.bf16.mxu0 0
        %8777 = vmatpush1.bf16.msra.mxu0 0
        %8778 = vmatprep.subr.bf16.mxu0 0
        %8779 = vmatpush1.bf16.msra.mxu0 0
        %8780 = vmatprep.subr.bf16.mxu0 0
        %8781 = vmatpush1.bf16.msra.mxu0 0
        %8782 = vmatprep.mubr.bf16.mxu0 0
        %8783 = vmatmul.mubr.bf16.gmra.mrb[0].mxu0 %v8736
        %v8784 = vpop.f32.mrb[0].mxu0
        %v8785 = vadd.f32 0.0, %v8784
        %v8786 = vpop.f32.mrb[0].mxu0
        %v8787 = vadd.f32 0.0, %v8786
        %v8788 = vpop.f32.mrb[0].mxu0
        %v8789 = vpop.f32.mrb[0].mxu0
        %8790 = vdwg.mxu0
        %8791 = vmatprep.subr.bf16.mxu0 %v8748
        %8792 = vmatpush1.bf16.msra.mxu0 %v8745
        %8793 = vmatprep.subr.bf16.mxu0 0
        %8794 = vmatpush1.bf16.msra.mxu0 0
        %8795 = vmatprep.subr.bf16.mxu0 0
        %8796 = vmatpush1.bf16.msra.mxu0 0
        %8797 = vmatprep.subr.bf16.mxu0 0
        %8798 = vmatpush1.bf16.msra.mxu0 0
        %8799 = vmatprep.subr.bf16.mxu0 0
        %8800 = vmatpush1.bf16.msra.mxu0 0
        %8801 = vmatprep.subr.bf16.mxu0 0
        %8802 = vmatpush1.bf16.msra.mxu0 0
        %8803 = vmatprep.subr.bf16.mxu0 0
        %8804 = vmatpush1.bf16.msra.mxu0 0
        %8805 = vmatprep.subr.bf16.mxu0 0
        %8806 = vmatpush1.bf16.msra.mxu0 0
        %8807 = vmatprep.subr.bf16.mxu0 0
        %8808 = vmatpush1.bf16.msra.mxu0 0
        %8809 = vmatprep.subr.bf16.mxu0 0
        %8810 = vmatpush1.bf16.msra.mxu0 0
        %8811 = vmatprep.subr.bf16.mxu0 0
        %8812 = vmatpush1.bf16.msra.mxu0 0
        %8813 = vmatprep.subr.bf16.mxu0 0
        %8814 = vmatpush1.bf16.msra.mxu0 0
        %8815 = vmatprep.subr.bf16.mxu0 0
        %8816 = vmatpush1.bf16.msra.mxu0 0
        %8817 = vmatprep.subr.bf16.mxu0 0
        %8818 = vmatpush1.bf16.msra.mxu0 0
        %8819 = vmatprep.subr.bf16.mxu0 0
        %8820 = vmatpush1.bf16.msra.mxu0 0
        %8821 = vmatprep.subr.bf16.mxu0 0
        %8822 = vmatpush1.bf16.msra.mxu0 0
        %8823 = vmatprep.mubr.bf16.mxu0 0
        %8824 = vmatmul.mubr.bf16.gmra.mrb[0].mxu0 %v8736
        %v8825 = vpop.f32.mrb[0].mxu0
        %v8826 = vadd.f32 0.0, %v8825
        %v8827 = vpop.f32.mrb[0].mxu0
        %v8828 = vadd.f32 0.0, %v8827
        %v8829 = vpop.f32.mrb[0].mxu0
        %v8830 = vpop.f32.mrb[0].mxu0
        %8831 = vdwg.mxu0
        %v8832 = vadd.f32 %v8660, %v8785
        %v8833 = vadd.f32 %v8661, %v8787
        %v8834 = vadd.f32 %v8662, %v8826
        %v8835 = vadd.f32 %v8663, %v8828
        %v8836 = vld [vmem:[%s4164] sm:$0xf]
        %vm8837 = vcmp.gt.f32.partialorder %v8836, 0.5
        %v8838 = vsel %vm8837, 1, 0
        %v8839 = vlaneseq
        %v8840 = vshrl.u32 %v8839, 7
        %v8841 = vsub.s32 0, %v8840
        %v8842 = vrot.slane %v8838, %v8841
        %v8843 = vlaneseq
        %v8844 = vshrl.u32 %v8843, 7
        %v8845 = vsub.s32 1, %v8844
        %v8846 = vrot.slane %v8838, %v8845
        %v8847 = vlaneseq
        %v8848 = vshrl.u32 %v8847, 7
        %v8849 = vsub.s32 2, %v8848
        %v8850 = vrot.slane %v8838, %v8849
        %v8851 = vlaneseq
        %v8852 = vshrl.u32 %v8851, 7
        %v8853 = vsub.s32 3, %v8852
        %v8854 = vrot.slane %v8838, %v8853
        %vm8855 = vcmp.eq.s32.totalorder %v8842, 1
        %vm8856 = vcmp.eq.s32.totalorder %v8846, 1
        %vm8857 = vcmp.eq.s32.totalorder %v8850, 1
        %vm8858 = vcmp.eq.s32.totalorder %v8854, 1
        %vm8859 = vmpackc.low %vm8856, %vm8855
        %vm8860 = vmpackc.low %vm8858, %vm8857
        %v8861 = vsel %vm8859, 65537, 0
        %v8862 = vsel %vm8860, 65537, 0
        %8863 = vrot.lane.b32.xlu0 %v8861, 65
        %v8864 = vpop.permute.xlu0 %8863
        %8865 = vrot.lane.b32.xlu0 %v8862, 65
        %v8866 = vpop.permute.xlu0 %8865
        %v8867 = vrot.slane %v8864, 4
        %v8868 = vrot.slane %v8866, 4
        %v8869 = vsel %vm789, %v8867, %v8864
        %v8870 = vsel %vm237, %v8867, %v8868
        %v8871 = vsel %vm789, %v8870, %v8866
        %vm8872 = vcmp.ne.s16.totalorder %v8869, 0
        %vm8873 = vcmp.ne.s16.totalorder %v8871, 0
        %vm8874 = vcmp.ne.s16.totalorder %v8868, 0
        %v8875 = vsel %vm8872, %v7285, 0
        %v8876 = vsel %vm8873, %v7286, 0
        %v8877 = vsel %vm8874, %v7287, 0
        %s8878 = scalar_lea.vmem %s3, 92
        %v8879 = vld [vmem:[%s8878] sm:$0xf]
        %v8883 = vunpack.c.l.b16 %v8875
        %v8884 = vunpack.c.h.b16 %v8875
        %v8885 = vunpack.c.l.b16 %v8876
        %v8886 = vunpack.c.h.b16 %v8876
        %v8887 = vunpack.c.l.b16 %v8877
        %v8888 = vpack.c.b16 %v8883, %v8883
        %v8889 = vpack.c.b16 %v8884, %v8884
        %v8890 = vpack.c.b16 %v8885, %v8885
        %v8891 = vpack.c.b16 %v8886, %v8886
        %v8892 = vpack.c.b16 %v8887, %v8887
        %8893 = vrot.lane.b32.xlu0 %v8888, 63
        %v8894 = vpop.permute.xlu0 %8893
        %8895 = vrot.lane.b32.xlu0 %v8889, 63
        %v8896 = vpop.permute.xlu0 %8895
        %8897 = vrot.lane.b32.xlu0 %v8890, 63
        %v8898 = vpop.permute.xlu0 %8897
        %8899 = vrot.lane.b32.xlu0 %v8891, 63
        %v8900 = vpop.permute.xlu0 %8899
        %8901 = vrot.lane.b32.xlu0 %v8892, 63
        %v8902 = vpop.permute.xlu0 %8901
        %v8903 = vsel %vm754, %v8894, %v8896
        %v8904 = vsel %vm754, %v8896, %v8898
        %v8905 = vsel %vm754, %v8898, %v8900
        %v8906 = vsel %vm754, %v8900, %v8902
        %v8908 = vsel %vm321, %v8879, 0
        %v8911 = vsel %vm325, %v8903, 0
        %v8914 = vsel %vm325, %v8904, 0
        %v8917 = vsel %vm325, %v8905, 0
        %v8920 = vsel %vm325, %v8906, 0
        %8922 = vmatprep.subr.bf16.mxu0 %v8914
        %8923 = vmatpush1.bf16.msra.mxu0 %v8911
        %8924 = vmatprep.subr.bf16.mxu0 0
        %8925 = vmatpush1.bf16.msra.mxu0 0
        %8926 = vmatprep.subr.bf16.mxu0 0
        %8927 = vmatpush1.bf16.msra.mxu0 0
        %8928 = vmatprep.subr.bf16.mxu0 0
        %8929 = vmatpush1.bf16.msra.mxu0 0
        %8930 = vmatprep.subr.bf16.mxu0 0
        %8931 = vmatpush1.bf16.msra.mxu0 0
        %8932 = vmatprep.subr.bf16.mxu0 0
        %8933 = vmatpush1.bf16.msra.mxu0 0
        %8934 = vmatprep.subr.bf16.mxu0 0
        %8935 = vmatpush1.bf16.msra.mxu0 0
        %8936 = vmatprep.subr.bf16.mxu0 0
        %8937 = vmatpush1.bf16.msra.mxu0 0
        %8938 = vmatprep.subr.bf16.mxu0 0
        %8939 = vmatpush1.bf16.msra.mxu0 0
        %8940 = vmatprep.subr.bf16.mxu0 0
        %8941 = vmatpush1.bf16.msra.mxu0 0
        %8942 = vmatprep.subr.bf16.mxu0 0
        %8943 = vmatpush1.bf16.msra.mxu0 0
        %8944 = vmatprep.subr.bf16.mxu0 0
        %8945 = vmatpush1.bf16.msra.mxu0 0
        %8946 = vmatprep.subr.bf16.mxu0 0
        %8947 = vmatpush1.bf16.msra.mxu0 0
        %8948 = vmatprep.subr.bf16.mxu0 0
        %8949 = vmatpush1.bf16.msra.mxu0 0
        %8950 = vmatprep.subr.bf16.mxu0 0
        %8951 = vmatpush1.bf16.msra.mxu0 0
        %8952 = vmatprep.subr.bf16.mxu0 0
        %8953 = vmatpush1.bf16.msra.mxu0 0
        %8954 = vmatprep.mubr.bf16.mxu0 0
        %8955 = vmatmul.mubr.bf16.gmra.mrb[0].mxu0 %v8908
        %v8956 = vpop.f32.mrb[0].mxu0
        %v8957 = vadd.f32 0.0, %v8956
        %v8958 = vpop.f32.mrb[0].mxu0
        %v8959 = vadd.f32 0.0, %v8958
        %v8960 = vpop.f32.mrb[0].mxu0
        %v8961 = vpop.f32.mrb[0].mxu0
        %8962 = vdwg.mxu0
        %8963 = vmatprep.subr.bf16.mxu0 %v8920
        %8964 = vmatpush1.bf16.msra.mxu0 %v8917
        %8965 = vmatprep.subr.bf16.mxu0 0
        %8966 = vmatpush1.bf16.msra.mxu0 0
        %8967 = vmatprep.subr.bf16.mxu0 0
        %8968 = vmatpush1.bf16.msra.mxu0 0
        %8969 = vmatprep.subr.bf16.mxu0 0
        %8970 = vmatpush1.bf16.msra.mxu0 0
        %8971 = vmatprep.subr.bf16.mxu0 0
        %8972 = vmatpush1.bf16.msra.mxu0 0
        %8973 = vmatprep.subr.bf16.mxu0 0
        %8974 = vmatpush1.bf16.msra.mxu0 0
        %8975 = vmatprep.subr.bf16.mxu0 0
        %8976 = vmatpush1.bf16.msra.mxu0 0
        %8977 = vmatprep.subr.bf16.mxu0 0
        %8978 = vmatpush1.bf16.msra.mxu0 0
        %8979 = vmatprep.subr.bf16.mxu0 0
        %8980 = vmatpush1.bf16.msra.mxu0 0
        %8981 = vmatprep.subr.bf16.mxu0 0
        %8982 = vmatpush1.bf16.msra.mxu0 0
        %8983 = vmatprep.subr.bf16.mxu0 0
        %8984 = vmatpush1.bf16.msra.mxu0 0
        %8985 = vmatprep.subr.bf16.mxu0 0
        %8986 = vmatpush1.bf16.msra.mxu0 0
        %8987 = vmatprep.subr.bf16.mxu0 0
        %8988 = vmatpush1.bf16.msra.mxu0 0
        %8989 = vmatprep.subr.bf16.mxu0 0
        %8990 = vmatpush1.bf16.msra.mxu0 0
        %8991 = vmatprep.subr.bf16.mxu0 0
        %8992 = vmatpush1.bf16.msra.mxu0 0
        %8993 = vmatprep.subr.bf16.mxu0 0
        %8994 = vmatpush1.bf16.msra.mxu0 0
        %8995 = vmatprep.mubr.bf16.mxu0 0
        %8996 = vmatmul.mubr.bf16.gmra.mrb[0].mxu0 %v8908
        %v8997 = vpop.f32.mrb[0].mxu0
        %v8998 = vadd.f32 0.0, %v8997
        %v8999 = vpop.f32.mrb[0].mxu0
        %v9000 = vadd.f32 0.0, %v8999
        %v9001 = vpop.f32.mrb[0].mxu0
        %v9002 = vpop.f32.mrb[0].mxu0
        %9003 = vdwg.mxu0
        %v9004 = vadd.f32 %v8832, %v8957
        %v9005 = vadd.f32 %v8833, %v8959
        %v9006 = vadd.f32 %v8834, %v8998
        %v9007 = vadd.f32 %v8835, %v9000
        %v9008 = vld [vmem:[%s4337] sm:$0xf]
        %vm9009 = vcmp.gt.f32.partialorder %v9008, 0.5
        %v9010 = vsel %vm9009, 1, 0
        %v9011 = vlaneseq
        %v9012 = vshrl.u32 %v9011, 7
        %v9013 = vsub.s32 0, %v9012
        %v9014 = vrot.slane %v9010, %v9013
        %v9015 = vlaneseq
        %v9016 = vshrl.u32 %v9015, 7
        %v9017 = vsub.s32 1, %v9016
        %v9018 = vrot.slane %v9010, %v9017
        %v9019 = vlaneseq
        %v9020 = vshrl.u32 %v9019, 7
        %v9021 = vsub.s32 2, %v9020
        %v9022 = vrot.slane %v9010, %v9021
        %v9023 = vlaneseq
        %v9024 = vshrl.u32 %v9023, 7
        %v9025 = vsub.s32 3, %v9024
        %v9026 = vrot.slane %v9010, %v9025
        %vm9027 = vcmp.eq.s32.totalorder %v9014, 1
        %vm9028 = vcmp.eq.s32.totalorder %v9018, 1
        %vm9029 = vcmp.eq.s32.totalorder %v9022, 1
        %vm9030 = vcmp.eq.s32.totalorder %v9026, 1
        %vm9031 = vmpackc.low %vm9028, %vm9027
        %vm9032 = vmpackc.low %vm9030, %vm9029
        %v9033 = vsel %vm9031, 65537, 0
        %v9034 = vsel %vm9032, 65537, 0
        %9035 = vrot.lane.b32.xlu0 %v9033, 71
        %v9036 = vpop.permute.xlu0 %9035
        %9037 = vrot.lane.b32.xlu0 %v9034, 71
        %v9038 = vpop.permute.xlu0 %9037
        %v9039 = vrot.slane %v9036, 4
        %v9040 = vrot.slane %v9038, 4
        %v9041 = vsel %vm614, %v9039, %v9036
        %v9042 = vsel %vm237, %v9039, %v9040
        %v9043 = vsel %vm614, %v9042, %v9038
        %vm9044 = vcmp.ne.s16.totalorder %v9041, 0
        %vm9045 = vcmp.ne.s16.totalorder %v9043, 0
        %vm9046 = vcmp.ne.s16.totalorder %v9040, 0
        %v9047 = vsel %vm9044, %v7285, 0
        %v9048 = vsel %vm9045, %v7286, 0
        %v9049 = vsel %vm9046, %v7287, 0
        %s9050 = scalar_lea.vmem %s3, 96
        %v9051 = vld [vmem:[%s9050] sm:$0xf]
        %v9055 = vunpack.c.l.b16 %v9047
        %v9056 = vunpack.c.h.b16 %v9047
        %v9057 = vunpack.c.l.b16 %v9048
        %v9058 = vunpack.c.h.b16 %v9048
        %v9059 = vunpack.c.l.b16 %v9049
        %v9060 = vpack.c.b16 %v9055, %v9055
        %v9061 = vpack.c.b16 %v9056, %v9056
        %v9062 = vpack.c.b16 %v9057, %v9057
        %v9063 = vpack.c.b16 %v9058, %v9058
        %v9064 = vpack.c.b16 %v9059, %v9059
        %9065 = vrot.lane.b32.xlu0 %v9060, 57
        %v9066 = vpop.permute.xlu0 %9065
        %9067 = vrot.lane.b32.xlu0 %v9061, 57
        %v9068 = vpop.permute.xlu0 %9067
        %9069 = vrot.lane.b32.xlu0 %v9062, 57
        %v9070 = vpop.permute.xlu0 %9069
        %9071 = vrot.lane.b32.xlu0 %v9063, 57
        %v9072 = vpop.permute.xlu0 %9071
        %9073 = vrot.lane.b32.xlu0 %v9064, 57
        %v9074 = vpop.permute.xlu0 %9073
        %v9075 = vsel %vm579, %v9066, %v9068
        %v9076 = vsel %vm579, %v9068, %v9070
        %v9077 = vsel %vm579, %v9070, %v9072
        %v9078 = vsel %vm579, %v9072, %v9074
        %v9080 = vsel %vm321, %v9051, 0
        %v9083 = vsel %vm325, %v9075, 0
        %v9086 = vsel %vm325, %v9076, 0
        %v9089 = vsel %vm325, %v9077, 0
        %v9092 = vsel %vm325, %v9078, 0
        %9094 = vmatprep.subr.bf16.mxu0 %v9086
        %9095 = vmatpush1.bf16.msra.mxu0 %v9083
        %9096 = vmatprep.subr.bf16.mxu0 0
        %9097 = vmatpush1.bf16.msra.mxu0 0
        %9098 = vmatprep.subr.bf16.mxu0 0
        %9099 = vmatpush1.bf16.msra.mxu0 0
        %9100 = vmatprep.subr.bf16.mxu0 0
        %9101 = vmatpush1.bf16.msra.mxu0 0
        %9102 = vmatprep.subr.bf16.mxu0 0
        %9103 = vmatpush1.bf16.msra.mxu0 0
        %9104 = vmatprep.subr.bf16.mxu0 0
        %9105 = vmatpush1.bf16.msra.mxu0 0
        %9106 = vmatprep.subr.bf16.mxu0 0
        %9107 = vmatpush1.bf16.msra.mxu0 0
        %9108 = vmatprep.subr.bf16.mxu0 0
        %9109 = vmatpush1.bf16.msra.mxu0 0
        %9110 = vmatprep.subr.bf16.mxu0 0
        %9111 = vmatpush1.bf16.msra.mxu0 0
        %9112 = vmatprep.subr.bf16.mxu0 0
        %9113 = vmatpush1.bf16.msra.mxu0 0
        %9114 = vmatprep.subr.bf16.mxu0 0
        %9115 = vmatpush1.bf16.msra.mxu0 0
        %9116 = vmatprep.subr.bf16.mxu0 0
        %9117 = vmatpush1.bf16.msra.mxu0 0
        %9118 = vmatprep.subr.bf16.mxu0 0
        %9119 = vmatpush1.bf16.msra.mxu0 0
        %9120 = vmatprep.subr.bf16.mxu0 0
        %9121 = vmatpush1.bf16.msra.mxu0 0
        %9122 = vmatprep.subr.bf16.mxu0 0
        %9123 = vmatpush1.bf16.msra.mxu0 0
        %9124 = vmatprep.subr.bf16.mxu0 0
        %9125 = vmatpush1.bf16.msra.mxu0 0
        %9126 = vmatprep.mubr.bf16.mxu0 0
        %9127 = vmatmul.mubr.bf16.gmra.mrb[0].mxu0 %v9080
        %v9128 = vpop.f32.mrb[0].mxu0
        %v9129 = vadd.f32 0.0, %v9128
        %v9130 = vpop.f32.mrb[0].mxu0
        %v9131 = vadd.f32 0.0, %v9130
        %v9132 = vpop.f32.mrb[0].mxu0
        %v9133 = vpop.f32.mrb[0].mxu0
        %9134 = vdwg.mxu0
        %9135 = vmatprep.subr.bf16.mxu0 %v9092
        %9136 = vmatpush1.bf16.msra.mxu0 %v9089
        %9137 = vmatprep.subr.bf16.mxu0 0
        %9138 = vmatpush1.bf16.msra.mxu0 0
        %9139 = vmatprep.subr.bf16.mxu0 0
        %9140 = vmatpush1.bf16.msra.mxu0 0
        %9141 = vmatprep.subr.bf16.mxu0 0
        %9142 = vmatpush1.bf16.msra.mxu0 0
        %9143 = vmatprep.subr.bf16.mxu0 0
        %9144 = vmatpush1.bf16.msra.mxu0 0
        %9145 = vmatprep.subr.bf16.mxu0 0
        %9146 = vmatpush1.bf16.msra.mxu0 0
        %9147 = vmatprep.subr.bf16.mxu0 0
        %9148 = vmatpush1.bf16.msra.mxu0 0
        %9149 = vmatprep.subr.bf16.mxu0 0
        %9150 = vmatpush1.bf16.msra.mxu0 0
        %9151 = vmatprep.subr.bf16.mxu0 0
        %9152 = vmatpush1.bf16.msra.mxu0 0
        %9153 = vmatprep.subr.bf16.mxu0 0
        %9154 = vmatpush1.bf16.msra.mxu0 0
        %9155 = vmatprep.subr.bf16.mxu0 0
        %9156 = vmatpush1.bf16.msra.mxu0 0
        %9157 = vmatprep.subr.bf16.mxu0 0
        %9158 = vmatpush1.bf16.msra.mxu0 0
        %9159 = vmatprep.subr.bf16.mxu0 0
        %9160 = vmatpush1.bf16.msra.mxu0 0
        %9161 = vmatprep.subr.bf16.mxu0 0
        %9162 = vmatpush1.bf16.msra.mxu0 0
        %9163 = vmatprep.subr.bf16.mxu0 0
        %9164 = vmatpush1.bf16.msra.mxu0 0
        %9165 = vmatprep.subr.bf16.mxu0 0
        %9166 = vmatpush1.bf16.msra.mxu0 0
        %9167 = vmatprep.mubr.bf16.mxu0 0
        %9168 = vmatmul.mubr.bf16.gmra.mrb[0].mxu0 %v9080
        %v9169 = vpop.f32.mrb[0].mxu0
        %v9170 = vadd.f32 0.0, %v9169
        %v9171 = vpop.f32.mrb[0].mxu0
        %v9172 = vadd.f32 0.0, %v9171
        %v9173 = vpop.f32.mrb[0].mxu0
        %v9174 = vpop.f32.mrb[0].mxu0
        %9175 = vdwg.mxu0
        %v9176 = vadd.f32 %v9004, %v9129
        %v9177 = vadd.f32 %v9005, %v9131
        %v9178 = vadd.f32 %v9006, %v9170
        %v9179 = vadd.f32 %v9007, %v9172
        %v9180 = vld [vmem:[%s4510] sm:$0xf]
        %vm9181 = vcmp.gt.f32.partialorder %v9180, 0.5
        %v9182 = vsel %vm9181, 1, 0
        %v9183 = vlaneseq
        %v9184 = vshrl.u32 %v9183, 7
        %v9185 = vsub.s32 0, %v9184
        %v9186 = vrot.slane %v9182, %v9185
        %v9187 = vlaneseq
        %v9188 = vshrl.u32 %v9187, 7
        %v9189 = vsub.s32 1, %v9188
        %v9190 = vrot.slane %v9182, %v9189
        %v9191 = vlaneseq
        %v9192 = vshrl.u32 %v9191, 7
        %v9193 = vsub.s32 2, %v9192
        %v9194 = vrot.slane %v9182, %v9193
        %v9195 = vlaneseq
        %v9196 = vshrl.u32 %v9195, 7
        %v9197 = vsub.s32 3, %v9196
        %v9198 = vrot.slane %v9182, %v9197
        %vm9199 = vcmp.eq.s32.totalorder %v9186, 1
        %vm9200 = vcmp.eq.s32.totalorder %v9190, 1
        %vm9201 = vcmp.eq.s32.totalorder %v9194, 1
        %vm9202 = vcmp.eq.s32.totalorder %v9198, 1
        %vm9203 = vmpackc.low %vm9200, %vm9199
        %vm9204 = vmpackc.low %vm9202, %vm9201
        %v9205 = vsel %vm9203, 65537, 0
        %v9206 = vsel %vm9204, 65537, 0
        %9207 = vrot.lane.b32.xlu0 %v9205, 72
        %v9208 = vpop.permute.xlu0 %9207
        %9209 = vrot.lane.b32.xlu0 %v9206, 72
        %v9210 = vpop.permute.xlu0 %9209
        %v9211 = vrot.slane %v9208, 4
        %v9212 = vrot.slane %v9210, 4
        %v9213 = vsel %vm316, %v9211, %v9208
        %v9214 = vsel %vm237, %v9211, %v9212
        %v9215 = vsel %vm316, %v9214, %v9210
        %vm9216 = vcmp.ne.s16.totalorder %v9213, 0
        %vm9217 = vcmp.ne.s16.totalorder %v9215, 0
        %vm9218 = vcmp.ne.s16.totalorder %v9212, 0
        %v9219 = vsel %vm9216, %v7285, 0
        %v9220 = vsel %vm9217, %v7286, 0
        %v9221 = vsel %vm9218, %v7287, 0
        %s9222 = scalar_lea.vmem %s3, 100
        %v9223 = vld [vmem:[%s9222] sm:$0xf]
        %v9227 = vunpack.c.l.b16 %v9219
        %v9228 = vunpack.c.h.b16 %v9219
        %v9229 = vunpack.c.l.b16 %v9220
        %v9230 = vunpack.c.h.b16 %v9220
        %v9231 = vunpack.c.l.b16 %v9221
        %v9232 = vpack.c.b16 %v9227, %v9227
        %v9233 = vpack.c.b16 %v9228, %v9228
        %v9234 = vpack.c.b16 %v9229, %v9229
        %v9235 = vpack.c.b16 %v9230, %v9230
        %v9236 = vpack.c.b16 %v9231, %v9231
        %9237 = vrot.lane.b32.xlu0 %v9232, 56
        %v9238 = vpop.permute.xlu0 %9237
        %9239 = vrot.lane.b32.xlu0 %v9233, 56
        %v9240 = vpop.permute.xlu0 %9239
        %9241 = vrot.lane.b32.xlu0 %v9234, 56
        %v9242 = vpop.permute.xlu0 %9241
        %9243 = vrot.lane.b32.xlu0 %v9235, 56
        %v9244 = vpop.permute.xlu0 %9243
        %9245 = vrot.lane.b32.xlu0 %v9236, 56
        %v9246 = vpop.permute.xlu0 %9245
        %v9247 = vsel %vm281, %v9238, %v9240
        %v9248 = vsel %vm281, %v9240, %v9242
        %v9249 = vsel %vm281, %v9242, %v9244
        %v9250 = vsel %vm281, %v9244, %v9246
        %v9252 = vsel %vm321, %v9223, 0
        %v9255 = vsel %vm325, %v9247, 0
        %v9258 = vsel %vm325, %v9248, 0
        %v9261 = vsel %vm325, %v9249, 0
        %v9264 = vsel %vm325, %v9250, 0
        %9266 = vmatprep.subr.bf16.mxu0 %v9258
        %9267 = vmatpush1.bf16.msra.mxu0 %v9255
        %9268 = vmatprep.subr.bf16.mxu0 0
        %9269 = vmatpush1.bf16.msra.mxu0 0
        %9270 = vmatprep.subr.bf16.mxu0 0
        %9271 = vmatpush1.bf16.msra.mxu0 0
        %9272 = vmatprep.subr.bf16.mxu0 0
        %9273 = vmatpush1.bf16.msra.mxu0 0
        %9274 = vmatprep.subr.bf16.mxu0 0
        %9275 = vmatpush1.bf16.msra.mxu0 0
        %9276 = vmatprep.subr.bf16.mxu0 0
        %9277 = vmatpush1.bf16.msra.mxu0 0
        %9278 = vmatprep.subr.bf16.mxu0 0
        %9279 = vmatpush1.bf16.msra.mxu0 0
        %9280 = vmatprep.subr.bf16.mxu0 0
        %9281 = vmatpush1.bf16.msra.mxu0 0
        %9282 = vmatprep.subr.bf16.mxu0 0
        %9283 = vmatpush1.bf16.msra.mxu0 0
        %9284 = vmatprep.subr.bf16.mxu0 0
        %9285 = vmatpush1.bf16.msra.mxu0 0
        %9286 = vmatprep.subr.bf16.mxu0 0
        %9287 = vmatpush1.bf16.msra.mxu0 0
        %9288 = vmatprep.subr.bf16.mxu0 0
        %9289 = vmatpush1.bf16.msra.mxu0 0
        %9290 = vmatprep.subr.bf16.mxu0 0
        %9291 = vmatpush1.bf16.msra.mxu0 0
        %9292 = vmatprep.subr.bf16.mxu0 0
        %9293 = vmatpush1.bf16.msra.mxu0 0
        %9294 = vmatprep.subr.bf16.mxu0 0
        %9295 = vmatpush1.bf16.msra.mxu0 0
        %9296 = vmatprep.subr.bf16.mxu0 0
        %9297 = vmatpush1.bf16.msra.mxu0 0
        %9298 = vmatprep.mubr.bf16.mxu0 0
        %9299 = vmatmul.mubr.bf16.gmra.mrb[0].mxu0 %v9252
        %v9300 = vpop.f32.mrb[0].mxu0
        %v9301 = vadd.f32 0.0, %v9300
        %v9302 = vpop.f32.mrb[0].mxu0
        %v9303 = vadd.f32 0.0, %v9302
        %v9304 = vpop.f32.mrb[0].mxu0
        %v9305 = vpop.f32.mrb[0].mxu0
        %9306 = vdwg.mxu0
        %9307 = vmatprep.subr.bf16.mxu0 %v9264
        %9308 = vmatpush1.bf16.msra.mxu0 %v9261
        %9309 = vmatprep.subr.bf16.mxu0 0
        %9310 = vmatpush1.bf16.msra.mxu0 0
        %9311 = vmatprep.subr.bf16.mxu0 0
        %9312 = vmatpush1.bf16.msra.mxu0 0
        %9313 = vmatprep.subr.bf16.mxu0 0
        %9314 = vmatpush1.bf16.msra.mxu0 0
        %9315 = vmatprep.subr.bf16.mxu0 0
        %9316 = vmatpush1.bf16.msra.mxu0 0
        %9317 = vmatprep.subr.bf16.mxu0 0
        %9318 = vmatpush1.bf16.msra.mxu0 0
        %9319 = vmatprep.subr.bf16.mxu0 0
        %9320 = vmatpush1.bf16.msra.mxu0 0
        %9321 = vmatprep.subr.bf16.mxu0 0
        %9322 = vmatpush1.bf16.msra.mxu0 0
        %9323 = vmatprep.subr.bf16.mxu0 0
        %9324 = vmatpush1.bf16.msra.mxu0 0
        %9325 = vmatprep.subr.bf16.mxu0 0
        %9326 = vmatpush1.bf16.msra.mxu0 0
        %9327 = vmatprep.subr.bf16.mxu0 0
        %9328 = vmatpush1.bf16.msra.mxu0 0
        %9329 = vmatprep.subr.bf16.mxu0 0
        %9330 = vmatpush1.bf16.msra.mxu0 0
        %9331 = vmatprep.subr.bf16.mxu0 0
        %9332 = vmatpush1.bf16.msra.mxu0 0
        %9333 = vmatprep.subr.bf16.mxu0 0
        %9334 = vmatpush1.bf16.msra.mxu0 0
        %9335 = vmatprep.subr.bf16.mxu0 0
        %9336 = vmatpush1.bf16.msra.mxu0 0
        %9337 = vmatprep.subr.bf16.mxu0 0
        %9338 = vmatpush1.bf16.msra.mxu0 0
        %9339 = vmatprep.mubr.bf16.mxu0 0
        %9340 = vmatmul.mubr.bf16.gmra.mrb[0].mxu0 %v9252
        %v9341 = vpop.f32.mrb[0].mxu0
        %v9342 = vadd.f32 0.0, %v9341
        %v9343 = vpop.f32.mrb[0].mxu0
        %v9344 = vadd.f32 0.0, %v9343
        %v9345 = vpop.f32.mrb[0].mxu0
        %v9346 = vpop.f32.mrb[0].mxu0
        %9347 = vdwg.mxu0
        %v9348 = vadd.f32 %v9176, %v9301
        %v9349 = vadd.f32 %v9177, %v9303
        %v9350 = vadd.f32 %v9178, %v9342
        %v9351 = vadd.f32 %v9179, %v9344
        %v9352 = vld [vmem:[%s4683] sm:$0xf]
        %vm9353 = vcmp.gt.f32.partialorder %v9352, 0.5
        %v9354 = vsel %vm9353, 1, 0
        %v9355 = vlaneseq
        %v9356 = vshrl.u32 %v9355, 7
        %v9357 = vsub.s32 0, %v9356
        %v9358 = vrot.slane %v9354, %v9357
        %v9359 = vlaneseq
        %v9360 = vshrl.u32 %v9359, 7
        %v9361 = vsub.s32 1, %v9360
        %v9362 = vrot.slane %v9354, %v9361
        %v9363 = vlaneseq
        %v9364 = vshrl.u32 %v9363, 7
        %v9365 = vsub.s32 2, %v9364
        %v9366 = vrot.slane %v9354, %v9365
        %v9367 = vlaneseq
        %v9368 = vshrl.u32 %v9367, 7
        %v9369 = vsub.s32 3, %v9368
        %v9370 = vrot.slane %v9354, %v9369
        %vm9371 = vcmp.eq.s32.totalorder %v9358, 1
        %vm9372 = vcmp.eq.s32.totalorder %v9362, 1
        %vm9373 = vcmp.eq.s32.totalorder %v9366, 1
        %vm9374 = vcmp.eq.s32.totalorder %v9370, 1
        %vm9375 = vmpackc.low %vm9372, %vm9371
        %vm9376 = vmpackc.low %vm9374, %vm9373
        %v9377 = vsel %vm9375, 65537, 0
        %v9378 = vsel %vm9376, 65537, 0
        %9379 = vrot.lane.b32.xlu0 %v9377, 73
        %v9380 = vpop.permute.xlu0 %9379
        %9381 = vrot.lane.b32.xlu0 %v9378, 73
        %v9382 = vpop.permute.xlu0 %9381
        %v9383 = vrot.slane %v9380, 4
        %v9384 = vrot.slane %v9382, 4
        %v9385 = vsel %vm443, %v9383, %v9380
        %v9386 = vsel %vm237, %v9383, %v9384
        %v9387 = vsel %vm443, %v9386, %v9382
        %vm9388 = vcmp.ne.s16.totalorder %v9385, 0
        %vm9389 = vcmp.ne.s16.totalorder %v9387, 0
        %vm9390 = vcmp.ne.s16.totalorder %v9384, 0
        %v9391 = vsel %vm9388, %v7285, 0
        %v9392 = vsel %vm9389, %v7286, 0
        %v9393 = vsel %vm9390, %v7287, 0
        %s9394 = scalar_lea.vmem %s3, 104
        %v9395 = vld [vmem:[%s9394] sm:$0xf]
        %v9399 = vunpack.c.l.b16 %v9391
        %v9400 = vunpack.c.h.b16 %v9391
        %v9401 = vunpack.c.l.b16 %v9392
        %v9402 = vunpack.c.h.b16 %v9392
        %v9403 = vunpack.c.l.b16 %v9393
        %v9404 = vpack.c.b16 %v9399, %v9399
        %v9405 = vpack.c.b16 %v9400, %v9400
        %v9406 = vpack.c.b16 %v9401, %v9401
        %v9407 = vpack.c.b16 %v9402, %v9402
        %v9408 = vpack.c.b16 %v9403, %v9403
        %9409 = vrot.lane.b32.xlu0 %v9404, 55
        %v9410 = vpop.permute.xlu0 %9409
        %9411 = vrot.lane.b32.xlu0 %v9405, 55
        %v9412 = vpop.permute.xlu0 %9411
        %9413 = vrot.lane.b32.xlu0 %v9406, 55
        %v9414 = vpop.permute.xlu0 %9413
        %9415 = vrot.lane.b32.xlu0 %v9407, 55
        %v9416 = vpop.permute.xlu0 %9415
        %9417 = vrot.lane.b32.xlu0 %v9408, 55
        %v9418 = vpop.permute.xlu0 %9417
        %v9419 = vsel %vm235, %v9410, %v9412
        %v9420 = vsel %vm235, %v9412, %v9414
        %v9421 = vsel %vm235, %v9414, %v9416
        %v9422 = vsel %vm235, %v9416, %v9418
        %v9424 = vsel %vm321, %v9395, 0
        %v9427 = vsel %vm325, %v9419, 0
        %v9430 = vsel %vm325, %v9420, 0
        %v9433 = vsel %vm325, %v9421, 0
        %v9436 = vsel %vm325, %v9422, 0
        %9438 = vmatprep.subr.bf16.mxu0 %v9430
        %9439 = vmatpush1.bf16.msra.mxu0 %v9427
        %9440 = vmatprep.subr.bf16.mxu0 0
        %9441 = vmatpush1.bf16.msra.mxu0 0
        %9442 = vmatprep.subr.bf16.mxu0 0
        %9443 = vmatpush1.bf16.msra.mxu0 0
        %9444 = vmatprep.subr.bf16.mxu0 0
        %9445 = vmatpush1.bf16.msra.mxu0 0
        %9446 = vmatprep.subr.bf16.mxu0 0
        %9447 = vmatpush1.bf16.msra.mxu0 0
        %9448 = vmatprep.subr.bf16.mxu0 0
        %9449 = vmatpush1.bf16.msra.mxu0 0
        %9450 = vmatprep.subr.bf16.mxu0 0
        %9451 = vmatpush1.bf16.msra.mxu0 0
        %9452 = vmatprep.subr.bf16.mxu0 0
        %9453 = vmatpush1.bf16.msra.mxu0 0
        %9454 = vmatprep.subr.bf16.mxu0 0
        %9455 = vmatpush1.bf16.msra.mxu0 0
        %9456 = vmatprep.subr.bf16.mxu0 0
        %9457 = vmatpush1.bf16.msra.mxu0 0
        %9458 = vmatprep.subr.bf16.mxu0 0
        %9459 = vmatpush1.bf16.msra.mxu0 0
        %9460 = vmatprep.subr.bf16.mxu0 0
        %9461 = vmatpush1.bf16.msra.mxu0 0
        %9462 = vmatprep.subr.bf16.mxu0 0
        %9463 = vmatpush1.bf16.msra.mxu0 0
        %9464 = vmatprep.subr.bf16.mxu0 0
        %9465 = vmatpush1.bf16.msra.mxu0 0
        %9466 = vmatprep.subr.bf16.mxu0 0
        %9467 = vmatpush1.bf16.msra.mxu0 0
        %9468 = vmatprep.subr.bf16.mxu0 0
        %9469 = vmatpush1.bf16.msra.mxu0 0
        %9470 = vmatprep.mubr.bf16.mxu0 0
        %9471 = vmatmul.mubr.bf16.gmra.mrb[0].mxu0 %v9424
        %v9472 = vpop.f32.mrb[0].mxu0
        %v9473 = vadd.f32 0.0, %v9472
        %v9474 = vpop.f32.mrb[0].mxu0
        %v9475 = vadd.f32 0.0, %v9474
        %v9476 = vpop.f32.mrb[0].mxu0
        %v9477 = vpop.f32.mrb[0].mxu0
        %9478 = vdwg.mxu0
        %9479 = vmatprep.subr.bf16.mxu0 %v9436
        %9480 = vmatpush1.bf16.msra.mxu0 %v9433
        %9481 = vmatprep.subr.bf16.mxu0 0
        %9482 = vmatpush1.bf16.msra.mxu0 0
        %9483 = vmatprep.subr.bf16.mxu0 0
        %9484 = vmatpush1.bf16.msra.mxu0 0
        %9485 = vmatprep.subr.bf16.mxu0 0
        %9486 = vmatpush1.bf16.msra.mxu0 0
        %9487 = vmatprep.subr.bf16.mxu0 0
        %9488 = vmatpush1.bf16.msra.mxu0 0
        %9489 = vmatprep.subr.bf16.mxu0 0
        %9490 = vmatpush1.bf16.msra.mxu0 0
        %9491 = vmatprep.subr.bf16.mxu0 0
        %9492 = vmatpush1.bf16.msra.mxu0 0
        %9493 = vmatprep.subr.bf16.mxu0 0
        %9494 = vmatpush1.bf16.msra.mxu0 0
        %9495 = vmatprep.subr.bf16.mxu0 0
        %9496 = vmatpush1.bf16.msra.mxu0 0
        %9497 = vmatprep.subr.bf16.mxu0 0
        %9498 = vmatpush1.bf16.msra.mxu0 0
        %9499 = vmatprep.subr.bf16.mxu0 0
        %9500 = vmatpush1.bf16.msra.mxu0 0
        %9501 = vmatprep.subr.bf16.mxu0 0
        %9502 = vmatpush1.bf16.msra.mxu0 0
        %9503 = vmatprep.subr.bf16.mxu0 0
        %9504 = vmatpush1.bf16.msra.mxu0 0
        %9505 = vmatprep.subr.bf16.mxu0 0
        %9506 = vmatpush1.bf16.msra.mxu0 0
        %9507 = vmatprep.subr.bf16.mxu0 0
        %9508 = vmatpush1.bf16.msra.mxu0 0
        %9509 = vmatprep.subr.bf16.mxu0 0
        %9510 = vmatpush1.bf16.msra.mxu0 0
        %9511 = vmatprep.mubr.bf16.mxu0 0
        %9512 = vmatmul.mubr.bf16.gmra.mrb[0].mxu0 %v9424
        %v9513 = vpop.f32.mrb[0].mxu0
        %v9514 = vadd.f32 0.0, %v9513
        %v9515 = vpop.f32.mrb[0].mxu0
        %v9516 = vadd.f32 0.0, %v9515
        %v9517 = vpop.f32.mrb[0].mxu0
        %v9518 = vpop.f32.mrb[0].mxu0
        %9519 = vdwg.mxu0
        %v9520 = vadd.f32 %v9348, %v9473
        %v9521 = vadd.f32 %v9349, %v9475
        %v9522 = vadd.f32 %v9350, %v9514
        %v9523 = vadd.f32 %v9351, %v9516
        %v9524 = vadd.f32 %v9520, %v9521
        %v9525 = vadd.f32 %v9524, %v9522
        %v9526 = vadd.f32 %v9525, %v9523
        %9527 = vadd.xlane.f32.xlu0 %v9526
        %v9528 = vpop.xlane.xlu0 %9527
        %v9529 = vmul.f32 %v9528, 0.001953125
        %v9530 = vsub.f32 %v9520, %v9529
        %v9531 = vsub.f32 %v9521, %v9529
        %v9532 = vsub.f32 %v9522, %v9529
        %v9533 = vsub.f32 %v9523, %v9529
        %v9534 = vmul.f32 %v9530, %v9530
        %v9535 = vmul.f32 %v9531, %v9531
        %v9536 = vmul.f32 %v9532, %v9532
        %v9537 = vmul.f32 %v9533, %v9533
        %v9538 = vadd.f32 %v9534, %v9535
        %v9539 = vadd.f32 %v9538, %v9536
        %v9540 = vadd.f32 %v9539, %v9537
        %9541 = vadd.xlane.f32.xlu0 %v9540
        %v9542 = vpop.xlane.xlu0 %9541
        %v9543 = vmul.f32 %v9542, 0.001953125
        %v9544 = vmax.f32 %v9543, 0.0
        %v9545 = vadd.f32 %v9544, 1e-05
        %v9546 = vrsqrt.pop %v9545
        %v9547 = vmul.f32 %v9530, %v9546
        %v9548 = vmul.f32 %v9531, %v9546
        %v9549 = vmul.f32 %v9532, %v9546
        %v9550 = vmul.f32 %v9533, %v9546
        %vm9551 = vcmp.gt.f32.partialorder %v9547, 0.0
        %vm9552 = vcmp.gt.f32.partialorder %v9548, 0.0
        %vm9553 = vcmp.gt.f32.partialorder %v9549, 0.0
        %vm9554 = vcmp.gt.f32.partialorder %v9550, 0.0
        %v9555 = vmul.f32 %v9547, 0.01
        %v9556 = vmul.f32 %v9548, 0.01
        %v9557 = vmul.f32 %v9549, 0.01
        %v9558 = vmul.f32 %v9550, 0.01
        %v9559 = vsel %vm9551, %v9547, %v9555
        %v9560 = vsel %vm9552, %v9548, %v9556
        %v9561 = vsel %vm9553, %v9549, %v9557
        %v9562 = vsel %vm9554, %v9550, %v9558
        %9563 = vst [vmem:[%s190] sm:$0xff] %v9559
        %9564 = vst [vmem:[%s190 + $0x8] sm:$0xff] %v9560
        %9565 = vst [vmem:[%s190 + $0x10] sm:$0xff] %v9561
        %9566 = vst [vmem:[%s190 + $0x18] sm:$0xff] %v9562
        %s9567 = sand.u32 %s115, 1
        %s9568 = scalar_lea.sflag [#allocation4], %s9567
        %s9569 = sand.u32 %s115, 1
        %s9570 = smul.addr %s9569, 32
        %s9571 = scalar_lea.vmem [#allocation3], %s9570
        // Predicated region
        $region37: #{tpu_custom_call.1} parent=35 // pred_check
          %p9572 = pneg %p125
        $region38: #{tpu_custom_call.1} parent=35 // pred_check_branch
          %9574 = sbr.rel (%p9572) target = $region40
        $region39: #{tpu_custom_call.1} parent=35 // pred_region
          %s9576 = ssub.s32 512, 512
          %9577 = vsyncadd %s9568, %s9576
          %s9578 = smul.addr %s18, 4
          %s9579 = smul.addr %s9578, 128
          %s9580 = scalar_lea.hbm %s4, %s9579
          %s9582 = sshll.u32 %s9571, 4
          %s9583 = int_to_ptr.vmem [resolvable:$true] %s9582
          %9585 = dma.vmem_to_hbm [thread:$0]  %s9583, 512, %s9580, %s9568
        $region40: #{tpu_custom_call.1} parent=35 // pred_fallthru
          _
      $region36: #{tpu_custom_call.1} parent=5 // pred_fallthru
        _
      %p9586 = scmp.le.s32.totalorder 2, %s13
      // Predicated region
      $region41: #{tpu_custom_call.1} parent=5 // pred_check
        %p9587 = pneg %p9586
      $region42: #{tpu_custom_call.1} parent=5 // pred_check_branch
        %9589 = sbr.rel (%p9587) target = $region44
      $region43: #{tpu_custom_call.1} parent=5 // pred_region
        %s9590 = ssub.s32 %s13, 2
        // Predicated region
        $region45: #{tpu_custom_call.1} parent=43 // pred_check
          %p9591 = pneg %p131
        $region46: #{tpu_custom_call.1} parent=43 // pred_check_branch
          %9593 = sbr.rel (%p9591) target = $region48
        $region47: #{tpu_custom_call.1} parent=43 // pred_region
          %s9594 = sand.u32 %s116, 1
          %s9595 = scalar_lea.sflag [#allocation4], %s9594
          %s9596 = sand.u32 %s116, 1
          %s9597 = smul.addr %s9596, 32
          %s9598 = scalar_lea.vmem [#allocation3], %s9597
          %9599 = dma.done %s9595, 512
        $region48: #{tpu_custom_call.1} parent=43 // pred_fallthru
          _
      $region44: #{tpu_custom_call.1} parent=5 // pred_fallthru
        _
    $region6: #{tpu_custom_call.1} parent=1 // loop_footer
      %s17 = sadd.s32 1, %s13
    $region7: #{tpu_custom_call.1} parent=1 // loop_footer_branch
      %12 = sbr.rel target = $region3
    $region8: #{tpu_custom_call.1} parent=1 // loop_exit
      _
    %9600 = vsyncpa [#allocation4], 1
    %s9601 = scalar_lea.sflag [#allocation4], 1
    %9602 = vsyncpa %s9601, 1

</llo_original>
